<compile_context>
chip_gen: v7x
topology: tpu7x:2x2x1
jax: 0.10.0
libtpu: 0.0.40
codegen_flags: <defaults>
</compile_context>

<pallas_src>
import math
import functools

import jax
import jax.numpy as jnp
from jax import lax
from jax.experimental import pallas as pl
from jax.experimental.pallas import tpu as pltpu

EPS = 1e-6   # CAE uses norm_layer=partial(nn.LayerNorm, eps=1e-6)


def _vmem_limit_bytes():
    """Generation-aware VMEM limit (3/4 of capacity, capped at 100 MiB)."""
    try:
        cap = pltpu.get_tpu_info().vmem_capacity_bytes
        return int(min(cap * 3 // 4, 100 * 1024 * 1024))
    except Exception:
        return 48 * 1024 * 1024   # safe default (fits v7x's 64 MiB)


VMEM_LIMIT = _vmem_limit_bytes()


# --------------------------- fused block kernel -----------------------------
# One grid step = one batch element, the whole RegressorBlock in VMEM.

def _block_kernel(xq_ref, xkv_ref, pq_ref, pk_ref,
                  g1q_ref, b1q_ref, g1k_ref, b1k_ref, g1v_ref, b1v_ref,
                  wq_ref, bq_ref, wk_ref, wv_ref, bv_ref,
                  wp_ref, bp_ref, gamma1_ref,
                  g2_ref, b2_ref,
                  w1_ref, fb1_ref, w2_ref, fb2_ref, gamma2_ref,
                  gf_ref, bf_ref,
                  o_ref,
                  *, num_heads, head_dim, eps, apply_final_ln):

    def ln(x, g, b):
        mu = jnp.mean(x, axis=-1, keepdims=True)
        var = jnp.mean(jnp.square(x - mu), axis=-1, keepdims=True)
        return (x - mu) * lax.rsqrt(var + eps) * g + b

    def gelu(x):
        # tanh-form GELU (EUP slot); max deviation from exact erf GELU ~3e-4.
        return 0.5 * x * (1.0 + jnp.tanh(0.7978845608028654 *
                                         (x + 0.044715 * x * x * x)))

    xq = xq_ref[0]      # [Nq, D] f32
    xkv = xkv_ref[0]    # [Nk, D] f32
    pq = pq_ref[0]      # [Nq, D]
    pk = pk_ref[0]      # [Nk, D]

    # --- fused LN prologues + q/k/v projections (bf16 MXU, f32 accumulate) --
    q_in = ln(xq + pq, g1q_ref[...], b1q_ref[...]).astype(jnp.bfloat16)
    k_in = ln(xkv + pk, g1k_ref[...], b1k_ref[...]).astype(jnp.bfloat16)
    v_in = ln(xkv, g1v_ref[...], b1v_ref[...]).astype(jnp.bfloat16)

    # wq/bq already have head_dim**-0.5 folded in (hoisted in prepare_params).
    q = (jnp.dot(q_in, wq_ref[...], preferred_element_type=jnp.float32)
         + bq_ref[...]).astype(jnp.bfloat16)                       # [Nq, D]
    k = jnp.dot(k_in, wk_ref[...],
                preferred_element_type=jnp.float32).astype(jnp.bfloat16)  # [Nk, D]
    v = (jnp.dot(v_in, wv_ref[...], preferred_element_type=jnp.float32)
         + bv_ref[...]).astype(jnp.bfloat16)                       # [Nk, D]

    # --- per-head attention; proj matmul folded in per head -----------------
    nq, dim = q.shape
    proj = jnp.zeros((nq, dim), jnp.float32)
    for h in range(num_heads):
        lo = h * head_dim
        hi = lo + head_dim
        qh = q[:, lo:hi]                                            # [Nq, Dh]
        kh = k[:, lo:hi]                                            # [Nk, Dh]
        vh = v[:, lo:hi]                                            # [Nk, Dh]
        s = lax.dot_general(qh, kh, (((1,), (1,)), ((), ())),
                            preferred_element_type=jnp.float32)     # [Nq, Nk]
        s = s - jnp.max(s, axis=-1, keepdims=True)
        e = jnp.exp(s)
        p = e / jnp.sum(e, axis=-1, keepdims=True)
        oh = jnp.dot(p.astype(jnp.bfloat16), vh,
                     preferred_element_type=jnp.float32)            # [Nq, Dh]
        proj = proj + jnp.dot(oh.astype(jnp.bfloat16), wp_ref[lo:hi, :],
                              preferred_element_type=jnp.float32)   # [Nq, D]

    # --- residual + norm2 + MLP + residual (+ optional final LayerNorm) -----
    x1 = xq + gamma1_ref[...] * (proj + bp_ref[...])
    x2 = ln(x1, g2_ref[...], b2_ref[...])
    h1 = gelu(jnp.dot(x2.astype(jnp.bfloat16), w1_ref[...],
                      preferred_element_type=jnp.float32) + fb1_ref[...])
    h2 = jnp.dot(h1.astype(jnp.bfloat16), w2_ref[...],
                 preferred_element_type=jnp.float32) + fb2_ref[...]
    xo = x2 + gamma2_ref[...] * h2
    if apply_final_ln:
        xo = ln(xo, gf_ref[...], bf_ref[...])
    o_ref[0] = xo.astype(o_ref.dtype)


def regressor_block(x_q, x_un, pos_q, pos_k, bp, final_ln, cfg):
    """One fused RegressorBlock.  x_q:[B,Nq,D], x_un:[B,Nu,D], pos_*: [1,*,D]."""
    B, Nq, D = x_q.shape
    Nk = x_un.shape[1] + Nq
    H = cfg["num_heads"]
    Dh = D // H
    hidden = bp["fc1"].shape[1]

    # Cheap per-block concat (~50 KB); everything else stays in VMEM.
    x_kv = jnp.concatenate([x_un, x_q], axis=1)        # [B, Nk, D]

    row_d = pl.BlockSpec((1, D), lambda b: (0, 0))
    row_h = pl.BlockSpec((1, hidden), lambda b: (0, 0))
    mat_dd = pl.BlockSpec((D, D), lambda b: (0, 0))

    in_specs = [
        pl.BlockSpec((1, Nq, D), lambda b: (b, 0, 0)),   # x_q
        pl.BlockSpec((1, Nk, D), lambda b: (b, 0, 0)),   # x_kv
        pl.BlockSpec((1, Nq, D), lambda b: (0, 0, 0)),   # pos_q (batch dim 1)
        pl.BlockSpec((1, Nk, D), lambda b: (0, 0, 0)),   # pos_k (batch dim 1)
        row_d, row_d,                                    # ln1_q gamma/beta
        row_d, row_d,                                    # ln1_k gamma/beta
        row_d, row_d,                                    # ln1_v gamma/beta
        mat_dd, row_d,                                   # wq (scale folded), bq
        mat_dd,                                          # wk (no bias)
        mat_dd, row_d,                                   # wv, bv
        mat_dd, row_d,                                   # wproj, bproj
        row_d,                                           # gamma_1
        row_d, row_d,                                    # norm2 gamma/beta
        pl.BlockSpec((D, hidden), lambda b: (0, 0)),     # fc1
        row_h,                                           # fc1 bias
        pl.BlockSpec((hidden, D), lambda b: (0, 0)),     # fc2
        row_d,                                           # fc2 bias
        row_d,                                           # gamma_2
        row_d, row_d,                                    # final LN gamma/beta
    ]

    if final_ln is None:
        gf, bf = bp["ln2_g"], bp["ln2_b"]                # unread placeholders
    else:
        gf, bf = final_ln

    args = [x_q, x_kv, pos_q, pos_k,
            bp["ln1q_g"], bp["ln1q_b"], bp["ln1k_g"], bp["ln1k_b"],
            bp["ln1v_g"], bp["ln1v_b"],
            bp["wq"], bp["bq"], bp["wk"], bp["wv"], bp["bv"],
            bp["wproj"], bp["bproj"], bp["gamma1"],
            bp["ln2_g"], bp["ln2_b"],
            bp["fc1"], bp["b1"], bp["fc2"], bp["b2"], bp["gamma2"],
            gf, bf]

    return pl.pallas_call(
        functools.partial(_block_kernel, num_heads=H, head_dim=Dh, eps=EPS,
                          apply_final_ln=final_ln is not None),
        grid=(B,),
        in_specs=in_specs,
        out_specs=pl.BlockSpec((1, Nq, D), lambda b: (b, 0, 0)),
        out_shape=jax.ShapeDtypeStruct((B, Nq, D), jnp.float32),
        compiler_params=pltpu.CompilerParams(
            dimension_semantics=("parallel",),
            vmem_limit_bytes=VMEM_LIMIT),
    )(*args)


def latent_regresser_forward(params, x_masked, x_unmasked, pos_masked,
                             pos_unmasked, cfg):
    # pos_k concat is constant across blocks -> hoisted out of the loop.
    pos_k = jnp.concatenate([pos_unmasked, pos_masked], axis=1)   # [1, Nk, D]
    x = x_masked
    nb = len(params["blocks"])
    for i, bp in enumerate(params["blocks"]):
        fin = (params["norm_g"], params["norm_b"]) if i == nb - 1 else None
        x = regressor_block(x, x_unmasked, pos_masked, pos_k, bp, fin, cfg)
    return x     # final self.norm fused into the last block (model_type='cae')


# --------------------------- deterministic init ------------------------------

def trunc_normal(key, shape, std):
    # trunc_normal_(t, std=s, a=-s, b=s)
    return std * jax.random.truncated_normal(key, -1.0, 1.0, shape, dtype=jnp.float32)


def init_params(key, cfg):
    D = cfg["embed_dim"]
    hidden = int(D * cfg["mlp_ratio"])
    depth = cfg["regresser_depth"]
    std = cfg["init_std"]
    keys = jax.random.split(key, 6 * depth)
    blocks = []
    for i in range(depth):
        k = keys[6 * i: 6 * (i + 1)]
        rescale = math.sqrt(2.0 * (i + 1))          # fix_init_weight
        blocks.append(dict(
            norm1_q_w=jnp.ones((D,), jnp.float32), norm1_q_b=jnp.zeros((D,), jnp.float32),
            norm1_k_w=jnp.ones((D,), jnp.float32), norm1_k_b=jnp.zeros((D,), jnp.float32),
            norm1_v_w=jnp.ones((D,), jnp.float32), norm1_v_b=jnp.zeros((D,), jnp.float32),
            norm2_w=jnp.ones((D,), jnp.float32), norm2_b=jnp.zeros((D,), jnp.float32),
            q_w=trunc_normal(k[0], (D, D), std), q_bias=jnp.zeros((D,), jnp.float32),
            k_w=trunc_normal(k[1], (D, D), std),
            v_w=trunc_normal(k[2], (D, D), std), v_bias=jnp.zeros((D,), jnp.float32),
            proj_w=trunc_normal(k[3], (D, D), std) / rescale,
            proj_b=jnp.zeros((D,), jnp.float32),
            fc1_w=trunc_normal(k[4], (D, hidden), std),
            fc1_b=jnp.zeros((hidden,), jnp.float32),
            fc2_w=trunc_normal(k[5], (hidden, D), std) / rescale,
            fc2_b=jnp.zeros((D,), jnp.float32),
            gamma_1=cfg["init_values"] * jnp.ones((D,), jnp.float32),
            gamma_2=cfg["init_values"] * jnp.ones((D,), jnp.float32),
        ))
    return dict(blocks=blocks,
                norm_w=jnp.ones((D,), jnp.float32),
                norm_b=jnp.zeros((D,), jnp.float32))


def prepare_params(raw, cfg):
    """One-time hoist: bf16 weights, folded q-scale, (1,D)-shaped vectors."""
    scale = (cfg["embed_dim"] // cfg["num_heads"]) ** -0.5

    def row(v):
        return v.reshape(1, -1).astype(jnp.float32)

    blocks = []
    for bp in raw["blocks"]:
        blocks.append(dict(
            ln1q_g=row(bp["norm1_q_w"]), ln1q_b=row(bp["norm1_q_b"]),
            ln1k_g=row(bp["norm1_k_w"]), ln1k_b=row(bp["norm1_k_b"]),
            ln1v_g=row(bp["norm1_v_w"]), ln1v_b=row(bp["norm1_v_b"]),
            ln2_g=row(bp["norm2_w"]), ln2_b=row(bp["norm2_b"]),
            wq=(bp["q_w"] * scale).astype(jnp.bfloat16), bq=row(bp["q_bias"] * scale),
            wk=bp["k_w"].astype(jnp.bfloat16),
            wv=bp["v_w"].astype(jnp.bfloat16), bv=row(bp["v_bias"]),
            wproj=bp["proj_w"].astype(jnp.bfloat16), bproj=row(bp["proj_b"]),
            fc1=bp["fc1_w"].astype(jnp.bfloat16), b1=row(bp["fc1_b"]),
            fc2=bp["fc2_w"].astype(jnp.bfloat16), b2=row(bp["fc2_b"]),
            gamma1=row(bp["gamma_1"]), gamma2=row(bp["gamma_2"]),
        ))
    return dict(blocks=blocks, norm_g=row(raw["norm_w"]), norm_b=row(raw["norm_b"]))


# --------------------------- pure-JAX reference ------------------------------
# Faithful f32 spec math (exact erf GELU, exact softmax, f32 matmuls).

def reference_forward(raw, x_m, x_u, pos_m, pos_u, cfg):
    D, H = cfg["embed_dim"], cfg["num_heads"]
    Dh = D // H
    scale = Dh ** -0.5

    def ln(x, g, b):
        mu = x.mean(-1, keepdims=True)
        var = ((x - mu) ** 2).mean(-1, keepdims=True)
        return (x - mu) / jnp.sqrt(var + EPS) * g + b

    def gelu(x):
        return 0.5 * x * (1.0 + jax.scipy.special.erf(x / jnp.sqrt(2.0)))

    pos_k = jnp.concatenate([pos_u, pos_m], axis=1)
    x = x_m
    for bp in raw["blocks"]:
        x_kv = jnp.concatenate([x_u, x], axis=1)
        qi = ln(x + pos_m, bp["norm1_q_w"], bp["norm1_q_b"])
        ki = ln(x_kv + pos_k, bp["norm1_k_w"], bp["norm1_k_b"])
        vi = ln(x_kv, bp["norm1_v_w"], bp["norm1_v_b"])
        q = qi @ bp["q_w"] + bp["q_bias"]
        k = ki @ bp["k_w"]
        v = vi @ bp["v_w"] + bp["v_bias"]
        B, Nq, _ = q.shape
        Nk = k.shape[1]
        q = q.reshape(B, Nq, H, Dh).transpose(0, 2, 1, 3) * scale
        k = k.reshape(B, Nk, H, Dh).transpose(0, 2, 1, 3)
        v = v.reshape(B, Nk, H, Dh).transpose(0, 2, 1, 3)
        a = jax.nn.softmax(q @ k.transpose(0, 1, 3, 2), axis=-1)
        o = (a @ v).transpose(0, 2, 1, 3).reshape(B, Nq, D)
        o = o @ bp["proj_w"] + bp["proj_b"]
        x = x + bp["gamma_1"] * o
        x = ln(x, bp["norm2_w"], bp["norm2_b"])
        hm = gelu(x @ bp["fc1_w"] + bp["fc1_b"]) @ bp["fc2_w"] + bp["fc2_b"]
        x = x + bp["gamma_2"] * hm
    return ln(x, raw["norm_w"], raw["norm_b"])


# ---------------------------------- main -------------------------------------

if __name__ == "__main__":
    cfg = dict(embed_dim=256, regresser_depth=2, num_heads=2, mlp_ratio=4.0,
               init_values=0.1, init_std=0.02)

    key = jax.random.PRNGKey(0)
    k_p, k_xm, k_xu, k_pm, k_pu = jax.random.split(key, 5)
    raw_params = init_params(k_p, cfg)
    dev_params = prepare_params(raw_params, cfg)

    B, Nm, Nu, D = 2, 8, 16, cfg["embed_dim"]
    x_masked = jax.random.normal(k_xm, (B, Nm, D), jnp.float32)
    x_unmasked = jax.random.normal(k_xu, (B, Nu, D), jnp.float32)
    pos_masked = jax.random.normal(k_pm, (1, Nm, D), jnp.float32)
    pos_unmasked = jax.random.normal(k_pu, (1, Nu, D), jnp.float32)

    fwd = jax.jit(functools.partial(latent_regresser_forward, cfg=cfg))
    out = fwd(dev_params, x_masked, x_unmasked, pos_masked, pos_unmasked)
    out = jax.block_until_ready(out)
    assert out.shape == (B, Nm, D), out.shape

    ref = reference_forward(raw_params, x_masked, x_unmasked, pos_masked,
                            pos_unmasked, cfg)
    # bf16 MXU operands + tanh-GELU vs. the pure-f32 erf reference:
    # estimated max abs error ~1e-3 for depth=2 / D=256; allow margin.
    err = float(jnp.max(jnp.abs(out - ref)))
    if err < 5e-3:
        print("KERNEL_OK")
    else:
        print(f"MISMATCH max_abs_err={err:.3e}")
</pallas_src>

<mosaic_0001>
module attributes {stable_mosaic.version = 11 : i64} {
  func.func @_block_kernel(%arg0: i32, %arg1: memref<1x8x256xf32, #tpu.memory_space<vmem>>, %arg2: memref<1x24x256xf32, #tpu.memory_space<vmem>>, %arg3: memref<1x8x256xf32, #tpu.memory_space<vmem>>, %arg4: memref<1x24x256xf32, #tpu.memory_space<vmem>>, %arg5: memref<1x256xf32, #tpu.memory_space<vmem>>, %arg6: memref<1x256xf32, #tpu.memory_space<vmem>>, %arg7: memref<1x256xf32, #tpu.memory_space<vmem>>, %arg8: memref<1x256xf32, #tpu.memory_space<vmem>>, %arg9: memref<1x256xf32, #tpu.memory_space<vmem>>, %arg10: memref<1x256xf32, #tpu.memory_space<vmem>>, %arg11: memref<256x256xbf16, #tpu.memory_space<vmem>>, %arg12: memref<1x256xf32, #tpu.memory_space<vmem>>, %arg13: memref<256x256xbf16, #tpu.memory_space<vmem>>, %arg14: memref<256x256xbf16, #tpu.memory_space<vmem>>, %arg15: memref<1x256xf32, #tpu.memory_space<vmem>>, %arg16: memref<256x256xbf16, #tpu.memory_space<vmem>>, %arg17: memref<1x256xf32, #tpu.memory_space<vmem>>, %arg18: memref<1x256xf32, #tpu.memory_space<vmem>>, %arg19: memref<1x256xf32, #tpu.memory_space<vmem>>, %arg20: memref<1x256xf32, #tpu.memory_space<vmem>>, %arg21: memref<256x1024xbf16, #tpu.memory_space<vmem>>, %arg22: memref<1x1024xf32, #tpu.memory_space<vmem>>, %arg23: memref<1024x256xbf16, #tpu.memory_space<vmem>>, %arg24: memref<1x256xf32, #tpu.memory_space<vmem>>, %arg25: memref<1x256xf32, #tpu.memory_space<vmem>>, %arg26: memref<1x256xf32, #tpu.memory_space<vmem>>, %arg27: memref<1x256xf32, #tpu.memory_space<vmem>>, %arg28: memref<1x8x256xf32, #tpu.memory_space<vmem>>) attributes {dimension_semantics = [#tpu.dimension_semantics<parallel>], iteration_bounds = array<i64: 2>, scalar_prefetch = 0 : i64, scratch_operands = 0 : i64, tpu.core_type = #tpu.core_type<tc>, window_params = [{transform_indices = @transform_0, window_bounds = array<i64: 1, 8, 256>}, {transform_indices = @transform_1, window_bounds = array<i64: 1, 24, 256>}, {pipeline_mode = #tpu.pipeline_mode<synchronous>, transform_indices = @transform_2, window_bounds = array<i64: 1, 8, 256>}, {pipeline_mode = #tpu.pipeline_mode<synchronous>, transform_indices = @transform_3, window_bounds = array<i64: 1, 24, 256>}, {pipeline_mode = #tpu.pipeline_mode<synchronous>, transform_indices = @transform_4, window_bounds = array<i64: 1, 256>}, {pipeline_mode = #tpu.pipeline_mode<synchronous>, transform_indices = @transform_5, window_bounds = array<i64: 1, 256>}, {pipeline_mode = #tpu.pipeline_mode<synchronous>, transform_indices = @transform_6, window_bounds = array<i64: 1, 256>}, {pipeline_mode = #tpu.pipeline_mode<synchronous>, transform_indices = @transform_7, window_bounds = array<i64: 1, 256>}, {pipeline_mode = #tpu.pipeline_mode<synchronous>, transform_indices = @transform_8, window_bounds = array<i64: 1, 256>}, {pipeline_mode = #tpu.pipeline_mode<synchronous>, transform_indices = @transform_9, window_bounds = array<i64: 1, 256>}, {pipeline_mode = #tpu.pipeline_mode<synchronous>, transform_indices = @transform_10, window_bounds = array<i64: 256, 256>}, {pipeline_mode = #tpu.pipeline_mode<synchronous>, transform_indices = @transform_11, window_bounds = array<i64: 1, 256>}, {pipeline_mode = #tpu.pipeline_mode<synchronous>, transform_indices = @transform_12, window_bounds = array<i64: 256, 256>}, {pipeline_mode = #tpu.pipeline_mode<synchronous>, transform_indices = @transform_13, window_bounds = array<i64: 256, 256>}, {pipeline_mode = #tpu.pipeline_mode<synchronous>, transform_indices = @transform_14, window_bounds = array<i64: 1, 256>}, {pipeline_mode = #tpu.pipeline_mode<synchronous>, transform_indices = @transform_15, window_bounds = array<i64: 256, 256>}, {pipeline_mode = #tpu.pipeline_mode<synchronous>, transform_indices = @transform_16, window_bounds = array<i64: 1, 256>}, {pipeline_mode = #tpu.pipeline_mode<synchronous>, transform_indices = @transform_17, window_bounds = array<i64: 1, 256>}, {pipeline_mode = #tpu.pipeline_mode<synchronous>, transform_indices = @transform_18, window_bounds = array<i64: 1, 256>}, {pipeline_mode = #tpu.pipeline_mode<synchronous>, transform_indices = @transform_19, window_bounds = array<i64: 1, 256>}, {pipeline_mode = #tpu.pipeline_mode<synchronous>, transform_indices = @transform_20, window_bounds = array<i64: 256, 1024>}, {pipeline_mode = #tpu.pipeline_mode<synchronous>, transform_indices = @transform_21, window_bounds = array<i64: 1, 1024>}, {pipeline_mode = #tpu.pipeline_mode<synchronous>, transform_indices = @transform_22, window_bounds = array<i64: 1024, 256>}, {pipeline_mode = #tpu.pipeline_mode<synchronous>, transform_indices = @transform_23, window_bounds = array<i64: 1, 256>}, {pipeline_mode = #tpu.pipeline_mode<synchronous>, transform_indices = @transform_24, window_bounds = array<i64: 1, 256>}, {pipeline_mode = #tpu.pipeline_mode<synchronous>, transform_indices = @transform_25, window_bounds = array<i64: 1, 256>}, {pipeline_mode = #tpu.pipeline_mode<synchronous>, transform_indices = @transform_26, window_bounds = array<i64: 1, 256>}, {transform_indices = @transform_27, window_bounds = array<i64: 1, 8, 256>}]} {
    %c0 = arith.constant 0 : index
    %c0_0 = arith.constant 0 : index
    %c0_1 = arith.constant 0 : index
    %0 = vector.load %arg1[%c0, %c0_0, %c0_1] : memref<1x8x256xf32, #tpu.memory_space<vmem>>, vector<1x8x256xf32>
    %1 = vector.shape_cast %0 : vector<1x8x256xf32> to vector<8x256xf32>
    %c0_2 = arith.constant 0 : index
    %c0_3 = arith.constant 0 : index
    %c0_4 = arith.constant 0 : index
    %2 = vector.load %arg2[%c0_2, %c0_3, %c0_4] : memref<1x24x256xf32, #tpu.memory_space<vmem>>, vector<1x24x256xf32>
    %3 = vector.shape_cast %2 : vector<1x24x256xf32> to vector<24x256xf32>
    %c0_5 = arith.constant 0 : index
    %c0_6 = arith.constant 0 : index
    %c0_7 = arith.constant 0 : index
    %4 = vector.load %arg3[%c0_5, %c0_6, %c0_7] : memref<1x8x256xf32, #tpu.memory_space<vmem>>, vector<1x8x256xf32>
    %5 = vector.shape_cast %4 : vector<1x8x256xf32> to vector<8x256xf32>
    %c0_8 = arith.constant 0 : index
    %c0_9 = arith.constant 0 : index
    %c0_10 = arith.constant 0 : index
    %6 = vector.load %arg4[%c0_8, %c0_9, %c0_10] : memref<1x24x256xf32, #tpu.memory_space<vmem>>, vector<1x24x256xf32>
    %7 = vector.shape_cast %6 : vector<1x24x256xf32> to vector<24x256xf32>
    %8 = arith.addf %1, %5 : vector<8x256xf32>
    %c0_11 = arith.constant 0 : index
    %c0_12 = arith.constant 0 : index
    %9 = vector.load %arg5[%c0_11, %c0_12] : memref<1x256xf32, #tpu.memory_space<vmem>>, vector<1x256xf32>
    %c0_13 = arith.constant 0 : index
    %c0_14 = arith.constant 0 : index
    %10 = vector.load %arg6[%c0_13, %c0_14] : memref<1x256xf32, #tpu.memory_space<vmem>>, vector<1x256xf32>
    %cst = arith.constant dense<0.000000e+00> : vector<8xf32>
    %11 = vector.multi_reduction <add>, %8, %cst [1] : vector<8x256xf32> to vector<8xf32>
    %12 = vector.shape_cast %11 : vector<8xf32> to vector<8x1xf32>
    %cst_15 = arith.constant 2.560000e+02 : f32
    %13 = vector.broadcast %cst_15 : f32 to vector<8x1xf32>
    %14 = arith.divf %12, %13 : vector<8x1xf32>
    %15 = vector.broadcast %14 : vector<8x1xf32> to vector<8x256xf32>
    %16 = arith.subf %8, %15 : vector<8x256xf32>
    %17 = arith.mulf %16, %16 : vector<8x256xf32>
    %cst_16 = arith.constant dense<0.000000e+00> : vector<8xf32>
    %18 = vector.multi_reduction <add>, %17, %cst_16 [1] : vector<8x256xf32> to vector<8xf32>
    %19 = vector.shape_cast %18 : vector<8xf32> to vector<8x1xf32>
    %cst_17 = arith.constant 2.560000e+02 : f32
    %20 = vector.broadcast %cst_17 : f32 to vector<8x1xf32>
    %21 = arith.divf %19, %20 : vector<8x1xf32>
    %22 = vector.broadcast %14 : vector<8x1xf32> to vector<8x256xf32>
    %23 = arith.subf %8, %22 : vector<8x256xf32>
    %cst_18 = arith.constant 9.99999997E-7 : f32
    %24 = vector.broadcast %cst_18 : f32 to vector<8x1xf32>
    %25 = arith.addf %21, %24 : vector<8x1xf32>
    %26 = math.rsqrt %25 : vector<8x1xf32>
    %27 = vector.broadcast %26 : vector<8x1xf32> to vector<8x256xf32>
    %28 = arith.mulf %23, %27 : vector<8x256xf32>
    %29 = vector.broadcast %9 : vector<1x256xf32> to vector<8x256xf32>
    %30 = arith.mulf %28, %29 : vector<8x256xf32>
    %31 = vector.broadcast %10 : vector<1x256xf32> to vector<8x256xf32>
    %32 = arith.addf %30, %31 : vector<8x256xf32>
    %33 = arith.truncf %32 : vector<8x256xf32> to vector<8x256xbf16>
    %34 = arith.addf %3, %7 : vector<24x256xf32>
    %c0_19 = arith.constant 0 : index
    %c0_20 = arith.constant 0 : index
    %35 = vector.load %arg7[%c0_19, %c0_20] : memref<1x256xf32, #tpu.memory_space<vmem>>, vector<1x256xf32>
    %c0_21 = arith.constant 0 : index
    %c0_22 = arith.constant 0 : index
    %36 = vector.load %arg8[%c0_21, %c0_22] : memref<1x256xf32, #tpu.memory_space<vmem>>, vector<1x256xf32>
    %cst_23 = arith.constant dense<0.000000e+00> : vector<24xf32>
    %37 = vector.multi_reduction <add>, %34, %cst_23 [1] : vector<24x256xf32> to vector<24xf32>
    %38 = vector.shape_cast %37 : vector<24xf32> to vector<24x1xf32>
    %cst_24 = arith.constant 2.560000e+02 : f32
    %39 = vector.broadcast %cst_24 : f32 to vector<24x1xf32>
    %40 = arith.divf %38, %39 : vector<24x1xf32>
    %41 = vector.broadcast %40 : vector<24x1xf32> to vector<24x256xf32>
    %42 = arith.subf %34, %41 : vector<24x256xf32>
    %43 = arith.mulf %42, %42 : vector<24x256xf32>
    %cst_25 = arith.constant dense<0.000000e+00> : vector<24xf32>
    %44 = vector.multi_reduction <add>, %43, %cst_25 [1] : vector<24x256xf32> to vector<24xf32>
    %45 = vector.shape_cast %44 : vector<24xf32> to vector<24x1xf32>
    %cst_26 = arith.constant 2.560000e+02 : f32
    %46 = vector.broadcast %cst_26 : f32 to vector<24x1xf32>
    %47 = arith.divf %45, %46 : vector<24x1xf32>
    %48 = vector.broadcast %40 : vector<24x1xf32> to vector<24x256xf32>
    %49 = arith.subf %34, %48 : vector<24x256xf32>
    %cst_27 = arith.constant 9.99999997E-7 : f32
    %50 = vector.broadcast %cst_27 : f32 to vector<24x1xf32>
    %51 = arith.addf %47, %50 : vector<24x1xf32>
    %52 = math.rsqrt %51 : vector<24x1xf32>
    %53 = vector.broadcast %52 : vector<24x1xf32> to vector<24x256xf32>
    %54 = arith.mulf %49, %53 : vector<24x256xf32>
    %55 = vector.broadcast %35 : vector<1x256xf32> to vector<24x256xf32>
    %56 = arith.mulf %54, %55 : vector<24x256xf32>
    %57 = vector.broadcast %36 : vector<1x256xf32> to vector<24x256xf32>
    %58 = arith.addf %56, %57 : vector<24x256xf32>
    %59 = arith.truncf %58 : vector<24x256xf32> to vector<24x256xbf16>
    %c0_28 = arith.constant 0 : index
    %c0_29 = arith.constant 0 : index
    %60 = vector.load %arg9[%c0_28, %c0_29] : memref<1x256xf32, #tpu.memory_space<vmem>>, vector<1x256xf32>
    %c0_30 = arith.constant 0 : index
    %c0_31 = arith.constant 0 : index
    %61 = vector.load %arg10[%c0_30, %c0_31] : memref<1x256xf32, #tpu.memory_space<vmem>>, vector<1x256xf32>
    %cst_32 = arith.constant dense<0.000000e+00> : vector<24xf32>
    %62 = vector.multi_reduction <add>, %3, %cst_32 [1] : vector<24x256xf32> to vector<24xf32>
    %63 = vector.shape_cast %62 : vector<24xf32> to vector<24x1xf32>
    %cst_33 = arith.constant 2.560000e+02 : f32
    %64 = vector.broadcast %cst_33 : f32 to vector<24x1xf32>
    %65 = arith.divf %63, %64 : vector<24x1xf32>
    %66 = vector.broadcast %65 : vector<24x1xf32> to vector<24x256xf32>
    %67 = arith.subf %3, %66 : vector<24x256xf32>
    %68 = arith.mulf %67, %67 : vector<24x256xf32>
    %cst_34 = arith.constant dense<0.000000e+00> : vector<24xf32>
    %69 = vector.multi_reduction <add>, %68, %cst_34 [1] : vector<24x256xf32> to vector<24xf32>
    %70 = vector.shape_cast %69 : vector<24xf32> to vector<24x1xf32>
    %cst_35 = arith.constant 2.560000e+02 : f32
    %71 = vector.broadcast %cst_35 : f32 to vector<24x1xf32>
    %72 = arith.divf %70, %71 : vector<24x1xf32>
    %73 = vector.broadcast %65 : vector<24x1xf32> to vector<24x256xf32>
    %74 = arith.subf %3, %73 : vector<24x256xf32>
    %cst_36 = arith.constant 9.99999997E-7 : f32
    %75 = vector.broadcast %cst_36 : f32 to vector<24x1xf32>
    %76 = arith.addf %72, %75 : vector<24x1xf32>
    %77 = math.rsqrt %76 : vector<24x1xf32>
    %78 = vector.broadcast %77 : vector<24x1xf32> to vector<24x256xf32>
    %79 = arith.mulf %74, %78 : vector<24x256xf32>
    %80 = vector.broadcast %60 : vector<1x256xf32> to vector<24x256xf32>
    %81 = arith.mulf %79, %80 : vector<24x256xf32>
    %82 = vector.broadcast %61 : vector<1x256xf32> to vector<24x256xf32>
    %83 = arith.addf %81, %82 : vector<24x256xf32>
    %84 = arith.truncf %83 : vector<24x256xf32> to vector<24x256xbf16>
    %c0_37 = arith.constant 0 : index
    %c0_38 = arith.constant 0 : index
    %85 = vector.load %arg11[%c0_37, %c0_38] : memref<256x256xbf16, #tpu.memory_space<vmem>>, vector<256x256xbf16>
    %cst_39 = arith.constant dense<0.000000e+00> : vector<8x256xf32>
    %86 = tpu.matmul %33, %85, %cst_39 {dimension_numbers = #tpu.dot_dimension_numbers<[1], [0], [0], [1], [0, 0, 1, 1], [], []>} : vector<8x256xbf16>, vector<256x256xbf16>, vector<8x256xf32> -> vector<8x256xf32>
    %c0_40 = arith.constant 0 : index
    %c0_41 = arith.constant 0 : index
    %87 = vector.load %arg12[%c0_40, %c0_41] : memref<1x256xf32, #tpu.memory_space<vmem>>, vector<1x256xf32>
    %88 = vector.broadcast %87 : vector<1x256xf32> to vector<8x256xf32>
    %89 = arith.addf %86, %88 : vector<8x256xf32>
    %90 = arith.truncf %89 : vector<8x256xf32> to vector<8x256xbf16>
    %c0_42 = arith.constant 0 : index
    %c0_43 = arith.constant 0 : index
    %91 = vector.load %arg13[%c0_42, %c0_43] : memref<256x256xbf16, #tpu.memory_space<vmem>>, vector<256x256xbf16>
    %cst_44 = arith.constant dense<0.000000e+00> : vector<24x256xf32>
    %92 = tpu.matmul %59, %91, %cst_44 {dimension_numbers = #tpu.dot_dimension_numbers<[1], [0], [0], [1], [0, 0, 1, 1], [], []>} : vector<24x256xbf16>, vector<256x256xbf16>, vector<24x256xf32> -> vector<24x256xf32>
    %93 = arith.truncf %92 : vector<24x256xf32> to vector<24x256xbf16>
    %c0_45 = arith.constant 0 : index
    %c0_46 = arith.constant 0 : index
    %94 = vector.load %arg14[%c0_45, %c0_46] : memref<256x256xbf16, #tpu.memory_space<vmem>>, vector<256x256xbf16>
    %cst_47 = arith.constant dense<0.000000e+00> : vector<24x256xf32>
    %95 = tpu.matmul %84, %94, %cst_47 {dimension_numbers = #tpu.dot_dimension_numbers<[1], [0], [0], [1], [0, 0, 1, 1], [], []>} : vector<24x256xbf16>, vector<256x256xbf16>, vector<24x256xf32> -> vector<24x256xf32>
    %c0_48 = arith.constant 0 : index
    %c0_49 = arith.constant 0 : index
    %96 = vector.load %arg15[%c0_48, %c0_49] : memref<1x256xf32, #tpu.memory_space<vmem>>, vector<1x256xf32>
    %97 = vector.broadcast %96 : vector<1x256xf32> to vector<24x256xf32>
    %98 = arith.addf %95, %97 : vector<24x256xf32>
    %99 = arith.truncf %98 : vector<24x256xf32> to vector<24x256xbf16>
    %cst_50 = arith.constant 0.000000e+00 : f32
    %100 = vector.broadcast %cst_50 : f32 to vector<8x256xf32>
    %101 = vector.extract_strided_slice %90 {offsets = [0, 0], sizes = [8, 128], strides = [1, 1]} : vector<8x256xbf16> to vector<8x128xbf16>
    %102 = vector.extract_strided_slice %93 {offsets = [0, 0], sizes = [24, 128], strides = [1, 1]} : vector<24x256xbf16> to vector<24x128xbf16>
    %103 = vector.extract_strided_slice %99 {offsets = [0, 0], sizes = [24, 128], strides = [1, 1]} : vector<24x256xbf16> to vector<24x128xbf16>
    %cst_51 = arith.constant dense<0.000000e+00> : vector<8x24xf32>
    %104 = tpu.matmul %101, %102, %cst_51 {dimension_numbers = #tpu.dot_dimension_numbers<[1], [1], [0], [0], [0, 0, 1, 0], [], []>} : vector<8x128xbf16>, vector<24x128xbf16>, vector<8x24xf32> -> vector<8x24xf32>
    %cst_52 = arith.constant dense<0xFF800000> : vector<8xf32>
    %105 = vector.multi_reduction <maximumf>, %104, %cst_52 [1] : vector<8x24xf32> to vector<8xf32>
    %106 = vector.shape_cast %105 : vector<8xf32> to vector<8x1xf32>
    %107 = vector.broadcast %106 : vector<8x1xf32> to vector<8x24xf32>
    %108 = arith.subf %104, %107 : vector<8x24xf32>
    %109 = math.exp %108 : vector<8x24xf32>
    %cst_53 = arith.constant dense<0.000000e+00> : vector<8xf32>
    %110 = vector.multi_reduction <add>, %109, %cst_53 [1] : vector<8x24xf32> to vector<8xf32>
    %111 = vector.shape_cast %110 : vector<8xf32> to vector<8x1xf32>
    %112 = vector.broadcast %111 : vector<8x1xf32> to vector<8x24xf32>
    %113 = arith.divf %109, %112 : vector<8x24xf32>
    %114 = arith.truncf %113 : vector<8x24xf32> to vector<8x24xbf16>
    %cst_54 = arith.constant dense<0.000000e+00> : vector<8x128xf32>
    %115 = tpu.matmul %114, %103, %cst_54 {dimension_numbers = #tpu.dot_dimension_numbers<[1], [0], [0], [1], [0, 0, 1, 1], [], []>} : vector<8x24xbf16>, vector<24x128xbf16>, vector<8x128xf32> -> vector<8x128xf32>
    %116 = arith.truncf %115 : vector<8x128xf32> to vector<8x128xbf16>
    %c0_55 = arith.constant 0 : index
    %c0_56 = arith.constant 0 : index
    %117 = vector.load %arg16[%c0_55, %c0_56] : memref<256x256xbf16, #tpu.memory_space<vmem>>, vector<128x256xbf16>
    %cst_57 = arith.constant dense<0.000000e+00> : vector<8x256xf32>
    %118 = tpu.matmul %116, %117, %cst_57 {dimension_numbers = #tpu.dot_dimension_numbers<[1], [0], [0], [1], [0, 0, 1, 1], [], []>} : vector<8x128xbf16>, vector<128x256xbf16>, vector<8x256xf32> -> vector<8x256xf32>
    %119 = arith.addf %100, %118 : vector<8x256xf32>
    %120 = vector.extract_strided_slice %90 {offsets = [0, 128], sizes = [8, 128], strides = [1, 1]} : vector<8x256xbf16> to vector<8x128xbf16>
    %121 = vector.extract_strided_slice %93 {offsets = [0, 128], sizes = [24, 128], strides = [1, 1]} : vector<24x256xbf16> to vector<24x128xbf16>
    %122 = vector.extract_strided_slice %99 {offsets = [0, 128], sizes = [24, 128], strides = [1, 1]} : vector<24x256xbf16> to vector<24x128xbf16>
    %cst_58 = arith.constant dense<0.000000e+00> : vector<8x24xf32>
    %123 = tpu.matmul %120, %121, %cst_58 {dimension_numbers = #tpu.dot_dimension_numbers<[1], [1], [0], [0], [0, 0, 1, 0], [], []>} : vector<8x128xbf16>, vector<24x128xbf16>, vector<8x24xf32> -> vector<8x24xf32>
    %cst_59 = arith.constant dense<0xFF800000> : vector<8xf32>
    %124 = vector.multi_reduction <maximumf>, %123, %cst_59 [1] : vector<8x24xf32> to vector<8xf32>
    %125 = vector.shape_cast %124 : vector<8xf32> to vector<8x1xf32>
    %126 = vector.broadcast %125 : vector<8x1xf32> to vector<8x24xf32>
    %127 = arith.subf %123, %126 : vector<8x24xf32>
    %128 = math.exp %127 : vector<8x24xf32>
    %cst_60 = arith.constant dense<0.000000e+00> : vector<8xf32>
    %129 = vector.multi_reduction <add>, %128, %cst_60 [1] : vector<8x24xf32> to vector<8xf32>
    %130 = vector.shape_cast %129 : vector<8xf32> to vector<8x1xf32>
    %131 = vector.broadcast %130 : vector<8x1xf32> to vector<8x24xf32>
    %132 = arith.divf %128, %131 : vector<8x24xf32>
    %133 = arith.truncf %132 : vector<8x24xf32> to vector<8x24xbf16>
    %cst_61 = arith.constant dense<0.000000e+00> : vector<8x128xf32>
    %134 = tpu.matmul %133, %122, %cst_61 {dimension_numbers = #tpu.dot_dimension_numbers<[1], [0], [0], [1], [0, 0, 1, 1], [], []>} : vector<8x24xbf16>, vector<24x128xbf16>, vector<8x128xf32> -> vector<8x128xf32>
    %135 = arith.truncf %134 : vector<8x128xf32> to vector<8x128xbf16>
    %c128 = arith.constant 128 : index
    %c0_62 = arith.constant 0 : index
    %136 = vector.load %arg16[%c128, %c0_62] : memref<256x256xbf16, #tpu.memory_space<vmem>>, vector<128x256xbf16>
    %cst_63 = arith.constant dense<0.000000e+00> : vector<8x256xf32>
    %137 = tpu.matmul %135, %136, %cst_63 {dimension_numbers = #tpu.dot_dimension_numbers<[1], [0], [0], [1], [0, 0, 1, 1], [], []>} : vector<8x128xbf16>, vector<128x256xbf16>, vector<8x256xf32> -> vector<8x256xf32>
    %138 = arith.addf %119, %137 : vector<8x256xf32>
    %c0_64 = arith.constant 0 : index
    %c0_65 = arith.constant 0 : index
    %139 = vector.load %arg18[%c0_64, %c0_65] : memref<1x256xf32, #tpu.memory_space<vmem>>, vector<1x256xf32>
    %c0_66 = arith.constant 0 : index
    %c0_67 = arith.constant 0 : index
    %140 = vector.load %arg17[%c0_66, %c0_67] : memref<1x256xf32, #tpu.memory_space<vmem>>, vector<1x256xf32>
    %141 = vector.broadcast %140 : vector<1x256xf32> to vector<8x256xf32>
    %142 = arith.addf %138, %141 : vector<8x256xf32>
    %143 = vector.broadcast %139 : vector<1x256xf32> to vector<8x256xf32>
    %144 = arith.mulf %143, %142 : vector<8x256xf32>
    %145 = arith.addf %1, %144 : vector<8x256xf32>
    %c0_68 = arith.constant 0 : index
    %c0_69 = arith.constant 0 : index
    %146 = vector.load %arg19[%c0_68, %c0_69] : memref<1x256xf32, #tpu.memory_space<vmem>>, vector<1x256xf32>
    %c0_70 = arith.constant 0 : index
    %c0_71 = arith.constant 0 : index
    %147 = vector.load %arg20[%c0_70, %c0_71] : memref<1x256xf32, #tpu.memory_space<vmem>>, vector<1x256xf32>
    %cst_72 = arith.constant dense<0.000000e+00> : vector<8xf32>
    %148 = vector.multi_reduction <add>, %145, %cst_72 [1] : vector<8x256xf32> to vector<8xf32>
    %149 = vector.shape_cast %148 : vector<8xf32> to vector<8x1xf32>
    %cst_73 = arith.constant 2.560000e+02 : f32
    %150 = vector.broadcast %cst_73 : f32 to vector<8x1xf32>
    %151 = arith.divf %149, %150 : vector<8x1xf32>
    %152 = vector.broadcast %151 : vector<8x1xf32> to vector<8x256xf32>
    %153 = arith.subf %145, %152 : vector<8x256xf32>
    %154 = arith.mulf %153, %153 : vector<8x256xf32>
    %cst_74 = arith.constant dense<0.000000e+00> : vector<8xf32>
    %155 = vector.multi_reduction <add>, %154, %cst_74 [1] : vector<8x256xf32> to vector<8xf32>
    %156 = vector.shape_cast %155 : vector<8xf32> to vector<8x1xf32>
    %cst_75 = arith.constant 2.560000e+02 : f32
    %157 = vector.broadcast %cst_75 : f32 to vector<8x1xf32>
    %158 = arith.divf %156, %157 : vector<8x1xf32>
    %159 = vector.broadcast %151 : vector<8x1xf32> to vector<8x256xf32>
    %160 = arith.subf %145, %159 : vector<8x256xf32>
    %cst_76 = arith.constant 9.99999997E-7 : f32
    %161 = vector.broadcast %cst_76 : f32 to vector<8x1xf32>
    %162 = arith.addf %158, %161 : vector<8x1xf32>
    %163 = math.rsqrt %162 : vector<8x1xf32>
    %164 = vector.broadcast %163 : vector<8x1xf32> to vector<8x256xf32>
    %165 = arith.mulf %160, %164 : vector<8x256xf32>
    %166 = vector.broadcast %146 : vector<1x256xf32> to vector<8x256xf32>
    %167 = arith.mulf %165, %166 : vector<8x256xf32>
    %168 = vector.broadcast %147 : vector<1x256xf32> to vector<8x256xf32>
    %169 = arith.addf %167, %168 : vector<8x256xf32>
    %170 = arith.truncf %169 : vector<8x256xf32> to vector<8x256xbf16>
    %c0_77 = arith.constant 0 : index
    %c0_78 = arith.constant 0 : index
    %171 = vector.load %arg21[%c0_77, %c0_78] : memref<256x1024xbf16, #tpu.memory_space<vmem>>, vector<256x1024xbf16>
    %cst_79 = arith.constant dense<0.000000e+00> : vector<8x1024xf32>
    %172 = tpu.matmul %170, %171, %cst_79 {dimension_numbers = #tpu.dot_dimension_numbers<[1], [0], [0], [1], [0, 0, 1, 1], [], []>} : vector<8x256xbf16>, vector<256x1024xbf16>, vector<8x1024xf32> -> vector<8x1024xf32>
    %c0_80 = arith.constant 0 : index
    %c0_81 = arith.constant 0 : index
    %173 = vector.load %arg22[%c0_80, %c0_81] : memref<1x1024xf32, #tpu.memory_space<vmem>>, vector<1x1024xf32>
    %174 = vector.broadcast %173 : vector<1x1024xf32> to vector<8x1024xf32>
    %175 = arith.addf %172, %174 : vector<8x1024xf32>
    %cst_82 = arith.constant 5.000000e-01 : f32
    %176 = vector.broadcast %cst_82 : f32 to vector<8x1024xf32>
    %177 = arith.mulf %176, %175 : vector<8x1024xf32>
    %cst_83 = arith.constant 4.471500e-02 : f32
    %178 = vector.broadcast %cst_83 : f32 to vector<8x1024xf32>
    %179 = arith.mulf %178, %175 : vector<8x1024xf32>
    %180 = arith.mulf %179, %175 : vector<8x1024xf32>
    %181 = arith.mulf %180, %175 : vector<8x1024xf32>
    %182 = arith.addf %175, %181 : vector<8x1024xf32>
    %cst_84 = arith.constant 0.797884583 : f32
    %183 = vector.broadcast %cst_84 : f32 to vector<8x1024xf32>
    %184 = arith.mulf %183, %182 : vector<8x1024xf32>
    %185 = math.tanh %184 : vector<8x1024xf32>
    %cst_85 = arith.constant 1.000000e+00 : f32
    %186 = vector.broadcast %cst_85 : f32 to vector<8x1024xf32>
    %187 = arith.addf %186, %185 : vector<8x1024xf32>
    %188 = arith.mulf %177, %187 : vector<8x1024xf32>
    %189 = arith.truncf %188 : vector<8x1024xf32> to vector<8x1024xbf16>
    %c0_86 = arith.constant 0 : index
    %c0_87 = arith.constant 0 : index
    %190 = vector.load %arg23[%c0_86, %c0_87] : memref<1024x256xbf16, #tpu.memory_space<vmem>>, vector<1024x256xbf16>
    %cst_88 = arith.constant dense<0.000000e+00> : vector<8x256xf32>
    %191 = tpu.matmul %189, %190, %cst_88 {dimension_numbers = #tpu.dot_dimension_numbers<[1], [0], [0], [1], [0, 0, 1, 1], [], []>} : vector<8x1024xbf16>, vector<1024x256xbf16>, vector<8x256xf32> -> vector<8x256xf32>
    %c0_89 = arith.constant 0 : index
    %c0_90 = arith.constant 0 : index
    %192 = vector.load %arg24[%c0_89, %c0_90] : memref<1x256xf32, #tpu.memory_space<vmem>>, vector<1x256xf32>
    %193 = vector.broadcast %192 : vector<1x256xf32> to vector<8x256xf32>
    %194 = arith.addf %191, %193 : vector<8x256xf32>
    %c0_91 = arith.constant 0 : index
    %c0_92 = arith.constant 0 : index
    %195 = vector.load %arg25[%c0_91, %c0_92] : memref<1x256xf32, #tpu.memory_space<vmem>>, vector<1x256xf32>
    %196 = vector.broadcast %195 : vector<1x256xf32> to vector<8x256xf32>
    %197 = arith.mulf %196, %194 : vector<8x256xf32>
    %198 = arith.addf %169, %197 : vector<8x256xf32>
    %c0_93 = arith.constant 0 : index
    %c0_94 = arith.constant 0 : index
    %c0_95 = arith.constant 0 : index
    %199 = vector.load %arg28[%c0_93, %c0_94, %c0_95] : memref<1x8x256xf32, #tpu.memory_space<vmem>>, vector<1x8x256xf32>
    %200 = vector.shape_cast %199 : vector<1x8x256xf32> to vector<8x256xf32>
    %201 = vector.shape_cast %198 : vector<8x256xf32> to vector<1x8x256xf32>
    tpu.vector_store %arg28[%c0_93, %c0_94, %c0_95], %201 {strides = array<i32>} : memref<1x8x256xf32, #tpu.memory_space<vmem>>, vector<1x8x256xf32>,
    return
  }
  func.func @transform_0(%arg0: i32) -> (i32, i32, i32) {
    %c0_i32 = arith.constant 0 : i32
    %c0_i32_0 = arith.constant 0 : i32
    %c0_i32_1 = arith.constant 0 : i32
    return %arg0, %c0_i32, %c0_i32_0 : i32, i32, i32
  }
  func.func @transform_1(%arg0: i32) -> (i32, i32, i32) {
    %c0_i32 = arith.constant 0 : i32
    %c0_i32_0 = arith.constant 0 : i32
    %c0_i32_1 = arith.constant 0 : i32
    return %arg0, %c0_i32, %c0_i32_0 : i32, i32, i32
  }
  func.func @transform_2(%arg0: i32) -> (i32, i32, i32) {
    %c0_i32 = arith.constant 0 : i32
    %c0_i32_0 = arith.constant 0 : i32
    %c0_i32_1 = arith.constant 0 : i32
    %c0_i32_2 = arith.constant 0 : i32
    return %c0_i32, %c0_i32_0, %c0_i32_1 : i32, i32, i32
  }
  func.func @transform_3(%arg0: i32) -> (i32, i32, i32) {
    %c0_i32 = arith.constant 0 : i32
    %c0_i32_0 = arith.constant 0 : i32
    %c0_i32_1 = arith.constant 0 : i32
    %c0_i32_2 = arith.constant 0 : i32
    return %c0_i32, %c0_i32_0, %c0_i32_1 : i32, i32, i32
  }
  func.func @transform_4(%arg0: i32) -> (i32, i32) {
    %c0_i32 = arith.constant 0 : i32
    %c0_i32_0 = arith.constant 0 : i32
    %c0_i32_1 = arith.constant 0 : i32
    return %c0_i32, %c0_i32_0 : i32, i32
  }
  func.func @transform_5(%arg0: i32) -> (i32, i32) {
    %c0_i32 = arith.constant 0 : i32
    %c0_i32_0 = arith.constant 0 : i32
    %c0_i32_1 = arith.constant 0 : i32
    return %c0_i32, %c0_i32_0 : i32, i32
  }
  func.func @transform_6(%arg0: i32) -> (i32, i32) {
    %c0_i32 = arith.constant 0 : i32
    %c0_i32_0 = arith.constant 0 : i32
    %c0_i32_1 = arith.constant 0 : i32
    return %c0_i32, %c0_i32_0 : i32, i32
  }
  func.func @transform_7(%arg0: i32) -> (i32, i32) {
    %c0_i32 = arith.constant 0 : i32
    %c0_i32_0 = arith.constant 0 : i32
    %c0_i32_1 = arith.constant 0 : i32
    return %c0_i32, %c0_i32_0 : i32, i32
  }
  func.func @transform_8(%arg0: i32) -> (i32, i32) {
    %c0_i32 = arith.constant 0 : i32
    %c0_i32_0 = arith.constant 0 : i32
    %c0_i32_1 = arith.constant 0 : i32
    return %c0_i32, %c0_i32_0 : i32, i32
  }
  func.func @transform_9(%arg0: i32) -> (i32, i32) {
    %c0_i32 = arith.constant 0 : i32
    %c0_i32_0 = arith.constant 0 : i32
    %c0_i32_1 = arith.constant 0 : i32
    return %c0_i32, %c0_i32_0 : i32, i32
  }
  func.func @transform_10(%arg0: i32) -> (i32, i32) {
    %c0_i32 = arith.constant 0 : i32
    %c0_i32_0 = arith.constant 0 : i32
    %c0_i32_1 = arith.constant 0 : i32
    return %c0_i32, %c0_i32_0 : i32, i32
  }
  func.func @transform_11(%arg0: i32) -> (i32, i32) {
    %c0_i32 = arith.constant 0 : i32
    %c0_i32_0 = arith.constant 0 : i32
    %c0_i32_1 = arith.constant 0 : i32
    return %c0_i32, %c0_i32_0 : i32, i32
  }
  func.func @transform_12(%arg0: i32) -> (i32, i32) {
    %c0_i32 = arith.constant 0 : i32
    %c0_i32_0 = arith.constant 0 : i32
    %c0_i32_1 = arith.constant 0 : i32
    return %c0_i32, %c0_i32_0 : i32, i32
  }
  func.func @transform_13(%arg0: i32) -> (i32, i32) {
    %c0_i32 = arith.constant 0 : i32
    %c0_i32_0 = arith.constant 0 : i32
    %c0_i32_1 = arith.constant 0 : i32
    return %c0_i32, %c0_i32_0 : i32, i32
  }
  func.func @transform_14(%arg0: i32) -> (i32, i32) {
    %c0_i32 = arith.constant 0 : i32
    %c0_i32_0 = arith.constant 0 : i32
    %c0_i32_1 = arith.constant 0 : i32
    return %c0_i32, %c0_i32_0 : i32, i32
  }
  func.func @transform_15(%arg0: i32) -> (i32, i32) {
    %c0_i32 = arith.constant 0 : i32
    %c0_i32_0 = arith.constant 0 : i32
    %c0_i32_1 = arith.constant 0 : i32
    return %c0_i32, %c0_i32_0 : i32, i32
  }
  func.func @transform_16(%arg0: i32) -> (i32, i32) {
    %c0_i32 = arith.constant 0 : i32
    %c0_i32_0 = arith.constant 0 : i32
    %c0_i32_1 = arith.constant 0 : i32
    return %c0_i32, %c0_i32_0 : i32, i32
  }
  func.func @transform_17(%arg0: i32) -> (i32, i32) {
    %c0_i32 = arith.constant 0 : i32
    %c0_i32_0 = arith.constant 0 : i32
    %c0_i32_1 = arith.constant 0 : i32
    return %c0_i32, %c0_i32_0 : i32, i32
  }
  func.func @transform_18(%arg0: i32) -> (i32, i32) {
    %c0_i32 = arith.constant 0 : i32
    %c0_i32_0 = arith.constant 0 : i32
    %c0_i32_1 = arith.constant 0 : i32
    return %c0_i32, %c0_i32_0 : i32, i32
  }
  func.func @transform_19(%arg0: i32) -> (i32, i32) {
    %c0_i32 = arith.constant 0 : i32
    %c0_i32_0 = arith.constant 0 : i32
    %c0_i32_1 = arith.constant 0 : i32
    return %c0_i32, %c0_i32_0 : i32, i32
  }
  func.func @transform_20(%arg0: i32) -> (i32, i32) {
    %c0_i32 = arith.constant 0 : i32
    %c0_i32_0 = arith.constant 0 : i32
    %c0_i32_1 = arith.constant 0 : i32
    return %c0_i32, %c0_i32_0 : i32, i32
  }
  func.func @transform_21(%arg0: i32) -> (i32, i32) {
    %c0_i32 = arith.constant 0 : i32
    %c0_i32_0 = arith.constant 0 : i32
    %c0_i32_1 = arith.constant 0 : i32
    return %c0_i32, %c0_i32_0 : i32, i32
  }
  func.func @transform_22(%arg0: i32) -> (i32, i32) {
    %c0_i32 = arith.constant 0 : i32
    %c0_i32_0 = arith.constant 0 : i32
    %c0_i32_1 = arith.constant 0 : i32
    return %c0_i32, %c0_i32_0 : i32, i32
  }
  func.func @transform_23(%arg0: i32) -> (i32, i32) {
    %c0_i32 = arith.constant 0 : i32
    %c0_i32_0 = arith.constant 0 : i32
    %c0_i32_1 = arith.constant 0 : i32
    return %c0_i32, %c0_i32_0 : i32, i32
  }
  func.func @transform_24(%arg0: i32) -> (i32, i32) {
    %c0_i32 = arith.constant 0 : i32
    %c0_i32_0 = arith.constant 0 : i32
    %c0_i32_1 = arith.constant 0 : i32
    return %c0_i32, %c0_i32_0 : i32, i32
  }
  func.func @transform_25(%arg0: i32) -> (i32, i32) {
    %c0_i32 = arith.constant 0 : i32
    %c0_i32_0 = arith.constant 0 : i32
    %c0_i32_1 = arith.constant 0 : i32
    return %c0_i32, %c0_i32_0 : i32, i32
  }
  func.func @transform_26(%arg0: i32) -> (i32, i32) {
    %c0_i32 = arith.constant 0 : i32
    %c0_i32_0 = arith.constant 0 : i32
    %c0_i32_1 = arith.constant 0 : i32
    return %c0_i32, %c0_i32_0 : i32, i32
  }
  func.func @transform_27(%arg0: i32) -> (i32, i32, i32) {
    %c0_i32 = arith.constant 0 : i32
    %c0_i32_0 = arith.constant 0 : i32
    %c0_i32_1 = arith.constant 0 : i32
    return %arg0, %c0_i32, %c0_i32_0 : i32, i32, i32
  }
}

module attributes {stable_mosaic.version = 11 : i64} {
  func.func @_block_kernel(%arg0: i32, %arg1: memref<1x8x256xf32, #tpu.memory_space<vmem>>, %arg2: memref<1x24x256xf32, #tpu.memory_space<vmem>>, %arg3: memref<1x8x256xf32, #tpu.memory_space<vmem>>, %arg4: memref<1x24x256xf32, #tpu.memory_space<vmem>>, %arg5: memref<1x256xf32, #tpu.memory_space<vmem>>, %arg6: memref<1x256xf32, #tpu.memory_space<vmem>>, %arg7: memref<1x256xf32, #tpu.memory_space<vmem>>, %arg8: memref<1x256xf32, #tpu.memory_space<vmem>>, %arg9: memref<1x256xf32, #tpu.memory_space<vmem>>, %arg10: memref<1x256xf32, #tpu.memory_space<vmem>>, %arg11: memref<256x256xbf16, #tpu.memory_space<vmem>>, %arg12: memref<1x256xf32, #tpu.memory_space<vmem>>, %arg13: memref<256x256xbf16, #tpu.memory_space<vmem>>, %arg14: memref<256x256xbf16, #tpu.memory_space<vmem>>, %arg15: memref<1x256xf32, #tpu.memory_space<vmem>>, %arg16: memref<256x256xbf16, #tpu.memory_space<vmem>>, %arg17: memref<1x256xf32, #tpu.memory_space<vmem>>, %arg18: memref<1x256xf32, #tpu.memory_space<vmem>>, %arg19: memref<1x256xf32, #tpu.memory_space<vmem>>, %arg20: memref<1x256xf32, #tpu.memory_space<vmem>>, %arg21: memref<256x1024xbf16, #tpu.memory_space<vmem>>, %arg22: memref<1x1024xf32, #tpu.memory_space<vmem>>, %arg23: memref<1024x256xbf16, #tpu.memory_space<vmem>>, %arg24: memref<1x256xf32, #tpu.memory_space<vmem>>, %arg25: memref<1x256xf32, #tpu.memory_space<vmem>>, %arg26: memref<1x256xf32, #tpu.memory_space<vmem>>, %arg27: memref<1x256xf32, #tpu.memory_space<vmem>>, %arg28: memref<1x8x256xf32, #tpu.memory_space<vmem>>) attributes {dimension_semantics = [#tpu.dimension_semantics<parallel>], iteration_bounds = array<i64: 2>, scalar_prefetch = 0 : i64, scratch_operands = 0 : i64, tpu.core_type = #tpu.core_type<tc>, window_params = [{transform_indices = @transform_0, window_bounds = array<i64: 1, 8, 256>}, {transform_indices = @transform_1, window_bounds = array<i64: 1, 24, 256>}, {pipeline_mode = #tpu.pipeline_mode<synchronous>, transform_indices = @transform_2, window_bounds = array<i64: 1, 8, 256>}, {pipeline_mode = #tpu.pipeline_mode<synchronous>, transform_indices = @transform_3, window_bounds = array<i64: 1, 24, 256>}, {pipeline_mode = #tpu.pipeline_mode<synchronous>, transform_indices = @transform_4, window_bounds = array<i64: 1, 256>}, {pipeline_mode = #tpu.pipeline_mode<synchronous>, transform_indices = @transform_5, window_bounds = array<i64: 1, 256>}, {pipeline_mode = #tpu.pipeline_mode<synchronous>, transform_indices = @transform_6, window_bounds = array<i64: 1, 256>}, {pipeline_mode = #tpu.pipeline_mode<synchronous>, transform_indices = @transform_7, window_bounds = array<i64: 1, 256>}, {pipeline_mode = #tpu.pipeline_mode<synchronous>, transform_indices = @transform_8, window_bounds = array<i64: 1, 256>}, {pipeline_mode = #tpu.pipeline_mode<synchronous>, transform_indices = @transform_9, window_bounds = array<i64: 1, 256>}, {pipeline_mode = #tpu.pipeline_mode<synchronous>, transform_indices = @transform_10, window_bounds = array<i64: 256, 256>}, {pipeline_mode = #tpu.pipeline_mode<synchronous>, transform_indices = @transform_11, window_bounds = array<i64: 1, 256>}, {pipeline_mode = #tpu.pipeline_mode<synchronous>, transform_indices = @transform_12, window_bounds = array<i64: 256, 256>}, {pipeline_mode = #tpu.pipeline_mode<synchronous>, transform_indices = @transform_13, window_bounds = array<i64: 256, 256>}, {pipeline_mode = #tpu.pipeline_mode<synchronous>, transform_indices = @transform_14, window_bounds = array<i64: 1, 256>}, {pipeline_mode = #tpu.pipeline_mode<synchronous>, transform_indices = @transform_15, window_bounds = array<i64: 256, 256>}, {pipeline_mode = #tpu.pipeline_mode<synchronous>, transform_indices = @transform_16, window_bounds = array<i64: 1, 256>}, {pipeline_mode = #tpu.pipeline_mode<synchronous>, transform_indices = @transform_17, window_bounds = array<i64: 1, 256>}, {pipeline_mode = #tpu.pipeline_mode<synchronous>, transform_indices = @transform_18, window_bounds = array<i64: 1, 256>}, {pipeline_mode = #tpu.pipeline_mode<synchronous>, transform_indices = @transform_19, window_bounds = array<i64: 1, 256>}, {pipeline_mode = #tpu.pipeline_mode<synchronous>, transform_indices = @transform_20, window_bounds = array<i64: 256, 1024>}, {pipeline_mode = #tpu.pipeline_mode<synchronous>, transform_indices = @transform_21, window_bounds = array<i64: 1, 1024>}, {pipeline_mode = #tpu.pipeline_mode<synchronous>, transform_indices = @transform_22, window_bounds = array<i64: 1024, 256>}, {pipeline_mode = #tpu.pipeline_mode<synchronous>, transform_indices = @transform_23, window_bounds = array<i64: 1, 256>}, {pipeline_mode = #tpu.pipeline_mode<synchronous>, transform_indices = @transform_24, window_bounds = array<i64: 1, 256>}, {pipeline_mode = #tpu.pipeline_mode<synchronous>, transform_indices = @transform_25, window_bounds = array<i64: 1, 256>}, {pipeline_mode = #tpu.pipeline_mode<synchronous>, transform_indices = @transform_26, window_bounds = array<i64: 1, 256>}, {transform_indices = @transform_27, window_bounds = array<i64: 1, 8, 256>}]} {
    %c0 = arith.constant 0 : index
    %c0_0 = arith.constant 0 : index
    %c0_1 = arith.constant 0 : index
    %0 = vector.load %arg1[%c0, %c0_0, %c0_1] : memref<1x8x256xf32, #tpu.memory_space<vmem>>, vector<1x8x256xf32>
    %1 = vector.shape_cast %0 : vector<1x8x256xf32> to vector<8x256xf32>
    %c0_2 = arith.constant 0 : index
    %c0_3 = arith.constant 0 : index
    %c0_4 = arith.constant 0 : index
    %2 = vector.load %arg2[%c0_2, %c0_3, %c0_4] : memref<1x24x256xf32, #tpu.memory_space<vmem>>, vector<1x24x256xf32>
    %3 = vector.shape_cast %2 : vector<1x24x256xf32> to vector<24x256xf32>
    %c0_5 = arith.constant 0 : index
    %c0_6 = arith.constant 0 : index
    %c0_7 = arith.constant 0 : index
    %4 = vector.load %arg3[%c0_5, %c0_6, %c0_7] : memref<1x8x256xf32, #tpu.memory_space<vmem>>, vector<1x8x256xf32>
    %5 = vector.shape_cast %4 : vector<1x8x256xf32> to vector<8x256xf32>
    %c0_8 = arith.constant 0 : index
    %c0_9 = arith.constant 0 : index
    %c0_10 = arith.constant 0 : index
    %6 = vector.load %arg4[%c0_8, %c0_9, %c0_10] : memref<1x24x256xf32, #tpu.memory_space<vmem>>, vector<1x24x256xf32>
    %7 = vector.shape_cast %6 : vector<1x24x256xf32> to vector<24x256xf32>
    %8 = arith.addf %1, %5 : vector<8x256xf32>
    %c0_11 = arith.constant 0 : index
    %c0_12 = arith.constant 0 : index
    %9 = vector.load %arg5[%c0_11, %c0_12] : memref<1x256xf32, #tpu.memory_space<vmem>>, vector<1x256xf32>
    %c0_13 = arith.constant 0 : index
    %c0_14 = arith.constant 0 : index
    %10 = vector.load %arg6[%c0_13, %c0_14] : memref<1x256xf32, #tpu.memory_space<vmem>>, vector<1x256xf32>
    %cst = arith.constant dense<0.000000e+00> : vector<8xf32>
    %11 = vector.multi_reduction <add>, %8, %cst [1] : vector<8x256xf32> to vector<8xf32>
    %12 = vector.shape_cast %11 : vector<8xf32> to vector<8x1xf32>
    %cst_15 = arith.constant 2.560000e+02 : f32
    %13 = vector.broadcast %cst_15 : f32 to vector<8x1xf32>
    %14 = arith.divf %12, %13 : vector<8x1xf32>
    %15 = vector.broadcast %14 : vector<8x1xf32> to vector<8x256xf32>
    %16 = arith.subf %8, %15 : vector<8x256xf32>
    %17 = arith.mulf %16, %16 : vector<8x256xf32>
    %cst_16 = arith.constant dense<0.000000e+00> : vector<8xf32>
    %18 = vector.multi_reduction <add>, %17, %cst_16 [1] : vector<8x256xf32> to vector<8xf32>
    %19 = vector.shape_cast %18 : vector<8xf32> to vector<8x1xf32>
    %cst_17 = arith.constant 2.560000e+02 : f32
    %20 = vector.broadcast %cst_17 : f32 to vector<8x1xf32>
    %21 = arith.divf %19, %20 : vector<8x1xf32>
    %22 = vector.broadcast %14 : vector<8x1xf32> to vector<8x256xf32>
    %23 = arith.subf %8, %22 : vector<8x256xf32>
    %cst_18 = arith.constant 9.99999997E-7 : f32
    %24 = vector.broadcast %cst_18 : f32 to vector<8x1xf32>
    %25 = arith.addf %21, %24 : vector<8x1xf32>
    %26 = math.rsqrt %25 : vector<8x1xf32>
    %27 = vector.broadcast %26 : vector<8x1xf32> to vector<8x256xf32>
    %28 = arith.mulf %23, %27 : vector<8x256xf32>
    %29 = vector.broadcast %9 : vector<1x256xf32> to vector<8x256xf32>
    %30 = arith.mulf %28, %29 : vector<8x256xf32>
    %31 = vector.broadcast %10 : vector<1x256xf32> to vector<8x256xf32>
    %32 = arith.addf %30, %31 : vector<8x256xf32>
    %33 = arith.truncf %32 : vector<8x256xf32> to vector<8x256xbf16>
    %34 = arith.addf %3, %7 : vector<24x256xf32>
    %c0_19 = arith.constant 0 : index
    %c0_20 = arith.constant 0 : index
    %35 = vector.load %arg7[%c0_19, %c0_20] : memref<1x256xf32, #tpu.memory_space<vmem>>, vector<1x256xf32>
    %c0_21 = arith.constant 0 : index
    %c0_22 = arith.constant 0 : index
    %36 = vector.load %arg8[%c0_21, %c0_22] : memref<1x256xf32, #tpu.memory_space<vmem>>, vector<1x256xf32>
    %cst_23 = arith.constant dense<0.000000e+00> : vector<24xf32>
    %37 = vector.multi_reduction <add>, %34, %cst_23 [1] : vector<24x256xf32> to vector<24xf32>
    %38 = vector.shape_cast %37 : vector<24xf32> to vector<24x1xf32>
    %cst_24 = arith.constant 2.560000e+02 : f32
    %39 = vector.broadcast %cst_24 : f32 to vector<24x1xf32>
    %40 = arith.divf %38, %39 : vector<24x1xf32>
    %41 = vector.broadcast %40 : vector<24x1xf32> to vector<24x256xf32>
    %42 = arith.subf %34, %41 : vector<24x256xf32>
    %43 = arith.mulf %42, %42 : vector<24x256xf32>
    %cst_25 = arith.constant dense<0.000000e+00> : vector<24xf32>
    %44 = vector.multi_reduction <add>, %43, %cst_25 [1] : vector<24x256xf32> to vector<24xf32>
    %45 = vector.shape_cast %44 : vector<24xf32> to vector<24x1xf32>
    %cst_26 = arith.constant 2.560000e+02 : f32
    %46 = vector.broadcast %cst_26 : f32 to vector<24x1xf32>
    %47 = arith.divf %45, %46 : vector<24x1xf32>
    %48 = vector.broadcast %40 : vector<24x1xf32> to vector<24x256xf32>
    %49 = arith.subf %34, %48 : vector<24x256xf32>
    %cst_27 = arith.constant 9.99999997E-7 : f32
    %50 = vector.broadcast %cst_27 : f32 to vector<24x1xf32>
    %51 = arith.addf %47, %50 : vector<24x1xf32>
    %52 = math.rsqrt %51 : vector<24x1xf32>
    %53 = vector.broadcast %52 : vector<24x1xf32> to vector<24x256xf32>
    %54 = arith.mulf %49, %53 : vector<24x256xf32>
    %55 = vector.broadcast %35 : vector<1x256xf32> to vector<24x256xf32>
    %56 = arith.mulf %54, %55 : vector<24x256xf32>
    %57 = vector.broadcast %36 : vector<1x256xf32> to vector<24x256xf32>
    %58 = arith.addf %56, %57 : vector<24x256xf32>
    %59 = arith.truncf %58 : vector<24x256xf32> to vector<24x256xbf16>
    %c0_28 = arith.constant 0 : index
    %c0_29 = arith.constant 0 : index
    %60 = vector.load %arg9[%c0_28, %c0_29] : memref<1x256xf32, #tpu.memory_space<vmem>>, vector<1x256xf32>
    %c0_30 = arith.constant 0 : index
    %c0_31 = arith.constant 0 : index
    %61 = vector.load %arg10[%c0_30, %c0_31] : memref<1x256xf32, #tpu.memory_space<vmem>>, vector<1x256xf32>
    %cst_32 = arith.constant dense<0.000000e+00> : vector<24xf32>
    %62 = vector.multi_reduction <add>, %3, %cst_32 [1] : vector<24x256xf32> to vector<24xf32>
    %63 = vector.shape_cast %62 : vector<24xf32> to vector<24x1xf32>
    %cst_33 = arith.constant 2.560000e+02 : f32
    %64 = vector.broadcast %cst_33 : f32 to vector<24x1xf32>
    %65 = arith.divf %63, %64 : vector<24x1xf32>
    %66 = vector.broadcast %65 : vector<24x1xf32> to vector<24x256xf32>
    %67 = arith.subf %3, %66 : vector<24x256xf32>
    %68 = arith.mulf %67, %67 : vector<24x256xf32>
    %cst_34 = arith.constant dense<0.000000e+00> : vector<24xf32>
    %69 = vector.multi_reduction <add>, %68, %cst_34 [1] : vector<24x256xf32> to vector<24xf32>
    %70 = vector.shape_cast %69 : vector<24xf32> to vector<24x1xf32>
    %cst_35 = arith.constant 2.560000e+02 : f32
    %71 = vector.broadcast %cst_35 : f32 to vector<24x1xf32>
    %72 = arith.divf %70, %71 : vector<24x1xf32>
    %73 = vector.broadcast %65 : vector<24x1xf32> to vector<24x256xf32>
    %74 = arith.subf %3, %73 : vector<24x256xf32>
    %cst_36 = arith.constant 9.99999997E-7 : f32
    %75 = vector.broadcast %cst_36 : f32 to vector<24x1xf32>
    %76 = arith.addf %72, %75 : vector<24x1xf32>
    %77 = math.rsqrt %76 : vector<24x1xf32>
    %78 = vector.broadcast %77 : vector<24x1xf32> to vector<24x256xf32>
    %79 = arith.mulf %74, %78 : vector<24x256xf32>
    %80 = vector.broadcast %60 : vector<1x256xf32> to vector<24x256xf32>
    %81 = arith.mulf %79, %80 : vector<24x256xf32>
    %82 = vector.broadcast %61 : vector<1x256xf32> to vector<24x256xf32>
    %83 = arith.addf %81, %82 : vector<24x256xf32>
    %84 = arith.truncf %83 : vector<24x256xf32> to vector<24x256xbf16>
    %c0_37 = arith.constant 0 : index
    %c0_38 = arith.constant 0 : index
    %85 = vector.load %arg11[%c0_37, %c0_38] : memref<256x256xbf16, #tpu.memory_space<vmem>>, vector<256x256xbf16>
    %cst_39 = arith.constant dense<0.000000e+00> : vector<8x256xf32>
    %86 = tpu.matmul %33, %85, %cst_39 {dimension_numbers = #tpu.dot_dimension_numbers<[1], [0], [0], [1], [0, 0, 1, 1], [], []>} : vector<8x256xbf16>, vector<256x256xbf16>, vector<8x256xf32> -> vector<8x256xf32>
    %c0_40 = arith.constant 0 : index
    %c0_41 = arith.constant 0 : index
    %87 = vector.load %arg12[%c0_40, %c0_41] : memref<1x256xf32, #tpu.memory_space<vmem>>, vector<1x256xf32>
    %88 = vector.broadcast %87 : vector<1x256xf32> to vector<8x256xf32>
    %89 = arith.addf %86, %88 : vector<8x256xf32>
    %90 = arith.truncf %89 : vector<8x256xf32> to vector<8x256xbf16>
    %c0_42 = arith.constant 0 : index
    %c0_43 = arith.constant 0 : index
    %91 = vector.load %arg13[%c0_42, %c0_43] : memref<256x256xbf16, #tpu.memory_space<vmem>>, vector<256x256xbf16>
    %cst_44 = arith.constant dense<0.000000e+00> : vector<24x256xf32>
    %92 = tpu.matmul %59, %91, %cst_44 {dimension_numbers = #tpu.dot_dimension_numbers<[1], [0], [0], [1], [0, 0, 1, 1], [], []>} : vector<24x256xbf16>, vector<256x256xbf16>, vector<24x256xf32> -> vector<24x256xf32>
    %93 = arith.truncf %92 : vector<24x256xf32> to vector<24x256xbf16>
    %c0_45 = arith.constant 0 : index
    %c0_46 = arith.constant 0 : index
    %94 = vector.load %arg14[%c0_45, %c0_46] : memref<256x256xbf16, #tpu.memory_space<vmem>>, vector<256x256xbf16>
    %cst_47 = arith.constant dense<0.000000e+00> : vector<24x256xf32>
    %95 = tpu.matmul %84, %94, %cst_47 {dimension_numbers = #tpu.dot_dimension_numbers<[1], [0], [0], [1], [0, 0, 1, 1], [], []>} : vector<24x256xbf16>, vector<256x256xbf16>, vector<24x256xf32> -> vector<24x256xf32>
    %c0_48 = arith.constant 0 : index
    %c0_49 = arith.constant 0 : index
    %96 = vector.load %arg15[%c0_48, %c0_49] : memref<1x256xf32, #tpu.memory_space<vmem>>, vector<1x256xf32>
    %97 = vector.broadcast %96 : vector<1x256xf32> to vector<24x256xf32>
    %98 = arith.addf %95, %97 : vector<24x256xf32>
    %99 = arith.truncf %98 : vector<24x256xf32> to vector<24x256xbf16>
    %cst_50 = arith.constant 0.000000e+00 : f32
    %100 = vector.broadcast %cst_50 : f32 to vector<8x256xf32>
    %101 = vector.extract_strided_slice %90 {offsets = [0, 0], sizes = [8, 128], strides = [1, 1]} : vector<8x256xbf16> to vector<8x128xbf16>
    %102 = vector.extract_strided_slice %93 {offsets = [0, 0], sizes = [24, 128], strides = [1, 1]} : vector<24x256xbf16> to vector<24x128xbf16>
    %103 = vector.extract_strided_slice %99 {offsets = [0, 0], sizes = [24, 128], strides = [1, 1]} : vector<24x256xbf16> to vector<24x128xbf16>
    %cst_51 = arith.constant dense<0.000000e+00> : vector<8x24xf32>
    %104 = tpu.matmul %101, %102, %cst_51 {dimension_numbers = #tpu.dot_dimension_numbers<[1], [1], [0], [0], [0, 0, 1, 0], [], []>} : vector<8x128xbf16>, vector<24x128xbf16>, vector<8x24xf32> -> vector<8x24xf32>
    %cst_52 = arith.constant dense<0xFF800000> : vector<8xf32>
    %105 = vector.multi_reduction <maximumf>, %104, %cst_52 [1] : vector<8x24xf32> to vector<8xf32>
    %106 = vector.shape_cast %105 : vector<8xf32> to vector<8x1xf32>
    %107 = vector.broadcast %106 : vector<8x1xf32> to vector<8x24xf32>
    %108 = arith.subf %104, %107 : vector<8x24xf32>
    %109 = math.exp %108 : vector<8x24xf32>
    %cst_53 = arith.constant dense<0.000000e+00> : vector<8xf32>
    %110 = vector.multi_reduction <add>, %109, %cst_53 [1] : vector<8x24xf32> to vector<8xf32>
    %111 = vector.shape_cast %110 : vector<8xf32> to vector<8x1xf32>
    %112 = vector.broadcast %111 : vector<8x1xf32> to vector<8x24xf32>
    %113 = arith.divf %109, %112 : vector<8x24xf32>
    %114 = arith.truncf %113 : vector<8x24xf32> to vector<8x24xbf16>
    %cst_54 = arith.constant dense<0.000000e+00> : vector<8x128xf32>
    %115 = tpu.matmul %114, %103, %cst_54 {dimension_numbers = #tpu.dot_dimension_numbers<[1], [0], [0], [1], [0, 0, 1, 1], [], []>} : vector<8x24xbf16>, vector<24x128xbf16>, vector<8x128xf32> -> vector<8x128xf32>
    %116 = arith.truncf %115 : vector<8x128xf32> to vector<8x128xbf16>
    %c0_55 = arith.constant 0 : index
    %c0_56 = arith.constant 0 : index
    %117 = vector.load %arg16[%c0_55, %c0_56] : memref<256x256xbf16, #tpu.memory_space<vmem>>, vector<128x256xbf16>
    %cst_57 = arith.constant dense<0.000000e+00> : vector<8x256xf32>
    %118 = tpu.matmul %116, %117, %cst_57 {dimension_numbers = #tpu.dot_dimension_numbers<[1], [0], [0], [1], [0, 0, 1, 1], [], []>} : vector<8x128xbf16>, vector<128x256xbf16>, vector<8x256xf32> -> vector<8x256xf32>
    %119 = arith.addf %100, %118 : vector<8x256xf32>
    %120 = vector.extract_strided_slice %90 {offsets = [0, 128], sizes = [8, 128], strides = [1, 1]} : vector<8x256xbf16> to vector<8x128xbf16>
    %121 = vector.extract_strided_slice %93 {offsets = [0, 128], sizes = [24, 128], strides = [1, 1]} : vector<24x256xbf16> to vector<24x128xbf16>
    %122 = vector.extract_strided_slice %99 {offsets = [0, 128], sizes = [24, 128], strides = [1, 1]} : vector<24x256xbf16> to vector<24x128xbf16>
    %cst_58 = arith.constant dense<0.000000e+00> : vector<8x24xf32>
    %123 = tpu.matmul %120, %121, %cst_58 {dimension_numbers = #tpu.dot_dimension_numbers<[1], [1], [0], [0], [0, 0, 1, 0], [], []>} : vector<8x128xbf16>, vector<24x128xbf16>, vector<8x24xf32> -> vector<8x24xf32>
    %cst_59 = arith.constant dense<0xFF800000> : vector<8xf32>
    %124 = vector.multi_reduction <maximumf>, %123, %cst_59 [1] : vector<8x24xf32> to vector<8xf32>
    %125 = vector.shape_cast %124 : vector<8xf32> to vector<8x1xf32>
    %126 = vector.broadcast %125 : vector<8x1xf32> to vector<8x24xf32>
    %127 = arith.subf %123, %126 : vector<8x24xf32>
    %128 = math.exp %127 : vector<8x24xf32>
    %cst_60 = arith.constant dense<0.000000e+00> : vector<8xf32>
    %129 = vector.multi_reduction <add>, %128, %cst_60 [1] : vector<8x24xf32> to vector<8xf32>
    %130 = vector.shape_cast %129 : vector<8xf32> to vector<8x1xf32>
    %131 = vector.broadcast %130 : vector<8x1xf32> to vector<8x24xf32>
    %132 = arith.divf %128, %131 : vector<8x24xf32>
    %133 = arith.truncf %132 : vector<8x24xf32> to vector<8x24xbf16>
    %cst_61 = arith.constant dense<0.000000e+00> : vector<8x128xf32>
    %134 = tpu.matmul %133, %122, %cst_61 {dimension_numbers = #tpu.dot_dimension_numbers<[1], [0], [0], [1], [0, 0, 1, 1], [], []>} : vector<8x24xbf16>, vector<24x128xbf16>, vector<8x128xf32> -> vector<8x128xf32>
    %135 = arith.truncf %134 : vector<8x128xf32> to vector<8x128xbf16>
    %c128 = arith.constant 128 : index
    %c0_62 = arith.constant 0 : index
    %136 = vector.load %arg16[%c128, %c0_62] : memref<256x256xbf16, #tpu.memory_space<vmem>>, vector<128x256xbf16>
    %cst_63 = arith.constant dense<0.000000e+00> : vector<8x256xf32>
    %137 = tpu.matmul %135, %136, %cst_63 {dimension_numbers = #tpu.dot_dimension_numbers<[1], [0], [0], [1], [0, 0, 1, 1], [], []>} : vector<8x128xbf16>, vector<128x256xbf16>, vector<8x256xf32> -> vector<8x256xf32>
    %138 = arith.addf %119, %137 : vector<8x256xf32>
    %c0_64 = arith.constant 0 : index
    %c0_65 = arith.constant 0 : index
    %139 = vector.load %arg18[%c0_64, %c0_65] : memref<1x256xf32, #tpu.memory_space<vmem>>, vector<1x256xf32>
    %c0_66 = arith.constant 0 : index
    %c0_67 = arith.constant 0 : index
    %140 = vector.load %arg17[%c0_66, %c0_67] : memref<1x256xf32, #tpu.memory_space<vmem>>, vector<1x256xf32>
    %141 = vector.broadcast %140 : vector<1x256xf32> to vector<8x256xf32>
    %142 = arith.addf %138, %141 : vector<8x256xf32>
    %143 = vector.broadcast %139 : vector<1x256xf32> to vector<8x256xf32>
    %144 = arith.mulf %143, %142 : vector<8x256xf32>
    %145 = arith.addf %1, %144 : vector<8x256xf32>
    %c0_68 = arith.constant 0 : index
    %c0_69 = arith.constant 0 : index
    %146 = vector.load %arg19[%c0_68, %c0_69] : memref<1x256xf32, #tpu.memory_space<vmem>>, vector<1x256xf32>
    %c0_70 = arith.constant 0 : index
    %c0_71 = arith.constant 0 : index
    %147 = vector.load %arg20[%c0_70, %c0_71] : memref<1x256xf32, #tpu.memory_space<vmem>>, vector<1x256xf32>
    %cst_72 = arith.constant dense<0.000000e+00> : vector<8xf32>
    %148 = vector.multi_reduction <add>, %145, %cst_72 [1] : vector<8x256xf32> to vector<8xf32>
    %149 = vector.shape_cast %148 : vector<8xf32> to vector<8x1xf32>
    %cst_73 = arith.constant 2.560000e+02 : f32
    %150 = vector.broadcast %cst_73 : f32 to vector<8x1xf32>
    %151 = arith.divf %149, %150 : vector<8x1xf32>
    %152 = vector.broadcast %151 : vector<8x1xf32> to vector<8x256xf32>
    %153 = arith.subf %145, %152 : vector<8x256xf32>
    %154 = arith.mulf %153, %153 : vector<8x256xf32>
    %cst_74 = arith.constant dense<0.000000e+00> : vector<8xf32>
    %155 = vector.multi_reduction <add>, %154, %cst_74 [1] : vector<8x256xf32> to vector<8xf32>
    %156 = vector.shape_cast %155 : vector<8xf32> to vector<8x1xf32>
    %cst_75 = arith.constant 2.560000e+02 : f32
    %157 = vector.broadcast %cst_75 : f32 to vector<8x1xf32>
    %158 = arith.divf %156, %157 : vector<8x1xf32>
    %159 = vector.broadcast %151 : vector<8x1xf32> to vector<8x256xf32>
    %160 = arith.subf %145, %159 : vector<8x256xf32>
    %cst_76 = arith.constant 9.99999997E-7 : f32
    %161 = vector.broadcast %cst_76 : f32 to vector<8x1xf32>
    %162 = arith.addf %158, %161 : vector<8x1xf32>
    %163 = math.rsqrt %162 : vector<8x1xf32>
    %164 = vector.broadcast %163 : vector<8x1xf32> to vector<8x256xf32>
    %165 = arith.mulf %160, %164 : vector<8x256xf32>
    %166 = vector.broadcast %146 : vector<1x256xf32> to vector<8x256xf32>
    %167 = arith.mulf %165, %166 : vector<8x256xf32>
    %168 = vector.broadcast %147 : vector<1x256xf32> to vector<8x256xf32>
    %169 = arith.addf %167, %168 : vector<8x256xf32>
    %170 = arith.truncf %169 : vector<8x256xf32> to vector<8x256xbf16>
    %c0_77 = arith.constant 0 : index
    %c0_78 = arith.constant 0 : index
    %171 = vector.load %arg21[%c0_77, %c0_78] : memref<256x1024xbf16, #tpu.memory_space<vmem>>, vector<256x1024xbf16>
    %cst_79 = arith.constant dense<0.000000e+00> : vector<8x1024xf32>
    %172 = tpu.matmul %170, %171, %cst_79 {dimension_numbers = #tpu.dot_dimension_numbers<[1], [0], [0], [1], [0, 0, 1, 1], [], []>} : vector<8x256xbf16>, vector<256x1024xbf16>, vector<8x1024xf32> -> vector<8x1024xf32>
    %c0_80 = arith.constant 0 : index
    %c0_81 = arith.constant 0 : index
    %173 = vector.load %arg22[%c0_80, %c0_81] : memref<1x1024xf32, #tpu.memory_space<vmem>>, vector<1x1024xf32>
    %174 = vector.broadcast %173 : vector<1x1024xf32> to vector<8x1024xf32>
    %175 = arith.addf %172, %174 : vector<8x1024xf32>
    %cst_82 = arith.constant 5.000000e-01 : f32
    %176 = vector.broadcast %cst_82 : f32 to vector<8x1024xf32>
    %177 = arith.mulf %176, %175 : vector<8x1024xf32>
    %cst_83 = arith.constant 4.471500e-02 : f32
    %178 = vector.broadcast %cst_83 : f32 to vector<8x1024xf32>
    %179 = arith.mulf %178, %175 : vector<8x1024xf32>
    %180 = arith.mulf %179, %175 : vector<8x1024xf32>
    %181 = arith.mulf %180, %175 : vector<8x1024xf32>
    %182 = arith.addf %175, %181 : vector<8x1024xf32>
    %cst_84 = arith.constant 0.797884583 : f32
    %183 = vector.broadcast %cst_84 : f32 to vector<8x1024xf32>
    %184 = arith.mulf %183, %182 : vector<8x1024xf32>
    %185 = math.tanh %184 : vector<8x1024xf32>
    %cst_85 = arith.constant 1.000000e+00 : f32
    %186 = vector.broadcast %cst_85 : f32 to vector<8x1024xf32>
    %187 = arith.addf %186, %185 : vector<8x1024xf32>
    %188 = arith.mulf %177, %187 : vector<8x1024xf32>
    %189 = arith.truncf %188 : vector<8x1024xf32> to vector<8x1024xbf16>
    %c0_86 = arith.constant 0 : index
    %c0_87 = arith.constant 0 : index
    %190 = vector.load %arg23[%c0_86, %c0_87] : memref<1024x256xbf16, #tpu.memory_space<vmem>>, vector<1024x256xbf16>
    %cst_88 = arith.constant dense<0.000000e+00> : vector<8x256xf32>
    %191 = tpu.matmul %189, %190, %cst_88 {dimension_numbers = #tpu.dot_dimension_numbers<[1], [0], [0], [1], [0, 0, 1, 1], [], []>} : vector<8x1024xbf16>, vector<1024x256xbf16>, vector<8x256xf32> -> vector<8x256xf32>
    %c0_89 = arith.constant 0 : index
    %c0_90 = arith.constant 0 : index
    %192 = vector.load %arg24[%c0_89, %c0_90] : memref<1x256xf32, #tpu.memory_space<vmem>>, vector<1x256xf32>
    %193 = vector.broadcast %192 : vector<1x256xf32> to vector<8x256xf32>
    %194 = arith.addf %191, %193 : vector<8x256xf32>
    %c0_91 = arith.constant 0 : index
    %c0_92 = arith.constant 0 : index
    %195 = vector.load %arg25[%c0_91, %c0_92] : memref<1x256xf32, #tpu.memory_space<vmem>>, vector<1x256xf32>
    %196 = vector.broadcast %195 : vector<1x256xf32> to vector<8x256xf32>
    %197 = arith.mulf %196, %194 : vector<8x256xf32>
    %198 = arith.addf %169, %197 : vector<8x256xf32>
    %c0_93 = arith.constant 0 : index
    %c0_94 = arith.constant 0 : index
    %199 = vector.load %arg26[%c0_93, %c0_94] : memref<1x256xf32, #tpu.memory_space<vmem>>, vector<1x256xf32>
    %c0_95 = arith.constant 0 : index
    %c0_96 = arith.constant 0 : index
    %200 = vector.load %arg27[%c0_95, %c0_96] : memref<1x256xf32, #tpu.memory_space<vmem>>, vector<1x256xf32>
    %cst_97 = arith.constant dense<0.000000e+00> : vector<8xf32>
    %201 = vector.multi_reduction <add>, %198, %cst_97 [1] : vector<8x256xf32> to vector<8xf32>
    %202 = vector.shape_cast %201 : vector<8xf32> to vector<8x1xf32>
    %cst_98 = arith.constant 2.560000e+02 : f32
    %203 = vector.broadcast %cst_98 : f32 to vector<8x1xf32>
    %204 = arith.divf %202, %203 : vector<8x1xf32>
    %205 = vector.broadcast %204 : vector<8x1xf32> to vector<8x256xf32>
    %206 = arith.subf %198, %205 : vector<8x256xf32>
    %207 = arith.mulf %206, %206 : vector<8x256xf32>
    %cst_99 = arith.constant dense<0.000000e+00> : vector<8xf32>
    %208 = vector.multi_reduction <add>, %207, %cst_99 [1] : vector<8x256xf32> to vector<8xf32>
    %209 = vector.shape_cast %208 : vector<8xf32> to vector<8x1xf32>
    %cst_100 = arith.constant 2.560000e+02 : f32
    %210 = vector.broadcast %cst_100 : f32 to vector<8x1xf32>
    %211 = arith.divf %209, %210 : vector<8x1xf32>
    %212 = vector.broadcast %204 : vector<8x1xf32> to vector<8x256xf32>
    %213 = arith.subf %198, %212 : vector<8x256xf32>
    %cst_101 = arith.constant 9.99999997E-7 : f32
    %214 = vector.broadcast %cst_101 : f32 to vector<8x1xf32>
    %215 = arith.addf %211, %214 : vector<8x1xf32>
    %216 = math.rsqrt %215 : vector<8x1xf32>
    %217 = vector.broadcast %216 : vector<8x1xf32> to vector<8x256xf32>
    %218 = arith.mulf %213, %217 : vector<8x256xf32>
    %219 = vector.broadcast %199 : vector<1x256xf32> to vector<8x256xf32>
    %220 = arith.mulf %218, %219 : vector<8x256xf32>
    %221 = vector.broadcast %200 : vector<1x256xf32> to vector<8x256xf32>
    %222 = arith.addf %220, %221 : vector<8x256xf32>
    %c0_102 = arith.constant 0 : index
    %c0_103 = arith.constant 0 : index
    %c0_104 = arith.constant 0 : index
    %223 = vector.load %arg28[%c0_102, %c0_103, %c0_104] : memref<1x8x256xf32, #tpu.memory_space<vmem>>, vector<1x8x256xf32>
    %224 = vector.shape_cast %223 : vector<1x8x256xf32> to vector<8x256xf32>
    %225 = vector.shape_cast %222 : vector<8x256xf32> to vector<1x8x256xf32>
    tpu.vector_store %arg28[%c0_102, %c0_103, %c0_104], %225 {strides = array<i32>} : memref<1x8x256xf32, #tpu.memory_space<vmem>>, vector<1x8x256xf32>,
    return
  }
  func.func @transform_0(%arg0: i32) -> (i32, i32, i32) {
    %c0_i32 = arith.constant 0 : i32
    %c0_i32_0 = arith.constant 0 : i32
    %c0_i32_1 = arith.constant 0 : i32
    return %arg0, %c0_i32, %c0_i32_0 : i32, i32, i32
  }
  func.func @transform_1(%arg0: i32) -> (i32, i32, i32) {
    %c0_i32 = arith.constant 0 : i32
    %c0_i32_0 = arith.constant 0 : i32
    %c0_i32_1 = arith.constant 0 : i32
    return %arg0, %c0_i32, %c0_i32_0 : i32, i32, i32
  }
  func.func @transform_2(%arg0: i32) -> (i32, i32, i32) {
    %c0_i32 = arith.constant 0 : i32
    %c0_i32_0 = arith.constant 0 : i32
    %c0_i32_1 = arith.constant 0 : i32
    %c0_i32_2 = arith.constant 0 : i32
    return %c0_i32, %c0_i32_0, %c0_i32_1 : i32, i32, i32
  }
  func.func @transform_3(%arg0: i32) -> (i32, i32, i32) {
    %c0_i32 = arith.constant 0 : i32
    %c0_i32_0 = arith.constant 0 : i32
    %c0_i32_1 = arith.constant 0 : i32
    %c0_i32_2 = arith.constant 0 : i32
    return %c0_i32, %c0_i32_0, %c0_i32_1 : i32, i32, i32
  }
  func.func @transform_4(%arg0: i32) -> (i32, i32) {
    %c0_i32 = arith.constant 0 : i32
    %c0_i32_0 = arith.constant 0 : i32
    %c0_i32_1 = arith.constant 0 : i32
    return %c0_i32, %c0_i32_0 : i32, i32
  }
  func.func @transform_5(%arg0: i32) -> (i32, i32) {
    %c0_i32 = arith.constant 0 : i32
    %c0_i32_0 = arith.constant 0 : i32
    %c0_i32_1 = arith.constant 0 : i32
    return %c0_i32, %c0_i32_0 : i32, i32
  }
  func.func @transform_6(%arg0: i32) -> (i32, i32) {
    %c0_i32 = arith.constant 0 : i32
    %c0_i32_0 = arith.constant 0 : i32
    %c0_i32_1 = arith.constant 0 : i32
    return %c0_i32, %c0_i32_0 : i32, i32
  }
  func.func @transform_7(%arg0: i32) -> (i32, i32) {
    %c0_i32 = arith.constant 0 : i32
    %c0_i32_0 = arith.constant 0 : i32
    %c0_i32_1 = arith.constant 0 : i32
    return %c0_i32, %c0_i32_0 : i32, i32
  }
  func.func @transform_8(%arg0: i32) -> (i32, i32) {
    %c0_i32 = arith.constant 0 : i32
    %c0_i32_0 = arith.constant 0 : i32
    %c0_i32_1 = arith.constant 0 : i32
    return %c0_i32, %c0_i32_0 : i32, i32
  }
  func.func @transform_9(%arg0: i32) -> (i32, i32) {
    %c0_i32 = arith.constant 0 : i32
    %c0_i32_0 = arith.constant 0 : i32
    %c0_i32_1 = arith.constant 0 : i32
    return %c0_i32, %c0_i32_0 : i32, i32
  }
  func.func @transform_10(%arg0: i32) -> (i32, i32) {
    %c0_i32 = arith.constant 0 : i32
    %c0_i32_0 = arith.constant 0 : i32
    %c0_i32_1 = arith.constant 0 : i32
    return %c0_i32, %c0_i32_0 : i32, i32
  }
  func.func @transform_11(%arg0: i32) -> (i32, i32) {
    %c0_i32 = arith.constant 0 : i32
    %c0_i32_0 = arith.constant 0 : i32
    %c0_i32_1 = arith.constant 0 : i32
    return %c0_i32, %c0_i32_0 : i32, i32
  }
  func.func @transform_12(%arg0: i32) -> (i32, i32) {
    %c0_i32 = arith.constant 0 : i32
    %c0_i32_0 = arith.constant 0 : i32
    %c0_i32_1 = arith.constant 0 : i32
    return %c0_i32, %c0_i32_0 : i32, i32
  }
  func.func @transform_13(%arg0: i32) -> (i32, i32) {
    %c0_i32 = arith.constant 0 : i32
    %c0_i32_0 = arith.constant 0 : i32
    %c0_i32_1 = arith.constant 0 : i32
    return %c0_i32, %c0_i32_0 : i32, i32
  }
  func.func @transform_14(%arg0: i32) -> (i32, i32) {
    %c0_i32 = arith.constant 0 : i32
    %c0_i32_0 = arith.constant 0 : i32
    %c0_i32_1 = arith.constant 0 : i32
    return %c0_i32, %c0_i32_0 : i32, i32
  }
  func.func @transform_15(%arg0: i32) -> (i32, i32) {
    %c0_i32 = arith.constant 0 : i32
    %c0_i32_0 = arith.constant 0 : i32
    %c0_i32_1 = arith.constant 0 : i32
    return %c0_i32, %c0_i32_0 : i32, i32
  }
  func.func @transform_16(%arg0: i32) -> (i32, i32) {
    %c0_i32 = arith.constant 0 : i32
    %c0_i32_0 = arith.constant 0 : i32
    %c0_i32_1 = arith.constant 0 : i32
    return %c0_i32, %c0_i32_0 : i32, i32
  }
  func.func @transform_17(%arg0: i32) -> (i32, i32) {
    %c0_i32 = arith.constant 0 : i32
    %c0_i32_0 = arith.constant 0 : i32
    %c0_i32_1 = arith.constant 0 : i32
    return %c0_i32, %c0_i32_0 : i32, i32
  }
  func.func @transform_18(%arg0: i32) -> (i32, i32) {
    %c0_i32 = arith.constant 0 : i32
    %c0_i32_0 = arith.constant 0 : i32
    %c0_i32_1 = arith.constant 0 : i32
    return %c0_i32, %c0_i32_0 : i32, i32
  }
  func.func @transform_19(%arg0: i32) -> (i32, i32) {
    %c0_i32 = arith.constant 0 : i32
    %c0_i32_0 = arith.constant 0 : i32
    %c0_i32_1 = arith.constant 0 : i32
    return %c0_i32, %c0_i32_0 : i32, i32
  }
  func.func @transform_20(%arg0: i32) -> (i32, i32) {
    %c0_i32 = arith.constant 0 : i32
    %c0_i32_0 = arith.constant 0 : i32
    %c0_i32_1 = arith.constant 0 : i32
    return %c0_i32, %c0_i32_0 : i32, i32
  }
  func.func @transform_21(%arg0: i32) -> (i32, i32) {
    %c0_i32 = arith.constant 0 : i32
    %c0_i32_0 = arith.constant 0 : i32
    %c0_i32_1 = arith.constant 0 : i32
    return %c0_i32, %c0_i32_0 : i32, i32
  }
  func.func @transform_22(%arg0: i32) -> (i32, i32) {
    %c0_i32 = arith.constant 0 : i32
    %c0_i32_0 = arith.constant 0 : i32
    %c0_i32_1 = arith.constant 0 : i32
    return %c0_i32, %c0_i32_0 : i32, i32
  }
  func.func @transform_23(%arg0: i32) -> (i32, i32) {
    %c0_i32 = arith.constant 0 : i32
    %c0_i32_0 = arith.constant 0 : i32
    %c0_i32_1 = arith.constant 0 : i32
    return %c0_i32, %c0_i32_0 : i32, i32
  }
  func.func @transform_24(%arg0: i32) -> (i32, i32) {
    %c0_i32 = arith.constant 0 : i32
    %c0_i32_0 = arith.constant 0 : i32
    %c0_i32_1 = arith.constant 0 : i32
    return %c0_i32, %c0_i32_0 : i32, i32
  }
  func.func @transform_25(%arg0: i32) -> (i32, i32) {
    %c0_i32 = arith.constant 0 : i32
    %c0_i32_0 = arith.constant 0 : i32
    %c0_i32_1 = arith.constant 0 : i32
    return %c0_i32, %c0_i32_0 : i32, i32
  }
  func.func @transform_26(%arg0: i32) -> (i32, i32) {
    %c0_i32 = arith.constant 0 : i32
    %c0_i32_0 = arith.constant 0 : i32
    %c0_i32_1 = arith.constant 0 : i32
    return %c0_i32, %c0_i32_0 : i32, i32
  }
  func.func @transform_27(%arg0: i32) -> (i32, i32, i32) {
    %c0_i32 = arith.constant 0 : i32
    %c0_i32_0 = arith.constant 0 : i32
    %c0_i32_1 = arith.constant 0 : i32
    return %arg0, %c0_i32, %c0_i32_0 : i32, i32, i32
  }
}

</mosaic_0001>

<llo_original>
// kernel: latent_regresser_forward.2
$region0: #{latent_regresser_forward.2}
  #allocation0 [shape = 'u32[]', space=smem, size = 0x4, offset = 0x4, fixed_abs, tag = 'smem constant byte address 0x4 - core index']
  #allocation1 [shape = 'u32[144,128]{1,0:T(1,128)}', space=vmem, size = 0x12000, scoped, tag = 'internal scratch']
  %s0 = inlined_call_operand.vmem [shape: f32[2,8,256], index: 0, kind: input, shape index: {}]
  %s1 = inlined_call_operand.vmem [shape: f32[2,24,256], index: 1, kind: input, shape index: {}]
  %s2 = inlined_call_operand.vmem [shape: f32[1,8,256], index: 2, kind: input, shape index: {}]
  %s3 = inlined_call_operand.vmem [shape: f32[1,24,256], index: 3, kind: input, shape index: {}]
  %s4 = inlined_call_operand.vmem [shape: f32[1,256], index: 4, kind: input, shape index: {}]
  %s5 = inlined_call_operand.vmem [shape: f32[1,256], index: 5, kind: input, shape index: {}]
  %s6 = inlined_call_operand.vmem [shape: f32[1,256], index: 6, kind: input, shape index: {}]
  %s7 = inlined_call_operand.vmem [shape: f32[1,256], index: 7, kind: input, shape index: {}]
  %s8 = inlined_call_operand.vmem [shape: f32[1,256], index: 8, kind: input, shape index: {}]
  %s9 = inlined_call_operand.vmem [shape: f32[1,256], index: 9, kind: input, shape index: {}]
  %s10 = inlined_call_operand.hbm [shape: bf16[256,256], index: 10, kind: input, shape index: {}]
  %s11 = inlined_call_operand.vmem [shape: f32[1,256], index: 11, kind: input, shape index: {}]
  %s12 = inlined_call_operand.hbm [shape: bf16[256,256], index: 12, kind: input, shape index: {}]
  %s13 = inlined_call_operand.hbm [shape: bf16[256,256], index: 13, kind: input, shape index: {}]
  %s14 = inlined_call_operand.vmem [shape: f32[1,256], index: 14, kind: input, shape index: {}]
  %s15 = inlined_call_operand.hbm [shape: bf16[256,256], index: 15, kind: input, shape index: {}]
  %s16 = inlined_call_operand.vmem [shape: f32[1,256], index: 16, kind: input, shape index: {}]
  %s17 = inlined_call_operand.vmem [shape: f32[1,256], index: 17, kind: input, shape index: {}]
  %s18 = inlined_call_operand.vmem [shape: f32[1,256], index: 18, kind: input, shape index: {}, may-alias: {18,25}]
  %s19 = inlined_call_operand.vmem [shape: f32[1,256], index: 19, kind: input, shape index: {}, may-alias: {19,26}]
  %s20 = inlined_call_operand.hbm [shape: bf16[256,1024], index: 20, kind: input, shape index: {}]
  %s21 = inlined_call_operand.vmem [shape: f32[1,1024], index: 21, kind: input, shape index: {}]
  %s22 = inlined_call_operand.hbm [shape: bf16[1024,256], index: 22, kind: input, shape index: {}]
  %s23 = inlined_call_operand.vmem [shape: f32[1,256], index: 23, kind: input, shape index: {}]
  %s24 = inlined_call_operand.vmem [shape: f32[1,256], index: 24, kind: input, shape index: {}]
  %s25 = inlined_call_operand.vmem [shape: f32[1,256], index: 25, kind: input, shape index: {}, may-alias: {18,25}]
  %s26 = inlined_call_operand.vmem [shape: f32[1,256], index: 26, kind: input, shape index: {}, may-alias: {19,26}]
  %s27 = inlined_call_operand.vmem [shape: f32[2,8,256], index: 27, kind: output, shape index: {}]
  %s28 = sld [smem:[#allocation0]]
  $region165: #{latent_regresser_forward.2} parent=0
    _
  %s30 = ssub.s32 1, %s28
  %s31 = scalar_select 0, %s30, %s28
  $region1: #{latent_regresser_forward.2} parent=0
    #allocation2 [shape = 'u8[131072]{0}', space=vmem, size = 0x20000, scoped, tag = 'input window, operand 10, single buffered']
    #allocation3 [shape = 's32[2]{0}', space=sflag, size = 0x8, scoped, tag = 'scoped memory for latent_regresser_forward.2']
    #allocation4 [shape = 'u8[131072]{0}', space=vmem, size = 0x20000, scoped, tag = 'input window, operand 12, single buffered']
    #allocation5 [shape = 's32[1]{0}', space=sflag, size = 0x4, scoped, tag = 'scoped memory for latent_regresser_forward.2']
    #allocation6 [shape = 'u8[131072]{0}', space=vmem, size = 0x20000, scoped, tag = 'input window, operand 13, single buffered']
    #allocation7 [shape = 'u8[131072]{0}', space=vmem, size = 0x20000, scoped, tag = 'input window, operand 15, single buffered']
    #allocation8 [shape = 's32[1]{0}', space=sflag, size = 0x4, scoped, tag = 'scoped memory for latent_regresser_forward.2']
    #allocation9 [shape = 'u8[524288]{0}', space=vmem, size = 0x80000, scoped, tag = 'input window, operand 20, single buffered']
    #allocation10 [shape = 'u8[524288]{0}', space=vmem, size = 0x80000, scoped, tag = 'input window, operand 22, single buffered']
    #allocation11 [shape = 's32[1]{0}', space=sflag, size = 0x4, scoped, tag = 'scoped memory for latent_regresser_forward.2']
    %32 = vsyncpa [#allocation3], 0
    %33 = vsyncpa [#allocation5], 0
    %34 = vsyncpa [#allocation8], 0
    %35 = vsyncpa [#allocation11], 0
    loop: start=0, step=1, limit=4
    $region2: #{latent_regresser_forward.2} parent=1 // loop_pre_header
      _
    $region3: #{latent_regresser_forward.2} parent=1 // loop_header
      %s37 = sphi 0, %s41
      %p38 = scmp.ge.s32.totalorder %s37, 4
      %s47 = sphi 0, %s49
      %s50 = sphi 0, %s47
      %s51 = sphi 0, %s50
      %s67 = sphi 0, %s51
      %s73 = sphi 0, %s75
      %s76 = sphi 0, %s73
      %s77 = sphi 0, %s76
      %s93 = sphi 0, %s77
      %s97 = sphi 0, %s97
      %s99 = sphi 0, %s97
      %s100 = sphi 0, %s99
      %s114 = sphi 0, %s100
      %s118 = sphi 0, %s118
      %s120 = sphi 0, %s118
      %s121 = sphi 0, %s120
      %s135 = sphi 0, %s121
      %s139 = sphi 0, %s139
      %s141 = sphi 0, %s139
      %s142 = sphi 0, %s141
      %s156 = sphi 0, %s142
      %s160 = sphi 0, %s160
      %s162 = sphi 0, %s160
      %s163 = sphi 0, %s162
      %s177 = sphi 0, %s163
      %s181 = sphi 0, %s181
      %s183 = sphi 0, %s181
      %s184 = sphi 0, %s183
      %s198 = sphi 0, %s184
      %s202 = sphi 0, %s202
      %s204 = sphi 0, %s202
      %s205 = sphi 0, %s204
      %s219 = sphi 0, %s205
      %s223 = sphi 0, %s223
      %s225 = sphi 0, %s223
      %s226 = sphi 0, %s225
      %s240 = sphi 0, %s226
      %s244 = sphi 0, %s244
      %s246 = sphi 0, %s244
      %s247 = sphi 0, %s246
      %s261 = sphi 0, %s247
      %s265 = sphi 0, %s265
      %s267 = sphi 0, %s265
      %s268 = sphi 0, %s267
      %s282 = sphi 0, %s268
      %s286 = sphi 0, %s286
      %s288 = sphi 0, %s286
      %s289 = sphi 0, %s288
      %s303 = sphi 0, %s289
      %s307 = sphi 0, %s307
      %s309 = sphi 0, %s307
      %s310 = sphi 0, %s309
      %s324 = sphi 0, %s310
      %s328 = sphi 0, %s328
      %s330 = sphi 0, %s328
      %s331 = sphi 0, %s330
      %s345 = sphi 0, %s331
      %s349 = sphi 0, %s349
      %s351 = sphi 0, %s349
      %s352 = sphi 0, %s351
      %s366 = sphi 0, %s352
      %s370 = sphi 0, %s370
      %s372 = sphi 0, %s370
      %s373 = sphi 0, %s372
      %s387 = sphi 0, %s373
      %s391 = sphi 0, %s391
      %s393 = sphi 0, %s391
      %s394 = sphi 0, %s393
      %s408 = sphi 0, %s394
      %s412 = sphi 0, %s412
      %s414 = sphi 0, %s412
      %s415 = sphi 0, %s414
      %s429 = sphi 0, %s415
      %s433 = sphi 0, %s433
      %s435 = sphi 0, %s433
      %s436 = sphi 0, %s435
      %s450 = sphi 0, %s436
      %s454 = sphi 0, %s454
      %s456 = sphi 0, %s454
      %s457 = sphi 0, %s456
      %s471 = sphi 0, %s457
      %s475 = sphi 0, %s475
      %s477 = sphi 0, %s475
      %s478 = sphi 0, %s477
      %s492 = sphi 0, %s478
      %s496 = sphi 0, %s496
      %s498 = sphi 0, %s496
      %s499 = sphi 0, %s498
      %s513 = sphi 0, %s499
      %s517 = sphi 0, %s517
      %s519 = sphi 0, %s517
      %s520 = sphi 0, %s519
      %s534 = sphi 0, %s520
      %s538 = sphi 0, %s538
      %s540 = sphi 0, %s538
      %s541 = sphi 0, %s540
      %s555 = sphi 0, %s541
      %s559 = sphi 0, %s559
      %s561 = sphi 0, %s559
      %s562 = sphi 0, %s561
      %s576 = sphi 0, %s562
      %s580 = sphi 0, %s580
      %s582 = sphi 0, %s580
      %s583 = sphi 0, %s582
      %s597 = sphi 0, %s583
      %s601 = sphi 0, %s601
      %s603 = sphi 0, %s601
      %s604 = sphi 0, %s603
      %s618 = sphi 0, %s604
      %s624 = sphi 0, %s626
      %s627 = sphi 0, %s624
      %s628 = sphi 0, %s627
      %s644 = sphi 0, %s628
    $region4: #{latent_regresser_forward.2} parent=1 // loop_header_branch
      %40 = sbr.rel (%p38) target = $region8
    $region5: #{latent_regresser_forward.2} parent=1 // loop_body
      %s42 = ssub.s32 %s37, 1
      %s43 = ssub.s32 %s37, 2
      %s44 = sadd.s32 %s37, 1
      %s45 = ssub.s32 %s37, %s44
      %p46 = scmp.eq.s32.totalorder %s45, 0
      %s48 = sadd.s32 %s47, 1
      %s49 = scalar_select %p46, %s47, %s48
      %p52 = pneg %p46
      %p53 = scmp.eq.s32.totalorder %s37, 1
      %p54 = por %p52, %p53
      %p55 = scmp.ne.s32.totalorder %s47, %s50
      %p56 = scmp.eq.s32.totalorder %s37, 0
      %p57 = por %p55, %p56
      %p58 = scmp.ne.s32.totalorder %s47, %s50
      %p59 = scmp.eq.s32.totalorder %s42, 1
      %p60 = por %p58, %p59
      %p61 = scmp.ne.s32.totalorder %s50, %s51
      %p62 = scmp.eq.s32.totalorder %s42, 0
      %p63 = por %p61, %p62
      %p64 = scmp.ne.s32.totalorder %s50, %s51
      %p65 = scmp.eq.s32.totalorder %s43, 1
      %p66 = por %p64, %p65
      %p68 = scmp.ne.s32.totalorder %s51, %s67
      %p69 = scmp.eq.s32.totalorder %s43, 0
      %p70 = por %p68, %p69
      %s71 = ssub.s32 %s37, %s44
      %p72 = scmp.eq.s32.totalorder %s71, 0
      %s74 = sadd.s32 %s73, 1
      %s75 = scalar_select %p72, %s73, %s74
      %p78 = pneg %p72
      %p79 = scmp.eq.s32.totalorder %s37, 1
      %p80 = por %p78, %p79
      %p81 = scmp.ne.s32.totalorder %s73, %s76
      %p82 = scmp.eq.s32.totalorder %s37, 0
      %p83 = por %p81, %p82
      %p84 = scmp.ne.s32.totalorder %s73, %s76
      %p85 = scmp.eq.s32.totalorder %s42, 1
      %p86 = por %p84, %p85
      %p87 = scmp.ne.s32.totalorder %s76, %s77
      %p88 = scmp.eq.s32.totalorder %s42, 0
      %p89 = por %p87, %p88
      %p90 = scmp.ne.s32.totalorder %s76, %s77
      %p91 = scmp.eq.s32.totalorder %s43, 1
      %p92 = por %p90, %p91
      %p94 = scmp.ne.s32.totalorder %s77, %s93
      %p95 = scmp.eq.s32.totalorder %s43, 0
      %p96 = por %p94, %p95
      %s98 = sadd.s32 %s97, 1
      %p101 = scmp.eq.s32.totalorder %s37, 1
      %p102 = scmp.ne.s32.totalorder %s97, %s99
      %p103 = scmp.eq.s32.totalorder %s37, 0
      %p104 = por %p102, %p103
      %p105 = scmp.ne.s32.totalorder %s97, %s99
      %p106 = scmp.eq.s32.totalorder %s42, 1
      %p107 = por %p105, %p106
      %p108 = scmp.ne.s32.totalorder %s99, %s100
      %p109 = scmp.eq.s32.totalorder %s42, 0
      %p110 = por %p108, %p109
      %p111 = scmp.ne.s32.totalorder %s99, %s100
      %p112 = scmp.eq.s32.totalorder %s43, 1
      %p113 = por %p111, %p112
      %p115 = scmp.ne.s32.totalorder %s100, %s114
      %p116 = scmp.eq.s32.totalorder %s43, 0
      %p117 = por %p115, %p116
      %s119 = sadd.s32 %s118, 1
      %p122 = scmp.eq.s32.totalorder %s37, 1
      %p123 = scmp.ne.s32.totalorder %s118, %s120
      %p124 = scmp.eq.s32.totalorder %s37, 0
      %p125 = por %p123, %p124
      %p126 = scmp.ne.s32.totalorder %s118, %s120
      %p127 = scmp.eq.s32.totalorder %s42, 1
      %p128 = por %p126, %p127
      %p129 = scmp.ne.s32.totalorder %s120, %s121
      %p130 = scmp.eq.s32.totalorder %s42, 0
      %p131 = por %p129, %p130
      %p132 = scmp.ne.s32.totalorder %s120, %s121
      %p133 = scmp.eq.s32.totalorder %s43, 1
      %p134 = por %p132, %p133
      %p136 = scmp.ne.s32.totalorder %s121, %s135
      %p137 = scmp.eq.s32.totalorder %s43, 0
      %p138 = por %p136, %p137
      %s140 = sadd.s32 %s139, 1
      %p143 = scmp.eq.s32.totalorder %s37, 1
      %p144 = scmp.ne.s32.totalorder %s139, %s141
      %p145 = scmp.eq.s32.totalorder %s37, 0
      %p146 = por %p144, %p145
      %p147 = scmp.ne.s32.totalorder %s139, %s141
      %p148 = scmp.eq.s32.totalorder %s42, 1
      %p149 = por %p147, %p148
      %p150 = scmp.ne.s32.totalorder %s141, %s142
      %p151 = scmp.eq.s32.totalorder %s42, 0
      %p152 = por %p150, %p151
      %p153 = scmp.ne.s32.totalorder %s141, %s142
      %p154 = scmp.eq.s32.totalorder %s43, 1
      %p155 = por %p153, %p154
      %p157 = scmp.ne.s32.totalorder %s142, %s156
      %p158 = scmp.eq.s32.totalorder %s43, 0
      %p159 = por %p157, %p158
      %s161 = sadd.s32 %s160, 1
      %p164 = scmp.eq.s32.totalorder %s37, 1
      %p165 = scmp.ne.s32.totalorder %s160, %s162
      %p166 = scmp.eq.s32.totalorder %s37, 0
      %p167 = por %p165, %p166
      %p168 = scmp.ne.s32.totalorder %s160, %s162
      %p169 = scmp.eq.s32.totalorder %s42, 1
      %p170 = por %p168, %p169
      %p171 = scmp.ne.s32.totalorder %s162, %s163
      %p172 = scmp.eq.s32.totalorder %s42, 0
      %p173 = por %p171, %p172
      %p174 = scmp.ne.s32.totalorder %s162, %s163
      %p175 = scmp.eq.s32.totalorder %s43, 1
      %p176 = por %p174, %p175
      %p178 = scmp.ne.s32.totalorder %s163, %s177
      %p179 = scmp.eq.s32.totalorder %s43, 0
      %p180 = por %p178, %p179
      %s182 = sadd.s32 %s181, 1
      %p185 = scmp.eq.s32.totalorder %s37, 1
      %p186 = scmp.ne.s32.totalorder %s181, %s183
      %p187 = scmp.eq.s32.totalorder %s37, 0
      %p188 = por %p186, %p187
      %p189 = scmp.ne.s32.totalorder %s181, %s183
      %p190 = scmp.eq.s32.totalorder %s42, 1
      %p191 = por %p189, %p190
      %p192 = scmp.ne.s32.totalorder %s183, %s184
      %p193 = scmp.eq.s32.totalorder %s42, 0
      %p194 = por %p192, %p193
      %p195 = scmp.ne.s32.totalorder %s183, %s184
      %p196 = scmp.eq.s32.totalorder %s43, 1
      %p197 = por %p195, %p196
      %p199 = scmp.ne.s32.totalorder %s184, %s198
      %p200 = scmp.eq.s32.totalorder %s43, 0
      %p201 = por %p199, %p200
      %s203 = sadd.s32 %s202, 1
      %p206 = scmp.eq.s32.totalorder %s37, 1
      %p207 = scmp.ne.s32.totalorder %s202, %s204
      %p208 = scmp.eq.s32.totalorder %s37, 0
      %p209 = por %p207, %p208
      %p210 = scmp.ne.s32.totalorder %s202, %s204
      %p211 = scmp.eq.s32.totalorder %s42, 1
      %p212 = por %p210, %p211
      %p213 = scmp.ne.s32.totalorder %s204, %s205
      %p214 = scmp.eq.s32.totalorder %s42, 0
      %p215 = por %p213, %p214
      %p216 = scmp.ne.s32.totalorder %s204, %s205
      %p217 = scmp.eq.s32.totalorder %s43, 1
      %p218 = por %p216, %p217
      %p220 = scmp.ne.s32.totalorder %s205, %s219
      %p221 = scmp.eq.s32.totalorder %s43, 0
      %p222 = por %p220, %p221
      %s224 = sadd.s32 %s223, 1
      %p227 = scmp.eq.s32.totalorder %s37, 1
      %p228 = scmp.ne.s32.totalorder %s223, %s225
      %p229 = scmp.eq.s32.totalorder %s37, 0
      %p230 = por %p228, %p229
      %p231 = scmp.ne.s32.totalorder %s223, %s225
      %p232 = scmp.eq.s32.totalorder %s42, 1
      %p233 = por %p231, %p232
      %p234 = scmp.ne.s32.totalorder %s225, %s226
      %p235 = scmp.eq.s32.totalorder %s42, 0
      %p236 = por %p234, %p235
      %p237 = scmp.ne.s32.totalorder %s225, %s226
      %p238 = scmp.eq.s32.totalorder %s43, 1
      %p239 = por %p237, %p238
      %p241 = scmp.ne.s32.totalorder %s226, %s240
      %p242 = scmp.eq.s32.totalorder %s43, 0
      %p243 = por %p241, %p242
      %s245 = sadd.s32 %s244, 1
      %p248 = scmp.eq.s32.totalorder %s37, 1
      %p249 = scmp.ne.s32.totalorder %s244, %s246
      %p250 = scmp.eq.s32.totalorder %s37, 0
      %p251 = por %p249, %p250
      %p252 = scmp.ne.s32.totalorder %s244, %s246
      %p253 = scmp.eq.s32.totalorder %s42, 1
      %p254 = por %p252, %p253
      %p255 = scmp.ne.s32.totalorder %s246, %s247
      %p256 = scmp.eq.s32.totalorder %s42, 0
      %p257 = por %p255, %p256
      %p258 = scmp.ne.s32.totalorder %s246, %s247
      %p259 = scmp.eq.s32.totalorder %s43, 1
      %p260 = por %p258, %p259
      %p262 = scmp.ne.s32.totalorder %s247, %s261
      %p263 = scmp.eq.s32.totalorder %s43, 0
      %p264 = por %p262, %p263
      %s266 = sadd.s32 %s265, 1
      %p269 = scmp.eq.s32.totalorder %s37, 1
      %p270 = scmp.ne.s32.totalorder %s265, %s267
      %p271 = scmp.eq.s32.totalorder %s37, 0
      %p272 = por %p270, %p271
      %p273 = scmp.ne.s32.totalorder %s265, %s267
      %p274 = scmp.eq.s32.totalorder %s42, 1
      %p275 = por %p273, %p274
      %p276 = scmp.ne.s32.totalorder %s267, %s268
      %p277 = scmp.eq.s32.totalorder %s42, 0
      %p278 = por %p276, %p277
      %p279 = scmp.ne.s32.totalorder %s267, %s268
      %p280 = scmp.eq.s32.totalorder %s43, 1
      %p281 = por %p279, %p280
      %p283 = scmp.ne.s32.totalorder %s268, %s282
      %p284 = scmp.eq.s32.totalorder %s43, 0
      %p285 = por %p283, %p284
      %s287 = sadd.s32 %s286, 1
      %p290 = scmp.eq.s32.totalorder %s37, 1
      %p291 = scmp.ne.s32.totalorder %s286, %s288
      %p292 = scmp.eq.s32.totalorder %s37, 0
      %p293 = por %p291, %p292
      %p294 = scmp.ne.s32.totalorder %s286, %s288
      %p295 = scmp.eq.s32.totalorder %s42, 1
      %p296 = por %p294, %p295
      %p297 = scmp.ne.s32.totalorder %s288, %s289
      %p298 = scmp.eq.s32.totalorder %s42, 0
      %p299 = por %p297, %p298
      %p300 = scmp.ne.s32.totalorder %s288, %s289
      %p301 = scmp.eq.s32.totalorder %s43, 1
      %p302 = por %p300, %p301
      %p304 = scmp.ne.s32.totalorder %s289, %s303
      %p305 = scmp.eq.s32.totalorder %s43, 0
      %p306 = por %p304, %p305
      %s308 = sadd.s32 %s307, 1
      %p311 = scmp.eq.s32.totalorder %s37, 1
      %p312 = scmp.ne.s32.totalorder %s307, %s309
      %p313 = scmp.eq.s32.totalorder %s37, 0
      %p314 = por %p312, %p313
      %p315 = scmp.ne.s32.totalorder %s307, %s309
      %p316 = scmp.eq.s32.totalorder %s42, 1
      %p317 = por %p315, %p316
      %p318 = scmp.ne.s32.totalorder %s309, %s310
      %p319 = scmp.eq.s32.totalorder %s42, 0
      %p320 = por %p318, %p319
      %p321 = scmp.ne.s32.totalorder %s309, %s310
      %p322 = scmp.eq.s32.totalorder %s43, 1
      %p323 = por %p321, %p322
      %p325 = scmp.ne.s32.totalorder %s310, %s324
      %p326 = scmp.eq.s32.totalorder %s43, 0
      %p327 = por %p325, %p326
      %s329 = sadd.s32 %s328, 1
      %p332 = scmp.eq.s32.totalorder %s37, 1
      %p333 = scmp.ne.s32.totalorder %s328, %s330
      %p334 = scmp.eq.s32.totalorder %s37, 0
      %p335 = por %p333, %p334
      %p336 = scmp.ne.s32.totalorder %s328, %s330
      %p337 = scmp.eq.s32.totalorder %s42, 1
      %p338 = por %p336, %p337
      %p339 = scmp.ne.s32.totalorder %s330, %s331
      %p340 = scmp.eq.s32.totalorder %s42, 0
      %p341 = por %p339, %p340
      %p342 = scmp.ne.s32.totalorder %s330, %s331
      %p343 = scmp.eq.s32.totalorder %s43, 1
      %p344 = por %p342, %p343
      %p346 = scmp.ne.s32.totalorder %s331, %s345
      %p347 = scmp.eq.s32.totalorder %s43, 0
      %p348 = por %p346, %p347
      %s350 = sadd.s32 %s349, 1
      %p353 = scmp.eq.s32.totalorder %s37, 1
      %p354 = scmp.ne.s32.totalorder %s349, %s351
      %p355 = scmp.eq.s32.totalorder %s37, 0
      %p356 = por %p354, %p355
      %p357 = scmp.ne.s32.totalorder %s349, %s351
      %p358 = scmp.eq.s32.totalorder %s42, 1
      %p359 = por %p357, %p358
      %p360 = scmp.ne.s32.totalorder %s351, %s352
      %p361 = scmp.eq.s32.totalorder %s42, 0
      %p362 = por %p360, %p361
      %p363 = scmp.ne.s32.totalorder %s351, %s352
      %p364 = scmp.eq.s32.totalorder %s43, 1
      %p365 = por %p363, %p364
      %p367 = scmp.ne.s32.totalorder %s352, %s366
      %p368 = scmp.eq.s32.totalorder %s43, 0
      %p369 = por %p367, %p368
      %s371 = sadd.s32 %s370, 1
      %p374 = scmp.eq.s32.totalorder %s37, 1
      %p375 = scmp.ne.s32.totalorder %s370, %s372
      %p376 = scmp.eq.s32.totalorder %s37, 0
      %p377 = por %p375, %p376
      %p378 = scmp.ne.s32.totalorder %s370, %s372
      %p379 = scmp.eq.s32.totalorder %s42, 1
      %p380 = por %p378, %p379
      %p381 = scmp.ne.s32.totalorder %s372, %s373
      %p382 = scmp.eq.s32.totalorder %s42, 0
      %p383 = por %p381, %p382
      %p384 = scmp.ne.s32.totalorder %s372, %s373
      %p385 = scmp.eq.s32.totalorder %s43, 1
      %p386 = por %p384, %p385
      %p388 = scmp.ne.s32.totalorder %s373, %s387
      %p389 = scmp.eq.s32.totalorder %s43, 0
      %p390 = por %p388, %p389
      %s392 = sadd.s32 %s391, 1
      %p395 = scmp.eq.s32.totalorder %s37, 1
      %p396 = scmp.ne.s32.totalorder %s391, %s393
      %p397 = scmp.eq.s32.totalorder %s37, 0
      %p398 = por %p396, %p397
      %p399 = scmp.ne.s32.totalorder %s391, %s393
      %p400 = scmp.eq.s32.totalorder %s42, 1
      %p401 = por %p399, %p400
      %p402 = scmp.ne.s32.totalorder %s393, %s394
      %p403 = scmp.eq.s32.totalorder %s42, 0
      %p404 = por %p402, %p403
      %p405 = scmp.ne.s32.totalorder %s393, %s394
      %p406 = scmp.eq.s32.totalorder %s43, 1
      %p407 = por %p405, %p406
      %p409 = scmp.ne.s32.totalorder %s394, %s408
      %p410 = scmp.eq.s32.totalorder %s43, 0
      %p411 = por %p409, %p410
      %s413 = sadd.s32 %s412, 1
      %p416 = scmp.eq.s32.totalorder %s37, 1
      %p417 = scmp.ne.s32.totalorder %s412, %s414
      %p418 = scmp.eq.s32.totalorder %s37, 0
      %p419 = por %p417, %p418
      %p420 = scmp.ne.s32.totalorder %s412, %s414
      %p421 = scmp.eq.s32.totalorder %s42, 1
      %p422 = por %p420, %p421
      %p423 = scmp.ne.s32.totalorder %s414, %s415
      %p424 = scmp.eq.s32.totalorder %s42, 0
      %p425 = por %p423, %p424
      %p426 = scmp.ne.s32.totalorder %s414, %s415
      %p427 = scmp.eq.s32.totalorder %s43, 1
      %p428 = por %p426, %p427
      %p430 = scmp.ne.s32.totalorder %s415, %s429
      %p431 = scmp.eq.s32.totalorder %s43, 0
      %p432 = por %p430, %p431
      %s434 = sadd.s32 %s433, 1
      %p437 = scmp.eq.s32.totalorder %s37, 1
      %p438 = scmp.ne.s32.totalorder %s433, %s435
      %p439 = scmp.eq.s32.totalorder %s37, 0
      %p440 = por %p438, %p439
      %p441 = scmp.ne.s32.totalorder %s433, %s435
      %p442 = scmp.eq.s32.totalorder %s42, 1
      %p443 = por %p441, %p442
      %p444 = scmp.ne.s32.totalorder %s435, %s436
      %p445 = scmp.eq.s32.totalorder %s42, 0
      %p446 = por %p444, %p445
      %p447 = scmp.ne.s32.totalorder %s435, %s436
      %p448 = scmp.eq.s32.totalorder %s43, 1
      %p449 = por %p447, %p448
      %p451 = scmp.ne.s32.totalorder %s436, %s450
      %p452 = scmp.eq.s32.totalorder %s43, 0
      %p453 = por %p451, %p452
      %s455 = sadd.s32 %s454, 1
      %p458 = scmp.eq.s32.totalorder %s37, 1
      %p459 = scmp.ne.s32.totalorder %s454, %s456
      %p460 = scmp.eq.s32.totalorder %s37, 0
      %p461 = por %p459, %p460
      %p462 = scmp.ne.s32.totalorder %s454, %s456
      %p463 = scmp.eq.s32.totalorder %s42, 1
      %p464 = por %p462, %p463
      %p465 = scmp.ne.s32.totalorder %s456, %s457
      %p466 = scmp.eq.s32.totalorder %s42, 0
      %p467 = por %p465, %p466
      %p468 = scmp.ne.s32.totalorder %s456, %s457
      %p469 = scmp.eq.s32.totalorder %s43, 1
      %p470 = por %p468, %p469
      %p472 = scmp.ne.s32.totalorder %s457, %s471
      %p473 = scmp.eq.s32.totalorder %s43, 0
      %p474 = por %p472, %p473
      %s476 = sadd.s32 %s475, 1
      %p479 = scmp.eq.s32.totalorder %s37, 1
      %p480 = scmp.ne.s32.totalorder %s475, %s477
      %p481 = scmp.eq.s32.totalorder %s37, 0
      %p482 = por %p480, %p481
      %p483 = scmp.ne.s32.totalorder %s475, %s477
      %p484 = scmp.eq.s32.totalorder %s42, 1
      %p485 = por %p483, %p484
      %p486 = scmp.ne.s32.totalorder %s477, %s478
      %p487 = scmp.eq.s32.totalorder %s42, 0
      %p488 = por %p486, %p487
      %p489 = scmp.ne.s32.totalorder %s477, %s478
      %p490 = scmp.eq.s32.totalorder %s43, 1
      %p491 = por %p489, %p490
      %p493 = scmp.ne.s32.totalorder %s478, %s492
      %p494 = scmp.eq.s32.totalorder %s43, 0
      %p495 = por %p493, %p494
      %s497 = sadd.s32 %s496, 1
      %p500 = scmp.eq.s32.totalorder %s37, 1
      %p501 = scmp.ne.s32.totalorder %s496, %s498
      %p502 = scmp.eq.s32.totalorder %s37, 0
      %p503 = por %p501, %p502
      %p504 = scmp.ne.s32.totalorder %s496, %s498
      %p505 = scmp.eq.s32.totalorder %s42, 1
      %p506 = por %p504, %p505
      %p507 = scmp.ne.s32.totalorder %s498, %s499
      %p508 = scmp.eq.s32.totalorder %s42, 0
      %p509 = por %p507, %p508
      %p510 = scmp.ne.s32.totalorder %s498, %s499
      %p511 = scmp.eq.s32.totalorder %s43, 1
      %p512 = por %p510, %p511
      %p514 = scmp.ne.s32.totalorder %s499, %s513
      %p515 = scmp.eq.s32.totalorder %s43, 0
      %p516 = por %p514, %p515
      %s518 = sadd.s32 %s517, 1
      %p521 = scmp.eq.s32.totalorder %s37, 1
      %p522 = scmp.ne.s32.totalorder %s517, %s519
      %p523 = scmp.eq.s32.totalorder %s37, 0
      %p524 = por %p522, %p523
      %p525 = scmp.ne.s32.totalorder %s517, %s519
      %p526 = scmp.eq.s32.totalorder %s42, 1
      %p527 = por %p525, %p526
      %p528 = scmp.ne.s32.totalorder %s519, %s520
      %p529 = scmp.eq.s32.totalorder %s42, 0
      %p530 = por %p528, %p529
      %p531 = scmp.ne.s32.totalorder %s519, %s520
      %p532 = scmp.eq.s32.totalorder %s43, 1
      %p533 = por %p531, %p532
      %p535 = scmp.ne.s32.totalorder %s520, %s534
      %p536 = scmp.eq.s32.totalorder %s43, 0
      %p537 = por %p535, %p536
      %s539 = sadd.s32 %s538, 1
      %p542 = scmp.eq.s32.totalorder %s37, 1
      %p543 = scmp.ne.s32.totalorder %s538, %s540
      %p544 = scmp.eq.s32.totalorder %s37, 0
      %p545 = por %p543, %p544
      %p546 = scmp.ne.s32.totalorder %s538, %s540
      %p547 = scmp.eq.s32.totalorder %s42, 1
      %p548 = por %p546, %p547
      %p549 = scmp.ne.s32.totalorder %s540, %s541
      %p550 = scmp.eq.s32.totalorder %s42, 0
      %p551 = por %p549, %p550
      %p552 = scmp.ne.s32.totalorder %s540, %s541
      %p553 = scmp.eq.s32.totalorder %s43, 1
      %p554 = por %p552, %p553
      %p556 = scmp.ne.s32.totalorder %s541, %s555
      %p557 = scmp.eq.s32.totalorder %s43, 0
      %p558 = por %p556, %p557
      %s560 = sadd.s32 %s559, 1
      %p563 = scmp.eq.s32.totalorder %s37, 1
      %p564 = scmp.ne.s32.totalorder %s559, %s561
      %p565 = scmp.eq.s32.totalorder %s37, 0
      %p566 = por %p564, %p565
      %p567 = scmp.ne.s32.totalorder %s559, %s561
      %p568 = scmp.eq.s32.totalorder %s42, 1
      %p569 = por %p567, %p568
      %p570 = scmp.ne.s32.totalorder %s561, %s562
      %p571 = scmp.eq.s32.totalorder %s42, 0
      %p572 = por %p570, %p571
      %p573 = scmp.ne.s32.totalorder %s561, %s562
      %p574 = scmp.eq.s32.totalorder %s43, 1
      %p575 = por %p573, %p574
      %p577 = scmp.ne.s32.totalorder %s562, %s576
      %p578 = scmp.eq.s32.totalorder %s43, 0
      %p579 = por %p577, %p578
      %s581 = sadd.s32 %s580, 1
      %p584 = scmp.eq.s32.totalorder %s37, 1
      %p585 = scmp.ne.s32.totalorder %s580, %s582
      %p586 = scmp.eq.s32.totalorder %s37, 0
      %p587 = por %p585, %p586
      %p588 = scmp.ne.s32.totalorder %s580, %s582
      %p589 = scmp.eq.s32.totalorder %s42, 1
      %p590 = por %p588, %p589
      %p591 = scmp.ne.s32.totalorder %s582, %s583
      %p592 = scmp.eq.s32.totalorder %s42, 0
      %p593 = por %p591, %p592
      %p594 = scmp.ne.s32.totalorder %s582, %s583
      %p595 = scmp.eq.s32.totalorder %s43, 1
      %p596 = por %p594, %p595
      %p598 = scmp.ne.s32.totalorder %s583, %s597
      %p599 = scmp.eq.s32.totalorder %s43, 0
      %p600 = por %p598, %p599
      %s602 = sadd.s32 %s601, 1
      %p605 = scmp.eq.s32.totalorder %s37, 1
      %p606 = scmp.ne.s32.totalorder %s601, %s603
      %p607 = scmp.eq.s32.totalorder %s37, 0
      %p608 = por %p606, %p607
      %p609 = scmp.ne.s32.totalorder %s601, %s603
      %p610 = scmp.eq.s32.totalorder %s42, 1
      %p611 = por %p609, %p610
      %p612 = scmp.ne.s32.totalorder %s603, %s604
      %p613 = scmp.eq.s32.totalorder %s42, 0
      %p614 = por %p612, %p613
      %p615 = scmp.ne.s32.totalorder %s603, %s604
      %p616 = scmp.eq.s32.totalorder %s43, 1
      %p617 = por %p615, %p616
      %p619 = scmp.ne.s32.totalorder %s604, %s618
      %p620 = scmp.eq.s32.totalorder %s43, 0
      %p621 = por %p619, %p620
      %s622 = ssub.s32 %s37, %s44
      %p623 = scmp.eq.s32.totalorder %s622, 0
      %s625 = sadd.s32 %s624, 1
      %s626 = scalar_select %p623, %s624, %s625
      %p629 = pneg %p623
      %p630 = scmp.eq.s32.totalorder %s37, 1
      %p631 = por %p629, %p630
      %p632 = scmp.ne.s32.totalorder %s624, %s627
      %p633 = scmp.eq.s32.totalorder %s37, 0
      %p634 = por %p632, %p633
      %p635 = scmp.ne.s32.totalorder %s624, %s627
      %p636 = scmp.eq.s32.totalorder %s42, 1
      %p637 = por %p635, %p636
      %p638 = scmp.ne.s32.totalorder %s627, %s628
      %p639 = scmp.eq.s32.totalorder %s42, 0
      %p640 = por %p638, %p639
      %p641 = scmp.ne.s32.totalorder %s627, %s628
      %p642 = scmp.eq.s32.totalorder %s43, 1
      %p643 = por %p641, %p642
      %p645 = scmp.ne.s32.totalorder %s628, %s644
      %p646 = scmp.eq.s32.totalorder %s43, 0
      %p647 = por %p645, %p646
      %p648 = scmp.le.s32.totalorder 1, %s37
      %p649 = scmp.lt.s32.totalorder %s37, 3
      %p650 = pnand %p648, %p649
      %p651 = pneg %p650
      // Predicated region
      $region9: #{latent_regresser_forward.2} parent=5 // pred_check
        _
      $region10: #{latent_regresser_forward.2} parent=5 // pred_check_branch
        %653 = sbr.rel (%p650) target = $region12
      $region11: #{latent_regresser_forward.2} parent=5 // pred_region
        %s654 = ssub.s32 %s37, 1
        // Predicated region
        $region13: #{latent_regresser_forward.2} parent=11 // pred_check
          %p655 = pneg %p110
        $region14: #{latent_regresser_forward.2} parent=11 // pred_check_branch
          %657 = sbr.rel (%p655) target = $region16
        $region15: #{latent_regresser_forward.2} parent=11 // pred_region
          _
        $region16: #{latent_regresser_forward.2} parent=11 // pred_fallthru
          _
        // Predicated region
        $region17: #{latent_regresser_forward.2} parent=11 // pred_check
          %p658 = pneg %p131
        $region18: #{latent_regresser_forward.2} parent=11 // pred_check_branch
          %660 = sbr.rel (%p658) target = $region20
        $region19: #{latent_regresser_forward.2} parent=11 // pred_region
          _
        $region20: #{latent_regresser_forward.2} parent=11 // pred_fallthru
          _
        // Predicated region
        $region21: #{latent_regresser_forward.2} parent=11 // pred_check
          %p661 = pneg %p152
        $region22: #{latent_regresser_forward.2} parent=11 // pred_check_branch
          %663 = sbr.rel (%p661) target = $region24
        $region23: #{latent_regresser_forward.2} parent=11 // pred_region
          _
        $region24: #{latent_regresser_forward.2} parent=11 // pred_fallthru
          _
        // Predicated region
        $region25: #{latent_regresser_forward.2} parent=11 // pred_check
          %p664 = pneg %p173
        $region26: #{latent_regresser_forward.2} parent=11 // pred_check_branch
          %666 = sbr.rel (%p664) target = $region28
        $region27: #{latent_regresser_forward.2} parent=11 // pred_region
          _
        $region28: #{latent_regresser_forward.2} parent=11 // pred_fallthru
          _
        // Predicated region
        $region29: #{latent_regresser_forward.2} parent=11 // pred_check
          %p667 = pneg %p194
        $region30: #{latent_regresser_forward.2} parent=11 // pred_check_branch
          %669 = sbr.rel (%p667) target = $region32
        $region31: #{latent_regresser_forward.2} parent=11 // pred_region
          _
        $region32: #{latent_regresser_forward.2} parent=11 // pred_fallthru
          _
        // Predicated region
        $region33: #{latent_regresser_forward.2} parent=11 // pred_check
          %p670 = pneg %p215
        $region34: #{latent_regresser_forward.2} parent=11 // pred_check_branch
          %672 = sbr.rel (%p670) target = $region36
        $region35: #{latent_regresser_forward.2} parent=11 // pred_region
          _
        $region36: #{latent_regresser_forward.2} parent=11 // pred_fallthru
          _
        // Predicated region
        $region37: #{latent_regresser_forward.2} parent=11 // pred_check
          %p673 = pneg %p236
        $region38: #{latent_regresser_forward.2} parent=11 // pred_check_branch
          %675 = sbr.rel (%p673) target = $region40
        $region39: #{latent_regresser_forward.2} parent=11 // pred_region
          _
        $region40: #{latent_regresser_forward.2} parent=11 // pred_fallthru
          _
        // Predicated region
        $region41: #{latent_regresser_forward.2} parent=11 // pred_check
          %p676 = pneg %p257
        $region42: #{latent_regresser_forward.2} parent=11 // pred_check_branch
          %678 = sbr.rel (%p676) target = $region44
        $region43: #{latent_regresser_forward.2} parent=11 // pred_region
          _
        $region44: #{latent_regresser_forward.2} parent=11 // pred_fallthru
          _
        // Predicated region
        $region45: #{latent_regresser_forward.2} parent=11 // pred_check
          %p679 = pneg %p278
        $region46: #{latent_regresser_forward.2} parent=11 // pred_check_branch
          %681 = sbr.rel (%p679) target = $region48
        $region47: #{latent_regresser_forward.2} parent=11 // pred_region
          %s683 = ssub.s32 4096, 4096
          %684 = vsyncadd [#allocation3], %s683
          %s685 = sshll.u32 [#allocation2], 4
          %s686 = int_to_ptr.vmem [resolvable:$true] %s685
          %691 = dma.hbm_to_vmem [thread:$0]  %s10, 4096, %s686, [#allocation3], 128, 128, 8
        $region48: #{latent_regresser_forward.2} parent=11 // pred_fallthru
          _
        // Predicated region
        $region49: #{latent_regresser_forward.2} parent=11 // pred_check
          %p692 = pneg %p299
        $region50: #{latent_regresser_forward.2} parent=11 // pred_check_branch
          %694 = sbr.rel (%p692) target = $region52
        $region51: #{latent_regresser_forward.2} parent=11 // pred_region
          _
        $region52: #{latent_regresser_forward.2} parent=11 // pred_fallthru
          _
        // Predicated region
        $region53: #{latent_regresser_forward.2} parent=11 // pred_check
          %p695 = pneg %p320
        $region54: #{latent_regresser_forward.2} parent=11 // pred_check_branch
          %697 = sbr.rel (%p695) target = $region56
        $region55: #{latent_regresser_forward.2} parent=11 // pred_region
          %s699 = ssub.s32 4096, 4096
          %700 = vsyncadd [#allocation5], %s699
          %s701 = sshll.u32 [#allocation4], 4
          %s702 = int_to_ptr.vmem [resolvable:$true] %s701
          %707 = dma.hbm_to_vmem [thread:$0]  %s12, 4096, %s702, [#allocation5], 128, 128, 8
        $region56: #{latent_regresser_forward.2} parent=11 // pred_fallthru
          _
        // Predicated region
        $region57: #{latent_regresser_forward.2} parent=11 // pred_check
          %p708 = pneg %p341
        $region58: #{latent_regresser_forward.2} parent=11 // pred_check_branch
          %710 = sbr.rel (%p708) target = $region60
        $region59: #{latent_regresser_forward.2} parent=11 // pred_region
          %s712 = ssub.s32 4096, 4096
          %713 = vsyncadd [#allocation5], %s712
          %s714 = sshll.u32 [#allocation6], 4
          %s715 = int_to_ptr.vmem [resolvable:$true] %s714
          %720 = dma.hbm_to_vmem [thread:$0]  %s13, 4096, %s715, [#allocation5], 128, 128, 8
        $region60: #{latent_regresser_forward.2} parent=11 // pred_fallthru
          _
        // Predicated region
        $region61: #{latent_regresser_forward.2} parent=11 // pred_check
          %p721 = pneg %p362
        $region62: #{latent_regresser_forward.2} parent=11 // pred_check_branch
          %723 = sbr.rel (%p721) target = $region64
        $region63: #{latent_regresser_forward.2} parent=11 // pred_region
          _
        $region64: #{latent_regresser_forward.2} parent=11 // pred_fallthru
          _
        // Predicated region
        $region65: #{latent_regresser_forward.2} parent=11 // pred_check
          %p724 = pneg %p383
        $region66: #{latent_regresser_forward.2} parent=11 // pred_check_branch
          %726 = sbr.rel (%p724) target = $region68
        $region67: #{latent_regresser_forward.2} parent=11 // pred_region
          %s728 = ssub.s32 4096, 4096
          %729 = vsyncadd [#allocation8], %s728
          %s730 = sshll.u32 [#allocation7], 4
          %s731 = int_to_ptr.vmem [resolvable:$true] %s730
          %736 = dma.hbm_to_vmem [thread:$0]  %s15, 4096, %s731, [#allocation8], 128, 128, 8
        $region68: #{latent_regresser_forward.2} parent=11 // pred_fallthru
          _
        // Predicated region
        $region69: #{latent_regresser_forward.2} parent=11 // pred_check
          %p737 = pneg %p404
        $region70: #{latent_regresser_forward.2} parent=11 // pred_check_branch
          %739 = sbr.rel (%p737) target = $region72
        $region71: #{latent_regresser_forward.2} parent=11 // pred_region
          _
        $region72: #{latent_regresser_forward.2} parent=11 // pred_fallthru
          _
        // Predicated region
        $region73: #{latent_regresser_forward.2} parent=11 // pred_check
          %p740 = pneg %p425
        $region74: #{latent_regresser_forward.2} parent=11 // pred_check_branch
          %742 = sbr.rel (%p740) target = $region76
        $region75: #{latent_regresser_forward.2} parent=11 // pred_region
          _
        $region76: #{latent_regresser_forward.2} parent=11 // pred_fallthru
          _
        // Predicated region
        $region77: #{latent_regresser_forward.2} parent=11 // pred_check
          %p743 = pneg %p446
        $region78: #{latent_regresser_forward.2} parent=11 // pred_check_branch
          %745 = sbr.rel (%p743) target = $region80
        $region79: #{latent_regresser_forward.2} parent=11 // pred_region
          _
        $region80: #{latent_regresser_forward.2} parent=11 // pred_fallthru
          _
        // Predicated region
        $region81: #{latent_regresser_forward.2} parent=11 // pred_check
          %p746 = pneg %p467
        $region82: #{latent_regresser_forward.2} parent=11 // pred_check_branch
          %748 = sbr.rel (%p746) target = $region84
        $region83: #{latent_regresser_forward.2} parent=11 // pred_region
          _
        $region84: #{latent_regresser_forward.2} parent=11 // pred_fallthru
          _
        // Predicated region
        $region85: #{latent_regresser_forward.2} parent=11 // pred_check
          %p749 = pneg %p488
        $region86: #{latent_regresser_forward.2} parent=11 // pred_check_branch
          %751 = sbr.rel (%p749) target = $region88
        $region87: #{latent_regresser_forward.2} parent=11 // pred_region
          %s753 = ssub.s32 16384, 16384
          %754 = vsyncadd [#allocation8], %s753
          %s755 = sshll.u32 [#allocation9], 4
          %s756 = int_to_ptr.vmem [resolvable:$true] %s755
          %761 = dma.hbm_to_vmem [thread:$0]  %s20, 16384, %s756, [#allocation8], 512, 512, 32
        $region88: #{latent_regresser_forward.2} parent=11 // pred_fallthru
          _
        // Predicated region
        $region89: #{latent_regresser_forward.2} parent=11 // pred_check
          %p762 = pneg %p509
        $region90: #{latent_regresser_forward.2} parent=11 // pred_check_branch
          %764 = sbr.rel (%p762) target = $region92
        $region91: #{latent_regresser_forward.2} parent=11 // pred_region
          _
        $region92: #{latent_regresser_forward.2} parent=11 // pred_fallthru
          _
        // Predicated region
        $region93: #{latent_regresser_forward.2} parent=11 // pred_check
          %p765 = pneg %p530
        $region94: #{latent_regresser_forward.2} parent=11 // pred_check_branch
          %767 = sbr.rel (%p765) target = $region96
        $region95: #{latent_regresser_forward.2} parent=11 // pred_region
          %s769 = ssub.s32 16384, 16384
          %770 = vsyncadd [#allocation11], %s769
          %s771 = sshll.u32 [#allocation10], 4
          %s772 = int_to_ptr.vmem [resolvable:$true] %s771
          %777 = dma.hbm_to_vmem [thread:$0]  %s22, 16384, %s772, [#allocation11], 128, 128, 8
        $region96: #{latent_regresser_forward.2} parent=11 // pred_fallthru
          _
        // Predicated region
        $region97: #{latent_regresser_forward.2} parent=11 // pred_check
          %p778 = pneg %p551
        $region98: #{latent_regresser_forward.2} parent=11 // pred_check_branch
          %780 = sbr.rel (%p778) target = $region100
        $region99: #{latent_regresser_forward.2} parent=11 // pred_region
          _
        $region100: #{latent_regresser_forward.2} parent=11 // pred_fallthru
          _
        // Predicated region
        $region101: #{latent_regresser_forward.2} parent=11 // pred_check
          %p781 = pneg %p572
        $region102: #{latent_regresser_forward.2} parent=11 // pred_check_branch
          %783 = sbr.rel (%p781) target = $region104
        $region103: #{latent_regresser_forward.2} parent=11 // pred_region
          _
        $region104: #{latent_regresser_forward.2} parent=11 // pred_fallthru
          _
        // Predicated region
        $region105: #{latent_regresser_forward.2} parent=11 // pred_check
          %p784 = pneg %p593
        $region106: #{latent_regresser_forward.2} parent=11 // pred_check_branch
          %786 = sbr.rel (%p784) target = $region108
        $region107: #{latent_regresser_forward.2} parent=11 // pred_region
          _
        $region108: #{latent_regresser_forward.2} parent=11 // pred_fallthru
          _
        // Predicated region
        $region109: #{latent_regresser_forward.2} parent=11 // pred_check
          %p787 = pneg %p614
        $region110: #{latent_regresser_forward.2} parent=11 // pred_check_branch
          %789 = sbr.rel (%p787) target = $region112
        $region111: #{latent_regresser_forward.2} parent=11 // pred_region
          _
        $region112: #{latent_regresser_forward.2} parent=11 // pred_fallthru
          _
      $region12: #{latent_regresser_forward.2} parent=5 // pred_fallthru
        _
      %p790 = scmp.lt.s32.totalorder %s37, 2
      // Predicated region
      $region113: #{latent_regresser_forward.2} parent=5 // pred_check
        %p791 = pneg %p790
      $region114: #{latent_regresser_forward.2} parent=5 // pred_check_branch
        %793 = sbr.rel (%p791) target = $region116
      $region115: #{latent_regresser_forward.2} parent=5 // pred_region
        // Predicated region
        $region117: #{latent_regresser_forward.2} parent=115 // pred_check
          %p794 = pneg %p57
        $region118: #{latent_regresser_forward.2} parent=115 // pred_check_branch
          %796 = sbr.rel (%p794) target = $region120
        $region119: #{latent_regresser_forward.2} parent=115 // pred_region
          %p797 = scmp.lt.s32.totalorder %s37, 1
          %s798 = scalar_select %p797, %s37, 1
          %s799 = smul.addr %s798, 2
          %s800 = smul.addr %s799, 8
          %s801 = scalar_lea.vmem %s0, %s800
        $region120: #{latent_regresser_forward.2} parent=115 // pred_fallthru
          _
        // Predicated region
        $region121: #{latent_regresser_forward.2} parent=115 // pred_check
          %p802 = pneg %p83
        $region122: #{latent_regresser_forward.2} parent=115 // pred_check_branch
          %804 = sbr.rel (%p802) target = $region124
        $region123: #{latent_regresser_forward.2} parent=115 // pred_region
          %p805 = scmp.lt.s32.totalorder %s37, 1
          %s806 = scalar_select %p805, %s37, 1
          %s807 = smul.addr %s806, 6
          %s808 = smul.addr %s807, 8
          %s809 = scalar_lea.vmem %s1, %s808
        $region124: #{latent_regresser_forward.2} parent=115 // pred_fallthru
          _
      $region116: #{latent_regresser_forward.2} parent=5 // pred_fallthru
        _
      %p810 = scmp.le.s32.totalorder 1, %s37
      %p811 = scmp.lt.s32.totalorder %s37, 3
      %p812 = pnand %p810, %p811
      %p813 = pneg %p812
      // Predicated region
      $region125: #{latent_regresser_forward.2} parent=5 // pred_check
        _
      $region126: #{latent_regresser_forward.2} parent=5 // pred_check_branch
        %815 = sbr.rel (%p812) target = $region128
      $region127: #{latent_regresser_forward.2} parent=5 // pred_region
        %s816 = ssub.s32 %s37, 1
        // Predicated region
        $region129: #{latent_regresser_forward.2} parent=127 // pred_check
          %p817 = pneg %p278
        $region130: #{latent_regresser_forward.2} parent=127 // pred_check_branch
          %819 = sbr.rel (%p817) target = $region132
        $region131: #{latent_regresser_forward.2} parent=127 // pred_region
          %820 = dma.done [#allocation3], 4096
        $region132: #{latent_regresser_forward.2} parent=127 // pred_fallthru
          _
        // Predicated region
        $region133: #{latent_regresser_forward.2} parent=127 // pred_check
          %p821 = pneg %p320
        $region134: #{latent_regresser_forward.2} parent=127 // pred_check_branch
          %823 = sbr.rel (%p821) target = $region136
        $region135: #{latent_regresser_forward.2} parent=127 // pred_region
          %824 = dma.done [#allocation5], 4096
        $region136: #{latent_regresser_forward.2} parent=127 // pred_fallthru
          _
        // Predicated region
        $region137: #{latent_regresser_forward.2} parent=127 // pred_check
          %p825 = pneg %p341
        $region138: #{latent_regresser_forward.2} parent=127 // pred_check_branch
          %827 = sbr.rel (%p825) target = $region140
        $region139: #{latent_regresser_forward.2} parent=127 // pred_region
          %828 = dma.done [#allocation5], 4096
        $region140: #{latent_regresser_forward.2} parent=127 // pred_fallthru
          _
        // Predicated region
        $region141: #{latent_regresser_forward.2} parent=127 // pred_check
          %p829 = pneg %p383
        $region142: #{latent_regresser_forward.2} parent=127 // pred_check_branch
          %831 = sbr.rel (%p829) target = $region144
        $region143: #{latent_regresser_forward.2} parent=127 // pred_region
          %832 = dma.done [#allocation8], 4096
        $region144: #{latent_regresser_forward.2} parent=127 // pred_fallthru
          _
        // Predicated region
        $region145: #{latent_regresser_forward.2} parent=127 // pred_check
          %p833 = pneg %p488
        $region146: #{latent_regresser_forward.2} parent=127 // pred_check_branch
          %835 = sbr.rel (%p833) target = $region148
        $region147: #{latent_regresser_forward.2} parent=127 // pred_region
          %836 = dma.done [#allocation8], 16384
        $region148: #{latent_regresser_forward.2} parent=127 // pred_fallthru
          _
        // Predicated region
        $region149: #{latent_regresser_forward.2} parent=127 // pred_check
          %p837 = pneg %p530
        $region150: #{latent_regresser_forward.2} parent=127 // pred_check_branch
          %839 = sbr.rel (%p837) target = $region152
        $region151: #{latent_regresser_forward.2} parent=127 // pred_region
          %840 = dma.done [#allocation11], 16384
        $region152: #{latent_regresser_forward.2} parent=127 // pred_fallthru
          _
        %p841 = scmp.lt.s32.totalorder %s42, 1
        %s842 = scalar_select %p841, %s42, 1
        %s843 = smul.addr %s842, 2
        %s844 = smul.addr %s843, 8
        %s845 = scalar_lea.vmem %s0, %s844
        %p846 = pneg %p63
        %p847 = pneg %p60
        %p848 = scmp.lt.s32.totalorder %s42, 1
        %s849 = scalar_select %p848, %s42, 1
        %s850 = smul.addr %s849, 6
        %s851 = smul.addr %s850, 8
        %s852 = scalar_lea.vmem %s1, %s851
        %p853 = pneg %p89
        %p854 = pneg %p86
        %p855 = pneg %p110
        %p856 = pneg %p107
        %p857 = pneg %p131
        %p858 = pneg %p128
        %p859 = pneg %p152
        %p860 = pneg %p149
        %p861 = pneg %p173
        %p862 = pneg %p170
        %p863 = pneg %p194
        %p864 = pneg %p191
        %p865 = pneg %p215
        %p866 = pneg %p212
        %p867 = pneg %p236
        %p868 = pneg %p233
        %p869 = pneg %p257
        %p870 = pneg %p254
        %p871 = pneg %p278
        %p872 = pneg %p275
        %p873 = pneg %p299
        %p874 = pneg %p296
        %p875 = pneg %p320
        %p876 = pneg %p317
        %p877 = pneg %p341
        %p878 = pneg %p338
        %p879 = pneg %p362
        %p880 = pneg %p359
        %p881 = pneg %p383
        %p882 = pneg %p380
        %p883 = pneg %p404
        %p884 = pneg %p401
        %p885 = pneg %p425
        %p886 = pneg %p422
        %p887 = pneg %p446
        %p888 = pneg %p443
        %p889 = pneg %p467
        %p890 = pneg %p464
        %p891 = pneg %p488
        %p892 = pneg %p485
        %p893 = pneg %p509
        %p894 = pneg %p506
        %p895 = pneg %p530
        %p896 = pneg %p527
        %p897 = pneg %p551
        %p898 = pneg %p548
        %p899 = pneg %p572
        %p900 = pneg %p569
        %p901 = pneg %p593
        %p902 = pneg %p590
        %p903 = pneg %p614
        %p904 = pneg %p611
        %p905 = pneg %p640
        %p906 = pneg %p637
        %p907 = scmp.lt.s32.totalorder %s42, 1
        %s908 = scalar_select %p907, %s42, 1
        %s909 = smul.addr %s908, 2
        %s910 = smul.addr %s909, 8
        %s911 = scalar_lea.vmem %s27, %s910
        %p912 = scmp.lt.s32.totalorder %s42, 1
        %s913 = scalar_select %p912, %s42, 1
        %s914 = smul.addr %s913, 2
        %s915 = smul.addr %s914, 8
        %s916 = scalar_lea.vmem %s0, %s915
        %p917 = scmp.lt.s32.totalorder %s42, 1
        %s918 = scalar_select %p917, %s42, 1
        %s919 = smul.addr %s918, 6
        %s920 = smul.addr %s919, 8
        %s921 = scalar_lea.vmem %s1, %s920
        %p922 = scmp.lt.s32.totalorder %s42, 1
        %s923 = scalar_select %p922, %s42, 1
        %s924 = smul.addr %s923, 2
        %s925 = smul.addr %s924, 8
        %s926 = scalar_lea.vmem %s27, %s925
        %v928 = vld [vmem:[%s916] sm:$0xff]
        %v929 = vld [vmem:[%s916 + $0x8] sm:$0xff]
        %v930 = vld [vmem:[%s921] sm:$0xff]
        %v931 = vld [vmem:[%s921 + $0x8] sm:$0xff]
        %v932 = vld [vmem:[%s921 + $0x10] sm:$0xff]
        %v933 = vld [vmem:[%s921 + $0x18] sm:$0xff]
        %v934 = vld [vmem:[%s921 + $0x20] sm:$0xff]
        %v935 = vld [vmem:[%s921 + $0x28] sm:$0xff]
        %v936 = vld [vmem:[%s2] sm:$0xff]
        %v937 = vld [vmem:[%s2 + $0x8] sm:$0xff]
        %v938 = vld [vmem:[%s3] sm:$0xff]
        %v939 = vld [vmem:[%s3 + $0x8] sm:$0xff]
        %v940 = vld [vmem:[%s3 + $0x10] sm:$0xff]
        %v941 = vld [vmem:[%s3 + $0x18] sm:$0xff]
        %v942 = vld [vmem:[%s3 + $0x20] sm:$0xff]
        %v943 = vld [vmem:[%s3 + $0x28] sm:$0xff]
        %v944 = vadd.f32 %v928, %v936
        %v945 = vadd.f32 %v929, %v937
        %v946 = vld [vmem:[%s4] sm:$0x3]
        %v947 = vld [vmem:[%s5] sm:$0x3]
        %v948 = vadd.f32 %v944, %v945
        %949 = vadd.xlane.f32.xlu0 %v948
        %v950 = vpop.xlane.xlu0 %949
        %v951 = vrcp.pop 256.0
        %v952 = vmul.f32 %v950, %v951
        %v953 = vsub.f32 %v944, %v952
        %v954 = vsub.f32 %v945, %v952
        %v955 = vmul.f32 %v953, %v953
        %v956 = vmul.f32 %v954, %v954
        %v957 = vadd.f32 %v955, %v956
        %958 = vadd.xlane.f32.xlu0 %v957
        %v959 = vpop.xlane.xlu0 %958
        %v960 = vmul.f32 %v959, %v951
        %v961 = vadd.f32 %v960, 1e-06
        %v962 = vrsqrt.pop %v961
        %v963 = vmul.f32 %v953, %v962
        %v964 = vmul.f32 %v954, %v962
        %v966 = vlaneseq
        %v967 = vshrl.u32 %v966, 7
        %v968 = vsub.s32 0, %v967
        %v969 = vrot.slane %v946, %v968
        %v970 = vlaneseq
        %v971 = vshrl.u32 %v970, 7
        %v972 = vsub.s32 1, %v971
        %v973 = vrot.slane %v946, %v972
        %v976 = vmul.f32 %v963, %v969
        %v977 = vmul.f32 %v964, %v973
        %v979 = vlaneseq
        %v980 = vshrl.u32 %v979, 7
        %v981 = vsub.s32 0, %v980
        %v982 = vrot.slane %v947, %v981
        %v983 = vlaneseq
        %v984 = vshrl.u32 %v983, 7
        %v985 = vsub.s32 1, %v984
        %v986 = vrot.slane %v947, %v985
        %v989 = vadd.f32 %v976, %v982
        %v990 = vadd.f32 %v977, %v986
        %v991 = vpack.c.bf16 %v989, %v989
        %v992 = vpack.c.bf16 %v990, %v990
        %v993 = vadd.f32 %v930, %v938
        %v994 = vadd.f32 %v931, %v939
        %v995 = vadd.f32 %v932, %v940
        %v996 = vadd.f32 %v933, %v941
        %v997 = vadd.f32 %v934, %v942
        %v998 = vadd.f32 %v935, %v943
        %v999 = vld [vmem:[%s6] sm:$0x3]
        %v1000 = vld [vmem:[%s7] sm:$0x3]
        %v1001 = vadd.f32 %v993, %v994
        %1002 = vadd.xlane.f32.xlu0 %v1001
        %v1003 = vpop.xlane.xlu0 %1002
        %v1004 = vadd.f32 %v995, %v996
        %1005 = vadd.xlane.f32.xlu0 %v1004
        %v1006 = vpop.xlane.xlu0 %1005
        %v1007 = vadd.f32 %v997, %v998
        %1008 = vadd.xlane.f32.xlu0 %v1007
        %v1009 = vpop.xlane.xlu0 %1008
        %v1010 = vmul.f32 %v1003, %v951
        %v1011 = vmul.f32 %v1006, %v951
        %v1012 = vmul.f32 %v1009, %v951
        %v1013 = vsub.f32 %v993, %v1010
        %v1014 = vsub.f32 %v994, %v1010
        %v1015 = vsub.f32 %v995, %v1011
        %v1016 = vsub.f32 %v996, %v1011
        %v1017 = vsub.f32 %v997, %v1012
        %v1018 = vsub.f32 %v998, %v1012
        %v1019 = vmul.f32 %v1013, %v1013
        %v1020 = vmul.f32 %v1014, %v1014
        %v1021 = vmul.f32 %v1015, %v1015
        %v1022 = vmul.f32 %v1016, %v1016
        %v1023 = vmul.f32 %v1017, %v1017
        %v1024 = vmul.f32 %v1018, %v1018
        %v1025 = vadd.f32 %v1019, %v1020
        %1026 = vadd.xlane.f32.xlu0 %v1025
        %v1027 = vpop.xlane.xlu0 %1026
        %v1028 = vadd.f32 %v1021, %v1022
        %1029 = vadd.xlane.f32.xlu0 %v1028
        %v1030 = vpop.xlane.xlu0 %1029
        %v1031 = vadd.f32 %v1023, %v1024
        %1032 = vadd.xlane.f32.xlu0 %v1031
        %v1033 = vpop.xlane.xlu0 %1032
        %v1034 = vmul.f32 %v1027, %v951
        %v1035 = vmul.f32 %v1030, %v951
        %v1036 = vmul.f32 %v1033, %v951
        %v1037 = vadd.f32 %v1034, 1e-06
        %v1038 = vadd.f32 %v1035, 1e-06
        %v1039 = vadd.f32 %v1036, 1e-06
        %v1040 = vrsqrt.pop %v1037
        %v1041 = vrsqrt.pop %v1038
        %v1042 = vrsqrt.pop %v1039
        %v1043 = vmul.f32 %v1013, %v1040
        %v1044 = vmul.f32 %v1014, %v1040
        %v1045 = vmul.f32 %v1015, %v1041
        %v1046 = vmul.f32 %v1016, %v1041
        %v1047 = vmul.f32 %v1017, %v1042
        %v1048 = vmul.f32 %v1018, %v1042
        %v1050 = vlaneseq
        %v1051 = vshrl.u32 %v1050, 7
        %v1052 = vsub.s32 0, %v1051
        %v1053 = vrot.slane %v999, %v1052
        %v1054 = vlaneseq
        %v1055 = vshrl.u32 %v1054, 7
        %v1056 = vsub.s32 1, %v1055
        %v1057 = vrot.slane %v999, %v1056
        %v1060 = vmul.f32 %v1043, %v1053
        %v1061 = vmul.f32 %v1044, %v1057
        %v1062 = vmul.f32 %v1045, %v1053
        %v1063 = vmul.f32 %v1046, %v1057
        %v1064 = vmul.f32 %v1047, %v1053
        %v1065 = vmul.f32 %v1048, %v1057
        %v1067 = vlaneseq
        %v1068 = vshrl.u32 %v1067, 7
        %v1069 = vsub.s32 0, %v1068
        %v1070 = vrot.slane %v1000, %v1069
        %v1071 = vlaneseq
        %v1072 = vshrl.u32 %v1071, 7
        %v1073 = vsub.s32 1, %v1072
        %v1074 = vrot.slane %v1000, %v1073
        %v1077 = vadd.f32 %v1060, %v1070
        %v1078 = vadd.f32 %v1061, %v1074
        %v1079 = vadd.f32 %v1062, %v1070
        %v1080 = vadd.f32 %v1063, %v1074
        %v1081 = vadd.f32 %v1064, %v1070
        %v1082 = vadd.f32 %v1065, %v1074
        %v1083 = vpack.c.bf16 %v1079, %v1077
        %v1084 = vpack.c.bf16 %v1080, %v1078
        %v1085 = vpack.c.bf16 %v1081, %v1081
        %v1086 = vpack.c.bf16 %v1082, %v1082
        %v1087 = vld [vmem:[%s8] sm:$0x3]
        %v1088 = vld [vmem:[%s9] sm:$0x3]
        %v1089 = vadd.f32 %v930, %v931
        %1090 = vadd.xlane.f32.xlu0 %v1089
        %v1091 = vpop.xlane.xlu0 %1090
        %v1092 = vadd.f32 %v932, %v933
        %1093 = vadd.xlane.f32.xlu0 %v1092
        %v1094 = vpop.xlane.xlu0 %1093
        %v1095 = vadd.f32 %v934, %v935
        %1096 = vadd.xlane.f32.xlu0 %v1095
        %v1097 = vpop.xlane.xlu0 %1096
        %v1098 = vmul.f32 %v1091, %v951
        %v1099 = vmul.f32 %v1094, %v951
        %v1100 = vmul.f32 %v1097, %v951
        %v1101 = vsub.f32 %v930, %v1098
        %v1102 = vsub.f32 %v931, %v1098
        %v1103 = vsub.f32 %v932, %v1099
        %v1104 = vsub.f32 %v933, %v1099
        %v1105 = vsub.f32 %v934, %v1100
        %v1106 = vsub.f32 %v935, %v1100
        %v1107 = vmul.f32 %v1101, %v1101
        %v1108 = vmul.f32 %v1102, %v1102
        %v1109 = vmul.f32 %v1103, %v1103
        %v1110 = vmul.f32 %v1104, %v1104
        %v1111 = vmul.f32 %v1105, %v1105
        %v1112 = vmul.f32 %v1106, %v1106
        %v1113 = vadd.f32 %v1107, %v1108
        %1114 = vadd.xlane.f32.xlu0 %v1113
        %v1115 = vpop.xlane.xlu0 %1114
        %v1116 = vadd.f32 %v1109, %v1110
        %1117 = vadd.xlane.f32.xlu0 %v1116
        %v1118 = vpop.xlane.xlu0 %1117
        %v1119 = vadd.f32 %v1111, %v1112
        %1120 = vadd.xlane.f32.xlu0 %v1119
        %v1121 = vpop.xlane.xlu0 %1120
        %v1122 = vmul.f32 %v1115, %v951
        %v1123 = vmul.f32 %v1118, %v951
        %v1124 = vmul.f32 %v1121, %v951
        %v1125 = vadd.f32 %v1122, 1e-06
        %v1126 = vadd.f32 %v1123, 1e-06
        %v1127 = vadd.f32 %v1124, 1e-06
        %v1128 = vrsqrt.pop %v1125
        %v1129 = vrsqrt.pop %v1126
        %v1130 = vrsqrt.pop %v1127
        %v1131 = vmul.f32 %v1101, %v1128
        %v1132 = vmul.f32 %v1102, %v1128
        %v1133 = vmul.f32 %v1103, %v1129
        %v1134 = vmul.f32 %v1104, %v1129
        %v1135 = vmul.f32 %v1105, %v1130
        %v1136 = vmul.f32 %v1106, %v1130
        %v1138 = vlaneseq
        %v1139 = vshrl.u32 %v1138, 7
        %v1140 = vsub.s32 0, %v1139
        %v1141 = vrot.slane %v1087, %v1140
        %v1142 = vlaneseq
        %v1143 = vshrl.u32 %v1142, 7
        %v1144 = vsub.s32 1, %v1143
        %v1145 = vrot.slane %v1087, %v1144
        %v1148 = vmul.f32 %v1131, %v1141
        %v1149 = vmul.f32 %v1132, %v1145
        %v1150 = vmul.f32 %v1133, %v1141
        %v1151 = vmul.f32 %v1134, %v1145
        %v1152 = vmul.f32 %v1135, %v1141
        %v1153 = vmul.f32 %v1136, %v1145
        %v1155 = vlaneseq
        %v1156 = vshrl.u32 %v1155, 7
        %v1157 = vsub.s32 0, %v1156
        %v1158 = vrot.slane %v1088, %v1157
        %v1159 = vlaneseq
        %v1160 = vshrl.u32 %v1159, 7
        %v1161 = vsub.s32 1, %v1160
        %v1162 = vrot.slane %v1088, %v1161
        %v1165 = vadd.f32 %v1148, %v1158
        %v1166 = vadd.f32 %v1149, %v1162
        %v1167 = vadd.f32 %v1150, %v1158
        %v1168 = vadd.f32 %v1151, %v1162
        %v1169 = vadd.f32 %v1152, %v1158
        %v1170 = vadd.f32 %v1153, %v1162
        %v1171 = vpack.c.bf16 %v1167, %v1165
        %v1172 = vpack.c.bf16 %v1168, %v1166
        %v1173 = vpack.c.bf16 %v1169, %v1169
        %v1174 = vpack.c.bf16 %v1170, %v1170
        %v1175 = vld [vmem:[#allocation2] sm:$0xff]
        %v1176 = vld [vmem:[#allocation2 + $0x8] sm:$0xff]
        %v1177 = vld [vmem:[#allocation2 + $0x10] sm:$0xff]
        %v1178 = vld [vmem:[#allocation2 + $0x18] sm:$0xff]
        %v1179 = vld [vmem:[#allocation2 + $0x20] sm:$0xff]
        %v1180 = vld [vmem:[#allocation2 + $0x28] sm:$0xff]
        %v1181 = vld [vmem:[#allocation2 + $0x30] sm:$0xff]
        %v1182 = vld [vmem:[#allocation2 + $0x38] sm:$0xff]
        %v1183 = vld [vmem:[#allocation2 + $0x40] sm:$0xff]
        %v1184 = vld [vmem:[#allocation2 + $0x48] sm:$0xff]
        %v1185 = vld [vmem:[#allocation2 + $0x50] sm:$0xff]
        %v1186 = vld [vmem:[#allocation2 + $0x58] sm:$0xff]
        %v1187 = vld [vmem:[#allocation2 + $0x60] sm:$0xff]
        %v1188 = vld [vmem:[#allocation2 + $0x68] sm:$0xff]
        %v1189 = vld [vmem:[#allocation2 + $0x70] sm:$0xff]
        %v1190 = vld [vmem:[#allocation2 + $0x78] sm:$0xff]
        %v1191 = vld [vmem:[#allocation2 + $0x80] sm:$0xff]
        %v1192 = vld [vmem:[#allocation2 + $0x88] sm:$0xff]
        %v1193 = vld [vmem:[#allocation2 + $0x90] sm:$0xff]
        %v1194 = vld [vmem:[#allocation2 + $0x98] sm:$0xff]
        %v1195 = vld [vmem:[#allocation2 + $0xa0] sm:$0xff]
        %v1196 = vld [vmem:[#allocation2 + $0xa8] sm:$0xff]
        %v1197 = vld [vmem:[#allocation2 + $0xb0] sm:$0xff]
        %v1198 = vld [vmem:[#allocation2 + $0xb8] sm:$0xff]
        %v1199 = vld [vmem:[#allocation2 + $0xc0] sm:$0xff]
        %v1200 = vld [vmem:[#allocation2 + $0xc8] sm:$0xff]
        %v1201 = vld [vmem:[#allocation2 + $0xd0] sm:$0xff]
        %v1202 = vld [vmem:[#allocation2 + $0xd8] sm:$0xff]
        %v1203 = vld [vmem:[#allocation2 + $0xe0] sm:$0xff]
        %v1204 = vld [vmem:[#allocation2 + $0xe8] sm:$0xff]
        %v1205 = vld [vmem:[#allocation2 + $0xf0] sm:$0xff]
        %v1206 = vld [vmem:[#allocation2 + $0xf8] sm:$0xff]
        %v1207 = vld [vmem:[%s11] sm:$0x3]
        %v1209 = vlaneseq
        %v1210 = vshrl.u32 %v1209, 7
        %v1211 = vsub.s32 0, %v1210
        %v1212 = vrot.slane %v1207, %v1211
        %v1213 = vlaneseq
        %v1214 = vshrl.u32 %v1213, 7
        %v1215 = vsub.s32 1, %v1214
        %v1216 = vrot.slane %v1207, %v1215
        %v1251 = vunpack.c.l.b16 %v1175
        %v1252 = vunpack.c.h.b16 %v1175
        %v1253 = vunpack.c.l.b16 %v1176
        %v1254 = vunpack.c.h.b16 %v1176
        %v1255 = vunpack.c.l.b16 %v1177
        %v1256 = vunpack.c.h.b16 %v1177
        %v1257 = vunpack.c.l.b16 %v1178
        %v1258 = vunpack.c.h.b16 %v1178
        %v1259 = vunpack.c.l.b16 %v1179
        %v1260 = vunpack.c.h.b16 %v1179
        %v1261 = vunpack.c.l.b16 %v1180
        %v1262 = vunpack.c.h.b16 %v1180
        %v1263 = vunpack.c.l.b16 %v1181
        %v1264 = vunpack.c.h.b16 %v1181
        %v1265 = vunpack.c.l.b16 %v1182
        %v1266 = vunpack.c.h.b16 %v1182
        %v1267 = vunpack.c.l.b16 %v1183
        %v1268 = vunpack.c.h.b16 %v1183
        %v1269 = vunpack.c.l.b16 %v1184
        %v1270 = vunpack.c.h.b16 %v1184
        %v1271 = vunpack.c.l.b16 %v1185
        %v1272 = vunpack.c.h.b16 %v1185
        %v1273 = vunpack.c.l.b16 %v1186
        %v1274 = vunpack.c.h.b16 %v1186
        %v1275 = vunpack.c.l.b16 %v1187
        %v1276 = vunpack.c.h.b16 %v1187
        %v1277 = vunpack.c.l.b16 %v1188
        %v1278 = vunpack.c.h.b16 %v1188
        %v1279 = vunpack.c.l.b16 %v1189
        %v1280 = vunpack.c.h.b16 %v1189
        %v1281 = vunpack.c.l.b16 %v1190
        %v1282 = vunpack.c.h.b16 %v1190
        %v1283 = vunpack.c.l.b16 %v1191
        %v1284 = vunpack.c.h.b16 %v1191
        %v1285 = vunpack.c.l.b16 %v1192
        %v1286 = vunpack.c.h.b16 %v1192
        %v1287 = vunpack.c.l.b16 %v1193
        %v1288 = vunpack.c.h.b16 %v1193
        %v1289 = vunpack.c.l.b16 %v1194
        %v1290 = vunpack.c.h.b16 %v1194
        %v1291 = vunpack.c.l.b16 %v1195
        %v1292 = vunpack.c.h.b16 %v1195
        %v1293 = vunpack.c.l.b16 %v1196
        %v1294 = vunpack.c.h.b16 %v1196
        %v1295 = vunpack.c.l.b16 %v1197
        %v1296 = vunpack.c.h.b16 %v1197
        %v1297 = vunpack.c.l.b16 %v1198
        %v1298 = vunpack.c.h.b16 %v1198
        %v1299 = vunpack.c.l.b16 %v1199
        %v1300 = vunpack.c.h.b16 %v1199
        %v1301 = vunpack.c.l.b16 %v1200
        %v1302 = vunpack.c.h.b16 %v1200
        %v1303 = vunpack.c.l.b16 %v1201
        %v1304 = vunpack.c.h.b16 %v1201
        %v1305 = vunpack.c.l.b16 %v1202
        %v1306 = vunpack.c.h.b16 %v1202
        %v1307 = vunpack.c.l.b16 %v1203
        %v1308 = vunpack.c.h.b16 %v1203
        %v1309 = vunpack.c.l.b16 %v1204
        %v1310 = vunpack.c.h.b16 %v1204
        %v1311 = vunpack.c.l.b16 %v1205
        %v1312 = vunpack.c.h.b16 %v1205
        %v1313 = vunpack.c.l.b16 %v1206
        %v1314 = vunpack.c.h.b16 %v1206
        %v1315 = vpack.c.b16 %v1253, %v1251
        %v1316 = vpack.c.b16 %v1254, %v1252
        %v1317 = vpack.c.b16 %v1257, %v1255
        %v1318 = vpack.c.b16 %v1258, %v1256
        %v1319 = vpack.c.b16 %v1261, %v1259
        %v1320 = vpack.c.b16 %v1262, %v1260
        %v1321 = vpack.c.b16 %v1265, %v1263
        %v1322 = vpack.c.b16 %v1266, %v1264
        %v1323 = vpack.c.b16 %v1269, %v1267
        %v1324 = vpack.c.b16 %v1270, %v1268
        %v1325 = vpack.c.b16 %v1273, %v1271
        %v1326 = vpack.c.b16 %v1274, %v1272
        %v1327 = vpack.c.b16 %v1277, %v1275
        %v1328 = vpack.c.b16 %v1278, %v1276
        %v1329 = vpack.c.b16 %v1281, %v1279
        %v1330 = vpack.c.b16 %v1282, %v1280
        %v1331 = vpack.c.b16 %v1285, %v1283
        %v1332 = vpack.c.b16 %v1286, %v1284
        %v1333 = vpack.c.b16 %v1289, %v1287
        %v1334 = vpack.c.b16 %v1290, %v1288
        %v1335 = vpack.c.b16 %v1293, %v1291
        %v1336 = vpack.c.b16 %v1294, %v1292
        %v1337 = vpack.c.b16 %v1297, %v1295
        %v1338 = vpack.c.b16 %v1298, %v1296
        %v1339 = vpack.c.b16 %v1301, %v1299
        %v1340 = vpack.c.b16 %v1302, %v1300
        %v1341 = vpack.c.b16 %v1305, %v1303
        %v1342 = vpack.c.b16 %v1306, %v1304
        %v1343 = vpack.c.b16 %v1309, %v1307
        %v1344 = vpack.c.b16 %v1310, %v1308
        %v1345 = vpack.c.b16 %v1313, %v1311
        %v1346 = vpack.c.b16 %v1314, %v1312
        %1379 = vmatprep.subr.bf16.mxu0 %v1316
        %1380 = vmatpush1.bf16.msra.mxu0 %v1315
        %1381 = vmatprep.subr.bf16.mxu0 %v1318
        %1382 = vmatpush1.bf16.msra.mxu0 %v1317
        %1383 = vmatprep.subr.bf16.mxu0 %v1320
        %1384 = vmatpush1.bf16.msra.mxu0 %v1319
        %1385 = vmatprep.subr.bf16.mxu0 %v1322
        %1386 = vmatpush1.bf16.msra.mxu0 %v1321
        %1387 = vmatprep.subr.bf16.mxu0 %v1324
        %1388 = vmatpush1.bf16.msra.mxu0 %v1323
        %1389 = vmatprep.subr.bf16.mxu0 %v1326
        %1390 = vmatpush1.bf16.msra.mxu0 %v1325
        %1391 = vmatprep.subr.bf16.mxu0 %v1328
        %1392 = vmatpush1.bf16.msra.mxu0 %v1327
        %1393 = vmatprep.subr.bf16.mxu0 %v1330
        %1394 = vmatpush1.bf16.msra.mxu0 %v1329
        %1395 = vmatprep.subr.bf16.mxu0 %v1332
        %1396 = vmatpush1.bf16.msra.mxu0 %v1331
        %1397 = vmatprep.subr.bf16.mxu0 %v1334
        %1398 = vmatpush1.bf16.msra.mxu0 %v1333
        %1399 = vmatprep.subr.bf16.mxu0 %v1336
        %1400 = vmatpush1.bf16.msra.mxu0 %v1335
        %1401 = vmatprep.subr.bf16.mxu0 %v1338
        %1402 = vmatpush1.bf16.msra.mxu0 %v1337
        %1403 = vmatprep.subr.bf16.mxu0 %v1340
        %1404 = vmatpush1.bf16.msra.mxu0 %v1339
        %1405 = vmatprep.subr.bf16.mxu0 %v1342
        %1406 = vmatpush1.bf16.msra.mxu0 %v1341
        %1407 = vmatprep.subr.bf16.mxu0 %v1344
        %1408 = vmatpush1.bf16.msra.mxu0 %v1343
        %1409 = vmatprep.subr.bf16.mxu0 %v1346
        %1410 = vmatpush1.bf16.msra.mxu0 %v1345
        %1411 = vmatprep.mubr.bf16.mxu0 %v992
        %1412 = vmatmul.mubr.bf16.gmra.mrb[0].mxu0 %v991
        %v1413 = vpop.f32.mrb[0].mxu0
        %v1414 = vadd.f32 %v1212, %v1413
        %v1415 = vpop.f32.mrb[0].mxu0
        %v1416 = vadd.f32 %v1216, %v1415
        %v1417 = vpop.f32.mrb[0].mxu0
        %v1418 = vpop.f32.mrb[0].mxu0
        %1419 = vdwg.mxu0
        %v1420 = vpack.c.bf16 %v1414, %v1414
        %v1421 = vpack.c.bf16 %v1416, %v1416
        %v1422 = vld [vmem:[#allocation4] sm:$0xff]
        %v1423 = vld [vmem:[#allocation4 + $0x8] sm:$0xff]
        %v1424 = vld [vmem:[#allocation4 + $0x10] sm:$0xff]
        %v1425 = vld [vmem:[#allocation4 + $0x18] sm:$0xff]
        %v1426 = vld [vmem:[#allocation4 + $0x20] sm:$0xff]
        %v1427 = vld [vmem:[#allocation4 + $0x28] sm:$0xff]
        %v1428 = vld [vmem:[#allocation4 + $0x30] sm:$0xff]
        %v1429 = vld [vmem:[#allocation4 + $0x38] sm:$0xff]
        %v1430 = vld [vmem:[#allocation4 + $0x40] sm:$0xff]
        %v1431 = vld [vmem:[#allocation4 + $0x48] sm:$0xff]
        %v1432 = vld [vmem:[#allocation4 + $0x50] sm:$0xff]
        %v1433 = vld [vmem:[#allocation4 + $0x58] sm:$0xff]
        %v1434 = vld [vmem:[#allocation4 + $0x60] sm:$0xff]
        %v1435 = vld [vmem:[#allocation4 + $0x68] sm:$0xff]
        %v1436 = vld [vmem:[#allocation4 + $0x70] sm:$0xff]
        %v1437 = vld [vmem:[#allocation4 + $0x78] sm:$0xff]
        %v1438 = vld [vmem:[#allocation4 + $0x80] sm:$0xff]
        %v1439 = vld [vmem:[#allocation4 + $0x88] sm:$0xff]
        %v1440 = vld [vmem:[#allocation4 + $0x90] sm:$0xff]
        %v1441 = vld [vmem:[#allocation4 + $0x98] sm:$0xff]
        %v1442 = vld [vmem:[#allocation4 + $0xa0] sm:$0xff]
        %v1443 = vld [vmem:[#allocation4 + $0xa8] sm:$0xff]
        %v1444 = vld [vmem:[#allocation4 + $0xb0] sm:$0xff]
        %v1445 = vld [vmem:[#allocation4 + $0xb8] sm:$0xff]
        %v1446 = vld [vmem:[#allocation4 + $0xc0] sm:$0xff]
        %v1447 = vld [vmem:[#allocation4 + $0xc8] sm:$0xff]
        %v1448 = vld [vmem:[#allocation4 + $0xd0] sm:$0xff]
        %v1449 = vld [vmem:[#allocation4 + $0xd8] sm:$0xff]
        %v1450 = vld [vmem:[#allocation4 + $0xe0] sm:$0xff]
        %v1451 = vld [vmem:[#allocation4 + $0xe8] sm:$0xff]
        %v1452 = vld [vmem:[#allocation4 + $0xf0] sm:$0xff]
        %v1453 = vld [vmem:[#allocation4 + $0xf8] sm:$0xff]
        %v1486 = vunpack.c.l.b16 %v1422
        %v1487 = vunpack.c.h.b16 %v1422
        %v1488 = vunpack.c.l.b16 %v1423
        %v1489 = vunpack.c.h.b16 %v1423
        %v1490 = vunpack.c.l.b16 %v1424
        %v1491 = vunpack.c.h.b16 %v1424
        %v1492 = vunpack.c.l.b16 %v1425
        %v1493 = vunpack.c.h.b16 %v1425
        %v1494 = vunpack.c.l.b16 %v1426
        %v1495 = vunpack.c.h.b16 %v1426
        %v1496 = vunpack.c.l.b16 %v1427
        %v1497 = vunpack.c.h.b16 %v1427
        %v1498 = vunpack.c.l.b16 %v1428
        %v1499 = vunpack.c.h.b16 %v1428
        %v1500 = vunpack.c.l.b16 %v1429
        %v1501 = vunpack.c.h.b16 %v1429
        %v1502 = vunpack.c.l.b16 %v1430
        %v1503 = vunpack.c.h.b16 %v1430
        %v1504 = vunpack.c.l.b16 %v1431
        %v1505 = vunpack.c.h.b16 %v1431
        %v1506 = vunpack.c.l.b16 %v1432
        %v1507 = vunpack.c.h.b16 %v1432
        %v1508 = vunpack.c.l.b16 %v1433
        %v1509 = vunpack.c.h.b16 %v1433
        %v1510 = vunpack.c.l.b16 %v1434
        %v1511 = vunpack.c.h.b16 %v1434
        %v1512 = vunpack.c.l.b16 %v1435
        %v1513 = vunpack.c.h.b16 %v1435
        %v1514 = vunpack.c.l.b16 %v1436
        %v1515 = vunpack.c.h.b16 %v1436
        %v1516 = vunpack.c.l.b16 %v1437
        %v1517 = vunpack.c.h.b16 %v1437
        %v1518 = vunpack.c.l.b16 %v1438
        %v1519 = vunpack.c.h.b16 %v1438
        %v1520 = vunpack.c.l.b16 %v1439
        %v1521 = vunpack.c.h.b16 %v1439
        %v1522 = vunpack.c.l.b16 %v1440
        %v1523 = vunpack.c.h.b16 %v1440
        %v1524 = vunpack.c.l.b16 %v1441
        %v1525 = vunpack.c.h.b16 %v1441
        %v1526 = vunpack.c.l.b16 %v1442
        %v1527 = vunpack.c.h.b16 %v1442
        %v1528 = vunpack.c.l.b16 %v1443
        %v1529 = vunpack.c.h.b16 %v1443
        %v1530 = vunpack.c.l.b16 %v1444
        %v1531 = vunpack.c.h.b16 %v1444
        %v1532 = vunpack.c.l.b16 %v1445
        %v1533 = vunpack.c.h.b16 %v1445
        %v1534 = vunpack.c.l.b16 %v1446
        %v1535 = vunpack.c.h.b16 %v1446
        %v1536 = vunpack.c.l.b16 %v1447
        %v1537 = vunpack.c.h.b16 %v1447
        %v1538 = vunpack.c.l.b16 %v1448
        %v1539 = vunpack.c.h.b16 %v1448
        %v1540 = vunpack.c.l.b16 %v1449
        %v1541 = vunpack.c.h.b16 %v1449
        %v1542 = vunpack.c.l.b16 %v1450
        %v1543 = vunpack.c.h.b16 %v1450
        %v1544 = vunpack.c.l.b16 %v1451
        %v1545 = vunpack.c.h.b16 %v1451
        %v1546 = vunpack.c.l.b16 %v1452
        %v1547 = vunpack.c.h.b16 %v1452
        %v1548 = vunpack.c.l.b16 %v1453
        %v1549 = vunpack.c.h.b16 %v1453
        %v1550 = vpack.c.b16 %v1488, %v1486
        %v1551 = vpack.c.b16 %v1489, %v1487
        %v1552 = vpack.c.b16 %v1492, %v1490
        %v1553 = vpack.c.b16 %v1493, %v1491
        %v1554 = vpack.c.b16 %v1496, %v1494
        %v1555 = vpack.c.b16 %v1497, %v1495
        %v1556 = vpack.c.b16 %v1500, %v1498
        %v1557 = vpack.c.b16 %v1501, %v1499
        %v1558 = vpack.c.b16 %v1504, %v1502
        %v1559 = vpack.c.b16 %v1505, %v1503
        %v1560 = vpack.c.b16 %v1508, %v1506
        %v1561 = vpack.c.b16 %v1509, %v1507
        %v1562 = vpack.c.b16 %v1512, %v1510
        %v1563 = vpack.c.b16 %v1513, %v1511
        %v1564 = vpack.c.b16 %v1516, %v1514
        %v1565 = vpack.c.b16 %v1517, %v1515
        %v1566 = vpack.c.b16 %v1520, %v1518
        %v1567 = vpack.c.b16 %v1521, %v1519
        %v1568 = vpack.c.b16 %v1524, %v1522
        %v1569 = vpack.c.b16 %v1525, %v1523
        %v1570 = vpack.c.b16 %v1528, %v1526
        %v1571 = vpack.c.b16 %v1529, %v1527
        %v1572 = vpack.c.b16 %v1532, %v1530
        %v1573 = vpack.c.b16 %v1533, %v1531
        %v1574 = vpack.c.b16 %v1536, %v1534
        %v1575 = vpack.c.b16 %v1537, %v1535
        %v1576 = vpack.c.b16 %v1540, %v1538
        %v1577 = vpack.c.b16 %v1541, %v1539
        %v1578 = vpack.c.b16 %v1544, %v1542
        %v1579 = vpack.c.b16 %v1545, %v1543
        %v1580 = vpack.c.b16 %v1548, %v1546
        %v1581 = vpack.c.b16 %v1549, %v1547
        %1614 = vmatprep.subr.bf16.mxu0 %v1551
        %1615 = vmatpush1.bf16.msra.mxu0 %v1550
        %1616 = vmatprep.subr.bf16.mxu0 %v1553
        %1617 = vmatpush1.bf16.msra.mxu0 %v1552
        %1618 = vmatprep.subr.bf16.mxu0 %v1555
        %1619 = vmatpush1.bf16.msra.mxu0 %v1554
        %1620 = vmatprep.subr.bf16.mxu0 %v1557
        %1621 = vmatpush1.bf16.msra.mxu0 %v1556
        %1622 = vmatprep.subr.bf16.mxu0 %v1559
        %1623 = vmatpush1.bf16.msra.mxu0 %v1558
        %1624 = vmatprep.subr.bf16.mxu0 %v1561
        %1625 = vmatpush1.bf16.msra.mxu0 %v1560
        %1626 = vmatprep.subr.bf16.mxu0 %v1563
        %1627 = vmatpush1.bf16.msra.mxu0 %v1562
        %1628 = vmatprep.subr.bf16.mxu0 %v1565
        %1629 = vmatpush1.bf16.msra.mxu0 %v1564
        %1630 = vmatprep.subr.bf16.mxu0 %v1567
        %1631 = vmatpush1.bf16.msra.mxu0 %v1566
        %1632 = vmatprep.subr.bf16.mxu0 %v1569
        %1633 = vmatpush1.bf16.msra.mxu0 %v1568
        %1634 = vmatprep.subr.bf16.mxu0 %v1571
        %1635 = vmatpush1.bf16.msra.mxu0 %v1570
        %1636 = vmatprep.subr.bf16.mxu0 %v1573
        %1637 = vmatpush1.bf16.msra.mxu0 %v1572
        %1638 = vmatprep.subr.bf16.mxu0 %v1575
        %1639 = vmatpush1.bf16.msra.mxu0 %v1574
        %1640 = vmatprep.subr.bf16.mxu0 %v1577
        %1641 = vmatpush1.bf16.msra.mxu0 %v1576
        %1642 = vmatprep.subr.bf16.mxu0 %v1579
        %1643 = vmatpush1.bf16.msra.mxu0 %v1578
        %1644 = vmatprep.subr.bf16.mxu0 %v1581
        %1645 = vmatpush1.bf16.msra.mxu0 %v1580
        %1646 = vmatprep.mubr.bf16.mxu0 %v1084
        %1647 = vmatmul.mubr.bf16.gmra.mrb[0].mxu0 %v1083
        %v1648 = vpop.f32.mrb[0].mxu0
        %v1649 = vadd.f32 0.0, %v1648
        %v1650 = vpop.f32.mrb[0].mxu0
        %v1651 = vadd.f32 0.0, %v1650
        %v1652 = vpop.f32.mrb[0].mxu0
        %v1653 = vadd.f32 0.0, %v1652
        %v1654 = vpop.f32.mrb[0].mxu0
        %v1655 = vadd.f32 0.0, %v1654
        %1656 = vmatprep.mubr.bf16.mxu0 %v1086
        %1657 = vmatmul.mubr.bf16.gmra.mrb[0].mxu0 %v1085
        %v1658 = vpop.f32.mrb[0].mxu0
        %v1659 = vadd.f32 0.0, %v1658
        %v1660 = vpop.f32.mrb[0].mxu0
        %v1661 = vadd.f32 0.0, %v1660
        %v1662 = vpop.f32.mrb[0].mxu0
        %v1663 = vpop.f32.mrb[0].mxu0
        %1664 = vdwg.mxu0
        %v1665 = vpack.c.bf16 %v1653, %v1649
        %v1666 = vpack.c.bf16 %v1655, %v1651
        %v1667 = vpack.c.bf16 %v1659, %v1659
        %v1668 = vpack.c.bf16 %v1661, %v1661
        %v1669 = vld [vmem:[#allocation6] sm:$0xff]
        %v1670 = vld [vmem:[#allocation6 + $0x8] sm:$0xff]
        %v1671 = vld [vmem:[#allocation6 + $0x10] sm:$0xff]
        %v1672 = vld [vmem:[#allocation6 + $0x18] sm:$0xff]
        %v1673 = vld [vmem:[#allocation6 + $0x20] sm:$0xff]
        %v1674 = vld [vmem:[#allocation6 + $0x28] sm:$0xff]
        %v1675 = vld [vmem:[#allocation6 + $0x30] sm:$0xff]
        %v1676 = vld [vmem:[#allocation6 + $0x38] sm:$0xff]
        %v1677 = vld [vmem:[#allocation6 + $0x40] sm:$0xff]
        %v1678 = vld [vmem:[#allocation6 + $0x48] sm:$0xff]
        %v1679 = vld [vmem:[#allocation6 + $0x50] sm:$0xff]
        %v1680 = vld [vmem:[#allocation6 + $0x58] sm:$0xff]
        %v1681 = vld [vmem:[#allocation6 + $0x60] sm:$0xff]
        %v1682 = vld [vmem:[#allocation6 + $0x68] sm:$0xff]
        %v1683 = vld [vmem:[#allocation6 + $0x70] sm:$0xff]
        %v1684 = vld [vmem:[#allocation6 + $0x78] sm:$0xff]
        %v1685 = vld [vmem:[#allocation6 + $0x80] sm:$0xff]
        %v1686 = vld [vmem:[#allocation6 + $0x88] sm:$0xff]
        %v1687 = vld [vmem:[#allocation6 + $0x90] sm:$0xff]
        %v1688 = vld [vmem:[#allocation6 + $0x98] sm:$0xff]
        %v1689 = vld [vmem:[#allocation6 + $0xa0] sm:$0xff]
        %v1690 = vld [vmem:[#allocation6 + $0xa8] sm:$0xff]
        %v1691 = vld [vmem:[#allocation6 + $0xb0] sm:$0xff]
        %v1692 = vld [vmem:[#allocation6 + $0xb8] sm:$0xff]
        %v1693 = vld [vmem:[#allocation6 + $0xc0] sm:$0xff]
        %v1694 = vld [vmem:[#allocation6 + $0xc8] sm:$0xff]
        %v1695 = vld [vmem:[#allocation6 + $0xd0] sm:$0xff]
        %v1696 = vld [vmem:[#allocation6 + $0xd8] sm:$0xff]
        %v1697 = vld [vmem:[#allocation6 + $0xe0] sm:$0xff]
        %v1698 = vld [vmem:[#allocation6 + $0xe8] sm:$0xff]
        %v1699 = vld [vmem:[#allocation6 + $0xf0] sm:$0xff]
        %v1700 = vld [vmem:[#allocation6 + $0xf8] sm:$0xff]
        %v1701 = vld [vmem:[%s14] sm:$0x3]
        %v1703 = vlaneseq
        %v1704 = vshrl.u32 %v1703, 7
        %v1705 = vsub.s32 0, %v1704
        %v1706 = vrot.slane %v1701, %v1705
        %v1707 = vlaneseq
        %v1708 = vshrl.u32 %v1707, 7
        %v1709 = vsub.s32 1, %v1708
        %v1710 = vrot.slane %v1701, %v1709
        %v1745 = vunpack.c.l.b16 %v1669
        %v1746 = vunpack.c.h.b16 %v1669
        %v1747 = vunpack.c.l.b16 %v1670
        %v1748 = vunpack.c.h.b16 %v1670
        %v1749 = vunpack.c.l.b16 %v1671
        %v1750 = vunpack.c.h.b16 %v1671
        %v1751 = vunpack.c.l.b16 %v1672
        %v1752 = vunpack.c.h.b16 %v1672
        %v1753 = vunpack.c.l.b16 %v1673
        %v1754 = vunpack.c.h.b16 %v1673
        %v1755 = vunpack.c.l.b16 %v1674
        %v1756 = vunpack.c.h.b16 %v1674
        %v1757 = vunpack.c.l.b16 %v1675
        %v1758 = vunpack.c.h.b16 %v1675
        %v1759 = vunpack.c.l.b16 %v1676
        %v1760 = vunpack.c.h.b16 %v1676
        %v1761 = vunpack.c.l.b16 %v1677
        %v1762 = vunpack.c.h.b16 %v1677
        %v1763 = vunpack.c.l.b16 %v1678
        %v1764 = vunpack.c.h.b16 %v1678
        %v1765 = vunpack.c.l.b16 %v1679
        %v1766 = vunpack.c.h.b16 %v1679
        %v1767 = vunpack.c.l.b16 %v1680
        %v1768 = vunpack.c.h.b16 %v1680
        %v1769 = vunpack.c.l.b16 %v1681
        %v1770 = vunpack.c.h.b16 %v1681
        %v1771 = vunpack.c.l.b16 %v1682
        %v1772 = vunpack.c.h.b16 %v1682
        %v1773 = vunpack.c.l.b16 %v1683
        %v1774 = vunpack.c.h.b16 %v1683
        %v1775 = vunpack.c.l.b16 %v1684
        %v1776 = vunpack.c.h.b16 %v1684
        %v1777 = vunpack.c.l.b16 %v1685
        %v1778 = vunpack.c.h.b16 %v1685
        %v1779 = vunpack.c.l.b16 %v1686
        %v1780 = vunpack.c.h.b16 %v1686
        %v1781 = vunpack.c.l.b16 %v1687
        %v1782 = vunpack.c.h.b16 %v1687
        %v1783 = vunpack.c.l.b16 %v1688
        %v1784 = vunpack.c.h.b16 %v1688
        %v1785 = vunpack.c.l.b16 %v1689
        %v1786 = vunpack.c.h.b16 %v1689
        %v1787 = vunpack.c.l.b16 %v1690
        %v1788 = vunpack.c.h.b16 %v1690
        %v1789 = vunpack.c.l.b16 %v1691
        %v1790 = vunpack.c.h.b16 %v1691
        %v1791 = vunpack.c.l.b16 %v1692
        %v1792 = vunpack.c.h.b16 %v1692
        %v1793 = vunpack.c.l.b16 %v1693
        %v1794 = vunpack.c.h.b16 %v1693
        %v1795 = vunpack.c.l.b16 %v1694
        %v1796 = vunpack.c.h.b16 %v1694
        %v1797 = vunpack.c.l.b16 %v1695
        %v1798 = vunpack.c.h.b16 %v1695
        %v1799 = vunpack.c.l.b16 %v1696
        %v1800 = vunpack.c.h.b16 %v1696
        %v1801 = vunpack.c.l.b16 %v1697
        %v1802 = vunpack.c.h.b16 %v1697
        %v1803 = vunpack.c.l.b16 %v1698
        %v1804 = vunpack.c.h.b16 %v1698
        %v1805 = vunpack.c.l.b16 %v1699
        %v1806 = vunpack.c.h.b16 %v1699
        %v1807 = vunpack.c.l.b16 %v1700
        %v1808 = vunpack.c.h.b16 %v1700
        %v1809 = vpack.c.b16 %v1747, %v1745
        %v1810 = vpack.c.b16 %v1748, %v1746
        %v1811 = vpack.c.b16 %v1751, %v1749
        %v1812 = vpack.c.b16 %v1752, %v1750
        %v1813 = vpack.c.b16 %v1755, %v1753
        %v1814 = vpack.c.b16 %v1756, %v1754
        %v1815 = vpack.c.b16 %v1759, %v1757
        %v1816 = vpack.c.b16 %v1760, %v1758
        %v1817 = vpack.c.b16 %v1763, %v1761
        %v1818 = vpack.c.b16 %v1764, %v1762
        %v1819 = vpack.c.b16 %v1767, %v1765
        %v1820 = vpack.c.b16 %v1768, %v1766
        %v1821 = vpack.c.b16 %v1771, %v1769
        %v1822 = vpack.c.b16 %v1772, %v1770
        %v1823 = vpack.c.b16 %v1775, %v1773
        %v1824 = vpack.c.b16 %v1776, %v1774
        %v1825 = vpack.c.b16 %v1779, %v1777
        %v1826 = vpack.c.b16 %v1780, %v1778
        %v1827 = vpack.c.b16 %v1783, %v1781
        %v1828 = vpack.c.b16 %v1784, %v1782
        %v1829 = vpack.c.b16 %v1787, %v1785
        %v1830 = vpack.c.b16 %v1788, %v1786
        %v1831 = vpack.c.b16 %v1791, %v1789
        %v1832 = vpack.c.b16 %v1792, %v1790
        %v1833 = vpack.c.b16 %v1795, %v1793
        %v1834 = vpack.c.b16 %v1796, %v1794
        %v1835 = vpack.c.b16 %v1799, %v1797
        %v1836 = vpack.c.b16 %v1800, %v1798
        %v1837 = vpack.c.b16 %v1803, %v1801
        %v1838 = vpack.c.b16 %v1804, %v1802
        %v1839 = vpack.c.b16 %v1807, %v1805
        %v1840 = vpack.c.b16 %v1808, %v1806
        %1873 = vmatprep.subr.bf16.mxu0 %v1810
        %1874 = vmatpush1.bf16.msra.mxu0 %v1809
        %1875 = vmatprep.subr.bf16.mxu0 %v1812
        %1876 = vmatpush1.bf16.msra.mxu0 %v1811
        %1877 = vmatprep.subr.bf16.mxu0 %v1814
        %1878 = vmatpush1.bf16.msra.mxu0 %v1813
        %1879 = vmatprep.subr.bf16.mxu0 %v1816
        %1880 = vmatpush1.bf16.msra.mxu0 %v1815
        %1881 = vmatprep.subr.bf16.mxu0 %v1818
        %1882 = vmatpush1.bf16.msra.mxu0 %v1817
        %1883 = vmatprep.subr.bf16.mxu0 %v1820
        %1884 = vmatpush1.bf16.msra.mxu0 %v1819
        %1885 = vmatprep.subr.bf16.mxu0 %v1822
        %1886 = vmatpush1.bf16.msra.mxu0 %v1821
        %1887 = vmatprep.subr.bf16.mxu0 %v1824
        %1888 = vmatpush1.bf16.msra.mxu0 %v1823
        %1889 = vmatprep.subr.bf16.mxu0 %v1826
        %1890 = vmatpush1.bf16.msra.mxu0 %v1825
        %1891 = vmatprep.subr.bf16.mxu0 %v1828
        %1892 = vmatpush1.bf16.msra.mxu0 %v1827
        %1893 = vmatprep.subr.bf16.mxu0 %v1830
        %1894 = vmatpush1.bf16.msra.mxu0 %v1829
        %1895 = vmatprep.subr.bf16.mxu0 %v1832
        %1896 = vmatpush1.bf16.msra.mxu0 %v1831
        %1897 = vmatprep.subr.bf16.mxu0 %v1834
        %1898 = vmatpush1.bf16.msra.mxu0 %v1833
        %1899 = vmatprep.subr.bf16.mxu0 %v1836
        %1900 = vmatpush1.bf16.msra.mxu0 %v1835
        %1901 = vmatprep.subr.bf16.mxu0 %v1838
        %1902 = vmatpush1.bf16.msra.mxu0 %v1837
        %1903 = vmatprep.subr.bf16.mxu0 %v1840
        %1904 = vmatpush1.bf16.msra.mxu0 %v1839
        %1905 = vmatprep.mubr.bf16.mxu0 %v1172
        %1906 = vmatmul.mubr.bf16.gmra.mrb[0].mxu0 %v1171
        %v1907 = vpop.f32.mrb[0].mxu0
        %v1908 = vadd.f32 %v1706, %v1907
        %v1909 = vpop.f32.mrb[0].mxu0
        %v1910 = vadd.f32 %v1710, %v1909
        %v1911 = vpop.f32.mrb[0].mxu0
        %v1912 = vadd.f32 %v1706, %v1911
        %v1913 = vpop.f32.mrb[0].mxu0
        %v1914 = vadd.f32 %v1710, %v1913
        %1915 = vmatprep.mubr.bf16.mxu0 %v1174
        %1916 = vmatmul.mubr.bf16.gmra.mrb[0].mxu0 %v1173
        %v1917 = vpop.f32.mrb[0].mxu0
        %v1918 = vadd.f32 %v1706, %v1917
        %v1919 = vpop.f32.mrb[0].mxu0
        %v1920 = vadd.f32 %v1710, %v1919
        %v1921 = vpop.f32.mrb[0].mxu0
        %v1922 = vpop.f32.mrb[0].mxu0
        %1923 = vdwg.mxu0
        %v1924 = vpack.c.bf16 %v1912, %v1908
        %v1925 = vpack.c.bf16 %v1914, %v1910
        %v1926 = vpack.c.bf16 %v1918, %v1918
        %v1927 = vpack.c.bf16 %v1920, %v1920
        %1928 = vmatprep.subr.bf16.mxu0 0
        %1929 = vmatpush1.bf16.xpose.msra.mxu0 %v1665
        %1930 = vmatprep.subr.bf16.mxu0 0
        %1931 = vmatpush1.bf16.xpose.msra.mxu0 %v1667
        %1932 = vmatprep.subr.bf16.mxu0 0
        %1933 = vmatpush1.bf16.xpose.msra.mxu0 0
        %1934 = vmatprep.subr.bf16.mxu0 0
        %1935 = vmatpush1.bf16.xpose.msra.mxu0 0
        %1936 = vmatprep.subr.bf16.mxu0 0
        %1937 = vmatpush1.bf16.xpose.msra.mxu0 0
        %1938 = vmatprep.subr.bf16.mxu0 0
        %1939 = vmatpush1.bf16.xpose.msra.mxu0 0
        %1940 = vmatprep.subr.bf16.mxu0 0
        %1941 = vmatpush1.bf16.xpose.msra.mxu0 0
        %1942 = vmatprep.subr.bf16.mxu0 0
        %1943 = vmatpush1.bf16.xpose.msra.mxu0 0
        %1944 = vmatprep.subr.bf16.mxu0 0
        %1945 = vmatpush1.bf16.xpose.msra.mxu0 0
        %1946 = vmatprep.subr.bf16.mxu0 0
        %1947 = vmatpush1.bf16.xpose.msra.mxu0 0
        %1948 = vmatprep.subr.bf16.mxu0 0
        %1949 = vmatpush1.bf16.xpose.msra.mxu0 0
        %1950 = vmatprep.subr.bf16.mxu0 0
        %1951 = vmatpush1.bf16.xpose.msra.mxu0 0
        %1952 = vmatprep.subr.bf16.mxu0 0
        %1953 = vmatpush1.bf16.xpose.msra.mxu0 0
        %1954 = vmatprep.subr.bf16.mxu0 0
        %1955 = vmatpush1.bf16.xpose.msra.mxu0 0
        %1956 = vmatprep.subr.bf16.mxu0 0
        %1957 = vmatpush1.bf16.xpose.msra.mxu0 0
        %1958 = vmatprep.subr.bf16.mxu0 0
        %1959 = vmatpush1.bf16.xpose.msra.mxu0 0
        %1960 = vmatprep.mubr.bf16.mxu0 0
        %1961 = vmatmul.mubr.bf16.gmra.mrb[0].mxu0 %v1420
        %v1962 = vpop.f32.mrb[0].mxu0
        %v1963 = vadd.f32 0.0, %v1962
        %v1964 = vpop.f32.mrb[0].mxu0
        %v1965 = vpop.f32.mrb[0].mxu0
        %v1966 = vpop.f32.mrb[0].mxu0
        %1967 = vdwg.mxu0
        %vm1968 = vcmask 195584
        %v1969 = vsel %vm1968, %v1963, -inf
        %1970 = vmax.xlane.f32.xlu0 %v1969
        %v1971 = vpop.xlane.xlu0 %1970
        %v1972 = vsub.f32 %v1963, %v1971
        %v1973 = vmul.f32 %v1972, 1.442695
        %v1974 = vpow.pop %v1973
        %v1975 = vsel %vm1968, %v1974, 0.0
        %1976 = vadd.xlane.f32.xlu0 %v1975
        %v1977 = vpop.xlane.xlu0 %1976
        %v1978 = vrcp.pop %v1977
        %v1979 = vmul.f32 %v1974, %v1978
        %v1980 = vpack.c.bf16 %v1979, %v1979
        %v1982 = vsel %vm1968, %v1980, 0
        %vm1984 = vcmask 1043456
        %v1986 = vsel %vm1984, %v1926, 0
        %1988 = vmatprep.subr.bf16.mxu0 0
        %1989 = vmatpush1.bf16.msra.mxu0 %v1924
        %1990 = vmatprep.subr.bf16.mxu0 0
        %1991 = vmatpush1.bf16.msra.mxu0 %v1986
        %1992 = vmatprep.subr.bf16.mxu0 0
        %1993 = vmatpush1.bf16.msra.mxu0 0
        %1994 = vmatprep.subr.bf16.mxu0 0
        %1995 = vmatpush1.bf16.msra.mxu0 0
        %1996 = vmatprep.subr.bf16.mxu0 0
        %1997 = vmatpush1.bf16.msra.mxu0 0
        %1998 = vmatprep.subr.bf16.mxu0 0
        %1999 = vmatpush1.bf16.msra.mxu0 0
        %2000 = vmatprep.subr.bf16.mxu0 0
        %2001 = vmatpush1.bf16.msra.mxu0 0
        %2002 = vmatprep.subr.bf16.mxu0 0
        %2003 = vmatpush1.bf16.msra.mxu0 0
        %2004 = vmatprep.subr.bf16.mxu0 0
        %2005 = vmatpush1.bf16.msra.mxu0 0
        %2006 = vmatprep.subr.bf16.mxu0 0
        %2007 = vmatpush1.bf16.msra.mxu0 0
        %2008 = vmatprep.subr.bf16.mxu0 0
        %2009 = vmatpush1.bf16.msra.mxu0 0
        %2010 = vmatprep.subr.bf16.mxu0 0
        %2011 = vmatpush1.bf16.msra.mxu0 0
        %2012 = vmatprep.subr.bf16.mxu0 0
        %2013 = vmatpush1.bf16.msra.mxu0 0
        %2014 = vmatprep.subr.bf16.mxu0 0
        %2015 = vmatpush1.bf16.msra.mxu0 0
        %2016 = vmatprep.subr.bf16.mxu0 0
        %2017 = vmatpush1.bf16.msra.mxu0 0
        %2018 = vmatprep.subr.bf16.mxu0 0
        %2019 = vmatpush1.bf16.msra.mxu0 0
        %2020 = vmatprep.mubr.bf16.mxu0 0
        %2021 = vmatmul.mubr.bf16.gmra.mrb[0].mxu0 %v1982
        %v2022 = vpop.f32.mrb[0].mxu0
        %v2023 = vadd.f32 0.0, %v2022
        %v2024 = vpop.f32.mrb[0].mxu0
        %v2025 = vpop.f32.mrb[0].mxu0
        %v2026 = vpop.f32.mrb[0].mxu0
        %2027 = vdwg.mxu0
        %v2028 = vpack.c.bf16 %v2023, %v2023
        %v2029 = vld [vmem:[#allocation7] sm:$0xff]
        %v2030 = vld [vmem:[#allocation7 + $0x8] sm:$0xff]
        %v2031 = vld [vmem:[#allocation7 + $0x10] sm:$0xff]
        %v2032 = vld [vmem:[#allocation7 + $0x18] sm:$0xff]
        %v2033 = vld [vmem:[#allocation7 + $0x20] sm:$0xff]
        %v2034 = vld [vmem:[#allocation7 + $0x28] sm:$0xff]
        %v2035 = vld [vmem:[#allocation7 + $0x30] sm:$0xff]
        %v2036 = vld [vmem:[#allocation7 + $0x38] sm:$0xff]
        %v2037 = vld [vmem:[#allocation7 + $0x40] sm:$0xff]
        %v2038 = vld [vmem:[#allocation7 + $0x48] sm:$0xff]
        %v2039 = vld [vmem:[#allocation7 + $0x50] sm:$0xff]
        %v2040 = vld [vmem:[#allocation7 + $0x58] sm:$0xff]
        %v2041 = vld [vmem:[#allocation7 + $0x60] sm:$0xff]
        %v2042 = vld [vmem:[#allocation7 + $0x68] sm:$0xff]
        %v2043 = vld [vmem:[#allocation7 + $0x70] sm:$0xff]
        %v2044 = vld [vmem:[#allocation7 + $0x78] sm:$0xff]
        %2045 = vmatprep.subr.bf16.mxu0 0
        %2046 = vmatpush1.bf16.xpose.msra.mxu0 %v1666
        %2047 = vmatprep.subr.bf16.mxu0 0
        %2048 = vmatpush1.bf16.xpose.msra.mxu0 %v1668
        %2049 = vmatprep.subr.bf16.mxu0 0
        %2050 = vmatpush1.bf16.xpose.msra.mxu0 0
        %2051 = vmatprep.subr.bf16.mxu0 0
        %2052 = vmatpush1.bf16.xpose.msra.mxu0 0
        %2053 = vmatprep.subr.bf16.mxu0 0
        %2054 = vmatpush1.bf16.xpose.msra.mxu0 0
        %2055 = vmatprep.subr.bf16.mxu0 0
        %2056 = vmatpush1.bf16.xpose.msra.mxu0 0
        %2057 = vmatprep.subr.bf16.mxu0 0
        %2058 = vmatpush1.bf16.xpose.msra.mxu0 0
        %2059 = vmatprep.subr.bf16.mxu0 0
        %2060 = vmatpush1.bf16.xpose.msra.mxu0 0
        %2061 = vmatprep.subr.bf16.mxu0 0
        %2062 = vmatpush1.bf16.xpose.msra.mxu0 0
        %2063 = vmatprep.subr.bf16.mxu0 0
        %2064 = vmatpush1.bf16.xpose.msra.mxu0 0
        %2065 = vmatprep.subr.bf16.mxu0 0
        %2066 = vmatpush1.bf16.xpose.msra.mxu0 0
        %2067 = vmatprep.subr.bf16.mxu0 0
        %2068 = vmatpush1.bf16.xpose.msra.mxu0 0
        %2069 = vmatprep.subr.bf16.mxu0 0
        %2070 = vmatpush1.bf16.xpose.msra.mxu0 0
        %2071 = vmatprep.subr.bf16.mxu0 0
        %2072 = vmatpush1.bf16.xpose.msra.mxu0 0
        %2073 = vmatprep.subr.bf16.mxu0 0
        %2074 = vmatpush1.bf16.xpose.msra.mxu0 0
        %2075 = vmatprep.subr.bf16.mxu0 0
        %2076 = vmatpush1.bf16.xpose.msra.mxu0 0
        %2077 = vmatprep.mubr.bf16.mxu0 0
        %2078 = vmatmul.mubr.bf16.gmra.mrb[0].mxu0 %v1421
        %v2079 = vpop.f32.mrb[0].mxu0
        %v2080 = vadd.f32 0.0, %v2079
        %v2081 = vpop.f32.mrb[0].mxu0
        %v2082 = vpop.f32.mrb[0].mxu0
        %v2083 = vpop.f32.mrb[0].mxu0
        %2084 = vdwg.mxu0
        %v2085 = vsel %vm1968, %v2080, -inf
        %2086 = vmax.xlane.f32.xlu0 %v2085
        %v2087 = vpop.xlane.xlu0 %2086
        %v2088 = vsub.f32 %v2080, %v2087
        %v2089 = vmul.f32 %v2088, 1.442695
        %v2090 = vpow.pop %v2089
        %v2091 = vsel %vm1968, %v2090, 0.0
        %2092 = vadd.xlane.f32.xlu0 %v2091
        %v2093 = vpop.xlane.xlu0 %2092
        %v2094 = vrcp.pop %v2093
        %v2095 = vmul.f32 %v2090, %v2094
        %v2096 = vpack.c.bf16 %v2095, %v2095
        %v2098 = vsel %vm1968, %v2096, 0
        %v2101 = vsel %vm1984, %v1927, 0
        %2103 = vmatprep.subr.bf16.mxu0 0
        %2104 = vmatpush1.bf16.msra.mxu0 %v1925
        %2105 = vmatprep.subr.bf16.mxu0 0
        %2106 = vmatpush1.bf16.msra.mxu0 %v2101
        %2107 = vmatprep.subr.bf16.mxu0 0
        %2108 = vmatpush1.bf16.msra.mxu0 0
        %2109 = vmatprep.subr.bf16.mxu0 0
        %2110 = vmatpush1.bf16.msra.mxu0 0
        %2111 = vmatprep.subr.bf16.mxu0 0
        %2112 = vmatpush1.bf16.msra.mxu0 0
        %2113 = vmatprep.subr.bf16.mxu0 0
        %2114 = vmatpush1.bf16.msra.mxu0 0
        %2115 = vmatprep.subr.bf16.mxu0 0
        %2116 = vmatpush1.bf16.msra.mxu0 0
        %2117 = vmatprep.subr.bf16.mxu0 0
        %2118 = vmatpush1.bf16.msra.mxu0 0
        %2119 = vmatprep.subr.bf16.mxu0 0
        %2120 = vmatpush1.bf16.msra.mxu0 0
        %2121 = vmatprep.subr.bf16.mxu0 0
        %2122 = vmatpush1.bf16.msra.mxu0 0
        %2123 = vmatprep.subr.bf16.mxu0 0
        %2124 = vmatpush1.bf16.msra.mxu0 0
        %2125 = vmatprep.subr.bf16.mxu0 0
        %2126 = vmatpush1.bf16.msra.mxu0 0
        %2127 = vmatprep.subr.bf16.mxu0 0
        %2128 = vmatpush1.bf16.msra.mxu0 0
        %2129 = vmatprep.subr.bf16.mxu0 0
        %2130 = vmatpush1.bf16.msra.mxu0 0
        %2131 = vmatprep.subr.bf16.mxu0 0
        %2132 = vmatpush1.bf16.msra.mxu0 0
        %2133 = vmatprep.subr.bf16.mxu0 0
        %2134 = vmatpush1.bf16.msra.mxu0 0
        %2135 = vmatprep.mubr.bf16.mxu0 0
        %2136 = vmatmul.mubr.bf16.gmra.mrb[0].mxu0 %v2098
        %v2137 = vpop.f32.mrb[0].mxu0
        %v2138 = vadd.f32 0.0, %v2137
        %v2139 = vpop.f32.mrb[0].mxu0
        %v2140 = vpop.f32.mrb[0].mxu0
        %v2141 = vpop.f32.mrb[0].mxu0
        %2142 = vdwg.mxu0
        %v2143 = vpack.c.bf16 %v2138, %v2138
        %v2144 = vld [vmem:[#allocation7 + $0x80] sm:$0xff]
        %v2145 = vld [vmem:[#allocation7 + $0x88] sm:$0xff]
        %v2146 = vld [vmem:[#allocation7 + $0x90] sm:$0xff]
        %v2147 = vld [vmem:[#allocation7 + $0x98] sm:$0xff]
        %v2148 = vld [vmem:[#allocation7 + $0xa0] sm:$0xff]
        %v2149 = vld [vmem:[#allocation7 + $0xa8] sm:$0xff]
        %v2150 = vld [vmem:[#allocation7 + $0xb0] sm:$0xff]
        %v2151 = vld [vmem:[#allocation7 + $0xb8] sm:$0xff]
        %v2152 = vld [vmem:[#allocation7 + $0xc0] sm:$0xff]
        %v2153 = vld [vmem:[#allocation7 + $0xc8] sm:$0xff]
        %v2154 = vld [vmem:[#allocation7 + $0xd0] sm:$0xff]
        %v2155 = vld [vmem:[#allocation7 + $0xd8] sm:$0xff]
        %v2156 = vld [vmem:[#allocation7 + $0xe0] sm:$0xff]
        %v2157 = vld [vmem:[#allocation7 + $0xe8] sm:$0xff]
        %v2158 = vld [vmem:[#allocation7 + $0xf0] sm:$0xff]
        %v2159 = vld [vmem:[#allocation7 + $0xf8] sm:$0xff]
        %v2176 = vunpack.c.l.b16 %v2144
        %v2177 = vunpack.c.h.b16 %v2144
        %v2178 = vunpack.c.l.b16 %v2145
        %v2179 = vunpack.c.h.b16 %v2145
        %v2180 = vunpack.c.l.b16 %v2146
        %v2181 = vunpack.c.h.b16 %v2146
        %v2182 = vunpack.c.l.b16 %v2147
        %v2183 = vunpack.c.h.b16 %v2147
        %v2184 = vunpack.c.l.b16 %v2148
        %v2185 = vunpack.c.h.b16 %v2148
        %v2186 = vunpack.c.l.b16 %v2149
        %v2187 = vunpack.c.h.b16 %v2149
        %v2188 = vunpack.c.l.b16 %v2150
        %v2189 = vunpack.c.h.b16 %v2150
        %v2190 = vunpack.c.l.b16 %v2151
        %v2191 = vunpack.c.h.b16 %v2151
        %v2192 = vunpack.c.l.b16 %v2152
        %v2193 = vunpack.c.h.b16 %v2152
        %v2194 = vunpack.c.l.b16 %v2153
        %v2195 = vunpack.c.h.b16 %v2153
        %v2196 = vunpack.c.l.b16 %v2154
        %v2197 = vunpack.c.h.b16 %v2154
        %v2198 = vunpack.c.l.b16 %v2155
        %v2199 = vunpack.c.h.b16 %v2155
        %v2200 = vunpack.c.l.b16 %v2156
        %v2201 = vunpack.c.h.b16 %v2156
        %v2202 = vunpack.c.l.b16 %v2157
        %v2203 = vunpack.c.h.b16 %v2157
        %v2204 = vunpack.c.l.b16 %v2158
        %v2205 = vunpack.c.h.b16 %v2158
        %v2206 = vunpack.c.l.b16 %v2159
        %v2207 = vunpack.c.h.b16 %v2159
        %v2208 = vpack.c.b16 %v2178, %v2176
        %v2209 = vpack.c.b16 %v2179, %v2177
        %v2210 = vpack.c.b16 %v2182, %v2180
        %v2211 = vpack.c.b16 %v2183, %v2181
        %v2212 = vpack.c.b16 %v2186, %v2184
        %v2213 = vpack.c.b16 %v2187, %v2185
        %v2214 = vpack.c.b16 %v2190, %v2188
        %v2215 = vpack.c.b16 %v2191, %v2189
        %v2216 = vpack.c.b16 %v2194, %v2192
        %v2217 = vpack.c.b16 %v2195, %v2193
        %v2218 = vpack.c.b16 %v2198, %v2196
        %v2219 = vpack.c.b16 %v2199, %v2197
        %v2220 = vpack.c.b16 %v2202, %v2200
        %v2221 = vpack.c.b16 %v2203, %v2201
        %v2222 = vpack.c.b16 %v2206, %v2204
        %v2223 = vpack.c.b16 %v2207, %v2205
        %2240 = vmatprep.subr.bf16.mxu0 %v2209
        %2241 = vmatpush1.bf16.msra.mxu0 %v2208
        %2242 = vmatprep.subr.bf16.mxu0 %v2211
        %2243 = vmatpush1.bf16.msra.mxu0 %v2210
        %2244 = vmatprep.subr.bf16.mxu0 %v2213
        %2245 = vmatpush1.bf16.msra.mxu0 %v2212
        %2246 = vmatprep.subr.bf16.mxu0 %v2215
        %2247 = vmatpush1.bf16.msra.mxu0 %v2214
        %2248 = vmatprep.subr.bf16.mxu0 %v2217
        %2249 = vmatpush1.bf16.msra.mxu0 %v2216
        %2250 = vmatprep.subr.bf16.mxu0 %v2219
        %2251 = vmatpush1.bf16.msra.mxu0 %v2218
        %2252 = vmatprep.subr.bf16.mxu0 %v2221
        %2253 = vmatpush1.bf16.msra.mxu0 %v2220
        %2254 = vmatprep.subr.bf16.mxu0 %v2223
        %2255 = vmatpush1.bf16.msra.mxu0 %v2222
        %2256 = vmatprep.subr.bf16.mxu0 0
        %2257 = vmatpush1.bf16.msra.mxu0 0
        %2258 = vmatprep.subr.bf16.mxu0 0
        %2259 = vmatpush1.bf16.msra.mxu0 0
        %2260 = vmatprep.subr.bf16.mxu0 0
        %2261 = vmatpush1.bf16.msra.mxu0 0
        %2262 = vmatprep.subr.bf16.mxu0 0
        %2263 = vmatpush1.bf16.msra.mxu0 0
        %2264 = vmatprep.subr.bf16.mxu0 0
        %2265 = vmatpush1.bf16.msra.mxu0 0
        %2266 = vmatprep.subr.bf16.mxu0 0
        %2267 = vmatpush1.bf16.msra.mxu0 0
        %2268 = vmatprep.subr.bf16.mxu0 0
        %2269 = vmatpush1.bf16.msra.mxu0 0
        %2270 = vmatprep.subr.bf16.mxu0 0
        %2271 = vmatpush1.bf16.msra.mxu0 0
        %2272 = vmatprep.mubr.bf16.mxu0 0
        %2273 = vmatmul.mubr.bf16.gmra.mrb[0].mxu0 %v2143
        %v2274 = vpop.f32.mrb[0].mxu0
        %v2275 = vadd.f32 0.0, %v2274
        %v2276 = vpop.f32.mrb[0].mxu0
        %v2277 = vadd.f32 0.0, %v2276
        %v2278 = vpop.f32.mrb[0].mxu0
        %v2279 = vpop.f32.mrb[0].mxu0
        %2280 = vdwg.mxu0
        %v2297 = vunpack.c.l.b16 %v2029
        %v2298 = vunpack.c.h.b16 %v2029
        %v2299 = vunpack.c.l.b16 %v2030
        %v2300 = vunpack.c.h.b16 %v2030
        %v2301 = vunpack.c.l.b16 %v2031
        %v2302 = vunpack.c.h.b16 %v2031
        %v2303 = vunpack.c.l.b16 %v2032
        %v2304 = vunpack.c.h.b16 %v2032
        %v2305 = vunpack.c.l.b16 %v2033
        %v2306 = vunpack.c.h.b16 %v2033
        %v2307 = vunpack.c.l.b16 %v2034
        %v2308 = vunpack.c.h.b16 %v2034
        %v2309 = vunpack.c.l.b16 %v2035
        %v2310 = vunpack.c.h.b16 %v2035
        %v2311 = vunpack.c.l.b16 %v2036
        %v2312 = vunpack.c.h.b16 %v2036
        %v2313 = vunpack.c.l.b16 %v2037
        %v2314 = vunpack.c.h.b16 %v2037
        %v2315 = vunpack.c.l.b16 %v2038
        %v2316 = vunpack.c.h.b16 %v2038
        %v2317 = vunpack.c.l.b16 %v2039
        %v2318 = vunpack.c.h.b16 %v2039
        %v2319 = vunpack.c.l.b16 %v2040
        %v2320 = vunpack.c.h.b16 %v2040
        %v2321 = vunpack.c.l.b16 %v2041
        %v2322 = vunpack.c.h.b16 %v2041
        %v2323 = vunpack.c.l.b16 %v2042
        %v2324 = vunpack.c.h.b16 %v2042
        %v2325 = vunpack.c.l.b16 %v2043
        %v2326 = vunpack.c.h.b16 %v2043
        %v2327 = vunpack.c.l.b16 %v2044
        %v2328 = vunpack.c.h.b16 %v2044
        %v2329 = vpack.c.b16 %v2299, %v2297
        %v2330 = vpack.c.b16 %v2300, %v2298
        %v2331 = vpack.c.b16 %v2303, %v2301
        %v2332 = vpack.c.b16 %v2304, %v2302
        %v2333 = vpack.c.b16 %v2307, %v2305
        %v2334 = vpack.c.b16 %v2308, %v2306
        %v2335 = vpack.c.b16 %v2311, %v2309
        %v2336 = vpack.c.b16 %v2312, %v2310
        %v2337 = vpack.c.b16 %v2315, %v2313
        %v2338 = vpack.c.b16 %v2316, %v2314
        %v2339 = vpack.c.b16 %v2319, %v2317
        %v2340 = vpack.c.b16 %v2320, %v2318
        %v2341 = vpack.c.b16 %v2323, %v2321
        %v2342 = vpack.c.b16 %v2324, %v2322
        %v2343 = vpack.c.b16 %v2327, %v2325
        %v2344 = vpack.c.b16 %v2328, %v2326
        %2361 = vmatprep.subr.bf16.mxu0 %v2330
        %2362 = vmatpush1.bf16.msra.mxu0 %v2329
        %2363 = vmatprep.subr.bf16.mxu0 %v2332
        %2364 = vmatpush1.bf16.msra.mxu0 %v2331
        %2365 = vmatprep.subr.bf16.mxu0 %v2334
        %2366 = vmatpush1.bf16.msra.mxu0 %v2333
        %2367 = vmatprep.subr.bf16.mxu0 %v2336
        %2368 = vmatpush1.bf16.msra.mxu0 %v2335
        %2369 = vmatprep.subr.bf16.mxu0 %v2338
        %2370 = vmatpush1.bf16.msra.mxu0 %v2337
        %2371 = vmatprep.subr.bf16.mxu0 %v2340
        %2372 = vmatpush1.bf16.msra.mxu0 %v2339
        %2373 = vmatprep.subr.bf16.mxu0 %v2342
        %2374 = vmatpush1.bf16.msra.mxu0 %v2341
        %2375 = vmatprep.subr.bf16.mxu0 %v2344
        %2376 = vmatpush1.bf16.msra.mxu0 %v2343
        %2377 = vmatprep.subr.bf16.mxu0 0
        %2378 = vmatpush1.bf16.msra.mxu0 0
        %2379 = vmatprep.subr.bf16.mxu0 0
        %2380 = vmatpush1.bf16.msra.mxu0 0
        %2381 = vmatprep.subr.bf16.mxu0 0
        %2382 = vmatpush1.bf16.msra.mxu0 0
        %2383 = vmatprep.subr.bf16.mxu0 0
        %2384 = vmatpush1.bf16.msra.mxu0 0
        %2385 = vmatprep.subr.bf16.mxu0 0
        %2386 = vmatpush1.bf16.msra.mxu0 0
        %2387 = vmatprep.subr.bf16.mxu0 0
        %2388 = vmatpush1.bf16.msra.mxu0 0
        %2389 = vmatprep.subr.bf16.mxu0 0
        %2390 = vmatpush1.bf16.msra.mxu0 0
        %2391 = vmatprep.subr.bf16.mxu0 0
        %2392 = vmatpush1.bf16.msra.mxu0 0
        %2393 = vmatprep.mubr.bf16.mxu0 0
        %2394 = vmatmul.mubr.bf16.gmra.mrb[0].mxu0 %v2028
        %v2395 = vpop.f32.mrb[0].mxu0
        %v2396 = vadd.f32 %v2275, %v2395
        %v2397 = vpop.f32.mrb[0].mxu0
        %v2398 = vadd.f32 %v2277, %v2397
        %v2399 = vpop.f32.mrb[0].mxu0
        %v2400 = vpop.f32.mrb[0].mxu0
        %2401 = vdwg.mxu0
        %v2402 = vld [vmem:[%s17] sm:$0x3]
        %v2403 = vld [vmem:[%s16] sm:$0x3]
        %v2405 = vlaneseq
        %v2406 = vshrl.u32 %v2405, 7
        %v2407 = vsub.s32 0, %v2406
        %v2408 = vrot.slane %v2403, %v2407
        %v2409 = vlaneseq
        %v2410 = vshrl.u32 %v2409, 7
        %v2411 = vsub.s32 1, %v2410
        %v2412 = vrot.slane %v2403, %v2411
        %v2415 = vadd.f32 %v2396, %v2408
        %v2416 = vadd.f32 %v2398, %v2412
        %v2418 = vlaneseq
        %v2419 = vshrl.u32 %v2418, 7
        %v2420 = vsub.s32 0, %v2419
        %v2421 = vrot.slane %v2402, %v2420
        %v2422 = vlaneseq
        %v2423 = vshrl.u32 %v2422, 7
        %v2424 = vsub.s32 1, %v2423
        %v2425 = vrot.slane %v2402, %v2424
        %v2428 = vmul.f32 %v2421, %v2415
        %v2429 = vmul.f32 %v2425, %v2416
        %v2430 = vadd.f32 %v928, %v2428
        %v2431 = vadd.f32 %v929, %v2429
        %v2432 = vld [vmem:[%s18] sm:$0x3]
        %v2433 = vld [vmem:[%s19] sm:$0x3]
        %v2434 = vadd.f32 %v2430, %v2431
        %2435 = vadd.xlane.f32.xlu0 %v2434
        %v2436 = vpop.xlane.xlu0 %2435
        %v2437 = vmul.f32 %v2436, %v951
        %v2438 = vsub.f32 %v2430, %v2437
        %v2439 = vsub.f32 %v2431, %v2437
        %v2440 = vmul.f32 %v2438, %v2438
        %v2441 = vmul.f32 %v2439, %v2439
        %v2442 = vadd.f32 %v2440, %v2441
        %2443 = vadd.xlane.f32.xlu0 %v2442
        %v2444 = vpop.xlane.xlu0 %2443
        %v2445 = vmul.f32 %v2444, %v951
        %v2446 = vadd.f32 %v2445, 1e-06
        %v2447 = vrsqrt.pop %v2446
        %v2448 = vmul.f32 %v2438, %v2447
        %v2449 = vmul.f32 %v2439, %v2447
        %v2451 = vlaneseq
        %v2452 = vshrl.u32 %v2451, 7
        %v2453 = vsub.s32 0, %v2452
        %v2454 = vrot.slane %v2432, %v2453
        %v2455 = vlaneseq
        %v2456 = vshrl.u32 %v2455, 7
        %v2457 = vsub.s32 1, %v2456
        %v2458 = vrot.slane %v2432, %v2457
        %v2461 = vmul.f32 %v2448, %v2454
        %v2462 = vmul.f32 %v2449, %v2458
        %v2464 = vlaneseq
        %v2465 = vshrl.u32 %v2464, 7
        %v2466 = vsub.s32 0, %v2465
        %v2467 = vrot.slane %v2433, %v2466
        %v2468 = vlaneseq
        %v2469 = vshrl.u32 %v2468, 7
        %v2470 = vsub.s32 1, %v2469
        %v2471 = vrot.slane %v2433, %v2470
        %v2474 = vadd.f32 %v2461, %v2467
        %v2475 = vadd.f32 %v2462, %v2471
        %v2476 = vpack.c.bf16 %v2474, %v2474
        %v2477 = vpack.c.bf16 %v2475, %v2475
        %v2478 = vld [vmem:[#allocation9] sm:$0xff]
        %v2479 = vld [vmem:[#allocation9 + $0x8] sm:$0xff]
        %v2480 = vld [vmem:[#allocation9 + $0x10] sm:$0xff]
        %v2481 = vld [vmem:[#allocation9 + $0x18] sm:$0xff]
        %v2482 = vld [vmem:[#allocation9 + $0x20] sm:$0xff]
        %v2483 = vld [vmem:[#allocation9 + $0x28] sm:$0xff]
        %v2484 = vld [vmem:[#allocation9 + $0x30] sm:$0xff]
        %v2485 = vld [vmem:[#allocation9 + $0x38] sm:$0xff]
        %v2486 = vld [vmem:[#allocation9 + $0x40] sm:$0xff]
        %v2487 = vld [vmem:[#allocation9 + $0x48] sm:$0xff]
        %v2488 = vld [vmem:[#allocation9 + $0x50] sm:$0xff]
        %v2489 = vld [vmem:[#allocation9 + $0x58] sm:$0xff]
        %v2490 = vld [vmem:[#allocation9 + $0x60] sm:$0xff]
        %v2491 = vld [vmem:[#allocation9 + $0x68] sm:$0xff]
        %v2492 = vld [vmem:[#allocation9 + $0x70] sm:$0xff]
        %v2493 = vld [vmem:[#allocation9 + $0x78] sm:$0xff]
        %v2494 = vld [vmem:[#allocation9 + $0x80] sm:$0xff]
        %v2495 = vld [vmem:[#allocation9 + $0x88] sm:$0xff]
        %v2496 = vld [vmem:[#allocation9 + $0x90] sm:$0xff]
        %v2497 = vld [vmem:[#allocation9 + $0x98] sm:$0xff]
        %v2498 = vld [vmem:[#allocation9 + $0xa0] sm:$0xff]
        %v2499 = vld [vmem:[#allocation9 + $0xa8] sm:$0xff]
        %v2500 = vld [vmem:[#allocation9 + $0xb0] sm:$0xff]
        %v2501 = vld [vmem:[#allocation9 + $0xb8] sm:$0xff]
        %v2502 = vld [vmem:[#allocation9 + $0xc0] sm:$0xff]
        %v2503 = vld [vmem:[#allocation9 + $0xc8] sm:$0xff]
        %v2504 = vld [vmem:[#allocation9 + $0xd0] sm:$0xff]
        %v2505 = vld [vmem:[#allocation9 + $0xd8] sm:$0xff]
        %v2506 = vld [vmem:[#allocation9 + $0xe0] sm:$0xff]
        %v2507 = vld [vmem:[#allocation9 + $0xe8] sm:$0xff]
        %v2508 = vld [vmem:[#allocation9 + $0xf0] sm:$0xff]
        %v2509 = vld [vmem:[#allocation9 + $0xf8] sm:$0xff]
        %v2510 = vld [vmem:[#allocation9 + $0x100] sm:$0xff]
        %v2511 = vld [vmem:[#allocation9 + $0x108] sm:$0xff]
        %v2512 = vld [vmem:[#allocation9 + $0x110] sm:$0xff]
        %v2513 = vld [vmem:[#allocation9 + $0x118] sm:$0xff]
        %v2514 = vld [vmem:[#allocation9 + $0x120] sm:$0xff]
        %v2515 = vld [vmem:[#allocation9 + $0x128] sm:$0xff]
        %v2516 = vld [vmem:[#allocation9 + $0x130] sm:$0xff]
        %v2517 = vld [vmem:[#allocation9 + $0x138] sm:$0xff]
        %v2518 = vld [vmem:[#allocation9 + $0x140] sm:$0xff]
        %v2519 = vld [vmem:[#allocation9 + $0x148] sm:$0xff]
        %v2520 = vld [vmem:[#allocation9 + $0x150] sm:$0xff]
        %v2521 = vld [vmem:[#allocation9 + $0x158] sm:$0xff]
        %v2522 = vld [vmem:[#allocation9 + $0x160] sm:$0xff]
        %v2523 = vld [vmem:[#allocation9 + $0x168] sm:$0xff]
        %v2524 = vld [vmem:[#allocation9 + $0x170] sm:$0xff]
        %v2525 = vld [vmem:[#allocation9 + $0x178] sm:$0xff]
        %v2526 = vld [vmem:[#allocation9 + $0x180] sm:$0xff]
        %v2527 = vld [vmem:[#allocation9 + $0x188] sm:$0xff]
        %v2528 = vld [vmem:[#allocation9 + $0x190] sm:$0xff]
        %v2529 = vld [vmem:[#allocation9 + $0x198] sm:$0xff]
        %v2530 = vld [vmem:[#allocation9 + $0x1a0] sm:$0xff]
        %v2531 = vld [vmem:[#allocation9 + $0x1a8] sm:$0xff]
        %v2532 = vld [vmem:[#allocation9 + $0x1b0] sm:$0xff]
        %v2533 = vld [vmem:[#allocation9 + $0x1b8] sm:$0xff]
        %v2534 = vld [vmem:[#allocation9 + $0x1c0] sm:$0xff]
        %v2535 = vld [vmem:[#allocation9 + $0x1c8] sm:$0xff]
        %v2536 = vld [vmem:[#allocation9 + $0x1d0] sm:$0xff]
        %v2537 = vld [vmem:[#allocation9 + $0x1d8] sm:$0xff]
        %v2538 = vld [vmem:[#allocation9 + $0x1e0] sm:$0xff]
        %v2539 = vld [vmem:[#allocation9 + $0x1e8] sm:$0xff]
        %v2540 = vld [vmem:[#allocation9 + $0x1f0] sm:$0xff]
        %v2541 = vld [vmem:[#allocation9 + $0x1f8] sm:$0xff]
        %v2542 = vld [vmem:[#allocation9 + $0x200] sm:$0xff]
        %v2543 = vld [vmem:[#allocation9 + $0x208] sm:$0xff]
        %v2544 = vld [vmem:[#allocation9 + $0x210] sm:$0xff]
        %v2545 = vld [vmem:[#allocation9 + $0x218] sm:$0xff]
        %v2546 = vld [vmem:[#allocation9 + $0x220] sm:$0xff]
        %v2547 = vld [vmem:[#allocation9 + $0x228] sm:$0xff]
        %v2548 = vld [vmem:[#allocation9 + $0x230] sm:$0xff]
        %v2549 = vld [vmem:[#allocation9 + $0x238] sm:$0xff]
        %v2550 = vld [vmem:[#allocation9 + $0x240] sm:$0xff]
        %v2551 = vld [vmem:[#allocation9 + $0x248] sm:$0xff]
        %v2552 = vld [vmem:[#allocation9 + $0x250] sm:$0xff]
        %v2553 = vld [vmem:[#allocation9 + $0x258] sm:$0xff]
        %v2554 = vld [vmem:[#allocation9 + $0x260] sm:$0xff]
        %v2555 = vld [vmem:[#allocation9 + $0x268] sm:$0xff]
        %v2556 = vld [vmem:[#allocation9 + $0x270] sm:$0xff]
        %v2557 = vld [vmem:[#allocation9 + $0x278] sm:$0xff]
        %v2558 = vld [vmem:[#allocation9 + $0x280] sm:$0xff]
        %v2559 = vld [vmem:[#allocation9 + $0x288] sm:$0xff]
        %v2560 = vld [vmem:[#allocation9 + $0x290] sm:$0xff]
        %v2561 = vld [vmem:[#allocation9 + $0x298] sm:$0xff]
        %v2562 = vld [vmem:[#allocation9 + $0x2a0] sm:$0xff]
        %v2563 = vld [vmem:[#allocation9 + $0x2a8] sm:$0xff]
        %v2564 = vld [vmem:[#allocation9 + $0x2b0] sm:$0xff]
        %v2565 = vld [vmem:[#allocation9 + $0x2b8] sm:$0xff]
        %v2566 = vld [vmem:[#allocation9 + $0x2c0] sm:$0xff]
        %v2567 = vld [vmem:[#allocation9 + $0x2c8] sm:$0xff]
        %v2568 = vld [vmem:[#allocation9 + $0x2d0] sm:$0xff]
        %v2569 = vld [vmem:[#allocation9 + $0x2d8] sm:$0xff]
        %v2570 = vld [vmem:[#allocation9 + $0x2e0] sm:$0xff]
        %v2571 = vld [vmem:[#allocation9 + $0x2e8] sm:$0xff]
        %v2572 = vld [vmem:[#allocation9 + $0x2f0] sm:$0xff]
        %v2573 = vld [vmem:[#allocation9 + $0x2f8] sm:$0xff]
        %v2574 = vld [vmem:[#allocation9 + $0x300] sm:$0xff]
        %v2575 = vld [vmem:[#allocation9 + $0x308] sm:$0xff]
        %v2576 = vld [vmem:[#allocation9 + $0x310] sm:$0xff]
        %v2577 = vld [vmem:[#allocation9 + $0x318] sm:$0xff]
        %v2578 = vld [vmem:[#allocation9 + $0x320] sm:$0xff]
        %v2579 = vld [vmem:[#allocation9 + $0x328] sm:$0xff]
        %v2580 = vld [vmem:[#allocation9 + $0x330] sm:$0xff]
        %v2581 = vld [vmem:[#allocation9 + $0x338] sm:$0xff]
        %v2582 = vld [vmem:[#allocation9 + $0x340] sm:$0xff]
        %v2583 = vld [vmem:[#allocation9 + $0x348] sm:$0xff]
        %v2584 = vld [vmem:[#allocation9 + $0x350] sm:$0xff]
        %v2585 = vld [vmem:[#allocation9 + $0x358] sm:$0xff]
        %v2586 = vld [vmem:[#allocation9 + $0x360] sm:$0xff]
        %v2587 = vld [vmem:[#allocation9 + $0x368] sm:$0xff]
        %v2588 = vld [vmem:[#allocation9 + $0x370] sm:$0xff]
        %v2589 = vld [vmem:[#allocation9 + $0x378] sm:$0xff]
        %v2590 = vld [vmem:[#allocation9 + $0x380] sm:$0xff]
        %v2591 = vld [vmem:[#allocation9 + $0x388] sm:$0xff]
        %v2592 = vld [vmem:[#allocation9 + $0x390] sm:$0xff]
        %v2593 = vld [vmem:[#allocation9 + $0x398] sm:$0xff]
        %v2594 = vld [vmem:[#allocation9 + $0x3a0] sm:$0xff]
        %v2595 = vld [vmem:[#allocation9 + $0x3a8] sm:$0xff]
        %v2596 = vld [vmem:[#allocation9 + $0x3b0] sm:$0xff]
        %v2597 = vld [vmem:[#allocation9 + $0x3b8] sm:$0xff]
        %v2598 = vld [vmem:[#allocation9 + $0x3c0] sm:$0xff]
        %v2599 = vld [vmem:[#allocation9 + $0x3c8] sm:$0xff]
        %v2600 = vld [vmem:[#allocation9 + $0x3d0] sm:$0xff]
        %v2601 = vld [vmem:[#allocation9 + $0x3d8] sm:$0xff]
        %v2602 = vld [vmem:[#allocation9 + $0x3e0] sm:$0xff]
        %v2603 = vld [vmem:[#allocation9 + $0x3e8] sm:$0xff]
        %v2604 = vld [vmem:[#allocation9 + $0x3f0] sm:$0xff]
        %v2605 = vld [vmem:[#allocation9 + $0x3f8] sm:$0xff]
        %v2606 = vld [vmem:[%s21] sm:$0xff]
        %v2608 = vlaneseq
        %v2609 = vshrl.u32 %v2608, 7
        %v2610 = vsub.s32 0, %v2609
        %v2611 = vrot.slane %v2606, %v2610
        %v2612 = vlaneseq
        %v2613 = vshrl.u32 %v2612, 7
        %v2614 = vsub.s32 1, %v2613
        %v2615 = vrot.slane %v2606, %v2614
        %v2616 = vlaneseq
        %v2617 = vshrl.u32 %v2616, 7
        %v2618 = vsub.s32 2, %v2617
        %v2619 = vrot.slane %v2606, %v2618
        %v2620 = vlaneseq
        %v2621 = vshrl.u32 %v2620, 7
        %v2622 = vsub.s32 3, %v2621
        %v2623 = vrot.slane %v2606, %v2622
        %v2624 = vlaneseq
        %v2625 = vshrl.u32 %v2624, 7
        %v2626 = vsub.s32 4, %v2625
        %v2627 = vrot.slane %v2606, %v2626
        %v2628 = vlaneseq
        %v2629 = vshrl.u32 %v2628, 7
        %v2630 = vsub.s32 5, %v2629
        %v2631 = vrot.slane %v2606, %v2630
        %v2632 = vlaneseq
        %v2633 = vshrl.u32 %v2632, 7
        %v2634 = vsub.s32 6, %v2633
        %v2635 = vrot.slane %v2606, %v2634
        %v2636 = vlaneseq
        %v2637 = vshrl.u32 %v2636, 7
        %v2638 = vsub.s32 7, %v2637
        %v2639 = vrot.slane %v2606, %v2638
        %v2776 = vunpack.c.l.b16 %v2478
        %v2777 = vunpack.c.h.b16 %v2478
        %v2778 = vunpack.c.l.b16 %v2479
        %v2779 = vunpack.c.h.b16 %v2479
        %v2780 = vunpack.c.l.b16 %v2480
        %v2781 = vunpack.c.h.b16 %v2480
        %v2782 = vunpack.c.l.b16 %v2481
        %v2783 = vunpack.c.h.b16 %v2481
        %v2784 = vunpack.c.l.b16 %v2482
        %v2785 = vunpack.c.h.b16 %v2482
        %v2786 = vunpack.c.l.b16 %v2483
        %v2787 = vunpack.c.h.b16 %v2483
        %v2788 = vunpack.c.l.b16 %v2484
        %v2789 = vunpack.c.h.b16 %v2484
        %v2790 = vunpack.c.l.b16 %v2485
        %v2791 = vunpack.c.h.b16 %v2485
        %v2792 = vunpack.c.l.b16 %v2486
        %v2793 = vunpack.c.h.b16 %v2486
        %v2794 = vunpack.c.l.b16 %v2487
        %v2795 = vunpack.c.h.b16 %v2487
        %v2796 = vunpack.c.l.b16 %v2488
        %v2797 = vunpack.c.h.b16 %v2488
        %v2798 = vunpack.c.l.b16 %v2489
        %v2799 = vunpack.c.h.b16 %v2489
        %v2800 = vunpack.c.l.b16 %v2490
        %v2801 = vunpack.c.h.b16 %v2490
        %v2802 = vunpack.c.l.b16 %v2491
        %v2803 = vunpack.c.h.b16 %v2491
        %v2804 = vunpack.c.l.b16 %v2492
        %v2805 = vunpack.c.h.b16 %v2492
        %v2806 = vunpack.c.l.b16 %v2493
        %v2807 = vunpack.c.h.b16 %v2493
        %v2808 = vunpack.c.l.b16 %v2494
        %v2809 = vunpack.c.h.b16 %v2494
        %v2810 = vunpack.c.l.b16 %v2495
        %v2811 = vunpack.c.h.b16 %v2495
        %v2812 = vunpack.c.l.b16 %v2496
        %v2813 = vunpack.c.h.b16 %v2496
        %v2814 = vunpack.c.l.b16 %v2497
        %v2815 = vunpack.c.h.b16 %v2497
        %v2816 = vunpack.c.l.b16 %v2498
        %v2817 = vunpack.c.h.b16 %v2498
        %v2818 = vunpack.c.l.b16 %v2499
        %v2819 = vunpack.c.h.b16 %v2499
        %v2820 = vunpack.c.l.b16 %v2500
        %v2821 = vunpack.c.h.b16 %v2500
        %v2822 = vunpack.c.l.b16 %v2501
        %v2823 = vunpack.c.h.b16 %v2501
        %v2824 = vunpack.c.l.b16 %v2502
        %v2825 = vunpack.c.h.b16 %v2502
        %v2826 = vunpack.c.l.b16 %v2503
        %v2827 = vunpack.c.h.b16 %v2503
        %v2828 = vunpack.c.l.b16 %v2504
        %v2829 = vunpack.c.h.b16 %v2504
        %v2830 = vunpack.c.l.b16 %v2505
        %v2831 = vunpack.c.h.b16 %v2505
        %v2832 = vunpack.c.l.b16 %v2506
        %v2833 = vunpack.c.h.b16 %v2506
        %v2834 = vunpack.c.l.b16 %v2507
        %v2835 = vunpack.c.h.b16 %v2507
        %v2836 = vunpack.c.l.b16 %v2508
        %v2837 = vunpack.c.h.b16 %v2508
        %v2838 = vunpack.c.l.b16 %v2509
        %v2839 = vunpack.c.h.b16 %v2509
        %v2840 = vunpack.c.l.b16 %v2510
        %v2841 = vunpack.c.h.b16 %v2510
        %v2842 = vunpack.c.l.b16 %v2511
        %v2843 = vunpack.c.h.b16 %v2511
        %v2844 = vunpack.c.l.b16 %v2512
        %v2845 = vunpack.c.h.b16 %v2512
        %v2846 = vunpack.c.l.b16 %v2513
        %v2847 = vunpack.c.h.b16 %v2513
        %v2848 = vunpack.c.l.b16 %v2514
        %v2849 = vunpack.c.h.b16 %v2514
        %v2850 = vunpack.c.l.b16 %v2515
        %v2851 = vunpack.c.h.b16 %v2515
        %v2852 = vunpack.c.l.b16 %v2516
        %v2853 = vunpack.c.h.b16 %v2516
        %v2854 = vunpack.c.l.b16 %v2517
        %v2855 = vunpack.c.h.b16 %v2517
        %v2856 = vunpack.c.l.b16 %v2518
        %v2857 = vunpack.c.h.b16 %v2518
        %v2858 = vunpack.c.l.b16 %v2519
        %v2859 = vunpack.c.h.b16 %v2519
        %v2860 = vunpack.c.l.b16 %v2520
        %v2861 = vunpack.c.h.b16 %v2520
        %v2862 = vunpack.c.l.b16 %v2521
        %v2863 = vunpack.c.h.b16 %v2521
        %v2864 = vunpack.c.l.b16 %v2522
        %v2865 = vunpack.c.h.b16 %v2522
        %v2866 = vunpack.c.l.b16 %v2523
        %v2867 = vunpack.c.h.b16 %v2523
        %v2868 = vunpack.c.l.b16 %v2524
        %v2869 = vunpack.c.h.b16 %v2524
        %v2870 = vunpack.c.l.b16 %v2525
        %v2871 = vunpack.c.h.b16 %v2525
        %v2872 = vunpack.c.l.b16 %v2526
        %v2873 = vunpack.c.h.b16 %v2526
        %v2874 = vunpack.c.l.b16 %v2527
        %v2875 = vunpack.c.h.b16 %v2527
        %v2876 = vunpack.c.l.b16 %v2528
        %v2877 = vunpack.c.h.b16 %v2528
        %v2878 = vunpack.c.l.b16 %v2529
        %v2879 = vunpack.c.h.b16 %v2529
        %v2880 = vunpack.c.l.b16 %v2530
        %v2881 = vunpack.c.h.b16 %v2530
        %v2882 = vunpack.c.l.b16 %v2531
        %v2883 = vunpack.c.h.b16 %v2531
        %v2884 = vunpack.c.l.b16 %v2532
        %v2885 = vunpack.c.h.b16 %v2532
        %v2886 = vunpack.c.l.b16 %v2533
        %v2887 = vunpack.c.h.b16 %v2533
        %v2888 = vunpack.c.l.b16 %v2534
        %v2889 = vunpack.c.h.b16 %v2534
        %v2890 = vunpack.c.l.b16 %v2535
        %v2891 = vunpack.c.h.b16 %v2535
        %v2892 = vunpack.c.l.b16 %v2536
        %v2893 = vunpack.c.h.b16 %v2536
        %v2894 = vunpack.c.l.b16 %v2537
        %v2895 = vunpack.c.h.b16 %v2537
        %v2896 = vunpack.c.l.b16 %v2538
        %v2897 = vunpack.c.h.b16 %v2538
        %v2898 = vunpack.c.l.b16 %v2539
        %v2899 = vunpack.c.h.b16 %v2539
        %v2900 = vunpack.c.l.b16 %v2540
        %v2901 = vunpack.c.h.b16 %v2540
        %v2902 = vunpack.c.l.b16 %v2541
        %v2903 = vunpack.c.h.b16 %v2541
        %v2904 = vunpack.c.l.b16 %v2542
        %v2905 = vunpack.c.h.b16 %v2542
        %v2906 = vunpack.c.l.b16 %v2543
        %v2907 = vunpack.c.h.b16 %v2543
        %v2908 = vunpack.c.l.b16 %v2544
        %v2909 = vunpack.c.h.b16 %v2544
        %v2910 = vunpack.c.l.b16 %v2545
        %v2911 = vunpack.c.h.b16 %v2545
        %v2912 = vunpack.c.l.b16 %v2546
        %v2913 = vunpack.c.h.b16 %v2546
        %v2914 = vunpack.c.l.b16 %v2547
        %v2915 = vunpack.c.h.b16 %v2547
        %v2916 = vunpack.c.l.b16 %v2548
        %v2917 = vunpack.c.h.b16 %v2548
        %v2918 = vunpack.c.l.b16 %v2549
        %v2919 = vunpack.c.h.b16 %v2549
        %v2920 = vunpack.c.l.b16 %v2550
        %v2921 = vunpack.c.h.b16 %v2550
        %v2922 = vunpack.c.l.b16 %v2551
        %v2923 = vunpack.c.h.b16 %v2551
        %v2924 = vunpack.c.l.b16 %v2552
        %v2925 = vunpack.c.h.b16 %v2552
        %v2926 = vunpack.c.l.b16 %v2553
        %v2927 = vunpack.c.h.b16 %v2553
        %v2928 = vunpack.c.l.b16 %v2554
        %v2929 = vunpack.c.h.b16 %v2554
        %v2930 = vunpack.c.l.b16 %v2555
        %v2931 = vunpack.c.h.b16 %v2555
        %v2932 = vunpack.c.l.b16 %v2556
        %v2933 = vunpack.c.h.b16 %v2556
        %v2934 = vunpack.c.l.b16 %v2557
        %v2935 = vunpack.c.h.b16 %v2557
        %v2936 = vunpack.c.l.b16 %v2558
        %v2937 = vunpack.c.h.b16 %v2558
        %v2938 = vunpack.c.l.b16 %v2559
        %v2939 = vunpack.c.h.b16 %v2559
        %v2940 = vunpack.c.l.b16 %v2560
        %v2941 = vunpack.c.h.b16 %v2560
        %v2942 = vunpack.c.l.b16 %v2561
        %v2943 = vunpack.c.h.b16 %v2561
        %v2944 = vunpack.c.l.b16 %v2562
        %v2945 = vunpack.c.h.b16 %v2562
        %v2946 = vunpack.c.l.b16 %v2563
        %v2947 = vunpack.c.h.b16 %v2563
        %v2948 = vunpack.c.l.b16 %v2564
        %v2949 = vunpack.c.h.b16 %v2564
        %v2950 = vunpack.c.l.b16 %v2565
        %v2951 = vunpack.c.h.b16 %v2565
        %v2952 = vunpack.c.l.b16 %v2566
        %v2953 = vunpack.c.h.b16 %v2566
        %v2954 = vunpack.c.l.b16 %v2567
        %v2955 = vunpack.c.h.b16 %v2567
        %v2956 = vunpack.c.l.b16 %v2568
        %v2957 = vunpack.c.h.b16 %v2568
        %v2958 = vunpack.c.l.b16 %v2569
        %v2959 = vunpack.c.h.b16 %v2569
        %v2960 = vunpack.c.l.b16 %v2570
        %v2961 = vunpack.c.h.b16 %v2570
        %v2962 = vunpack.c.l.b16 %v2571
        %v2963 = vunpack.c.h.b16 %v2571
        %v2964 = vunpack.c.l.b16 %v2572
        %v2965 = vunpack.c.h.b16 %v2572
        %v2966 = vunpack.c.l.b16 %v2573
        %v2967 = vunpack.c.h.b16 %v2573
        %v2968 = vunpack.c.l.b16 %v2574
        %v2969 = vunpack.c.h.b16 %v2574
        %v2970 = vunpack.c.l.b16 %v2575
        %v2971 = vunpack.c.h.b16 %v2575
        %v2972 = vunpack.c.l.b16 %v2576
        %v2973 = vunpack.c.h.b16 %v2576
        %v2974 = vunpack.c.l.b16 %v2577
        %v2975 = vunpack.c.h.b16 %v2577
        %v2976 = vunpack.c.l.b16 %v2578
        %v2977 = vunpack.c.h.b16 %v2578
        %v2978 = vunpack.c.l.b16 %v2579
        %v2979 = vunpack.c.h.b16 %v2579
        %v2980 = vunpack.c.l.b16 %v2580
        %v2981 = vunpack.c.h.b16 %v2580
        %v2982 = vunpack.c.l.b16 %v2581
        %v2983 = vunpack.c.h.b16 %v2581
        %v2984 = vunpack.c.l.b16 %v2582
        %v2985 = vunpack.c.h.b16 %v2582
        %v2986 = vunpack.c.l.b16 %v2583
        %v2987 = vunpack.c.h.b16 %v2583
        %v2988 = vunpack.c.l.b16 %v2584
        %v2989 = vunpack.c.h.b16 %v2584
        %v2990 = vunpack.c.l.b16 %v2585
        %v2991 = vunpack.c.h.b16 %v2585
        %v2992 = vunpack.c.l.b16 %v2586
        %v2993 = vunpack.c.h.b16 %v2586
        %v2994 = vunpack.c.l.b16 %v2587
        %v2995 = vunpack.c.h.b16 %v2587
        %v2996 = vunpack.c.l.b16 %v2588
        %v2997 = vunpack.c.h.b16 %v2588
        %v2998 = vunpack.c.l.b16 %v2589
        %v2999 = vunpack.c.h.b16 %v2589
        %v3000 = vunpack.c.l.b16 %v2590
        %v3001 = vunpack.c.h.b16 %v2590
        %v3002 = vunpack.c.l.b16 %v2591
        %v3003 = vunpack.c.h.b16 %v2591
        %v3004 = vunpack.c.l.b16 %v2592
        %v3005 = vunpack.c.h.b16 %v2592
        %v3006 = vunpack.c.l.b16 %v2593
        %v3007 = vunpack.c.h.b16 %v2593
        %v3008 = vunpack.c.l.b16 %v2594
        %v3009 = vunpack.c.h.b16 %v2594
        %v3010 = vunpack.c.l.b16 %v2595
        %v3011 = vunpack.c.h.b16 %v2595
        %v3012 = vunpack.c.l.b16 %v2596
        %v3013 = vunpack.c.h.b16 %v2596
        %v3014 = vunpack.c.l.b16 %v2597
        %v3015 = vunpack.c.h.b16 %v2597
        %v3016 = vunpack.c.l.b16 %v2598
        %v3017 = vunpack.c.h.b16 %v2598
        %v3018 = vunpack.c.l.b16 %v2599
        %v3019 = vunpack.c.h.b16 %v2599
        %v3020 = vunpack.c.l.b16 %v2600
        %v3021 = vunpack.c.h.b16 %v2600
        %v3022 = vunpack.c.l.b16 %v2601
        %v3023 = vunpack.c.h.b16 %v2601
        %v3024 = vunpack.c.l.b16 %v2602
        %v3025 = vunpack.c.h.b16 %v2602
        %v3026 = vunpack.c.l.b16 %v2603
        %v3027 = vunpack.c.h.b16 %v2603
        %v3028 = vunpack.c.l.b16 %v2604
        %v3029 = vunpack.c.h.b16 %v2604
        %v3030 = vunpack.c.l.b16 %v2605
        %v3031 = vunpack.c.h.b16 %v2605
        %v3032 = vpack.c.b16 %v2784, %v2776
        %v3033 = vpack.c.b16 %v2785, %v2777
        %v3034 = vpack.c.b16 %v2786, %v2778
        %v3035 = vpack.c.b16 %v2787, %v2779
        %v3036 = vpack.c.b16 %v2788, %v2780
        %v3037 = vpack.c.b16 %v2789, %v2781
        %v3038 = vpack.c.b16 %v2790, %v2782
        %v3039 = vpack.c.b16 %v2791, %v2783
        %v3040 = vpack.c.b16 %v2800, %v2792
        %v3041 = vpack.c.b16 %v2801, %v2793
        %v3042 = vpack.c.b16 %v2802, %v2794
        %v3043 = vpack.c.b16 %v2803, %v2795
        %v3044 = vpack.c.b16 %v2804, %v2796
        %v3045 = vpack.c.b16 %v2805, %v2797
        %v3046 = vpack.c.b16 %v2806, %v2798
        %v3047 = vpack.c.b16 %v2807, %v2799
        %v3048 = vpack.c.b16 %v2816, %v2808
        %v3049 = vpack.c.b16 %v2817, %v2809
        %v3050 = vpack.c.b16 %v2818, %v2810
        %v3051 = vpack.c.b16 %v2819, %v2811
        %v3052 = vpack.c.b16 %v2820, %v2812
        %v3053 = vpack.c.b16 %v2821, %v2813
        %v3054 = vpack.c.b16 %v2822, %v2814
        %v3055 = vpack.c.b16 %v2823, %v2815
        %v3056 = vpack.c.b16 %v2832, %v2824
        %v3057 = vpack.c.b16 %v2833, %v2825
        %v3058 = vpack.c.b16 %v2834, %v2826
        %v3059 = vpack.c.b16 %v2835, %v2827
        %v3060 = vpack.c.b16 %v2836, %v2828
        %v3061 = vpack.c.b16 %v2837, %v2829
        %v3062 = vpack.c.b16 %v2838, %v2830
        %v3063 = vpack.c.b16 %v2839, %v2831
        %v3064 = vpack.c.b16 %v2848, %v2840
        %v3065 = vpack.c.b16 %v2849, %v2841
        %v3066 = vpack.c.b16 %v2850, %v2842
        %v3067 = vpack.c.b16 %v2851, %v2843
        %v3068 = vpack.c.b16 %v2852, %v2844
        %v3069 = vpack.c.b16 %v2853, %v2845
        %v3070 = vpack.c.b16 %v2854, %v2846
        %v3071 = vpack.c.b16 %v2855, %v2847
        %v3072 = vpack.c.b16 %v2864, %v2856
        %v3073 = vpack.c.b16 %v2865, %v2857
        %v3074 = vpack.c.b16 %v2866, %v2858
        %v3075 = vpack.c.b16 %v2867, %v2859
        %v3076 = vpack.c.b16 %v2868, %v2860
        %v3077 = vpack.c.b16 %v2869, %v2861
        %v3078 = vpack.c.b16 %v2870, %v2862
        %v3079 = vpack.c.b16 %v2871, %v2863
        %v3080 = vpack.c.b16 %v2880, %v2872
        %v3081 = vpack.c.b16 %v2881, %v2873
        %v3082 = vpack.c.b16 %v2882, %v2874
        %v3083 = vpack.c.b16 %v2883, %v2875
        %v3084 = vpack.c.b16 %v2884, %v2876
        %v3085 = vpack.c.b16 %v2885, %v2877
        %v3086 = vpack.c.b16 %v2886, %v2878
        %v3087 = vpack.c.b16 %v2887, %v2879
        %v3088 = vpack.c.b16 %v2896, %v2888
        %v3089 = vpack.c.b16 %v2897, %v2889
        %v3090 = vpack.c.b16 %v2898, %v2890
        %v3091 = vpack.c.b16 %v2899, %v2891
        %v3092 = vpack.c.b16 %v2900, %v2892
        %v3093 = vpack.c.b16 %v2901, %v2893
        %v3094 = vpack.c.b16 %v2902, %v2894
        %v3095 = vpack.c.b16 %v2903, %v2895
        %v3096 = vpack.c.b16 %v2912, %v2904
        %v3097 = vpack.c.b16 %v2913, %v2905
        %v3098 = vpack.c.b16 %v2914, %v2906
        %v3099 = vpack.c.b16 %v2915, %v2907
        %v3100 = vpack.c.b16 %v2916, %v2908
        %v3101 = vpack.c.b16 %v2917, %v2909
        %v3102 = vpack.c.b16 %v2918, %v2910
        %v3103 = vpack.c.b16 %v2919, %v2911
        %v3104 = vpack.c.b16 %v2928, %v2920
        %v3105 = vpack.c.b16 %v2929, %v2921
        %v3106 = vpack.c.b16 %v2930, %v2922
        %v3107 = vpack.c.b16 %v2931, %v2923
        %v3108 = vpack.c.b16 %v2932, %v2924
        %v3109 = vpack.c.b16 %v2933, %v2925
        %v3110 = vpack.c.b16 %v2934, %v2926
        %v3111 = vpack.c.b16 %v2935, %v2927
        %v3112 = vpack.c.b16 %v2944, %v2936
        %v3113 = vpack.c.b16 %v2945, %v2937
        %v3114 = vpack.c.b16 %v2946, %v2938
        %v3115 = vpack.c.b16 %v2947, %v2939
        %v3116 = vpack.c.b16 %v2948, %v2940
        %v3117 = vpack.c.b16 %v2949, %v2941
        %v3118 = vpack.c.b16 %v2950, %v2942
        %v3119 = vpack.c.b16 %v2951, %v2943
        %v3120 = vpack.c.b16 %v2960, %v2952
        %v3121 = vpack.c.b16 %v2961, %v2953
        %v3122 = vpack.c.b16 %v2962, %v2954
        %v3123 = vpack.c.b16 %v2963, %v2955
        %v3124 = vpack.c.b16 %v2964, %v2956
        %v3125 = vpack.c.b16 %v2965, %v2957
        %v3126 = vpack.c.b16 %v2966, %v2958
        %v3127 = vpack.c.b16 %v2967, %v2959
        %v3128 = vpack.c.b16 %v2976, %v2968
        %v3129 = vpack.c.b16 %v2977, %v2969
        %v3130 = vpack.c.b16 %v2978, %v2970
        %v3131 = vpack.c.b16 %v2979, %v2971
        %v3132 = vpack.c.b16 %v2980, %v2972
        %v3133 = vpack.c.b16 %v2981, %v2973
        %v3134 = vpack.c.b16 %v2982, %v2974
        %v3135 = vpack.c.b16 %v2983, %v2975
        %v3136 = vpack.c.b16 %v2992, %v2984
        %v3137 = vpack.c.b16 %v2993, %v2985
        %v3138 = vpack.c.b16 %v2994, %v2986
        %v3139 = vpack.c.b16 %v2995, %v2987
        %v3140 = vpack.c.b16 %v2996, %v2988
        %v3141 = vpack.c.b16 %v2997, %v2989
        %v3142 = vpack.c.b16 %v2998, %v2990
        %v3143 = vpack.c.b16 %v2999, %v2991
        %v3144 = vpack.c.b16 %v3008, %v3000
        %v3145 = vpack.c.b16 %v3009, %v3001
        %v3146 = vpack.c.b16 %v3010, %v3002
        %v3147 = vpack.c.b16 %v3011, %v3003
        %v3148 = vpack.c.b16 %v3012, %v3004
        %v3149 = vpack.c.b16 %v3013, %v3005
        %v3150 = vpack.c.b16 %v3014, %v3006
        %v3151 = vpack.c.b16 %v3015, %v3007
        %v3152 = vpack.c.b16 %v3024, %v3016
        %v3153 = vpack.c.b16 %v3025, %v3017
        %v3154 = vpack.c.b16 %v3026, %v3018
        %v3155 = vpack.c.b16 %v3027, %v3019
        %v3156 = vpack.c.b16 %v3028, %v3020
        %v3157 = vpack.c.b16 %v3029, %v3021
        %v3158 = vpack.c.b16 %v3030, %v3022
        %v3159 = vpack.c.b16 %v3031, %v3023
        %3288 = vmatprep.subr.bf16.mxu0 %v3033
        %3289 = vmatpush1.bf16.msra.mxu0 %v3032
        %3290 = vmatprep.subr.bf16.mxu0 %v3041
        %3291 = vmatpush1.bf16.msra.mxu0 %v3040
        %3292 = vmatprep.subr.bf16.mxu0 %v3049
        %3293 = vmatpush1.bf16.msra.mxu0 %v3048
        %3294 = vmatprep.subr.bf16.mxu0 %v3057
        %3295 = vmatpush1.bf16.msra.mxu0 %v3056
        %3296 = vmatprep.subr.bf16.mxu0 %v3065
        %3297 = vmatpush1.bf16.msra.mxu0 %v3064
        %3298 = vmatprep.subr.bf16.mxu0 %v3073
        %3299 = vmatpush1.bf16.msra.mxu0 %v3072
        %3300 = vmatprep.subr.bf16.mxu0 %v3081
        %3301 = vmatpush1.bf16.msra.mxu0 %v3080
        %3302 = vmatprep.subr.bf16.mxu0 %v3089
        %3303 = vmatpush1.bf16.msra.mxu0 %v3088
        %3304 = vmatprep.subr.bf16.mxu0 %v3097
        %3305 = vmatpush1.bf16.msra.mxu0 %v3096
        %3306 = vmatprep.subr.bf16.mxu0 %v3105
        %3307 = vmatpush1.bf16.msra.mxu0 %v3104
        %3308 = vmatprep.subr.bf16.mxu0 %v3113
        %3309 = vmatpush1.bf16.msra.mxu0 %v3112
        %3310 = vmatprep.subr.bf16.mxu0 %v3121
        %3311 = vmatpush1.bf16.msra.mxu0 %v3120
        %3312 = vmatprep.subr.bf16.mxu0 %v3129
        %3313 = vmatpush1.bf16.msra.mxu0 %v3128
        %3314 = vmatprep.subr.bf16.mxu0 %v3137
        %3315 = vmatpush1.bf16.msra.mxu0 %v3136
        %3316 = vmatprep.subr.bf16.mxu0 %v3145
        %3317 = vmatpush1.bf16.msra.mxu0 %v3144
        %3318 = vmatprep.subr.bf16.mxu0 %v3153
        %3319 = vmatpush1.bf16.msra.mxu0 %v3152
        %3320 = vmatprep.mubr.bf16.mxu0 %v2477
        %3321 = vmatmul.mubr.bf16.gmra.mrb[0].mxu0 %v2476
        %v3322 = vpop.f32.mrb[0].mxu0
        %v3323 = vadd.f32 %v2611, %v3322
        %v3324 = vpop.f32.mrb[0].mxu0
        %v3325 = vadd.f32 %v2615, %v3324
        %v3326 = vpop.f32.mrb[0].mxu0
        %v3327 = vpop.f32.mrb[0].mxu0
        %3328 = vdwg.mxu0
        %3329 = vmatprep.subr.bf16.mxu0 %v3035
        %3330 = vmatpush1.bf16.msra.mxu0 %v3034
        %3331 = vmatprep.subr.bf16.mxu0 %v3043
        %3332 = vmatpush1.bf16.msra.mxu0 %v3042
        %3333 = vmatprep.subr.bf16.mxu0 %v3051
        %3334 = vmatpush1.bf16.msra.mxu0 %v3050
        %3335 = vmatprep.subr.bf16.mxu0 %v3059
        %3336 = vmatpush1.bf16.msra.mxu0 %v3058
        %3337 = vmatprep.subr.bf16.mxu0 %v3067
        %3338 = vmatpush1.bf16.msra.mxu0 %v3066
        %3339 = vmatprep.subr.bf16.mxu0 %v3075
        %3340 = vmatpush1.bf16.msra.mxu0 %v3074
        %3341 = vmatprep.subr.bf16.mxu0 %v3083
        %3342 = vmatpush1.bf16.msra.mxu0 %v3082
        %3343 = vmatprep.subr.bf16.mxu0 %v3091
        %3344 = vmatpush1.bf16.msra.mxu0 %v3090
        %3345 = vmatprep.subr.bf16.mxu0 %v3099
        %3346 = vmatpush1.bf16.msra.mxu0 %v3098
        %3347 = vmatprep.subr.bf16.mxu0 %v3107
        %3348 = vmatpush1.bf16.msra.mxu0 %v3106
        %3349 = vmatprep.subr.bf16.mxu0 %v3115
        %3350 = vmatpush1.bf16.msra.mxu0 %v3114
        %3351 = vmatprep.subr.bf16.mxu0 %v3123
        %3352 = vmatpush1.bf16.msra.mxu0 %v3122
        %3353 = vmatprep.subr.bf16.mxu0 %v3131
        %3354 = vmatpush1.bf16.msra.mxu0 %v3130
        %3355 = vmatprep.subr.bf16.mxu0 %v3139
        %3356 = vmatpush1.bf16.msra.mxu0 %v3138
        %3357 = vmatprep.subr.bf16.mxu0 %v3147
        %3358 = vmatpush1.bf16.msra.mxu0 %v3146
        %3359 = vmatprep.subr.bf16.mxu0 %v3155
        %3360 = vmatpush1.bf16.msra.mxu0 %v3154
        %3361 = vmatprep.mubr.bf16.mxu0 %v2477
        %3362 = vmatmul.mubr.bf16.gmra.mrb[0].mxu0 %v2476
        %v3363 = vpop.f32.mrb[0].mxu0
        %v3364 = vadd.f32 %v2619, %v3363
        %v3365 = vpop.f32.mrb[0].mxu0
        %v3366 = vadd.f32 %v2623, %v3365
        %v3367 = vpop.f32.mrb[0].mxu0
        %v3368 = vpop.f32.mrb[0].mxu0
        %3369 = vdwg.mxu0
        %3370 = vmatprep.subr.bf16.mxu0 %v3037
        %3371 = vmatpush1.bf16.msra.mxu0 %v3036
        %3372 = vmatprep.subr.bf16.mxu0 %v3045
        %3373 = vmatpush1.bf16.msra.mxu0 %v3044
        %3374 = vmatprep.subr.bf16.mxu0 %v3053
        %3375 = vmatpush1.bf16.msra.mxu0 %v3052
        %3376 = vmatprep.subr.bf16.mxu0 %v3061
        %3377 = vmatpush1.bf16.msra.mxu0 %v3060
        %3378 = vmatprep.subr.bf16.mxu0 %v3069
        %3379 = vmatpush1.bf16.msra.mxu0 %v3068
        %3380 = vmatprep.subr.bf16.mxu0 %v3077
        %3381 = vmatpush1.bf16.msra.mxu0 %v3076
        %3382 = vmatprep.subr.bf16.mxu0 %v3085
        %3383 = vmatpush1.bf16.msra.mxu0 %v3084
        %3384 = vmatprep.subr.bf16.mxu0 %v3093
        %3385 = vmatpush1.bf16.msra.mxu0 %v3092
        %3386 = vmatprep.subr.bf16.mxu0 %v3101
        %3387 = vmatpush1.bf16.msra.mxu0 %v3100
        %3388 = vmatprep.subr.bf16.mxu0 %v3109
        %3389 = vmatpush1.bf16.msra.mxu0 %v3108
        %3390 = vmatprep.subr.bf16.mxu0 %v3117
        %3391 = vmatpush1.bf16.msra.mxu0 %v3116
        %3392 = vmatprep.subr.bf16.mxu0 %v3125
        %3393 = vmatpush1.bf16.msra.mxu0 %v3124
        %3394 = vmatprep.subr.bf16.mxu0 %v3133
        %3395 = vmatpush1.bf16.msra.mxu0 %v3132
        %3396 = vmatprep.subr.bf16.mxu0 %v3141
        %3397 = vmatpush1.bf16.msra.mxu0 %v3140
        %3398 = vmatprep.subr.bf16.mxu0 %v3149
        %3399 = vmatpush1.bf16.msra.mxu0 %v3148
        %3400 = vmatprep.subr.bf16.mxu0 %v3157
        %3401 = vmatpush1.bf16.msra.mxu0 %v3156
        %3402 = vmatprep.mubr.bf16.mxu0 %v2477
        %3403 = vmatmul.mubr.bf16.gmra.mrb[0].mxu0 %v2476
        %v3404 = vpop.f32.mrb[0].mxu0
        %v3405 = vadd.f32 %v2627, %v3404
        %v3406 = vpop.f32.mrb[0].mxu0
        %v3407 = vadd.f32 %v2631, %v3406
        %v3408 = vpop.f32.mrb[0].mxu0
        %v3409 = vpop.f32.mrb[0].mxu0
        %3410 = vdwg.mxu0
        %3411 = vmatprep.subr.bf16.mxu0 %v3039
        %3412 = vmatpush1.bf16.msra.mxu0 %v3038
        %3413 = vmatprep.subr.bf16.mxu0 %v3047
        %3414 = vmatpush1.bf16.msra.mxu0 %v3046
        %3415 = vmatprep.subr.bf16.mxu0 %v3055
        %3416 = vmatpush1.bf16.msra.mxu0 %v3054
        %3417 = vmatprep.subr.bf16.mxu0 %v3063
        %3418 = vmatpush1.bf16.msra.mxu0 %v3062
        %3419 = vmatprep.subr.bf16.mxu0 %v3071
        %3420 = vmatpush1.bf16.msra.mxu0 %v3070
        %3421 = vmatprep.subr.bf16.mxu0 %v3079
        %3422 = vmatpush1.bf16.msra.mxu0 %v3078
        %3423 = vmatprep.subr.bf16.mxu0 %v3087
        %3424 = vmatpush1.bf16.msra.mxu0 %v3086
        %3425 = vmatprep.subr.bf16.mxu0 %v3095
        %3426 = vmatpush1.bf16.msra.mxu0 %v3094
        %3427 = vmatprep.subr.bf16.mxu0 %v3103
        %3428 = vmatpush1.bf16.msra.mxu0 %v3102
        %3429 = vmatprep.subr.bf16.mxu0 %v3111
        %3430 = vmatpush1.bf16.msra.mxu0 %v3110
        %3431 = vmatprep.subr.bf16.mxu0 %v3119
        %3432 = vmatpush1.bf16.msra.mxu0 %v3118
        %3433 = vmatprep.subr.bf16.mxu0 %v3127
        %3434 = vmatpush1.bf16.msra.mxu0 %v3126
        %3435 = vmatprep.subr.bf16.mxu0 %v3135
        %3436 = vmatpush1.bf16.msra.mxu0 %v3134
        %3437 = vmatprep.subr.bf16.mxu0 %v3143
        %3438 = vmatpush1.bf16.msra.mxu0 %v3142
        %3439 = vmatprep.subr.bf16.mxu0 %v3151
        %3440 = vmatpush1.bf16.msra.mxu0 %v3150
        %3441 = vmatprep.subr.bf16.mxu0 %v3159
        %3442 = vmatpush1.bf16.msra.mxu0 %v3158
        %3443 = vmatprep.mubr.bf16.mxu0 %v2477
        %3444 = vmatmul.mubr.bf16.gmra.mrb[0].mxu0 %v2476
        %v3445 = vpop.f32.mrb[0].mxu0
        %v3446 = vadd.f32 %v2635, %v3445
        %v3447 = vpop.f32.mrb[0].mxu0
        %v3448 = vadd.f32 %v2639, %v3447
        %v3449 = vpop.f32.mrb[0].mxu0
        %v3450 = vpop.f32.mrb[0].mxu0
        %3451 = vdwg.mxu0
        %v3452 = vmul.f32 %v3323, 0.5
        %v3453 = vmul.f32 %v3325, 0.5
        %v3454 = vmul.f32 %v3364, 0.5
        %v3455 = vmul.f32 %v3366, 0.5
        %v3456 = vmul.f32 %v3405, 0.5
        %v3457 = vmul.f32 %v3407, 0.5
        %v3458 = vmul.f32 %v3446, 0.5
        %v3459 = vmul.f32 %v3448, 0.5
        %v3460 = vmul.f32 %v3323, 0.044715
        %v3461 = vmul.f32 %v3325, 0.044715
        %v3462 = vmul.f32 %v3364, 0.044715
        %v3463 = vmul.f32 %v3366, 0.044715
        %v3464 = vmul.f32 %v3405, 0.044715
        %v3465 = vmul.f32 %v3407, 0.044715
        %v3466 = vmul.f32 %v3446, 0.044715
        %v3467 = vmul.f32 %v3448, 0.044715
        %v3468 = vmul.f32 %v3460, %v3323
        %v3469 = vmul.f32 %v3461, %v3325
        %v3470 = vmul.f32 %v3462, %v3364
        %v3471 = vmul.f32 %v3463, %v3366
        %v3472 = vmul.f32 %v3464, %v3405
        %v3473 = vmul.f32 %v3465, %v3407
        %v3474 = vmul.f32 %v3466, %v3446
        %v3475 = vmul.f32 %v3467, %v3448
        %v3476 = vmul.f32 %v3468, %v3323
        %v3477 = vmul.f32 %v3469, %v3325
        %v3478 = vmul.f32 %v3470, %v3364
        %v3479 = vmul.f32 %v3471, %v3366
        %v3480 = vmul.f32 %v3472, %v3405
        %v3481 = vmul.f32 %v3473, %v3407
        %v3482 = vmul.f32 %v3474, %v3446
        %v3483 = vmul.f32 %v3475, %v3448
        %v3484 = vadd.f32 %v3323, %v3476
        %v3485 = vadd.f32 %v3325, %v3477
        %v3486 = vadd.f32 %v3364, %v3478
        %v3487 = vadd.f32 %v3366, %v3479
        %v3488 = vadd.f32 %v3405, %v3480
        %v3489 = vadd.f32 %v3407, %v3481
        %v3490 = vadd.f32 %v3446, %v3482
        %v3491 = vadd.f32 %v3448, %v3483
        %v3492 = vmul.f32 %v3484, 0.7978846
        %v3493 = vmul.f32 %v3485, 0.7978846
        %v3494 = vmul.f32 %v3486, 0.7978846
        %v3495 = vmul.f32 %v3487, 0.7978846
        %v3496 = vmul.f32 %v3488, 0.7978846
        %v3497 = vmul.f32 %v3489, 0.7978846
        %v3498 = vmul.f32 %v3490, 0.7978846
        %v3499 = vmul.f32 %v3491, 0.7978846
        %v3500 = vtanh.pop %v3492
        %v3501 = vtanh.pop %v3493
        %v3502 = vtanh.pop %v3494
        %v3503 = vtanh.pop %v3495
        %v3504 = vtanh.pop %v3496
        %v3505 = vtanh.pop %v3497
        %v3506 = vtanh.pop %v3498
        %v3507 = vtanh.pop %v3499
        %v3508 = vadd.f32 %v3500, 1.0
        %v3509 = vadd.f32 %v3501, 1.0
        %v3510 = vadd.f32 %v3502, 1.0
        %v3511 = vadd.f32 %v3503, 1.0
        %v3512 = vadd.f32 %v3504, 1.0
        %v3513 = vadd.f32 %v3505, 1.0
        %v3514 = vadd.f32 %v3506, 1.0
        %v3515 = vadd.f32 %v3507, 1.0
        %v3516 = vmul.f32 %v3452, %v3508
        %v3517 = vmul.f32 %v3453, %v3509
        %v3518 = vmul.f32 %v3454, %v3510
        %v3519 = vmul.f32 %v3455, %v3511
        %v3520 = vmul.f32 %v3456, %v3512
        %v3521 = vmul.f32 %v3457, %v3513
        %v3522 = vmul.f32 %v3458, %v3514
        %v3523 = vmul.f32 %v3459, %v3515
        %v3524 = vpack.c.bf16 %v3516, %v3516
        %v3525 = vpack.c.bf16 %v3517, %v3517
        %v3526 = vpack.c.bf16 %v3518, %v3518
        %v3527 = vpack.c.bf16 %v3519, %v3519
        %v3528 = vpack.c.bf16 %v3520, %v3520
        %v3529 = vpack.c.bf16 %v3521, %v3521
        %v3530 = vpack.c.bf16 %v3522, %v3522
        %v3531 = vpack.c.bf16 %v3523, %v3523
        %v3532 = vld [vmem:[#allocation10] sm:$0xff]
        %v3533 = vld [vmem:[#allocation10 + $0x8] sm:$0xff]
        %v3534 = vld [vmem:[#allocation10 + $0x10] sm:$0xff]
        %v3535 = vld [vmem:[#allocation10 + $0x18] sm:$0xff]
        %v3536 = vld [vmem:[#allocation10 + $0x20] sm:$0xff]
        %v3537 = vld [vmem:[#allocation10 + $0x28] sm:$0xff]
        %v3538 = vld [vmem:[#allocation10 + $0x30] sm:$0xff]
        %v3539 = vld [vmem:[#allocation10 + $0x38] sm:$0xff]
        %v3540 = vld [vmem:[#allocation10 + $0x40] sm:$0xff]
        %v3541 = vld [vmem:[#allocation10 + $0x48] sm:$0xff]
        %v3542 = vld [vmem:[#allocation10 + $0x50] sm:$0xff]
        %v3543 = vld [vmem:[#allocation10 + $0x58] sm:$0xff]
        %v3544 = vld [vmem:[#allocation10 + $0x60] sm:$0xff]
        %v3545 = vld [vmem:[#allocation10 + $0x68] sm:$0xff]
        %v3546 = vld [vmem:[#allocation10 + $0x70] sm:$0xff]
        %v3547 = vld [vmem:[#allocation10 + $0x78] sm:$0xff]
        %v3548 = vld [vmem:[#allocation10 + $0x80] sm:$0xff]
        %v3549 = vld [vmem:[#allocation10 + $0x88] sm:$0xff]
        %v3550 = vld [vmem:[#allocation10 + $0x90] sm:$0xff]
        %v3551 = vld [vmem:[#allocation10 + $0x98] sm:$0xff]
        %v3552 = vld [vmem:[#allocation10 + $0xa0] sm:$0xff]
        %v3553 = vld [vmem:[#allocation10 + $0xa8] sm:$0xff]
        %v3554 = vld [vmem:[#allocation10 + $0xb0] sm:$0xff]
        %v3555 = vld [vmem:[#allocation10 + $0xb8] sm:$0xff]
        %v3556 = vld [vmem:[#allocation10 + $0xc0] sm:$0xff]
        %v3557 = vld [vmem:[#allocation10 + $0xc8] sm:$0xff]
        %v3558 = vld [vmem:[#allocation10 + $0xd0] sm:$0xff]
        %v3559 = vld [vmem:[#allocation10 + $0xd8] sm:$0xff]
        %v3560 = vld [vmem:[#allocation10 + $0xe0] sm:$0xff]
        %v3561 = vld [vmem:[#allocation10 + $0xe8] sm:$0xff]
        %v3562 = vld [vmem:[#allocation10 + $0xf0] sm:$0xff]
        %v3563 = vld [vmem:[#allocation10 + $0xf8] sm:$0xff]
        %v3564 = vld [vmem:[#allocation10 + $0x100] sm:$0xff]
        %v3565 = vld [vmem:[#allocation10 + $0x108] sm:$0xff]
        %v3566 = vld [vmem:[#allocation10 + $0x110] sm:$0xff]
        %v3567 = vld [vmem:[#allocation10 + $0x118] sm:$0xff]
        %v3568 = vld [vmem:[#allocation10 + $0x120] sm:$0xff]
        %v3569 = vld [vmem:[#allocation10 + $0x128] sm:$0xff]
        %v3570 = vld [vmem:[#allocation10 + $0x130] sm:$0xff]
        %v3571 = vld [vmem:[#allocation10 + $0x138] sm:$0xff]
        %v3572 = vld [vmem:[#allocation10 + $0x140] sm:$0xff]
        %v3573 = vld [vmem:[#allocation10 + $0x148] sm:$0xff]
        %v3574 = vld [vmem:[#allocation10 + $0x150] sm:$0xff]
        %v3575 = vld [vmem:[#allocation10 + $0x158] sm:$0xff]
        %v3576 = vld [vmem:[#allocation10 + $0x160] sm:$0xff]
        %v3577 = vld [vmem:[#allocation10 + $0x168] sm:$0xff]
        %v3578 = vld [vmem:[#allocation10 + $0x170] sm:$0xff]
        %v3579 = vld [vmem:[#allocation10 + $0x178] sm:$0xff]
        %v3580 = vld [vmem:[#allocation10 + $0x180] sm:$0xff]
        %v3581 = vld [vmem:[#allocation10 + $0x188] sm:$0xff]
        %v3582 = vld [vmem:[#allocation10 + $0x190] sm:$0xff]
        %v3583 = vld [vmem:[#allocation10 + $0x198] sm:$0xff]
        %v3584 = vld [vmem:[#allocation10 + $0x1a0] sm:$0xff]
        %v3585 = vld [vmem:[#allocation10 + $0x1a8] sm:$0xff]
        %v3586 = vld [vmem:[#allocation10 + $0x1b0] sm:$0xff]
        %v3587 = vld [vmem:[#allocation10 + $0x1b8] sm:$0xff]
        %v3588 = vld [vmem:[#allocation10 + $0x1c0] sm:$0xff]
        %v3589 = vld [vmem:[#allocation10 + $0x1c8] sm:$0xff]
        %v3590 = vld [vmem:[#allocation10 + $0x1d0] sm:$0xff]
        %v3591 = vld [vmem:[#allocation10 + $0x1d8] sm:$0xff]
        %v3592 = vld [vmem:[#allocation10 + $0x1e0] sm:$0xff]
        %v3593 = vld [vmem:[#allocation10 + $0x1e8] sm:$0xff]
        %v3594 = vld [vmem:[#allocation10 + $0x1f0] sm:$0xff]
        %v3595 = vld [vmem:[#allocation10 + $0x1f8] sm:$0xff]
        %v3596 = vld [vmem:[#allocation10 + $0x200] sm:$0xff]
        %v3597 = vld [vmem:[#allocation10 + $0x208] sm:$0xff]
        %v3598 = vld [vmem:[#allocation10 + $0x210] sm:$0xff]
        %v3599 = vld [vmem:[#allocation10 + $0x218] sm:$0xff]
        %v3600 = vld [vmem:[#allocation10 + $0x220] sm:$0xff]
        %v3601 = vld [vmem:[#allocation10 + $0x228] sm:$0xff]
        %v3602 = vld [vmem:[#allocation10 + $0x230] sm:$0xff]
        %v3603 = vld [vmem:[#allocation10 + $0x238] sm:$0xff]
        %v3604 = vld [vmem:[#allocation10 + $0x240] sm:$0xff]
        %v3605 = vld [vmem:[#allocation10 + $0x248] sm:$0xff]
        %v3606 = vld [vmem:[#allocation10 + $0x250] sm:$0xff]
        %v3607 = vld [vmem:[#allocation10 + $0x258] sm:$0xff]
        %v3608 = vld [vmem:[#allocation10 + $0x260] sm:$0xff]
        %v3609 = vld [vmem:[#allocation10 + $0x268] sm:$0xff]
        %v3610 = vld [vmem:[#allocation10 + $0x270] sm:$0xff]
        %v3611 = vld [vmem:[#allocation10 + $0x278] sm:$0xff]
        %v3612 = vld [vmem:[#allocation10 + $0x280] sm:$0xff]
        %v3613 = vld [vmem:[#allocation10 + $0x288] sm:$0xff]
        %v3614 = vld [vmem:[#allocation10 + $0x290] sm:$0xff]
        %v3615 = vld [vmem:[#allocation10 + $0x298] sm:$0xff]
        %v3616 = vld [vmem:[#allocation10 + $0x2a0] sm:$0xff]
        %v3617 = vld [vmem:[#allocation10 + $0x2a8] sm:$0xff]
        %v3618 = vld [vmem:[#allocation10 + $0x2b0] sm:$0xff]
        %v3619 = vld [vmem:[#allocation10 + $0x2b8] sm:$0xff]
        %v3620 = vld [vmem:[#allocation10 + $0x2c0] sm:$0xff]
        %v3621 = vld [vmem:[#allocation10 + $0x2c8] sm:$0xff]
        %v3622 = vld [vmem:[#allocation10 + $0x2d0] sm:$0xff]
        %v3623 = vld [vmem:[#allocation10 + $0x2d8] sm:$0xff]
        %v3624 = vld [vmem:[#allocation10 + $0x2e0] sm:$0xff]
        %v3625 = vld [vmem:[#allocation10 + $0x2e8] sm:$0xff]
        %v3626 = vld [vmem:[#allocation10 + $0x2f0] sm:$0xff]
        %v3627 = vld [vmem:[#allocation10 + $0x2f8] sm:$0xff]
        %v3628 = vld [vmem:[#allocation10 + $0x300] sm:$0xff]
        %v3629 = vld [vmem:[#allocation10 + $0x308] sm:$0xff]
        %v3630 = vld [vmem:[#allocation10 + $0x310] sm:$0xff]
        %v3631 = vld [vmem:[#allocation10 + $0x318] sm:$0xff]
        %v3632 = vld [vmem:[#allocation10 + $0x320] sm:$0xff]
        %v3633 = vld [vmem:[#allocation10 + $0x328] sm:$0xff]
        %v3634 = vld [vmem:[#allocation10 + $0x330] sm:$0xff]
        %v3635 = vld [vmem:[#allocation10 + $0x338] sm:$0xff]
        %v3636 = vld [vmem:[#allocation10 + $0x340] sm:$0xff]
        %v3637 = vld [vmem:[#allocation10 + $0x348] sm:$0xff]
        %v3638 = vld [vmem:[#allocation10 + $0x350] sm:$0xff]
        %v3639 = vld [vmem:[#allocation10 + $0x358] sm:$0xff]
        %v3640 = vld [vmem:[#allocation10 + $0x360] sm:$0xff]
        %v3641 = vld [vmem:[#allocation10 + $0x368] sm:$0xff]
        %v3642 = vld [vmem:[#allocation10 + $0x370] sm:$0xff]
        %v3643 = vld [vmem:[#allocation10 + $0x378] sm:$0xff]
        %v3644 = vld [vmem:[#allocation10 + $0x380] sm:$0xff]
        %v3645 = vld [vmem:[#allocation10 + $0x388] sm:$0xff]
        %v3646 = vld [vmem:[#allocation10 + $0x390] sm:$0xff]
        %v3647 = vld [vmem:[#allocation10 + $0x398] sm:$0xff]
        %v3648 = vld [vmem:[#allocation10 + $0x3a0] sm:$0xff]
        %v3649 = vld [vmem:[#allocation10 + $0x3a8] sm:$0xff]
        %v3650 = vld [vmem:[#allocation10 + $0x3b0] sm:$0xff]
        %v3651 = vld [vmem:[#allocation10 + $0x3b8] sm:$0xff]
        %v3652 = vld [vmem:[#allocation10 + $0x3c0] sm:$0xff]
        %v3653 = vld [vmem:[#allocation10 + $0x3c8] sm:$0xff]
        %v3654 = vld [vmem:[#allocation10 + $0x3d0] sm:$0xff]
        %v3655 = vld [vmem:[#allocation10 + $0x3d8] sm:$0xff]
        %v3656 = vld [vmem:[#allocation10 + $0x3e0] sm:$0xff]
        %v3657 = vld [vmem:[#allocation10 + $0x3e8] sm:$0xff]
        %v3658 = vld [vmem:[#allocation10 + $0x3f0] sm:$0xff]
        %v3659 = vld [vmem:[#allocation10 + $0x3f8] sm:$0xff]
        %v3660 = vld [vmem:[%s23] sm:$0x3]
        %v3662 = vlaneseq
        %v3663 = vshrl.u32 %v3662, 7
        %v3664 = vsub.s32 0, %v3663
        %v3665 = vrot.slane %v3660, %v3664
        %v3666 = vlaneseq
        %v3667 = vshrl.u32 %v3666, 7
        %v3668 = vsub.s32 1, %v3667
        %v3669 = vrot.slane %v3660, %v3668
        %v3800 = vunpack.c.l.b16 %v3532
        %v3801 = vunpack.c.h.b16 %v3532
        %v3802 = vunpack.c.l.b16 %v3533
        %v3803 = vunpack.c.h.b16 %v3533
        %v3804 = vunpack.c.l.b16 %v3534
        %v3805 = vunpack.c.h.b16 %v3534
        %v3806 = vunpack.c.l.b16 %v3535
        %v3807 = vunpack.c.h.b16 %v3535
        %v3808 = vunpack.c.l.b16 %v3536
        %v3809 = vunpack.c.h.b16 %v3536
        %v3810 = vunpack.c.l.b16 %v3537
        %v3811 = vunpack.c.h.b16 %v3537
        %v3812 = vunpack.c.l.b16 %v3538
        %v3813 = vunpack.c.h.b16 %v3538
        %v3814 = vunpack.c.l.b16 %v3539
        %v3815 = vunpack.c.h.b16 %v3539
        %v3816 = vunpack.c.l.b16 %v3540
        %v3817 = vunpack.c.h.b16 %v3540
        %v3818 = vunpack.c.l.b16 %v3541
        %v3819 = vunpack.c.h.b16 %v3541
        %v3820 = vunpack.c.l.b16 %v3542
        %v3821 = vunpack.c.h.b16 %v3542
        %v3822 = vunpack.c.l.b16 %v3543
        %v3823 = vunpack.c.h.b16 %v3543
        %v3824 = vunpack.c.l.b16 %v3544
        %v3825 = vunpack.c.h.b16 %v3544
        %v3826 = vunpack.c.l.b16 %v3545
        %v3827 = vunpack.c.h.b16 %v3545
        %v3828 = vunpack.c.l.b16 %v3546
        %v3829 = vunpack.c.h.b16 %v3546
        %v3830 = vunpack.c.l.b16 %v3547
        %v3831 = vunpack.c.h.b16 %v3547
        %v3832 = vunpack.c.l.b16 %v3548
        %v3833 = vunpack.c.h.b16 %v3548
        %v3834 = vunpack.c.l.b16 %v3549
        %v3835 = vunpack.c.h.b16 %v3549
        %v3836 = vunpack.c.l.b16 %v3550
        %v3837 = vunpack.c.h.b16 %v3550
        %v3838 = vunpack.c.l.b16 %v3551
        %v3839 = vunpack.c.h.b16 %v3551
        %v3840 = vunpack.c.l.b16 %v3552
        %v3841 = vunpack.c.h.b16 %v3552
        %v3842 = vunpack.c.l.b16 %v3553
        %v3843 = vunpack.c.h.b16 %v3553
        %v3844 = vunpack.c.l.b16 %v3554
        %v3845 = vunpack.c.h.b16 %v3554
        %v3846 = vunpack.c.l.b16 %v3555
        %v3847 = vunpack.c.h.b16 %v3555
        %v3848 = vunpack.c.l.b16 %v3556
        %v3849 = vunpack.c.h.b16 %v3556
        %v3850 = vunpack.c.l.b16 %v3557
        %v3851 = vunpack.c.h.b16 %v3557
        %v3852 = vunpack.c.l.b16 %v3558
        %v3853 = vunpack.c.h.b16 %v3558
        %v3854 = vunpack.c.l.b16 %v3559
        %v3855 = vunpack.c.h.b16 %v3559
        %v3856 = vunpack.c.l.b16 %v3560
        %v3857 = vunpack.c.h.b16 %v3560
        %v3858 = vunpack.c.l.b16 %v3561
        %v3859 = vunpack.c.h.b16 %v3561
        %v3860 = vunpack.c.l.b16 %v3562
        %v3861 = vunpack.c.h.b16 %v3562
        %v3862 = vunpack.c.l.b16 %v3563
        %v3863 = vunpack.c.h.b16 %v3563
        %v3864 = vunpack.c.l.b16 %v3564
        %v3865 = vunpack.c.h.b16 %v3564
        %v3866 = vunpack.c.l.b16 %v3565
        %v3867 = vunpack.c.h.b16 %v3565
        %v3868 = vunpack.c.l.b16 %v3566
        %v3869 = vunpack.c.h.b16 %v3566
        %v3870 = vunpack.c.l.b16 %v3567
        %v3871 = vunpack.c.h.b16 %v3567
        %v3872 = vunpack.c.l.b16 %v3568
        %v3873 = vunpack.c.h.b16 %v3568
        %v3874 = vunpack.c.l.b16 %v3569
        %v3875 = vunpack.c.h.b16 %v3569
        %v3876 = vunpack.c.l.b16 %v3570
        %v3877 = vunpack.c.h.b16 %v3570
        %v3878 = vunpack.c.l.b16 %v3571
        %v3879 = vunpack.c.h.b16 %v3571
        %v3880 = vunpack.c.l.b16 %v3572
        %v3881 = vunpack.c.h.b16 %v3572
        %v3882 = vunpack.c.l.b16 %v3573
        %v3883 = vunpack.c.h.b16 %v3573
        %v3884 = vunpack.c.l.b16 %v3574
        %v3885 = vunpack.c.h.b16 %v3574
        %v3886 = vunpack.c.l.b16 %v3575
        %v3887 = vunpack.c.h.b16 %v3575
        %v3888 = vunpack.c.l.b16 %v3576
        %v3889 = vunpack.c.h.b16 %v3576
        %v3890 = vunpack.c.l.b16 %v3577
        %v3891 = vunpack.c.h.b16 %v3577
        %v3892 = vunpack.c.l.b16 %v3578
        %v3893 = vunpack.c.h.b16 %v3578
        %v3894 = vunpack.c.l.b16 %v3579
        %v3895 = vunpack.c.h.b16 %v3579
        %v3896 = vunpack.c.l.b16 %v3580
        %v3897 = vunpack.c.h.b16 %v3580
        %v3898 = vunpack.c.l.b16 %v3581
        %v3899 = vunpack.c.h.b16 %v3581
        %v3900 = vunpack.c.l.b16 %v3582
        %v3901 = vunpack.c.h.b16 %v3582
        %v3902 = vunpack.c.l.b16 %v3583
        %v3903 = vunpack.c.h.b16 %v3583
        %v3904 = vunpack.c.l.b16 %v3584
        %v3905 = vunpack.c.h.b16 %v3584
        %v3906 = vunpack.c.l.b16 %v3585
        %v3907 = vunpack.c.h.b16 %v3585
        %v3908 = vunpack.c.l.b16 %v3586
        %v3909 = vunpack.c.h.b16 %v3586
        %v3910 = vunpack.c.l.b16 %v3587
        %v3911 = vunpack.c.h.b16 %v3587
        %v3912 = vunpack.c.l.b16 %v3588
        %v3913 = vunpack.c.h.b16 %v3588
        %v3914 = vunpack.c.l.b16 %v3589
        %v3915 = vunpack.c.h.b16 %v3589
        %v3916 = vunpack.c.l.b16 %v3590
        %v3917 = vunpack.c.h.b16 %v3590
        %v3918 = vunpack.c.l.b16 %v3591
        %v3919 = vunpack.c.h.b16 %v3591
        %v3920 = vunpack.c.l.b16 %v3592
        %v3921 = vunpack.c.h.b16 %v3592
        %v3922 = vunpack.c.l.b16 %v3593
        %v3923 = vunpack.c.h.b16 %v3593
        %v3924 = vunpack.c.l.b16 %v3594
        %v3925 = vunpack.c.h.b16 %v3594
        %v3926 = vunpack.c.l.b16 %v3595
        %v3927 = vunpack.c.h.b16 %v3595
        %v3928 = vunpack.c.l.b16 %v3596
        %v3929 = vunpack.c.h.b16 %v3596
        %v3930 = vunpack.c.l.b16 %v3597
        %v3931 = vunpack.c.h.b16 %v3597
        %v3932 = vunpack.c.l.b16 %v3598
        %v3933 = vunpack.c.h.b16 %v3598
        %v3934 = vunpack.c.l.b16 %v3599
        %v3935 = vunpack.c.h.b16 %v3599
        %v3936 = vunpack.c.l.b16 %v3600
        %v3937 = vunpack.c.h.b16 %v3600
        %v3938 = vunpack.c.l.b16 %v3601
        %v3939 = vunpack.c.h.b16 %v3601
        %v3940 = vunpack.c.l.b16 %v3602
        %v3941 = vunpack.c.h.b16 %v3602
        %v3942 = vunpack.c.l.b16 %v3603
        %v3943 = vunpack.c.h.b16 %v3603
        %v3944 = vunpack.c.l.b16 %v3604
        %v3945 = vunpack.c.h.b16 %v3604
        %v3946 = vunpack.c.l.b16 %v3605
        %v3947 = vunpack.c.h.b16 %v3605
        %v3948 = vunpack.c.l.b16 %v3606
        %v3949 = vunpack.c.h.b16 %v3606
        %v3950 = vunpack.c.l.b16 %v3607
        %v3951 = vunpack.c.h.b16 %v3607
        %v3952 = vunpack.c.l.b16 %v3608
        %v3953 = vunpack.c.h.b16 %v3608
        %v3954 = vunpack.c.l.b16 %v3609
        %v3955 = vunpack.c.h.b16 %v3609
        %v3956 = vunpack.c.l.b16 %v3610
        %v3957 = vunpack.c.h.b16 %v3610
        %v3958 = vunpack.c.l.b16 %v3611
        %v3959 = vunpack.c.h.b16 %v3611
        %v3960 = vunpack.c.l.b16 %v3612
        %v3961 = vunpack.c.h.b16 %v3612
        %v3962 = vunpack.c.l.b16 %v3613
        %v3963 = vunpack.c.h.b16 %v3613
        %v3964 = vunpack.c.l.b16 %v3614
        %v3965 = vunpack.c.h.b16 %v3614
        %v3966 = vunpack.c.l.b16 %v3615
        %v3967 = vunpack.c.h.b16 %v3615
        %v3968 = vunpack.c.l.b16 %v3616
        %v3969 = vunpack.c.h.b16 %v3616
        %v3970 = vunpack.c.l.b16 %v3617
        %v3971 = vunpack.c.h.b16 %v3617
        %v3972 = vunpack.c.l.b16 %v3618
        %v3973 = vunpack.c.h.b16 %v3618
        %v3974 = vunpack.c.l.b16 %v3619
        %v3975 = vunpack.c.h.b16 %v3619
        %v3976 = vunpack.c.l.b16 %v3620
        %v3977 = vunpack.c.h.b16 %v3620
        %v3978 = vunpack.c.l.b16 %v3621
        %v3979 = vunpack.c.h.b16 %v3621
        %v3980 = vunpack.c.l.b16 %v3622
        %v3981 = vunpack.c.h.b16 %v3622
        %v3982 = vunpack.c.l.b16 %v3623
        %v3983 = vunpack.c.h.b16 %v3623
        %v3984 = vunpack.c.l.b16 %v3624
        %v3985 = vunpack.c.h.b16 %v3624
        %v3986 = vunpack.c.l.b16 %v3625
        %v3987 = vunpack.c.h.b16 %v3625
        %v3988 = vunpack.c.l.b16 %v3626
        %v3989 = vunpack.c.h.b16 %v3626
        %v3990 = vunpack.c.l.b16 %v3627
        %v3991 = vunpack.c.h.b16 %v3627
        %v3992 = vunpack.c.l.b16 %v3628
        %v3993 = vunpack.c.h.b16 %v3628
        %v3994 = vunpack.c.l.b16 %v3629
        %v3995 = vunpack.c.h.b16 %v3629
        %v3996 = vunpack.c.l.b16 %v3630
        %v3997 = vunpack.c.h.b16 %v3630
        %v3998 = vunpack.c.l.b16 %v3631
        %v3999 = vunpack.c.h.b16 %v3631
        %v4000 = vunpack.c.l.b16 %v3632
        %v4001 = vunpack.c.h.b16 %v3632
        %v4002 = vunpack.c.l.b16 %v3633
        %v4003 = vunpack.c.h.b16 %v3633
        %v4004 = vunpack.c.l.b16 %v3634
        %v4005 = vunpack.c.h.b16 %v3634
        %v4006 = vunpack.c.l.b16 %v3635
        %v4007 = vunpack.c.h.b16 %v3635
        %v4008 = vunpack.c.l.b16 %v3636
        %v4009 = vunpack.c.h.b16 %v3636
        %v4010 = vunpack.c.l.b16 %v3637
        %v4011 = vunpack.c.h.b16 %v3637
        %v4012 = vunpack.c.l.b16 %v3638
        %v4013 = vunpack.c.h.b16 %v3638
        %v4014 = vunpack.c.l.b16 %v3639
        %v4015 = vunpack.c.h.b16 %v3639
        %v4016 = vunpack.c.l.b16 %v3640
        %v4017 = vunpack.c.h.b16 %v3640
        %v4018 = vunpack.c.l.b16 %v3641
        %v4019 = vunpack.c.h.b16 %v3641
        %v4020 = vunpack.c.l.b16 %v3642
        %v4021 = vunpack.c.h.b16 %v3642
        %v4022 = vunpack.c.l.b16 %v3643
        %v4023 = vunpack.c.h.b16 %v3643
        %v4024 = vunpack.c.l.b16 %v3644
        %v4025 = vunpack.c.h.b16 %v3644
        %v4026 = vunpack.c.l.b16 %v3645
        %v4027 = vunpack.c.h.b16 %v3645
        %v4028 = vunpack.c.l.b16 %v3646
        %v4029 = vunpack.c.h.b16 %v3646
        %v4030 = vunpack.c.l.b16 %v3647
        %v4031 = vunpack.c.h.b16 %v3647
        %v4032 = vunpack.c.l.b16 %v3648
        %v4033 = vunpack.c.h.b16 %v3648
        %v4034 = vunpack.c.l.b16 %v3649
        %v4035 = vunpack.c.h.b16 %v3649
        %v4036 = vunpack.c.l.b16 %v3650
        %v4037 = vunpack.c.h.b16 %v3650
        %v4038 = vunpack.c.l.b16 %v3651
        %v4039 = vunpack.c.h.b16 %v3651
        %v4040 = vunpack.c.l.b16 %v3652
        %v4041 = vunpack.c.h.b16 %v3652
        %v4042 = vunpack.c.l.b16 %v3653
        %v4043 = vunpack.c.h.b16 %v3653
        %v4044 = vunpack.c.l.b16 %v3654
        %v4045 = vunpack.c.h.b16 %v3654
        %v4046 = vunpack.c.l.b16 %v3655
        %v4047 = vunpack.c.h.b16 %v3655
        %v4048 = vunpack.c.l.b16 %v3656
        %v4049 = vunpack.c.h.b16 %v3656
        %v4050 = vunpack.c.l.b16 %v3657
        %v4051 = vunpack.c.h.b16 %v3657
        %v4052 = vunpack.c.l.b16 %v3658
        %v4053 = vunpack.c.h.b16 %v3658
        %v4054 = vunpack.c.l.b16 %v3659
        %v4055 = vunpack.c.h.b16 %v3659
        %v4056 = vpack.c.b16 %v3802, %v3800
        %v4057 = vpack.c.b16 %v3803, %v3801
        %v4058 = vpack.c.b16 %v3806, %v3804
        %v4059 = vpack.c.b16 %v3807, %v3805
        %v4060 = vpack.c.b16 %v3810, %v3808
        %v4061 = vpack.c.b16 %v3811, %v3809
        %v4062 = vpack.c.b16 %v3814, %v3812
        %v4063 = vpack.c.b16 %v3815, %v3813
        %v4064 = vpack.c.b16 %v3818, %v3816
        %v4065 = vpack.c.b16 %v3819, %v3817
        %v4066 = vpack.c.b16 %v3822, %v3820
        %v4067 = vpack.c.b16 %v3823, %v3821
        %v4068 = vpack.c.b16 %v3826, %v3824
        %v4069 = vpack.c.b16 %v3827, %v3825
        %v4070 = vpack.c.b16 %v3830, %v3828
        %v4071 = vpack.c.b16 %v3831, %v3829
        %v4072 = vpack.c.b16 %v3834, %v3832
        %v4073 = vpack.c.b16 %v3835, %v3833
        %v4074 = vpack.c.b16 %v3838, %v3836
        %v4075 = vpack.c.b16 %v3839, %v3837
        %v4076 = vpack.c.b16 %v3842, %v3840
        %v4077 = vpack.c.b16 %v3843, %v3841
        %v4078 = vpack.c.b16 %v3846, %v3844
        %v4079 = vpack.c.b16 %v3847, %v3845
        %v4080 = vpack.c.b16 %v3850, %v3848
        %v4081 = vpack.c.b16 %v3851, %v3849
        %v4082 = vpack.c.b16 %v3854, %v3852
        %v4083 = vpack.c.b16 %v3855, %v3853
        %v4084 = vpack.c.b16 %v3858, %v3856
        %v4085 = vpack.c.b16 %v3859, %v3857
        %v4086 = vpack.c.b16 %v3862, %v3860
        %v4087 = vpack.c.b16 %v3863, %v3861
        %v4088 = vpack.c.b16 %v3866, %v3864
        %v4089 = vpack.c.b16 %v3867, %v3865
        %v4090 = vpack.c.b16 %v3870, %v3868
        %v4091 = vpack.c.b16 %v3871, %v3869
        %v4092 = vpack.c.b16 %v3874, %v3872
        %v4093 = vpack.c.b16 %v3875, %v3873
        %v4094 = vpack.c.b16 %v3878, %v3876
        %v4095 = vpack.c.b16 %v3879, %v3877
        %v4096 = vpack.c.b16 %v3882, %v3880
        %v4097 = vpack.c.b16 %v3883, %v3881
        %v4098 = vpack.c.b16 %v3886, %v3884
        %v4099 = vpack.c.b16 %v3887, %v3885
        %v4100 = vpack.c.b16 %v3890, %v3888
        %v4101 = vpack.c.b16 %v3891, %v3889
        %v4102 = vpack.c.b16 %v3894, %v3892
        %v4103 = vpack.c.b16 %v3895, %v3893
        %v4104 = vpack.c.b16 %v3898, %v3896
        %v4105 = vpack.c.b16 %v3899, %v3897
        %v4106 = vpack.c.b16 %v3902, %v3900
        %v4107 = vpack.c.b16 %v3903, %v3901
        %v4108 = vpack.c.b16 %v3906, %v3904
        %v4109 = vpack.c.b16 %v3907, %v3905
        %v4110 = vpack.c.b16 %v3910, %v3908
        %v4111 = vpack.c.b16 %v3911, %v3909
        %v4112 = vpack.c.b16 %v3914, %v3912
        %v4113 = vpack.c.b16 %v3915, %v3913
        %v4114 = vpack.c.b16 %v3918, %v3916
        %v4115 = vpack.c.b16 %v3919, %v3917
        %v4116 = vpack.c.b16 %v3922, %v3920
        %v4117 = vpack.c.b16 %v3923, %v3921
        %v4118 = vpack.c.b16 %v3926, %v3924
        %v4119 = vpack.c.b16 %v3927, %v3925
        %v4120 = vpack.c.b16 %v3930, %v3928
        %v4121 = vpack.c.b16 %v3931, %v3929
        %v4122 = vpack.c.b16 %v3934, %v3932
        %v4123 = vpack.c.b16 %v3935, %v3933
        %v4124 = vpack.c.b16 %v3938, %v3936
        %v4125 = vpack.c.b16 %v3939, %v3937
        %v4126 = vpack.c.b16 %v3942, %v3940
        %v4127 = vpack.c.b16 %v3943, %v3941
        %v4128 = vpack.c.b16 %v3946, %v3944
        %v4129 = vpack.c.b16 %v3947, %v3945
        %v4130 = vpack.c.b16 %v3950, %v3948
        %v4131 = vpack.c.b16 %v3951, %v3949
        %v4132 = vpack.c.b16 %v3954, %v3952
        %v4133 = vpack.c.b16 %v3955, %v3953
        %v4134 = vpack.c.b16 %v3958, %v3956
        %v4135 = vpack.c.b16 %v3959, %v3957
        %v4136 = vpack.c.b16 %v3962, %v3960
        %v4137 = vpack.c.b16 %v3963, %v3961
        %v4138 = vpack.c.b16 %v3966, %v3964
        %v4139 = vpack.c.b16 %v3967, %v3965
        %v4140 = vpack.c.b16 %v3970, %v3968
        %v4141 = vpack.c.b16 %v3971, %v3969
        %v4142 = vpack.c.b16 %v3974, %v3972
        %v4143 = vpack.c.b16 %v3975, %v3973
        %v4144 = vpack.c.b16 %v3978, %v3976
        %v4145 = vpack.c.b16 %v3979, %v3977
        %v4146 = vpack.c.b16 %v3982, %v3980
        %v4147 = vpack.c.b16 %v3983, %v3981
        %v4148 = vpack.c.b16 %v3986, %v3984
        %v4149 = vpack.c.b16 %v3987, %v3985
        %v4150 = vpack.c.b16 %v3990, %v3988
        %v4151 = vpack.c.b16 %v3991, %v3989
        %v4152 = vpack.c.b16 %v3994, %v3992
        %v4153 = vpack.c.b16 %v3995, %v3993
        %v4154 = vpack.c.b16 %v3998, %v3996
        %v4155 = vpack.c.b16 %v3999, %v3997
        %v4156 = vpack.c.b16 %v4002, %v4000
        %v4157 = vpack.c.b16 %v4003, %v4001
        %v4158 = vpack.c.b16 %v4006, %v4004
        %v4159 = vpack.c.b16 %v4007, %v4005
        %v4160 = vpack.c.b16 %v4010, %v4008
        %v4161 = vpack.c.b16 %v4011, %v4009
        %v4162 = vpack.c.b16 %v4014, %v4012
        %v4163 = vpack.c.b16 %v4015, %v4013
        %v4164 = vpack.c.b16 %v4018, %v4016
        %v4165 = vpack.c.b16 %v4019, %v4017
        %v4166 = vpack.c.b16 %v4022, %v4020
        %v4167 = vpack.c.b16 %v4023, %v4021
        %v4168 = vpack.c.b16 %v4026, %v4024
        %v4169 = vpack.c.b16 %v4027, %v4025
        %v4170 = vpack.c.b16 %v4030, %v4028
        %v4171 = vpack.c.b16 %v4031, %v4029
        %v4172 = vpack.c.b16 %v4034, %v4032
        %v4173 = vpack.c.b16 %v4035, %v4033
        %v4174 = vpack.c.b16 %v4038, %v4036
        %v4175 = vpack.c.b16 %v4039, %v4037
        %v4176 = vpack.c.b16 %v4042, %v4040
        %v4177 = vpack.c.b16 %v4043, %v4041
        %v4178 = vpack.c.b16 %v4046, %v4044
        %v4179 = vpack.c.b16 %v4047, %v4045
        %v4180 = vpack.c.b16 %v4050, %v4048
        %v4181 = vpack.c.b16 %v4051, %v4049
        %v4182 = vpack.c.b16 %v4054, %v4052
        %v4183 = vpack.c.b16 %v4055, %v4053
        %4312 = vmatprep.subr.bf16.mxu0 %v4057
        %4313 = vmatpush1.bf16.msra.mxu0 %v4056
        %4314 = vmatprep.subr.bf16.mxu0 %v4059
        %4315 = vmatpush1.bf16.msra.mxu0 %v4058
        %4316 = vmatprep.subr.bf16.mxu0 %v4061
        %4317 = vmatpush1.bf16.msra.mxu0 %v4060
        %4318 = vmatprep.subr.bf16.mxu0 %v4063
        %4319 = vmatpush1.bf16.msra.mxu0 %v4062
        %4320 = vmatprep.subr.bf16.mxu0 %v4065
        %4321 = vmatpush1.bf16.msra.mxu0 %v4064
        %4322 = vmatprep.subr.bf16.mxu0 %v4067
        %4323 = vmatpush1.bf16.msra.mxu0 %v4066
        %4324 = vmatprep.subr.bf16.mxu0 %v4069
        %4325 = vmatpush1.bf16.msra.mxu0 %v4068
        %4326 = vmatprep.subr.bf16.mxu0 %v4071
        %4327 = vmatpush1.bf16.msra.mxu0 %v4070
        %4328 = vmatprep.subr.bf16.mxu0 %v4073
        %4329 = vmatpush1.bf16.msra.mxu0 %v4072
        %4330 = vmatprep.subr.bf16.mxu0 %v4075
        %4331 = vmatpush1.bf16.msra.mxu0 %v4074
        %4332 = vmatprep.subr.bf16.mxu0 %v4077
        %4333 = vmatpush1.bf16.msra.mxu0 %v4076
        %4334 = vmatprep.subr.bf16.mxu0 %v4079
        %4335 = vmatpush1.bf16.msra.mxu0 %v4078
        %4336 = vmatprep.subr.bf16.mxu0 %v4081
        %4337 = vmatpush1.bf16.msra.mxu0 %v4080
        %4338 = vmatprep.subr.bf16.mxu0 %v4083
        %4339 = vmatpush1.bf16.msra.mxu0 %v4082
        %4340 = vmatprep.subr.bf16.mxu0 %v4085
        %4341 = vmatpush1.bf16.msra.mxu0 %v4084
        %4342 = vmatprep.subr.bf16.mxu0 %v4087
        %4343 = vmatpush1.bf16.msra.mxu0 %v4086
        %4344 = vmatprep.mubr.bf16.mxu0 %v3525
        %4345 = vmatmul.mubr.bf16.gmra.mrb[0].mxu0 %v3524
        %v4346 = vpop.f32.mrb[0].mxu0
        %v4347 = vadd.f32 %v3665, %v4346
        %v4348 = vpop.f32.mrb[0].mxu0
        %v4349 = vadd.f32 %v3669, %v4348
        %v4350 = vpop.f32.mrb[0].mxu0
        %v4351 = vpop.f32.mrb[0].mxu0
        %4352 = vdwg.mxu0
        %4353 = vmatprep.subr.bf16.mxu0 %v4089
        %4354 = vmatpush1.bf16.msra.mxu0 %v4088
        %4355 = vmatprep.subr.bf16.mxu0 %v4091
        %4356 = vmatpush1.bf16.msra.mxu0 %v4090
        %4357 = vmatprep.subr.bf16.mxu0 %v4093
        %4358 = vmatpush1.bf16.msra.mxu0 %v4092
        %4359 = vmatprep.subr.bf16.mxu0 %v4095
        %4360 = vmatpush1.bf16.msra.mxu0 %v4094
        %4361 = vmatprep.subr.bf16.mxu0 %v4097
        %4362 = vmatpush1.bf16.msra.mxu0 %v4096
        %4363 = vmatprep.subr.bf16.mxu0 %v4099
        %4364 = vmatpush1.bf16.msra.mxu0 %v4098
        %4365 = vmatprep.subr.bf16.mxu0 %v4101
        %4366 = vmatpush1.bf16.msra.mxu0 %v4100
        %4367 = vmatprep.subr.bf16.mxu0 %v4103
        %4368 = vmatpush1.bf16.msra.mxu0 %v4102
        %4369 = vmatprep.subr.bf16.mxu0 %v4105
        %4370 = vmatpush1.bf16.msra.mxu0 %v4104
        %4371 = vmatprep.subr.bf16.mxu0 %v4107
        %4372 = vmatpush1.bf16.msra.mxu0 %v4106
        %4373 = vmatprep.subr.bf16.mxu0 %v4109
        %4374 = vmatpush1.bf16.msra.mxu0 %v4108
        %4375 = vmatprep.subr.bf16.mxu0 %v4111
        %4376 = vmatpush1.bf16.msra.mxu0 %v4110
        %4377 = vmatprep.subr.bf16.mxu0 %v4113
        %4378 = vmatpush1.bf16.msra.mxu0 %v4112
        %4379 = vmatprep.subr.bf16.mxu0 %v4115
        %4380 = vmatpush1.bf16.msra.mxu0 %v4114
        %4381 = vmatprep.subr.bf16.mxu0 %v4117
        %4382 = vmatpush1.bf16.msra.mxu0 %v4116
        %4383 = vmatprep.subr.bf16.mxu0 %v4119
        %4384 = vmatpush1.bf16.msra.mxu0 %v4118
        %4385 = vmatprep.mubr.bf16.mxu0 %v3527
        %4386 = vmatmul.mubr.bf16.gmra.mrb[0].mxu0 %v3526
        %v4387 = vpop.f32.mrb[0].mxu0
        %v4388 = vadd.f32 %v4347, %v4387
        %v4389 = vpop.f32.mrb[0].mxu0
        %v4390 = vadd.f32 %v4349, %v4389
        %v4391 = vpop.f32.mrb[0].mxu0
        %v4392 = vpop.f32.mrb[0].mxu0
        %4393 = vdwg.mxu0
        %4394 = vmatprep.subr.bf16.mxu0 %v4121
        %4395 = vmatpush1.bf16.msra.mxu0 %v4120
        %4396 = vmatprep.subr.bf16.mxu0 %v4123
        %4397 = vmatpush1.bf16.msra.mxu0 %v4122
        %4398 = vmatprep.subr.bf16.mxu0 %v4125
        %4399 = vmatpush1.bf16.msra.mxu0 %v4124
        %4400 = vmatprep.subr.bf16.mxu0 %v4127
        %4401 = vmatpush1.bf16.msra.mxu0 %v4126
        %4402 = vmatprep.subr.bf16.mxu0 %v4129
        %4403 = vmatpush1.bf16.msra.mxu0 %v4128
        %4404 = vmatprep.subr.bf16.mxu0 %v4131
        %4405 = vmatpush1.bf16.msra.mxu0 %v4130
        %4406 = vmatprep.subr.bf16.mxu0 %v4133
        %4407 = vmatpush1.bf16.msra.mxu0 %v4132
        %4408 = vmatprep.subr.bf16.mxu0 %v4135
        %4409 = vmatpush1.bf16.msra.mxu0 %v4134
        %4410 = vmatprep.subr.bf16.mxu0 %v4137
        %4411 = vmatpush1.bf16.msra.mxu0 %v4136
        %4412 = vmatprep.subr.bf16.mxu0 %v4139
        %4413 = vmatpush1.bf16.msra.mxu0 %v4138
        %4414 = vmatprep.subr.bf16.mxu0 %v4141
        %4415 = vmatpush1.bf16.msra.mxu0 %v4140
        %4416 = vmatprep.subr.bf16.mxu0 %v4143
        %4417 = vmatpush1.bf16.msra.mxu0 %v4142
        %4418 = vmatprep.subr.bf16.mxu0 %v4145
        %4419 = vmatpush1.bf16.msra.mxu0 %v4144
        %4420 = vmatprep.subr.bf16.mxu0 %v4147
        %4421 = vmatpush1.bf16.msra.mxu0 %v4146
        %4422 = vmatprep.subr.bf16.mxu0 %v4149
        %4423 = vmatpush1.bf16.msra.mxu0 %v4148
        %4424 = vmatprep.subr.bf16.mxu0 %v4151
        %4425 = vmatpush1.bf16.msra.mxu0 %v4150
        %4426 = vmatprep.mubr.bf16.mxu0 %v3529
        %4427 = vmatmul.mubr.bf16.gmra.mrb[0].mxu0 %v3528
        %v4428 = vpop.f32.mrb[0].mxu0
        %v4429 = vadd.f32 %v4388, %v4428
        %v4430 = vpop.f32.mrb[0].mxu0
        %v4431 = vadd.f32 %v4390, %v4430
        %v4432 = vpop.f32.mrb[0].mxu0
        %v4433 = vpop.f32.mrb[0].mxu0
        %4434 = vdwg.mxu0
        %4435 = vmatprep.subr.bf16.mxu0 %v4153
        %4436 = vmatpush1.bf16.msra.mxu0 %v4152
        %4437 = vmatprep.subr.bf16.mxu0 %v4155
        %4438 = vmatpush1.bf16.msra.mxu0 %v4154
        %4439 = vmatprep.subr.bf16.mxu0 %v4157
        %4440 = vmatpush1.bf16.msra.mxu0 %v4156
        %4441 = vmatprep.subr.bf16.mxu0 %v4159
        %4442 = vmatpush1.bf16.msra.mxu0 %v4158
        %4443 = vmatprep.subr.bf16.mxu0 %v4161
        %4444 = vmatpush1.bf16.msra.mxu0 %v4160
        %4445 = vmatprep.subr.bf16.mxu0 %v4163
        %4446 = vmatpush1.bf16.msra.mxu0 %v4162
        %4447 = vmatprep.subr.bf16.mxu0 %v4165
        %4448 = vmatpush1.bf16.msra.mxu0 %v4164
        %4449 = vmatprep.subr.bf16.mxu0 %v4167
        %4450 = vmatpush1.bf16.msra.mxu0 %v4166
        %4451 = vmatprep.subr.bf16.mxu0 %v4169
        %4452 = vmatpush1.bf16.msra.mxu0 %v4168
        %4453 = vmatprep.subr.bf16.mxu0 %v4171
        %4454 = vmatpush1.bf16.msra.mxu0 %v4170
        %4455 = vmatprep.subr.bf16.mxu0 %v4173
        %4456 = vmatpush1.bf16.msra.mxu0 %v4172
        %4457 = vmatprep.subr.bf16.mxu0 %v4175
        %4458 = vmatpush1.bf16.msra.mxu0 %v4174
        %4459 = vmatprep.subr.bf16.mxu0 %v4177
        %4460 = vmatpush1.bf16.msra.mxu0 %v4176
        %4461 = vmatprep.subr.bf16.mxu0 %v4179
        %4462 = vmatpush1.bf16.msra.mxu0 %v4178
        %4463 = vmatprep.subr.bf16.mxu0 %v4181
        %4464 = vmatpush1.bf16.msra.mxu0 %v4180
        %4465 = vmatprep.subr.bf16.mxu0 %v4183
        %4466 = vmatpush1.bf16.msra.mxu0 %v4182
        %4467 = vmatprep.mubr.bf16.mxu0 %v3531
        %4468 = vmatmul.mubr.bf16.gmra.mrb[0].mxu0 %v3530
        %v4469 = vpop.f32.mrb[0].mxu0
        %v4470 = vadd.f32 %v4429, %v4469
        %v4471 = vpop.f32.mrb[0].mxu0
        %v4472 = vadd.f32 %v4431, %v4471
        %v4473 = vpop.f32.mrb[0].mxu0
        %v4474 = vpop.f32.mrb[0].mxu0
        %4475 = vdwg.mxu0
        %v4476 = vld [vmem:[%s24] sm:$0x3]
        %v4478 = vlaneseq
        %v4479 = vshrl.u32 %v4478, 7
        %v4480 = vsub.s32 0, %v4479
        %v4481 = vrot.slane %v4476, %v4480
        %v4482 = vlaneseq
        %v4483 = vshrl.u32 %v4482, 7
        %v4484 = vsub.s32 1, %v4483
        %v4485 = vrot.slane %v4476, %v4484
        %v4488 = vmul.f32 %v4481, %v4470
        %v4489 = vmul.f32 %v4485, %v4472
        %v4490 = vadd.f32 %v2474, %v4488
        %v4491 = vadd.f32 %v2475, %v4489
        %4492 = vst [vmem:[%s926] sm:$0xff] %v4490
        %4493 = vst [vmem:[%s926 + $0x8] sm:$0xff] %v4491
        %p4494 = scmp.lt.s32.totalorder %s42, 1
        %s4495 = scalar_select %p4494, %s42, 1
        %s4496 = smul.addr %s4495, 2
        %s4497 = smul.addr %s4496, 8
        %s4498 = scalar_lea.vmem %s27, %s4497
        // Predicated region
        $region153: #{latent_regresser_forward.2} parent=127 // pred_check
          %p4499 = pneg %p637
        $region154: #{latent_regresser_forward.2} parent=127 // pred_check_branch
          %4501 = sbr.rel (%p4499) target = $region156
        $region155: #{latent_regresser_forward.2} parent=127 // pred_region
          _
        $region156: #{latent_regresser_forward.2} parent=127 // pred_fallthru
          _
      $region128: #{latent_regresser_forward.2} parent=5 // pred_fallthru
        _
      %p4502 = scmp.le.s32.totalorder 2, %s37
      // Predicated region
      $region157: #{latent_regresser_forward.2} parent=5 // pred_check
        %p4503 = pneg %p4502
      $region158: #{latent_regresser_forward.2} parent=5 // pred_check_branch
        %4505 = sbr.rel (%p4503) target = $region160
      $region159: #{latent_regresser_forward.2} parent=5 // pred_region
        %s4506 = ssub.s32 %s37, 2
        // Predicated region
        $region161: #{latent_regresser_forward.2} parent=159 // pred_check
          %p4507 = pneg %p643
        $region162: #{latent_regresser_forward.2} parent=159 // pred_check_branch
          %4509 = sbr.rel (%p4507) target = $region164
        $region163: #{latent_regresser_forward.2} parent=159 // pred_region
          %p4510 = scmp.lt.s32.totalorder %s43, 1
          %s4511 = scalar_select %p4510, %s43, 1
          %s4512 = smul.addr %s4511, 2
          %s4513 = smul.addr %s4512, 8
          %s4514 = scalar_lea.vmem %s27, %s4513
        $region164: #{latent_regresser_forward.2} parent=159 // pred_fallthru
          _
      $region160: #{latent_regresser_forward.2} parent=5 // pred_fallthru
        _
    $region6: #{latent_regresser_forward.2} parent=1 // loop_footer
      %s41 = sadd.s32 1, %s37
    $region7: #{latent_regresser_forward.2} parent=1 // loop_footer_branch
      %36 = sbr.rel target = $region3
    $region8: #{latent_regresser_forward.2} parent=1 // loop_exit
      _
    %4515 = vsyncpa [#allocation3], 1
    %s4516 = scalar_lea.sflag [#allocation3], 1
    %4517 = vsyncpa %s4516, 1
    %4518 = vsyncpa [#allocation5], 1
    %4519 = vsyncpa [#allocation8], 1
    %4520 = vsyncpa [#allocation11], 1

// kernel: latent_regresser_forward.3
$region0: #{latent_regresser_forward.3}
  #allocation0 [shape = 'u32[]', space=smem, size = 0x4, offset = 0x4, fixed_abs, tag = 'smem constant byte address 0x4 - core index']
  #allocation1 [shape = 'u32[144,128]{1,0:T(1,128)}', space=vmem, size = 0x12000, scoped, tag = 'internal scratch']
  %s0 = inlined_call_operand.vmem [shape: f32[2,8,256], index: 0, kind: input, shape index: {}]
  %s1 = inlined_call_operand.vmem [shape: f32[2,24,256], index: 1, kind: input, shape index: {}]
  %s2 = inlined_call_operand.vmem [shape: f32[1,8,256], index: 2, kind: input, shape index: {}]
  %s3 = inlined_call_operand.vmem [shape: f32[1,24,256], index: 3, kind: input, shape index: {}]
  %s4 = inlined_call_operand.vmem [shape: f32[1,256], index: 4, kind: input, shape index: {}]
  %s5 = inlined_call_operand.vmem [shape: f32[1,256], index: 5, kind: input, shape index: {}]
  %s6 = inlined_call_operand.vmem [shape: f32[1,256], index: 6, kind: input, shape index: {}]
  %s7 = inlined_call_operand.vmem [shape: f32[1,256], index: 7, kind: input, shape index: {}]
  %s8 = inlined_call_operand.vmem [shape: f32[1,256], index: 8, kind: input, shape index: {}]
  %s9 = inlined_call_operand.vmem [shape: f32[1,256], index: 9, kind: input, shape index: {}]
  %s10 = inlined_call_operand.vmem [shape: bf16[256,256], index: 10, kind: input, shape index: {}]
  %s11 = inlined_call_operand.vmem [shape: f32[1,256], index: 11, kind: input, shape index: {}]
  %s12 = inlined_call_operand.vmem [shape: bf16[256,256], index: 12, kind: input, shape index: {}]
  %s13 = inlined_call_operand.vmem [shape: bf16[256,256], index: 13, kind: input, shape index: {}]
  %s14 = inlined_call_operand.vmem [shape: f32[1,256], index: 14, kind: input, shape index: {}]
  %s15 = inlined_call_operand.vmem [shape: bf16[256,256], index: 15, kind: input, shape index: {}]
  %s16 = inlined_call_operand.vmem [shape: f32[1,256], index: 16, kind: input, shape index: {}]
  %s17 = inlined_call_operand.vmem [shape: f32[1,256], index: 17, kind: input, shape index: {}]
  %s18 = inlined_call_operand.vmem [shape: f32[1,256], index: 18, kind: input, shape index: {}]
  %s19 = inlined_call_operand.vmem [shape: f32[1,256], index: 19, kind: input, shape index: {}]
  %s20 = inlined_call_operand.vmem [shape: bf16[256,1024], index: 20, kind: input, shape index: {}]
  %s21 = inlined_call_operand.vmem [shape: f32[1,1024], index: 21, kind: input, shape index: {}]
  %s22 = inlined_call_operand.vmem [shape: bf16[1024,256], index: 22, kind: input, shape index: {}]
  %s23 = inlined_call_operand.vmem [shape: f32[1,256], index: 23, kind: input, shape index: {}]
  %s24 = inlined_call_operand.vmem [shape: f32[1,256], index: 24, kind: input, shape index: {}]
  %s25 = inlined_call_operand.vmem [shape: f32[1,256], index: 25, kind: input, shape index: {}]
  %s26 = inlined_call_operand.vmem [shape: f32[1,256], index: 26, kind: input, shape index: {}]
  %s27 = inlined_call_operand.hbm [shape: f32[2,8,256], index: 27, kind: output, shape index: {}]
  %s28 = sld [smem:[#allocation0]]
  $region141: #{latent_regresser_forward.3} parent=0
    _
  %s30 = ssub.s32 1, %s28
  %s31 = scalar_select 0, %s30, %s28
  $region1: #{latent_regresser_forward.3} parent=0
    #allocation2 [shape = 'u8[16384]{0}', space=vmem, size = 0x4000, scoped, tag = 'output window, operand 0']
    #allocation3 [shape = 's32[2]{0}', space=sflag, size = 0x8, scoped, tag = 'scoped memory for latent_regresser_forward.3']
    %32 = vsyncpa [#allocation3], 0
    %s33 = scalar_lea.sflag [#allocation3], 1
    %34 = vsyncpa %s33, 0
    loop: start=0, step=1, limit=4
    $region2: #{latent_regresser_forward.3} parent=1 // loop_pre_header
      _
    $region3: #{latent_regresser_forward.3} parent=1 // loop_header
      %s36 = sphi 0, %s40
      %p37 = scmp.ge.s32.totalorder %s36, 4
      %s46 = sphi 0, %s48
      %s49 = sphi 0, %s46
      %s50 = sphi 0, %s49
      %s66 = sphi 0, %s50
      %s72 = sphi 0, %s74
      %s75 = sphi 0, %s72
      %s76 = sphi 0, %s75
      %s92 = sphi 0, %s76
      %s96 = sphi 0, %s96
      %s98 = sphi 0, %s96
      %s99 = sphi 0, %s98
      %s113 = sphi 0, %s99
      %s117 = sphi 0, %s117
      %s119 = sphi 0, %s117
      %s120 = sphi 0, %s119
      %s134 = sphi 0, %s120
      %s138 = sphi 0, %s138
      %s140 = sphi 0, %s138
      %s141 = sphi 0, %s140
      %s155 = sphi 0, %s141
      %s159 = sphi 0, %s159
      %s161 = sphi 0, %s159
      %s162 = sphi 0, %s161
      %s176 = sphi 0, %s162
      %s180 = sphi 0, %s180
      %s182 = sphi 0, %s180
      %s183 = sphi 0, %s182
      %s197 = sphi 0, %s183
      %s201 = sphi 0, %s201
      %s203 = sphi 0, %s201
      %s204 = sphi 0, %s203
      %s218 = sphi 0, %s204
      %s222 = sphi 0, %s222
      %s224 = sphi 0, %s222
      %s225 = sphi 0, %s224
      %s239 = sphi 0, %s225
      %s243 = sphi 0, %s243
      %s245 = sphi 0, %s243
      %s246 = sphi 0, %s245
      %s260 = sphi 0, %s246
      %s264 = sphi 0, %s264
      %s266 = sphi 0, %s264
      %s267 = sphi 0, %s266
      %s281 = sphi 0, %s267
      %s285 = sphi 0, %s285
      %s287 = sphi 0, %s285
      %s288 = sphi 0, %s287
      %s302 = sphi 0, %s288
      %s306 = sphi 0, %s306
      %s308 = sphi 0, %s306
      %s309 = sphi 0, %s308
      %s323 = sphi 0, %s309
      %s327 = sphi 0, %s327
      %s329 = sphi 0, %s327
      %s330 = sphi 0, %s329
      %s344 = sphi 0, %s330
      %s348 = sphi 0, %s348
      %s350 = sphi 0, %s348
      %s351 = sphi 0, %s350
      %s365 = sphi 0, %s351
      %s369 = sphi 0, %s369
      %s371 = sphi 0, %s369
      %s372 = sphi 0, %s371
      %s386 = sphi 0, %s372
      %s390 = sphi 0, %s390
      %s392 = sphi 0, %s390
      %s393 = sphi 0, %s392
      %s407 = sphi 0, %s393
      %s411 = sphi 0, %s411
      %s413 = sphi 0, %s411
      %s414 = sphi 0, %s413
      %s428 = sphi 0, %s414
      %s432 = sphi 0, %s432
      %s434 = sphi 0, %s432
      %s435 = sphi 0, %s434
      %s449 = sphi 0, %s435
      %s453 = sphi 0, %s453
      %s455 = sphi 0, %s453
      %s456 = sphi 0, %s455
      %s470 = sphi 0, %s456
      %s474 = sphi 0, %s474
      %s476 = sphi 0, %s474
      %s477 = sphi 0, %s476
      %s491 = sphi 0, %s477
      %s495 = sphi 0, %s495
      %s497 = sphi 0, %s495
      %s498 = sphi 0, %s497
      %s512 = sphi 0, %s498
      %s516 = sphi 0, %s516
      %s518 = sphi 0, %s516
      %s519 = sphi 0, %s518
      %s533 = sphi 0, %s519
      %s537 = sphi 0, %s537
      %s539 = sphi 0, %s537
      %s540 = sphi 0, %s539
      %s554 = sphi 0, %s540
      %s558 = sphi 0, %s558
      %s560 = sphi 0, %s558
      %s561 = sphi 0, %s560
      %s575 = sphi 0, %s561
      %s579 = sphi 0, %s579
      %s581 = sphi 0, %s579
      %s582 = sphi 0, %s581
      %s596 = sphi 0, %s582
      %s600 = sphi 0, %s600
      %s602 = sphi 0, %s600
      %s603 = sphi 0, %s602
      %s617 = sphi 0, %s603
      %s623 = sphi 0, %s625
      %s626 = sphi 0, %s623
      %s627 = sphi 0, %s626
      %s643 = sphi 0, %s627
    $region4: #{latent_regresser_forward.3} parent=1 // loop_header_branch
      %39 = sbr.rel (%p37) target = $region8
    $region5: #{latent_regresser_forward.3} parent=1 // loop_body
      %s41 = ssub.s32 %s36, 1
      %s42 = ssub.s32 %s36, 2
      %s43 = sadd.s32 %s36, 1
      %s44 = ssub.s32 %s36, %s43
      %p45 = scmp.eq.s32.totalorder %s44, 0
      %s47 = sadd.s32 %s46, 1
      %s48 = scalar_select %p45, %s46, %s47
      %p51 = pneg %p45
      %p52 = scmp.eq.s32.totalorder %s36, 1
      %p53 = por %p51, %p52
      %p54 = scmp.ne.s32.totalorder %s46, %s49
      %p55 = scmp.eq.s32.totalorder %s36, 0
      %p56 = por %p54, %p55
      %p57 = scmp.ne.s32.totalorder %s46, %s49
      %p58 = scmp.eq.s32.totalorder %s41, 1
      %p59 = por %p57, %p58
      %p60 = scmp.ne.s32.totalorder %s49, %s50
      %p61 = scmp.eq.s32.totalorder %s41, 0
      %p62 = por %p60, %p61
      %p63 = scmp.ne.s32.totalorder %s49, %s50
      %p64 = scmp.eq.s32.totalorder %s42, 1
      %p65 = por %p63, %p64
      %p67 = scmp.ne.s32.totalorder %s50, %s66
      %p68 = scmp.eq.s32.totalorder %s42, 0
      %p69 = por %p67, %p68
      %s70 = ssub.s32 %s36, %s43
      %p71 = scmp.eq.s32.totalorder %s70, 0
      %s73 = sadd.s32 %s72, 1
      %s74 = scalar_select %p71, %s72, %s73
      %p77 = pneg %p71
      %p78 = scmp.eq.s32.totalorder %s36, 1
      %p79 = por %p77, %p78
      %p80 = scmp.ne.s32.totalorder %s72, %s75
      %p81 = scmp.eq.s32.totalorder %s36, 0
      %p82 = por %p80, %p81
      %p83 = scmp.ne.s32.totalorder %s72, %s75
      %p84 = scmp.eq.s32.totalorder %s41, 1
      %p85 = por %p83, %p84
      %p86 = scmp.ne.s32.totalorder %s75, %s76
      %p87 = scmp.eq.s32.totalorder %s41, 0
      %p88 = por %p86, %p87
      %p89 = scmp.ne.s32.totalorder %s75, %s76
      %p90 = scmp.eq.s32.totalorder %s42, 1
      %p91 = por %p89, %p90
      %p93 = scmp.ne.s32.totalorder %s76, %s92
      %p94 = scmp.eq.s32.totalorder %s42, 0
      %p95 = por %p93, %p94
      %s97 = sadd.s32 %s96, 1
      %p100 = scmp.eq.s32.totalorder %s36, 1
      %p101 = scmp.ne.s32.totalorder %s96, %s98
      %p102 = scmp.eq.s32.totalorder %s36, 0
      %p103 = por %p101, %p102
      %p104 = scmp.ne.s32.totalorder %s96, %s98
      %p105 = scmp.eq.s32.totalorder %s41, 1
      %p106 = por %p104, %p105
      %p107 = scmp.ne.s32.totalorder %s98, %s99
      %p108 = scmp.eq.s32.totalorder %s41, 0
      %p109 = por %p107, %p108
      %p110 = scmp.ne.s32.totalorder %s98, %s99
      %p111 = scmp.eq.s32.totalorder %s42, 1
      %p112 = por %p110, %p111
      %p114 = scmp.ne.s32.totalorder %s99, %s113
      %p115 = scmp.eq.s32.totalorder %s42, 0
      %p116 = por %p114, %p115
      %s118 = sadd.s32 %s117, 1
      %p121 = scmp.eq.s32.totalorder %s36, 1
      %p122 = scmp.ne.s32.totalorder %s117, %s119
      %p123 = scmp.eq.s32.totalorder %s36, 0
      %p124 = por %p122, %p123
      %p125 = scmp.ne.s32.totalorder %s117, %s119
      %p126 = scmp.eq.s32.totalorder %s41, 1
      %p127 = por %p125, %p126
      %p128 = scmp.ne.s32.totalorder %s119, %s120
      %p129 = scmp.eq.s32.totalorder %s41, 0
      %p130 = por %p128, %p129
      %p131 = scmp.ne.s32.totalorder %s119, %s120
      %p132 = scmp.eq.s32.totalorder %s42, 1
      %p133 = por %p131, %p132
      %p135 = scmp.ne.s32.totalorder %s120, %s134
      %p136 = scmp.eq.s32.totalorder %s42, 0
      %p137 = por %p135, %p136
      %s139 = sadd.s32 %s138, 1
      %p142 = scmp.eq.s32.totalorder %s36, 1
      %p143 = scmp.ne.s32.totalorder %s138, %s140
      %p144 = scmp.eq.s32.totalorder %s36, 0
      %p145 = por %p143, %p144
      %p146 = scmp.ne.s32.totalorder %s138, %s140
      %p147 = scmp.eq.s32.totalorder %s41, 1
      %p148 = por %p146, %p147
      %p149 = scmp.ne.s32.totalorder %s140, %s141
      %p150 = scmp.eq.s32.totalorder %s41, 0
      %p151 = por %p149, %p150
      %p152 = scmp.ne.s32.totalorder %s140, %s141
      %p153 = scmp.eq.s32.totalorder %s42, 1
      %p154 = por %p152, %p153
      %p156 = scmp.ne.s32.totalorder %s141, %s155
      %p157 = scmp.eq.s32.totalorder %s42, 0
      %p158 = por %p156, %p157
      %s160 = sadd.s32 %s159, 1
      %p163 = scmp.eq.s32.totalorder %s36, 1
      %p164 = scmp.ne.s32.totalorder %s159, %s161
      %p165 = scmp.eq.s32.totalorder %s36, 0
      %p166 = por %p164, %p165
      %p167 = scmp.ne.s32.totalorder %s159, %s161
      %p168 = scmp.eq.s32.totalorder %s41, 1
      %p169 = por %p167, %p168
      %p170 = scmp.ne.s32.totalorder %s161, %s162
      %p171 = scmp.eq.s32.totalorder %s41, 0
      %p172 = por %p170, %p171
      %p173 = scmp.ne.s32.totalorder %s161, %s162
      %p174 = scmp.eq.s32.totalorder %s42, 1
      %p175 = por %p173, %p174
      %p177 = scmp.ne.s32.totalorder %s162, %s176
      %p178 = scmp.eq.s32.totalorder %s42, 0
      %p179 = por %p177, %p178
      %s181 = sadd.s32 %s180, 1
      %p184 = scmp.eq.s32.totalorder %s36, 1
      %p185 = scmp.ne.s32.totalorder %s180, %s182
      %p186 = scmp.eq.s32.totalorder %s36, 0
      %p187 = por %p185, %p186
      %p188 = scmp.ne.s32.totalorder %s180, %s182
      %p189 = scmp.eq.s32.totalorder %s41, 1
      %p190 = por %p188, %p189
      %p191 = scmp.ne.s32.totalorder %s182, %s183
      %p192 = scmp.eq.s32.totalorder %s41, 0
      %p193 = por %p191, %p192
      %p194 = scmp.ne.s32.totalorder %s182, %s183
      %p195 = scmp.eq.s32.totalorder %s42, 1
      %p196 = por %p194, %p195
      %p198 = scmp.ne.s32.totalorder %s183, %s197
      %p199 = scmp.eq.s32.totalorder %s42, 0
      %p200 = por %p198, %p199
      %s202 = sadd.s32 %s201, 1
      %p205 = scmp.eq.s32.totalorder %s36, 1
      %p206 = scmp.ne.s32.totalorder %s201, %s203
      %p207 = scmp.eq.s32.totalorder %s36, 0
      %p208 = por %p206, %p207
      %p209 = scmp.ne.s32.totalorder %s201, %s203
      %p210 = scmp.eq.s32.totalorder %s41, 1
      %p211 = por %p209, %p210
      %p212 = scmp.ne.s32.totalorder %s203, %s204
      %p213 = scmp.eq.s32.totalorder %s41, 0
      %p214 = por %p212, %p213
      %p215 = scmp.ne.s32.totalorder %s203, %s204
      %p216 = scmp.eq.s32.totalorder %s42, 1
      %p217 = por %p215, %p216
      %p219 = scmp.ne.s32.totalorder %s204, %s218
      %p220 = scmp.eq.s32.totalorder %s42, 0
      %p221 = por %p219, %p220
      %s223 = sadd.s32 %s222, 1
      %p226 = scmp.eq.s32.totalorder %s36, 1
      %p227 = scmp.ne.s32.totalorder %s222, %s224
      %p228 = scmp.eq.s32.totalorder %s36, 0
      %p229 = por %p227, %p228
      %p230 = scmp.ne.s32.totalorder %s222, %s224
      %p231 = scmp.eq.s32.totalorder %s41, 1
      %p232 = por %p230, %p231
      %p233 = scmp.ne.s32.totalorder %s224, %s225
      %p234 = scmp.eq.s32.totalorder %s41, 0
      %p235 = por %p233, %p234
      %p236 = scmp.ne.s32.totalorder %s224, %s225
      %p237 = scmp.eq.s32.totalorder %s42, 1
      %p238 = por %p236, %p237
      %p240 = scmp.ne.s32.totalorder %s225, %s239
      %p241 = scmp.eq.s32.totalorder %s42, 0
      %p242 = por %p240, %p241
      %s244 = sadd.s32 %s243, 1
      %p247 = scmp.eq.s32.totalorder %s36, 1
      %p248 = scmp.ne.s32.totalorder %s243, %s245
      %p249 = scmp.eq.s32.totalorder %s36, 0
      %p250 = por %p248, %p249
      %p251 = scmp.ne.s32.totalorder %s243, %s245
      %p252 = scmp.eq.s32.totalorder %s41, 1
      %p253 = por %p251, %p252
      %p254 = scmp.ne.s32.totalorder %s245, %s246
      %p255 = scmp.eq.s32.totalorder %s41, 0
      %p256 = por %p254, %p255
      %p257 = scmp.ne.s32.totalorder %s245, %s246
      %p258 = scmp.eq.s32.totalorder %s42, 1
      %p259 = por %p257, %p258
      %p261 = scmp.ne.s32.totalorder %s246, %s260
      %p262 = scmp.eq.s32.totalorder %s42, 0
      %p263 = por %p261, %p262
      %s265 = sadd.s32 %s264, 1
      %p268 = scmp.eq.s32.totalorder %s36, 1
      %p269 = scmp.ne.s32.totalorder %s264, %s266
      %p270 = scmp.eq.s32.totalorder %s36, 0
      %p271 = por %p269, %p270
      %p272 = scmp.ne.s32.totalorder %s264, %s266
      %p273 = scmp.eq.s32.totalorder %s41, 1
      %p274 = por %p272, %p273
      %p275 = scmp.ne.s32.totalorder %s266, %s267
      %p276 = scmp.eq.s32.totalorder %s41, 0
      %p277 = por %p275, %p276
      %p278 = scmp.ne.s32.totalorder %s266, %s267
      %p279 = scmp.eq.s32.totalorder %s42, 1
      %p280 = por %p278, %p279
      %p282 = scmp.ne.s32.totalorder %s267, %s281
      %p283 = scmp.eq.s32.totalorder %s42, 0
      %p284 = por %p282, %p283
      %s286 = sadd.s32 %s285, 1
      %p289 = scmp.eq.s32.totalorder %s36, 1
      %p290 = scmp.ne.s32.totalorder %s285, %s287
      %p291 = scmp.eq.s32.totalorder %s36, 0
      %p292 = por %p290, %p291
      %p293 = scmp.ne.s32.totalorder %s285, %s287
      %p294 = scmp.eq.s32.totalorder %s41, 1
      %p295 = por %p293, %p294
      %p296 = scmp.ne.s32.totalorder %s287, %s288
      %p297 = scmp.eq.s32.totalorder %s41, 0
      %p298 = por %p296, %p297
      %p299 = scmp.ne.s32.totalorder %s287, %s288
      %p300 = scmp.eq.s32.totalorder %s42, 1
      %p301 = por %p299, %p300
      %p303 = scmp.ne.s32.totalorder %s288, %s302
      %p304 = scmp.eq.s32.totalorder %s42, 0
      %p305 = por %p303, %p304
      %s307 = sadd.s32 %s306, 1
      %p310 = scmp.eq.s32.totalorder %s36, 1
      %p311 = scmp.ne.s32.totalorder %s306, %s308
      %p312 = scmp.eq.s32.totalorder %s36, 0
      %p313 = por %p311, %p312
      %p314 = scmp.ne.s32.totalorder %s306, %s308
      %p315 = scmp.eq.s32.totalorder %s41, 1
      %p316 = por %p314, %p315
      %p317 = scmp.ne.s32.totalorder %s308, %s309
      %p318 = scmp.eq.s32.totalorder %s41, 0
      %p319 = por %p317, %p318
      %p320 = scmp.ne.s32.totalorder %s308, %s309
      %p321 = scmp.eq.s32.totalorder %s42, 1
      %p322 = por %p320, %p321
      %p324 = scmp.ne.s32.totalorder %s309, %s323
      %p325 = scmp.eq.s32.totalorder %s42, 0
      %p326 = por %p324, %p325
      %s328 = sadd.s32 %s327, 1
      %p331 = scmp.eq.s32.totalorder %s36, 1
      %p332 = scmp.ne.s32.totalorder %s327, %s329
      %p333 = scmp.eq.s32.totalorder %s36, 0
      %p334 = por %p332, %p333
      %p335 = scmp.ne.s32.totalorder %s327, %s329
      %p336 = scmp.eq.s32.totalorder %s41, 1
      %p337 = por %p335, %p336
      %p338 = scmp.ne.s32.totalorder %s329, %s330
      %p339 = scmp.eq.s32.totalorder %s41, 0
      %p340 = por %p338, %p339
      %p341 = scmp.ne.s32.totalorder %s329, %s330
      %p342 = scmp.eq.s32.totalorder %s42, 1
      %p343 = por %p341, %p342
      %p345 = scmp.ne.s32.totalorder %s330, %s344
      %p346 = scmp.eq.s32.totalorder %s42, 0
      %p347 = por %p345, %p346
      %s349 = sadd.s32 %s348, 1
      %p352 = scmp.eq.s32.totalorder %s36, 1
      %p353 = scmp.ne.s32.totalorder %s348, %s350
      %p354 = scmp.eq.s32.totalorder %s36, 0
      %p355 = por %p353, %p354
      %p356 = scmp.ne.s32.totalorder %s348, %s350
      %p357 = scmp.eq.s32.totalorder %s41, 1
      %p358 = por %p356, %p357
      %p359 = scmp.ne.s32.totalorder %s350, %s351
      %p360 = scmp.eq.s32.totalorder %s41, 0
      %p361 = por %p359, %p360
      %p362 = scmp.ne.s32.totalorder %s350, %s351
      %p363 = scmp.eq.s32.totalorder %s42, 1
      %p364 = por %p362, %p363
      %p366 = scmp.ne.s32.totalorder %s351, %s365
      %p367 = scmp.eq.s32.totalorder %s42, 0
      %p368 = por %p366, %p367
      %s370 = sadd.s32 %s369, 1
      %p373 = scmp.eq.s32.totalorder %s36, 1
      %p374 = scmp.ne.s32.totalorder %s369, %s371
      %p375 = scmp.eq.s32.totalorder %s36, 0
      %p376 = por %p374, %p375
      %p377 = scmp.ne.s32.totalorder %s369, %s371
      %p378 = scmp.eq.s32.totalorder %s41, 1
      %p379 = por %p377, %p378
      %p380 = scmp.ne.s32.totalorder %s371, %s372
      %p381 = scmp.eq.s32.totalorder %s41, 0
      %p382 = por %p380, %p381
      %p383 = scmp.ne.s32.totalorder %s371, %s372
      %p384 = scmp.eq.s32.totalorder %s42, 1
      %p385 = por %p383, %p384
      %p387 = scmp.ne.s32.totalorder %s372, %s386
      %p388 = scmp.eq.s32.totalorder %s42, 0
      %p389 = por %p387, %p388
      %s391 = sadd.s32 %s390, 1
      %p394 = scmp.eq.s32.totalorder %s36, 1
      %p395 = scmp.ne.s32.totalorder %s390, %s392
      %p396 = scmp.eq.s32.totalorder %s36, 0
      %p397 = por %p395, %p396
      %p398 = scmp.ne.s32.totalorder %s390, %s392
      %p399 = scmp.eq.s32.totalorder %s41, 1
      %p400 = por %p398, %p399
      %p401 = scmp.ne.s32.totalorder %s392, %s393
      %p402 = scmp.eq.s32.totalorder %s41, 0
      %p403 = por %p401, %p402
      %p404 = scmp.ne.s32.totalorder %s392, %s393
      %p405 = scmp.eq.s32.totalorder %s42, 1
      %p406 = por %p404, %p405
      %p408 = scmp.ne.s32.totalorder %s393, %s407
      %p409 = scmp.eq.s32.totalorder %s42, 0
      %p410 = por %p408, %p409
      %s412 = sadd.s32 %s411, 1
      %p415 = scmp.eq.s32.totalorder %s36, 1
      %p416 = scmp.ne.s32.totalorder %s411, %s413
      %p417 = scmp.eq.s32.totalorder %s36, 0
      %p418 = por %p416, %p417
      %p419 = scmp.ne.s32.totalorder %s411, %s413
      %p420 = scmp.eq.s32.totalorder %s41, 1
      %p421 = por %p419, %p420
      %p422 = scmp.ne.s32.totalorder %s413, %s414
      %p423 = scmp.eq.s32.totalorder %s41, 0
      %p424 = por %p422, %p423
      %p425 = scmp.ne.s32.totalorder %s413, %s414
      %p426 = scmp.eq.s32.totalorder %s42, 1
      %p427 = por %p425, %p426
      %p429 = scmp.ne.s32.totalorder %s414, %s428
      %p430 = scmp.eq.s32.totalorder %s42, 0
      %p431 = por %p429, %p430
      %s433 = sadd.s32 %s432, 1
      %p436 = scmp.eq.s32.totalorder %s36, 1
      %p437 = scmp.ne.s32.totalorder %s432, %s434
      %p438 = scmp.eq.s32.totalorder %s36, 0
      %p439 = por %p437, %p438
      %p440 = scmp.ne.s32.totalorder %s432, %s434
      %p441 = scmp.eq.s32.totalorder %s41, 1
      %p442 = por %p440, %p441
      %p443 = scmp.ne.s32.totalorder %s434, %s435
      %p444 = scmp.eq.s32.totalorder %s41, 0
      %p445 = por %p443, %p444
      %p446 = scmp.ne.s32.totalorder %s434, %s435
      %p447 = scmp.eq.s32.totalorder %s42, 1
      %p448 = por %p446, %p447
      %p450 = scmp.ne.s32.totalorder %s435, %s449
      %p451 = scmp.eq.s32.totalorder %s42, 0
      %p452 = por %p450, %p451
      %s454 = sadd.s32 %s453, 1
      %p457 = scmp.eq.s32.totalorder %s36, 1
      %p458 = scmp.ne.s32.totalorder %s453, %s455
      %p459 = scmp.eq.s32.totalorder %s36, 0
      %p460 = por %p458, %p459
      %p461 = scmp.ne.s32.totalorder %s453, %s455
      %p462 = scmp.eq.s32.totalorder %s41, 1
      %p463 = por %p461, %p462
      %p464 = scmp.ne.s32.totalorder %s455, %s456
      %p465 = scmp.eq.s32.totalorder %s41, 0
      %p466 = por %p464, %p465
      %p467 = scmp.ne.s32.totalorder %s455, %s456
      %p468 = scmp.eq.s32.totalorder %s42, 1
      %p469 = por %p467, %p468
      %p471 = scmp.ne.s32.totalorder %s456, %s470
      %p472 = scmp.eq.s32.totalorder %s42, 0
      %p473 = por %p471, %p472
      %s475 = sadd.s32 %s474, 1
      %p478 = scmp.eq.s32.totalorder %s36, 1
      %p479 = scmp.ne.s32.totalorder %s474, %s476
      %p480 = scmp.eq.s32.totalorder %s36, 0
      %p481 = por %p479, %p480
      %p482 = scmp.ne.s32.totalorder %s474, %s476
      %p483 = scmp.eq.s32.totalorder %s41, 1
      %p484 = por %p482, %p483
      %p485 = scmp.ne.s32.totalorder %s476, %s477
      %p486 = scmp.eq.s32.totalorder %s41, 0
      %p487 = por %p485, %p486
      %p488 = scmp.ne.s32.totalorder %s476, %s477
      %p489 = scmp.eq.s32.totalorder %s42, 1
      %p490 = por %p488, %p489
      %p492 = scmp.ne.s32.totalorder %s477, %s491
      %p493 = scmp.eq.s32.totalorder %s42, 0
      %p494 = por %p492, %p493
      %s496 = sadd.s32 %s495, 1
      %p499 = scmp.eq.s32.totalorder %s36, 1
      %p500 = scmp.ne.s32.totalorder %s495, %s497
      %p501 = scmp.eq.s32.totalorder %s36, 0
      %p502 = por %p500, %p501
      %p503 = scmp.ne.s32.totalorder %s495, %s497
      %p504 = scmp.eq.s32.totalorder %s41, 1
      %p505 = por %p503, %p504
      %p506 = scmp.ne.s32.totalorder %s497, %s498
      %p507 = scmp.eq.s32.totalorder %s41, 0
      %p508 = por %p506, %p507
      %p509 = scmp.ne.s32.totalorder %s497, %s498
      %p510 = scmp.eq.s32.totalorder %s42, 1
      %p511 = por %p509, %p510
      %p513 = scmp.ne.s32.totalorder %s498, %s512
      %p514 = scmp.eq.s32.totalorder %s42, 0
      %p515 = por %p513, %p514
      %s517 = sadd.s32 %s516, 1
      %p520 = scmp.eq.s32.totalorder %s36, 1
      %p521 = scmp.ne.s32.totalorder %s516, %s518
      %p522 = scmp.eq.s32.totalorder %s36, 0
      %p523 = por %p521, %p522
      %p524 = scmp.ne.s32.totalorder %s516, %s518
      %p525 = scmp.eq.s32.totalorder %s41, 1
      %p526 = por %p524, %p525
      %p527 = scmp.ne.s32.totalorder %s518, %s519
      %p528 = scmp.eq.s32.totalorder %s41, 0
      %p529 = por %p527, %p528
      %p530 = scmp.ne.s32.totalorder %s518, %s519
      %p531 = scmp.eq.s32.totalorder %s42, 1
      %p532 = por %p530, %p531
      %p534 = scmp.ne.s32.totalorder %s519, %s533
      %p535 = scmp.eq.s32.totalorder %s42, 0
      %p536 = por %p534, %p535
      %s538 = sadd.s32 %s537, 1
      %p541 = scmp.eq.s32.totalorder %s36, 1
      %p542 = scmp.ne.s32.totalorder %s537, %s539
      %p543 = scmp.eq.s32.totalorder %s36, 0
      %p544 = por %p542, %p543
      %p545 = scmp.ne.s32.totalorder %s537, %s539
      %p546 = scmp.eq.s32.totalorder %s41, 1
      %p547 = por %p545, %p546
      %p548 = scmp.ne.s32.totalorder %s539, %s540
      %p549 = scmp.eq.s32.totalorder %s41, 0
      %p550 = por %p548, %p549
      %p551 = scmp.ne.s32.totalorder %s539, %s540
      %p552 = scmp.eq.s32.totalorder %s42, 1
      %p553 = por %p551, %p552
      %p555 = scmp.ne.s32.totalorder %s540, %s554
      %p556 = scmp.eq.s32.totalorder %s42, 0
      %p557 = por %p555, %p556
      %s559 = sadd.s32 %s558, 1
      %p562 = scmp.eq.s32.totalorder %s36, 1
      %p563 = scmp.ne.s32.totalorder %s558, %s560
      %p564 = scmp.eq.s32.totalorder %s36, 0
      %p565 = por %p563, %p564
      %p566 = scmp.ne.s32.totalorder %s558, %s560
      %p567 = scmp.eq.s32.totalorder %s41, 1
      %p568 = por %p566, %p567
      %p569 = scmp.ne.s32.totalorder %s560, %s561
      %p570 = scmp.eq.s32.totalorder %s41, 0
      %p571 = por %p569, %p570
      %p572 = scmp.ne.s32.totalorder %s560, %s561
      %p573 = scmp.eq.s32.totalorder %s42, 1
      %p574 = por %p572, %p573
      %p576 = scmp.ne.s32.totalorder %s561, %s575
      %p577 = scmp.eq.s32.totalorder %s42, 0
      %p578 = por %p576, %p577
      %s580 = sadd.s32 %s579, 1
      %p583 = scmp.eq.s32.totalorder %s36, 1
      %p584 = scmp.ne.s32.totalorder %s579, %s581
      %p585 = scmp.eq.s32.totalorder %s36, 0
      %p586 = por %p584, %p585
      %p587 = scmp.ne.s32.totalorder %s579, %s581
      %p588 = scmp.eq.s32.totalorder %s41, 1
      %p589 = por %p587, %p588
      %p590 = scmp.ne.s32.totalorder %s581, %s582
      %p591 = scmp.eq.s32.totalorder %s41, 0
      %p592 = por %p590, %p591
      %p593 = scmp.ne.s32.totalorder %s581, %s582
      %p594 = scmp.eq.s32.totalorder %s42, 1
      %p595 = por %p593, %p594
      %p597 = scmp.ne.s32.totalorder %s582, %s596
      %p598 = scmp.eq.s32.totalorder %s42, 0
      %p599 = por %p597, %p598
      %s601 = sadd.s32 %s600, 1
      %p604 = scmp.eq.s32.totalorder %s36, 1
      %p605 = scmp.ne.s32.totalorder %s600, %s602
      %p606 = scmp.eq.s32.totalorder %s36, 0
      %p607 = por %p605, %p606
      %p608 = scmp.ne.s32.totalorder %s600, %s602
      %p609 = scmp.eq.s32.totalorder %s41, 1
      %p610 = por %p608, %p609
      %p611 = scmp.ne.s32.totalorder %s602, %s603
      %p612 = scmp.eq.s32.totalorder %s41, 0
      %p613 = por %p611, %p612
      %p614 = scmp.ne.s32.totalorder %s602, %s603
      %p615 = scmp.eq.s32.totalorder %s42, 1
      %p616 = por %p614, %p615
      %p618 = scmp.ne.s32.totalorder %s603, %s617
      %p619 = scmp.eq.s32.totalorder %s42, 0
      %p620 = por %p618, %p619
      %s621 = ssub.s32 %s36, %s43
      %p622 = scmp.eq.s32.totalorder %s621, 0
      %s624 = sadd.s32 %s623, 1
      %s625 = scalar_select %p622, %s623, %s624
      %p628 = pneg %p622
      %p629 = scmp.eq.s32.totalorder %s36, 1
      %p630 = por %p628, %p629
      %p631 = scmp.ne.s32.totalorder %s623, %s626
      %p632 = scmp.eq.s32.totalorder %s36, 0
      %p633 = por %p631, %p632
      %p634 = scmp.ne.s32.totalorder %s623, %s626
      %p635 = scmp.eq.s32.totalorder %s41, 1
      %p636 = por %p634, %p635
      %p637 = scmp.ne.s32.totalorder %s626, %s627
      %p638 = scmp.eq.s32.totalorder %s41, 0
      %p639 = por %p637, %p638
      %p640 = scmp.ne.s32.totalorder %s626, %s627
      %p641 = scmp.eq.s32.totalorder %s42, 1
      %p642 = por %p640, %p641
      %p644 = scmp.ne.s32.totalorder %s627, %s643
      %p645 = scmp.eq.s32.totalorder %s42, 0
      %p646 = por %p644, %p645
      %p647 = scmp.le.s32.totalorder 1, %s36
      %p648 = scmp.lt.s32.totalorder %s36, 3
      %p649 = pnand %p647, %p648
      %p650 = pneg %p649
      // Predicated region
      $region9: #{latent_regresser_forward.3} parent=5 // pred_check
        _
      $region10: #{latent_regresser_forward.3} parent=5 // pred_check_branch
        %652 = sbr.rel (%p649) target = $region12
      $region11: #{latent_regresser_forward.3} parent=5 // pred_region
        %s653 = ssub.s32 %s36, 1
        // Predicated region
        $region13: #{latent_regresser_forward.3} parent=11 // pred_check
          %p654 = pneg %p109
        $region14: #{latent_regresser_forward.3} parent=11 // pred_check_branch
          %656 = sbr.rel (%p654) target = $region16
        $region15: #{latent_regresser_forward.3} parent=11 // pred_region
          _
        $region16: #{latent_regresser_forward.3} parent=11 // pred_fallthru
          _
        // Predicated region
        $region17: #{latent_regresser_forward.3} parent=11 // pred_check
          %p657 = pneg %p130
        $region18: #{latent_regresser_forward.3} parent=11 // pred_check_branch
          %659 = sbr.rel (%p657) target = $region20
        $region19: #{latent_regresser_forward.3} parent=11 // pred_region
          _
        $region20: #{latent_regresser_forward.3} parent=11 // pred_fallthru
          _
        // Predicated region
        $region21: #{latent_regresser_forward.3} parent=11 // pred_check
          %p660 = pneg %p151
        $region22: #{latent_regresser_forward.3} parent=11 // pred_check_branch
          %662 = sbr.rel (%p660) target = $region24
        $region23: #{latent_regresser_forward.3} parent=11 // pred_region
          _
        $region24: #{latent_regresser_forward.3} parent=11 // pred_fallthru
          _
        // Predicated region
        $region25: #{latent_regresser_forward.3} parent=11 // pred_check
          %p663 = pneg %p172
        $region26: #{latent_regresser_forward.3} parent=11 // pred_check_branch
          %665 = sbr.rel (%p663) target = $region28
        $region27: #{latent_regresser_forward.3} parent=11 // pred_region
          _
        $region28: #{latent_regresser_forward.3} parent=11 // pred_fallthru
          _
        // Predicated region
        $region29: #{latent_regresser_forward.3} parent=11 // pred_check
          %p666 = pneg %p193
        $region30: #{latent_regresser_forward.3} parent=11 // pred_check_branch
          %668 = sbr.rel (%p666) target = $region32
        $region31: #{latent_regresser_forward.3} parent=11 // pred_region
          _
        $region32: #{latent_regresser_forward.3} parent=11 // pred_fallthru
          _
        // Predicated region
        $region33: #{latent_regresser_forward.3} parent=11 // pred_check
          %p669 = pneg %p214
        $region34: #{latent_regresser_forward.3} parent=11 // pred_check_branch
          %671 = sbr.rel (%p669) target = $region36
        $region35: #{latent_regresser_forward.3} parent=11 // pred_region
          _
        $region36: #{latent_regresser_forward.3} parent=11 // pred_fallthru
          _
        // Predicated region
        $region37: #{latent_regresser_forward.3} parent=11 // pred_check
          %p672 = pneg %p235
        $region38: #{latent_regresser_forward.3} parent=11 // pred_check_branch
          %674 = sbr.rel (%p672) target = $region40
        $region39: #{latent_regresser_forward.3} parent=11 // pred_region
          _
        $region40: #{latent_regresser_forward.3} parent=11 // pred_fallthru
          _
        // Predicated region
        $region41: #{latent_regresser_forward.3} parent=11 // pred_check
          %p675 = pneg %p256
        $region42: #{latent_regresser_forward.3} parent=11 // pred_check_branch
          %677 = sbr.rel (%p675) target = $region44
        $region43: #{latent_regresser_forward.3} parent=11 // pred_region
          _
        $region44: #{latent_regresser_forward.3} parent=11 // pred_fallthru
          _
        // Predicated region
        $region45: #{latent_regresser_forward.3} parent=11 // pred_check
          %p678 = pneg %p277
        $region46: #{latent_regresser_forward.3} parent=11 // pred_check_branch
          %680 = sbr.rel (%p678) target = $region48
        $region47: #{latent_regresser_forward.3} parent=11 // pred_region
          _
        $region48: #{latent_regresser_forward.3} parent=11 // pred_fallthru
          _
        // Predicated region
        $region49: #{latent_regresser_forward.3} parent=11 // pred_check
          %p681 = pneg %p298
        $region50: #{latent_regresser_forward.3} parent=11 // pred_check_branch
          %683 = sbr.rel (%p681) target = $region52
        $region51: #{latent_regresser_forward.3} parent=11 // pred_region
          _
        $region52: #{latent_regresser_forward.3} parent=11 // pred_fallthru
          _
        // Predicated region
        $region53: #{latent_regresser_forward.3} parent=11 // pred_check
          %p684 = pneg %p319
        $region54: #{latent_regresser_forward.3} parent=11 // pred_check_branch
          %686 = sbr.rel (%p684) target = $region56
        $region55: #{latent_regresser_forward.3} parent=11 // pred_region
          _
        $region56: #{latent_regresser_forward.3} parent=11 // pred_fallthru
          _
        // Predicated region
        $region57: #{latent_regresser_forward.3} parent=11 // pred_check
          %p687 = pneg %p340
        $region58: #{latent_regresser_forward.3} parent=11 // pred_check_branch
          %689 = sbr.rel (%p687) target = $region60
        $region59: #{latent_regresser_forward.3} parent=11 // pred_region
          _
        $region60: #{latent_regresser_forward.3} parent=11 // pred_fallthru
          _
        // Predicated region
        $region61: #{latent_regresser_forward.3} parent=11 // pred_check
          %p690 = pneg %p361
        $region62: #{latent_regresser_forward.3} parent=11 // pred_check_branch
          %692 = sbr.rel (%p690) target = $region64
        $region63: #{latent_regresser_forward.3} parent=11 // pred_region
          _
        $region64: #{latent_regresser_forward.3} parent=11 // pred_fallthru
          _
        // Predicated region
        $region65: #{latent_regresser_forward.3} parent=11 // pred_check
          %p693 = pneg %p382
        $region66: #{latent_regresser_forward.3} parent=11 // pred_check_branch
          %695 = sbr.rel (%p693) target = $region68
        $region67: #{latent_regresser_forward.3} parent=11 // pred_region
          _
        $region68: #{latent_regresser_forward.3} parent=11 // pred_fallthru
          _
        // Predicated region
        $region69: #{latent_regresser_forward.3} parent=11 // pred_check
          %p696 = pneg %p403
        $region70: #{latent_regresser_forward.3} parent=11 // pred_check_branch
          %698 = sbr.rel (%p696) target = $region72
        $region71: #{latent_regresser_forward.3} parent=11 // pred_region
          _
        $region72: #{latent_regresser_forward.3} parent=11 // pred_fallthru
          _
        // Predicated region
        $region73: #{latent_regresser_forward.3} parent=11 // pred_check
          %p699 = pneg %p424
        $region74: #{latent_regresser_forward.3} parent=11 // pred_check_branch
          %701 = sbr.rel (%p699) target = $region76
        $region75: #{latent_regresser_forward.3} parent=11 // pred_region
          _
        $region76: #{latent_regresser_forward.3} parent=11 // pred_fallthru
          _
        // Predicated region
        $region77: #{latent_regresser_forward.3} parent=11 // pred_check
          %p702 = pneg %p445
        $region78: #{latent_regresser_forward.3} parent=11 // pred_check_branch
          %704 = sbr.rel (%p702) target = $region80
        $region79: #{latent_regresser_forward.3} parent=11 // pred_region
          _
        $region80: #{latent_regresser_forward.3} parent=11 // pred_fallthru
          _
        // Predicated region
        $region81: #{latent_regresser_forward.3} parent=11 // pred_check
          %p705 = pneg %p466
        $region82: #{latent_regresser_forward.3} parent=11 // pred_check_branch
          %707 = sbr.rel (%p705) target = $region84
        $region83: #{latent_regresser_forward.3} parent=11 // pred_region
          _
        $region84: #{latent_regresser_forward.3} parent=11 // pred_fallthru
          _
        // Predicated region
        $region85: #{latent_regresser_forward.3} parent=11 // pred_check
          %p708 = pneg %p487
        $region86: #{latent_regresser_forward.3} parent=11 // pred_check_branch
          %710 = sbr.rel (%p708) target = $region88
        $region87: #{latent_regresser_forward.3} parent=11 // pred_region
          _
        $region88: #{latent_regresser_forward.3} parent=11 // pred_fallthru
          _
        // Predicated region
        $region89: #{latent_regresser_forward.3} parent=11 // pred_check
          %p711 = pneg %p508
        $region90: #{latent_regresser_forward.3} parent=11 // pred_check_branch
          %713 = sbr.rel (%p711) target = $region92
        $region91: #{latent_regresser_forward.3} parent=11 // pred_region
          _
        $region92: #{latent_regresser_forward.3} parent=11 // pred_fallthru
          _
        // Predicated region
        $region93: #{latent_regresser_forward.3} parent=11 // pred_check
          %p714 = pneg %p529
        $region94: #{latent_regresser_forward.3} parent=11 // pred_check_branch
          %716 = sbr.rel (%p714) target = $region96
        $region95: #{latent_regresser_forward.3} parent=11 // pred_region
          _
        $region96: #{latent_regresser_forward.3} parent=11 // pred_fallthru
          _
        // Predicated region
        $region97: #{latent_regresser_forward.3} parent=11 // pred_check
          %p717 = pneg %p550
        $region98: #{latent_regresser_forward.3} parent=11 // pred_check_branch
          %719 = sbr.rel (%p717) target = $region100
        $region99: #{latent_regresser_forward.3} parent=11 // pred_region
          _
        $region100: #{latent_regresser_forward.3} parent=11 // pred_fallthru
          _
        // Predicated region
        $region101: #{latent_regresser_forward.3} parent=11 // pred_check
          %p720 = pneg %p571
        $region102: #{latent_regresser_forward.3} parent=11 // pred_check_branch
          %722 = sbr.rel (%p720) target = $region104
        $region103: #{latent_regresser_forward.3} parent=11 // pred_region
          _
        $region104: #{latent_regresser_forward.3} parent=11 // pred_fallthru
          _
        // Predicated region
        $region105: #{latent_regresser_forward.3} parent=11 // pred_check
          %p723 = pneg %p592
        $region106: #{latent_regresser_forward.3} parent=11 // pred_check_branch
          %725 = sbr.rel (%p723) target = $region108
        $region107: #{latent_regresser_forward.3} parent=11 // pred_region
          _
        $region108: #{latent_regresser_forward.3} parent=11 // pred_fallthru
          _
        // Predicated region
        $region109: #{latent_regresser_forward.3} parent=11 // pred_check
          %p726 = pneg %p613
        $region110: #{latent_regresser_forward.3} parent=11 // pred_check_branch
          %728 = sbr.rel (%p726) target = $region112
        $region111: #{latent_regresser_forward.3} parent=11 // pred_region
          _
        $region112: #{latent_regresser_forward.3} parent=11 // pred_fallthru
          _
      $region12: #{latent_regresser_forward.3} parent=5 // pred_fallthru
        _
      %p729 = scmp.lt.s32.totalorder %s36, 2
      // Predicated region
      $region113: #{latent_regresser_forward.3} parent=5 // pred_check
        %p730 = pneg %p729
      $region114: #{latent_regresser_forward.3} parent=5 // pred_check_branch
        %732 = sbr.rel (%p730) target = $region116
      $region115: #{latent_regresser_forward.3} parent=5 // pred_region
        // Predicated region
        $region117: #{latent_regresser_forward.3} parent=115 // pred_check
          %p733 = pneg %p56
        $region118: #{latent_regresser_forward.3} parent=115 // pred_check_branch
          %735 = sbr.rel (%p733) target = $region120
        $region119: #{latent_regresser_forward.3} parent=115 // pred_region
          %p736 = scmp.lt.s32.totalorder %s36, 1
          %s737 = scalar_select %p736, %s36, 1
          %s738 = smul.addr %s737, 2
          %s739 = smul.addr %s738, 8
          %s740 = scalar_lea.vmem %s0, %s739
        $region120: #{latent_regresser_forward.3} parent=115 // pred_fallthru
          _
        // Predicated region
        $region121: #{latent_regresser_forward.3} parent=115 // pred_check
          %p741 = pneg %p82
        $region122: #{latent_regresser_forward.3} parent=115 // pred_check_branch
          %743 = sbr.rel (%p741) target = $region124
        $region123: #{latent_regresser_forward.3} parent=115 // pred_region
          %p744 = scmp.lt.s32.totalorder %s36, 1
          %s745 = scalar_select %p744, %s36, 1
          %s746 = smul.addr %s745, 6
          %s747 = smul.addr %s746, 8
          %s748 = scalar_lea.vmem %s1, %s747
        $region124: #{latent_regresser_forward.3} parent=115 // pred_fallthru
          _
      $region116: #{latent_regresser_forward.3} parent=5 // pred_fallthru
        _
      %p749 = scmp.le.s32.totalorder 1, %s36
      %p750 = scmp.lt.s32.totalorder %s36, 3
      %p751 = pnand %p749, %p750
      %p752 = pneg %p751
      // Predicated region
      $region125: #{latent_regresser_forward.3} parent=5 // pred_check
        _
      $region126: #{latent_regresser_forward.3} parent=5 // pred_check_branch
        %754 = sbr.rel (%p751) target = $region128
      $region127: #{latent_regresser_forward.3} parent=5 // pred_region
        %s755 = ssub.s32 %s36, 1
        %p756 = scmp.lt.s32.totalorder %s41, 1
        %s757 = scalar_select %p756, %s41, 1
        %s758 = smul.addr %s757, 2
        %s759 = smul.addr %s758, 8
        %s760 = scalar_lea.vmem %s0, %s759
        %p761 = pneg %p62
        %p762 = pneg %p59
        %p763 = scmp.lt.s32.totalorder %s41, 1
        %s764 = scalar_select %p763, %s41, 1
        %s765 = smul.addr %s764, 6
        %s766 = smul.addr %s765, 8
        %s767 = scalar_lea.vmem %s1, %s766
        %p768 = pneg %p88
        %p769 = pneg %p85
        %p770 = pneg %p109
        %p771 = pneg %p106
        %p772 = pneg %p130
        %p773 = pneg %p127
        %p774 = pneg %p151
        %p775 = pneg %p148
        %p776 = pneg %p172
        %p777 = pneg %p169
        %p778 = pneg %p193
        %p779 = pneg %p190
        %p780 = pneg %p214
        %p781 = pneg %p211
        %p782 = pneg %p235
        %p783 = pneg %p232
        %p784 = pneg %p256
        %p785 = pneg %p253
        %p786 = pneg %p277
        %p787 = pneg %p274
        %p788 = pneg %p298
        %p789 = pneg %p295
        %p790 = pneg %p319
        %p791 = pneg %p316
        %p792 = pneg %p340
        %p793 = pneg %p337
        %p794 = pneg %p361
        %p795 = pneg %p358
        %p796 = pneg %p382
        %p797 = pneg %p379
        %p798 = pneg %p403
        %p799 = pneg %p400
        %p800 = pneg %p424
        %p801 = pneg %p421
        %p802 = pneg %p445
        %p803 = pneg %p442
        %p804 = pneg %p466
        %p805 = pneg %p463
        %p806 = pneg %p487
        %p807 = pneg %p484
        %p808 = pneg %p508
        %p809 = pneg %p505
        %p810 = pneg %p529
        %p811 = pneg %p526
        %p812 = pneg %p550
        %p813 = pneg %p547
        %p814 = pneg %p571
        %p815 = pneg %p568
        %p816 = pneg %p592
        %p817 = pneg %p589
        %p818 = pneg %p613
        %p819 = pneg %p610
        %p820 = pneg %p639
        %p821 = pneg %p636
        %s822 = sand.u32 %s626, 1
        %s823 = scalar_lea.sflag [#allocation3], %s822
        %s824 = sand.u32 %s626, 1
        %s825 = smul.addr %s824, 16
        %s826 = scalar_lea.vmem [#allocation2], %s825
        %p827 = scmp.lt.s32.totalorder %s41, 1
        %s828 = scalar_select %p827, %s41, 1
        %s829 = smul.addr %s828, 2
        %s830 = smul.addr %s829, 8
        %s831 = scalar_lea.vmem %s0, %s830
        %p832 = scmp.lt.s32.totalorder %s41, 1
        %s833 = scalar_select %p832, %s41, 1
        %s834 = smul.addr %s833, 6
        %s835 = smul.addr %s834, 8
        %s836 = scalar_lea.vmem %s1, %s835
        %v838 = vld [vmem:[%s831] sm:$0xff]
        %v839 = vld [vmem:[%s831 + $0x8] sm:$0xff]
        %v840 = vld [vmem:[%s836] sm:$0xff]
        %v841 = vld [vmem:[%s836 + $0x8] sm:$0xff]
        %v842 = vld [vmem:[%s836 + $0x10] sm:$0xff]
        %v843 = vld [vmem:[%s836 + $0x18] sm:$0xff]
        %v844 = vld [vmem:[%s836 + $0x20] sm:$0xff]
        %v845 = vld [vmem:[%s836 + $0x28] sm:$0xff]
        %v846 = vld [vmem:[%s2] sm:$0xff]
        %v847 = vld [vmem:[%s2 + $0x8] sm:$0xff]
        %v848 = vld [vmem:[%s3] sm:$0xff]
        %v849 = vld [vmem:[%s3 + $0x8] sm:$0xff]
        %v850 = vld [vmem:[%s3 + $0x10] sm:$0xff]
        %v851 = vld [vmem:[%s3 + $0x18] sm:$0xff]
        %v852 = vld [vmem:[%s3 + $0x20] sm:$0xff]
        %v853 = vld [vmem:[%s3 + $0x28] sm:$0xff]
        %v854 = vadd.f32 %v838, %v846
        %v855 = vadd.f32 %v839, %v847
        %v856 = vld [vmem:[%s4] sm:$0x3]
        %v857 = vld [vmem:[%s5] sm:$0x3]
        %v858 = vadd.f32 %v854, %v855
        %859 = vadd.xlane.f32.xlu0 %v858
        %v860 = vpop.xlane.xlu0 %859
        %v861 = vrcp.pop 256.0
        %v862 = vmul.f32 %v860, %v861
        %v863 = vsub.f32 %v854, %v862
        %v864 = vsub.f32 %v855, %v862
        %v865 = vmul.f32 %v863, %v863
        %v866 = vmul.f32 %v864, %v864
        %v867 = vadd.f32 %v865, %v866
        %868 = vadd.xlane.f32.xlu0 %v867
        %v869 = vpop.xlane.xlu0 %868
        %v870 = vmul.f32 %v869, %v861
        %v871 = vadd.f32 %v870, 1e-06
        %v872 = vrsqrt.pop %v871
        %v873 = vmul.f32 %v863, %v872
        %v874 = vmul.f32 %v864, %v872
        %v876 = vlaneseq
        %v877 = vshrl.u32 %v876, 7
        %v878 = vsub.s32 0, %v877
        %v879 = vrot.slane %v856, %v878
        %v880 = vlaneseq
        %v881 = vshrl.u32 %v880, 7
        %v882 = vsub.s32 1, %v881
        %v883 = vrot.slane %v856, %v882
        %v886 = vmul.f32 %v873, %v879
        %v887 = vmul.f32 %v874, %v883
        %v889 = vlaneseq
        %v890 = vshrl.u32 %v889, 7
        %v891 = vsub.s32 0, %v890
        %v892 = vrot.slane %v857, %v891
        %v893 = vlaneseq
        %v894 = vshrl.u32 %v893, 7
        %v895 = vsub.s32 1, %v894
        %v896 = vrot.slane %v857, %v895
        %v899 = vadd.f32 %v886, %v892
        %v900 = vadd.f32 %v887, %v896
        %v901 = vpack.c.bf16 %v899, %v899
        %v902 = vpack.c.bf16 %v900, %v900
        %v903 = vadd.f32 %v840, %v848
        %v904 = vadd.f32 %v841, %v849
        %v905 = vadd.f32 %v842, %v850
        %v906 = vadd.f32 %v843, %v851
        %v907 = vadd.f32 %v844, %v852
        %v908 = vadd.f32 %v845, %v853
        %v909 = vld [vmem:[%s6] sm:$0x3]
        %v910 = vld [vmem:[%s7] sm:$0x3]
        %v911 = vadd.f32 %v903, %v904
        %912 = vadd.xlane.f32.xlu0 %v911
        %v913 = vpop.xlane.xlu0 %912
        %v914 = vadd.f32 %v905, %v906
        %915 = vadd.xlane.f32.xlu0 %v914
        %v916 = vpop.xlane.xlu0 %915
        %v917 = vadd.f32 %v907, %v908
        %918 = vadd.xlane.f32.xlu0 %v917
        %v919 = vpop.xlane.xlu0 %918
        %v920 = vmul.f32 %v913, %v861
        %v921 = vmul.f32 %v916, %v861
        %v922 = vmul.f32 %v919, %v861
        %v923 = vsub.f32 %v903, %v920
        %v924 = vsub.f32 %v904, %v920
        %v925 = vsub.f32 %v905, %v921
        %v926 = vsub.f32 %v906, %v921
        %v927 = vsub.f32 %v907, %v922
        %v928 = vsub.f32 %v908, %v922
        %v929 = vmul.f32 %v923, %v923
        %v930 = vmul.f32 %v924, %v924
        %v931 = vmul.f32 %v925, %v925
        %v932 = vmul.f32 %v926, %v926
        %v933 = vmul.f32 %v927, %v927
        %v934 = vmul.f32 %v928, %v928
        %v935 = vadd.f32 %v929, %v930
        %936 = vadd.xlane.f32.xlu0 %v935
        %v937 = vpop.xlane.xlu0 %936
        %v938 = vadd.f32 %v931, %v932
        %939 = vadd.xlane.f32.xlu0 %v938
        %v940 = vpop.xlane.xlu0 %939
        %v941 = vadd.f32 %v933, %v934
        %942 = vadd.xlane.f32.xlu0 %v941
        %v943 = vpop.xlane.xlu0 %942
        %v944 = vmul.f32 %v937, %v861
        %v945 = vmul.f32 %v940, %v861
        %v946 = vmul.f32 %v943, %v861
        %v947 = vadd.f32 %v944, 1e-06
        %v948 = vadd.f32 %v945, 1e-06
        %v949 = vadd.f32 %v946, 1e-06
        %v950 = vrsqrt.pop %v947
        %v951 = vrsqrt.pop %v948
        %v952 = vrsqrt.pop %v949
        %v953 = vmul.f32 %v923, %v950
        %v954 = vmul.f32 %v924, %v950
        %v955 = vmul.f32 %v925, %v951
        %v956 = vmul.f32 %v926, %v951
        %v957 = vmul.f32 %v927, %v952
        %v958 = vmul.f32 %v928, %v952
        %v960 = vlaneseq
        %v961 = vshrl.u32 %v960, 7
        %v962 = vsub.s32 0, %v961
        %v963 = vrot.slane %v909, %v962
        %v964 = vlaneseq
        %v965 = vshrl.u32 %v964, 7
        %v966 = vsub.s32 1, %v965
        %v967 = vrot.slane %v909, %v966
        %v970 = vmul.f32 %v953, %v963
        %v971 = vmul.f32 %v954, %v967
        %v972 = vmul.f32 %v955, %v963
        %v973 = vmul.f32 %v956, %v967
        %v974 = vmul.f32 %v957, %v963
        %v975 = vmul.f32 %v958, %v967
        %v977 = vlaneseq
        %v978 = vshrl.u32 %v977, 7
        %v979 = vsub.s32 0, %v978
        %v980 = vrot.slane %v910, %v979
        %v981 = vlaneseq
        %v982 = vshrl.u32 %v981, 7
        %v983 = vsub.s32 1, %v982
        %v984 = vrot.slane %v910, %v983
        %v987 = vadd.f32 %v970, %v980
        %v988 = vadd.f32 %v971, %v984
        %v989 = vadd.f32 %v972, %v980
        %v990 = vadd.f32 %v973, %v984
        %v991 = vadd.f32 %v974, %v980
        %v992 = vadd.f32 %v975, %v984
        %v993 = vpack.c.bf16 %v989, %v987
        %v994 = vpack.c.bf16 %v990, %v988
        %v995 = vpack.c.bf16 %v991, %v991
        %v996 = vpack.c.bf16 %v992, %v992
        %v997 = vld [vmem:[%s8] sm:$0x3]
        %v998 = vld [vmem:[%s9] sm:$0x3]
        %v999 = vadd.f32 %v840, %v841
        %1000 = vadd.xlane.f32.xlu0 %v999
        %v1001 = vpop.xlane.xlu0 %1000
        %v1002 = vadd.f32 %v842, %v843
        %1003 = vadd.xlane.f32.xlu0 %v1002
        %v1004 = vpop.xlane.xlu0 %1003
        %v1005 = vadd.f32 %v844, %v845
        %1006 = vadd.xlane.f32.xlu0 %v1005
        %v1007 = vpop.xlane.xlu0 %1006
        %v1008 = vmul.f32 %v1001, %v861
        %v1009 = vmul.f32 %v1004, %v861
        %v1010 = vmul.f32 %v1007, %v861
        %v1011 = vsub.f32 %v840, %v1008
        %v1012 = vsub.f32 %v841, %v1008
        %v1013 = vsub.f32 %v842, %v1009
        %v1014 = vsub.f32 %v843, %v1009
        %v1015 = vsub.f32 %v844, %v1010
        %v1016 = vsub.f32 %v845, %v1010
        %v1017 = vmul.f32 %v1011, %v1011
        %v1018 = vmul.f32 %v1012, %v1012
        %v1019 = vmul.f32 %v1013, %v1013
        %v1020 = vmul.f32 %v1014, %v1014
        %v1021 = vmul.f32 %v1015, %v1015
        %v1022 = vmul.f32 %v1016, %v1016
        %v1023 = vadd.f32 %v1017, %v1018
        %1024 = vadd.xlane.f32.xlu0 %v1023
        %v1025 = vpop.xlane.xlu0 %1024
        %v1026 = vadd.f32 %v1019, %v1020
        %1027 = vadd.xlane.f32.xlu0 %v1026
        %v1028 = vpop.xlane.xlu0 %1027
        %v1029 = vadd.f32 %v1021, %v1022
        %1030 = vadd.xlane.f32.xlu0 %v1029
        %v1031 = vpop.xlane.xlu0 %1030
        %v1032 = vmul.f32 %v1025, %v861
        %v1033 = vmul.f32 %v1028, %v861
        %v1034 = vmul.f32 %v1031, %v861
        %v1035 = vadd.f32 %v1032, 1e-06
        %v1036 = vadd.f32 %v1033, 1e-06
        %v1037 = vadd.f32 %v1034, 1e-06
        %v1038 = vrsqrt.pop %v1035
        %v1039 = vrsqrt.pop %v1036
        %v1040 = vrsqrt.pop %v1037
        %v1041 = vmul.f32 %v1011, %v1038
        %v1042 = vmul.f32 %v1012, %v1038
        %v1043 = vmul.f32 %v1013, %v1039
        %v1044 = vmul.f32 %v1014, %v1039
        %v1045 = vmul.f32 %v1015, %v1040
        %v1046 = vmul.f32 %v1016, %v1040
        %v1048 = vlaneseq
        %v1049 = vshrl.u32 %v1048, 7
        %v1050 = vsub.s32 0, %v1049
        %v1051 = vrot.slane %v997, %v1050
        %v1052 = vlaneseq
        %v1053 = vshrl.u32 %v1052, 7
        %v1054 = vsub.s32 1, %v1053
        %v1055 = vrot.slane %v997, %v1054
        %v1058 = vmul.f32 %v1041, %v1051
        %v1059 = vmul.f32 %v1042, %v1055
        %v1060 = vmul.f32 %v1043, %v1051
        %v1061 = vmul.f32 %v1044, %v1055
        %v1062 = vmul.f32 %v1045, %v1051
        %v1063 = vmul.f32 %v1046, %v1055
        %v1065 = vlaneseq
        %v1066 = vshrl.u32 %v1065, 7
        %v1067 = vsub.s32 0, %v1066
        %v1068 = vrot.slane %v998, %v1067
        %v1069 = vlaneseq
        %v1070 = vshrl.u32 %v1069, 7
        %v1071 = vsub.s32 1, %v1070
        %v1072 = vrot.slane %v998, %v1071
        %v1075 = vadd.f32 %v1058, %v1068
        %v1076 = vadd.f32 %v1059, %v1072
        %v1077 = vadd.f32 %v1060, %v1068
        %v1078 = vadd.f32 %v1061, %v1072
        %v1079 = vadd.f32 %v1062, %v1068
        %v1080 = vadd.f32 %v1063, %v1072
        %v1081 = vpack.c.bf16 %v1077, %v1075
        %v1082 = vpack.c.bf16 %v1078, %v1076
        %v1083 = vpack.c.bf16 %v1079, %v1079
        %v1084 = vpack.c.bf16 %v1080, %v1080
        %v1085 = vld [vmem:[%s10] sm:$0xff]
        %v1086 = vld [vmem:[%s10 + $0x8] sm:$0xff]
        %v1087 = vld [vmem:[%s10 + $0x10] sm:$0xff]
        %v1088 = vld [vmem:[%s10 + $0x18] sm:$0xff]
        %v1089 = vld [vmem:[%s10 + $0x20] sm:$0xff]
        %v1090 = vld [vmem:[%s10 + $0x28] sm:$0xff]
        %v1091 = vld [vmem:[%s10 + $0x30] sm:$0xff]
        %v1092 = vld [vmem:[%s10 + $0x38] sm:$0xff]
        %v1093 = vld [vmem:[%s10 + $0x40] sm:$0xff]
        %v1094 = vld [vmem:[%s10 + $0x48] sm:$0xff]
        %v1095 = vld [vmem:[%s10 + $0x50] sm:$0xff]
        %v1096 = vld [vmem:[%s10 + $0x58] sm:$0xff]
        %v1097 = vld [vmem:[%s10 + $0x60] sm:$0xff]
        %v1098 = vld [vmem:[%s10 + $0x68] sm:$0xff]
        %v1099 = vld [vmem:[%s10 + $0x70] sm:$0xff]
        %v1100 = vld [vmem:[%s10 + $0x78] sm:$0xff]
        %v1101 = vld [vmem:[%s10 + $0x80] sm:$0xff]
        %v1102 = vld [vmem:[%s10 + $0x88] sm:$0xff]
        %v1103 = vld [vmem:[%s10 + $0x90] sm:$0xff]
        %v1104 = vld [vmem:[%s10 + $0x98] sm:$0xff]
        %v1105 = vld [vmem:[%s10 + $0xa0] sm:$0xff]
        %v1106 = vld [vmem:[%s10 + $0xa8] sm:$0xff]
        %v1107 = vld [vmem:[%s10 + $0xb0] sm:$0xff]
        %v1108 = vld [vmem:[%s10 + $0xb8] sm:$0xff]
        %v1109 = vld [vmem:[%s10 + $0xc0] sm:$0xff]
        %v1110 = vld [vmem:[%s10 + $0xc8] sm:$0xff]
        %v1111 = vld [vmem:[%s10 + $0xd0] sm:$0xff]
        %v1112 = vld [vmem:[%s10 + $0xd8] sm:$0xff]
        %v1113 = vld [vmem:[%s10 + $0xe0] sm:$0xff]
        %v1114 = vld [vmem:[%s10 + $0xe8] sm:$0xff]
        %v1115 = vld [vmem:[%s10 + $0xf0] sm:$0xff]
        %v1116 = vld [vmem:[%s10 + $0xf8] sm:$0xff]
        %v1117 = vld [vmem:[%s11] sm:$0x3]
        %v1119 = vlaneseq
        %v1120 = vshrl.u32 %v1119, 7
        %v1121 = vsub.s32 0, %v1120
        %v1122 = vrot.slane %v1117, %v1121
        %v1123 = vlaneseq
        %v1124 = vshrl.u32 %v1123, 7
        %v1125 = vsub.s32 1, %v1124
        %v1126 = vrot.slane %v1117, %v1125
        %v1161 = vunpack.c.l.b16 %v1085
        %v1162 = vunpack.c.h.b16 %v1085
        %v1163 = vunpack.c.l.b16 %v1086
        %v1164 = vunpack.c.h.b16 %v1086
        %v1165 = vunpack.c.l.b16 %v1087
        %v1166 = vunpack.c.h.b16 %v1087
        %v1167 = vunpack.c.l.b16 %v1088
        %v1168 = vunpack.c.h.b16 %v1088
        %v1169 = vunpack.c.l.b16 %v1089
        %v1170 = vunpack.c.h.b16 %v1089
        %v1171 = vunpack.c.l.b16 %v1090
        %v1172 = vunpack.c.h.b16 %v1090
        %v1173 = vunpack.c.l.b16 %v1091
        %v1174 = vunpack.c.h.b16 %v1091
        %v1175 = vunpack.c.l.b16 %v1092
        %v1176 = vunpack.c.h.b16 %v1092
        %v1177 = vunpack.c.l.b16 %v1093
        %v1178 = vunpack.c.h.b16 %v1093
        %v1179 = vunpack.c.l.b16 %v1094
        %v1180 = vunpack.c.h.b16 %v1094
        %v1181 = vunpack.c.l.b16 %v1095
        %v1182 = vunpack.c.h.b16 %v1095
        %v1183 = vunpack.c.l.b16 %v1096
        %v1184 = vunpack.c.h.b16 %v1096
        %v1185 = vunpack.c.l.b16 %v1097
        %v1186 = vunpack.c.h.b16 %v1097
        %v1187 = vunpack.c.l.b16 %v1098
        %v1188 = vunpack.c.h.b16 %v1098
        %v1189 = vunpack.c.l.b16 %v1099
        %v1190 = vunpack.c.h.b16 %v1099
        %v1191 = vunpack.c.l.b16 %v1100
        %v1192 = vunpack.c.h.b16 %v1100
        %v1193 = vunpack.c.l.b16 %v1101
        %v1194 = vunpack.c.h.b16 %v1101
        %v1195 = vunpack.c.l.b16 %v1102
        %v1196 = vunpack.c.h.b16 %v1102
        %v1197 = vunpack.c.l.b16 %v1103
        %v1198 = vunpack.c.h.b16 %v1103
        %v1199 = vunpack.c.l.b16 %v1104
        %v1200 = vunpack.c.h.b16 %v1104
        %v1201 = vunpack.c.l.b16 %v1105
        %v1202 = vunpack.c.h.b16 %v1105
        %v1203 = vunpack.c.l.b16 %v1106
        %v1204 = vunpack.c.h.b16 %v1106
        %v1205 = vunpack.c.l.b16 %v1107
        %v1206 = vunpack.c.h.b16 %v1107
        %v1207 = vunpack.c.l.b16 %v1108
        %v1208 = vunpack.c.h.b16 %v1108
        %v1209 = vunpack.c.l.b16 %v1109
        %v1210 = vunpack.c.h.b16 %v1109
        %v1211 = vunpack.c.l.b16 %v1110
        %v1212 = vunpack.c.h.b16 %v1110
        %v1213 = vunpack.c.l.b16 %v1111
        %v1214 = vunpack.c.h.b16 %v1111
        %v1215 = vunpack.c.l.b16 %v1112
        %v1216 = vunpack.c.h.b16 %v1112
        %v1217 = vunpack.c.l.b16 %v1113
        %v1218 = vunpack.c.h.b16 %v1113
        %v1219 = vunpack.c.l.b16 %v1114
        %v1220 = vunpack.c.h.b16 %v1114
        %v1221 = vunpack.c.l.b16 %v1115
        %v1222 = vunpack.c.h.b16 %v1115
        %v1223 = vunpack.c.l.b16 %v1116
        %v1224 = vunpack.c.h.b16 %v1116
        %v1225 = vpack.c.b16 %v1163, %v1161
        %v1226 = vpack.c.b16 %v1164, %v1162
        %v1227 = vpack.c.b16 %v1167, %v1165
        %v1228 = vpack.c.b16 %v1168, %v1166
        %v1229 = vpack.c.b16 %v1171, %v1169
        %v1230 = vpack.c.b16 %v1172, %v1170
        %v1231 = vpack.c.b16 %v1175, %v1173
        %v1232 = vpack.c.b16 %v1176, %v1174
        %v1233 = vpack.c.b16 %v1179, %v1177
        %v1234 = vpack.c.b16 %v1180, %v1178
        %v1235 = vpack.c.b16 %v1183, %v1181
        %v1236 = vpack.c.b16 %v1184, %v1182
        %v1237 = vpack.c.b16 %v1187, %v1185
        %v1238 = vpack.c.b16 %v1188, %v1186
        %v1239 = vpack.c.b16 %v1191, %v1189
        %v1240 = vpack.c.b16 %v1192, %v1190
        %v1241 = vpack.c.b16 %v1195, %v1193
        %v1242 = vpack.c.b16 %v1196, %v1194
        %v1243 = vpack.c.b16 %v1199, %v1197
        %v1244 = vpack.c.b16 %v1200, %v1198
        %v1245 = vpack.c.b16 %v1203, %v1201
        %v1246 = vpack.c.b16 %v1204, %v1202
        %v1247 = vpack.c.b16 %v1207, %v1205
        %v1248 = vpack.c.b16 %v1208, %v1206
        %v1249 = vpack.c.b16 %v1211, %v1209
        %v1250 = vpack.c.b16 %v1212, %v1210
        %v1251 = vpack.c.b16 %v1215, %v1213
        %v1252 = vpack.c.b16 %v1216, %v1214
        %v1253 = vpack.c.b16 %v1219, %v1217
        %v1254 = vpack.c.b16 %v1220, %v1218
        %v1255 = vpack.c.b16 %v1223, %v1221
        %v1256 = vpack.c.b16 %v1224, %v1222
        %1289 = vmatprep.subr.bf16.mxu0 %v1226
        %1290 = vmatpush1.bf16.msra.mxu0 %v1225
        %1291 = vmatprep.subr.bf16.mxu0 %v1228
        %1292 = vmatpush1.bf16.msra.mxu0 %v1227
        %1293 = vmatprep.subr.bf16.mxu0 %v1230
        %1294 = vmatpush1.bf16.msra.mxu0 %v1229
        %1295 = vmatprep.subr.bf16.mxu0 %v1232
        %1296 = vmatpush1.bf16.msra.mxu0 %v1231
        %1297 = vmatprep.subr.bf16.mxu0 %v1234
        %1298 = vmatpush1.bf16.msra.mxu0 %v1233
        %1299 = vmatprep.subr.bf16.mxu0 %v1236
        %1300 = vmatpush1.bf16.msra.mxu0 %v1235
        %1301 = vmatprep.subr.bf16.mxu0 %v1238
        %1302 = vmatpush1.bf16.msra.mxu0 %v1237
        %1303 = vmatprep.subr.bf16.mxu0 %v1240
        %1304 = vmatpush1.bf16.msra.mxu0 %v1239
        %1305 = vmatprep.subr.bf16.mxu0 %v1242
        %1306 = vmatpush1.bf16.msra.mxu0 %v1241
        %1307 = vmatprep.subr.bf16.mxu0 %v1244
        %1308 = vmatpush1.bf16.msra.mxu0 %v1243
        %1309 = vmatprep.subr.bf16.mxu0 %v1246
        %1310 = vmatpush1.bf16.msra.mxu0 %v1245
        %1311 = vmatprep.subr.bf16.mxu0 %v1248
        %1312 = vmatpush1.bf16.msra.mxu0 %v1247
        %1313 = vmatprep.subr.bf16.mxu0 %v1250
        %1314 = vmatpush1.bf16.msra.mxu0 %v1249
        %1315 = vmatprep.subr.bf16.mxu0 %v1252
        %1316 = vmatpush1.bf16.msra.mxu0 %v1251
        %1317 = vmatprep.subr.bf16.mxu0 %v1254
        %1318 = vmatpush1.bf16.msra.mxu0 %v1253
        %1319 = vmatprep.subr.bf16.mxu0 %v1256
        %1320 = vmatpush1.bf16.msra.mxu0 %v1255
        %1321 = vmatprep.mubr.bf16.mxu0 %v902
        %1322 = vmatmul.mubr.bf16.gmra.mrb[0].mxu0 %v901
        %v1323 = vpop.f32.mrb[0].mxu0
        %v1324 = vadd.f32 %v1122, %v1323
        %v1325 = vpop.f32.mrb[0].mxu0
        %v1326 = vadd.f32 %v1126, %v1325
        %v1327 = vpop.f32.mrb[0].mxu0
        %v1328 = vpop.f32.mrb[0].mxu0
        %1329 = vdwg.mxu0
        %v1330 = vpack.c.bf16 %v1324, %v1324
        %v1331 = vpack.c.bf16 %v1326, %v1326
        %v1332 = vld [vmem:[%s12] sm:$0xff]
        %v1333 = vld [vmem:[%s12 + $0x8] sm:$0xff]
        %v1334 = vld [vmem:[%s12 + $0x10] sm:$0xff]
        %v1335 = vld [vmem:[%s12 + $0x18] sm:$0xff]
        %v1336 = vld [vmem:[%s12 + $0x20] sm:$0xff]
        %v1337 = vld [vmem:[%s12 + $0x28] sm:$0xff]
        %v1338 = vld [vmem:[%s12 + $0x30] sm:$0xff]
        %v1339 = vld [vmem:[%s12 + $0x38] sm:$0xff]
        %v1340 = vld [vmem:[%s12 + $0x40] sm:$0xff]
        %v1341 = vld [vmem:[%s12 + $0x48] sm:$0xff]
        %v1342 = vld [vmem:[%s12 + $0x50] sm:$0xff]
        %v1343 = vld [vmem:[%s12 + $0x58] sm:$0xff]
        %v1344 = vld [vmem:[%s12 + $0x60] sm:$0xff]
        %v1345 = vld [vmem:[%s12 + $0x68] sm:$0xff]
        %v1346 = vld [vmem:[%s12 + $0x70] sm:$0xff]
        %v1347 = vld [vmem:[%s12 + $0x78] sm:$0xff]
        %v1348 = vld [vmem:[%s12 + $0x80] sm:$0xff]
        %v1349 = vld [vmem:[%s12 + $0x88] sm:$0xff]
        %v1350 = vld [vmem:[%s12 + $0x90] sm:$0xff]
        %v1351 = vld [vmem:[%s12 + $0x98] sm:$0xff]
        %v1352 = vld [vmem:[%s12 + $0xa0] sm:$0xff]
        %v1353 = vld [vmem:[%s12 + $0xa8] sm:$0xff]
        %v1354 = vld [vmem:[%s12 + $0xb0] sm:$0xff]
        %v1355 = vld [vmem:[%s12 + $0xb8] sm:$0xff]
        %v1356 = vld [vmem:[%s12 + $0xc0] sm:$0xff]
        %v1357 = vld [vmem:[%s12 + $0xc8] sm:$0xff]
        %v1358 = vld [vmem:[%s12 + $0xd0] sm:$0xff]
        %v1359 = vld [vmem:[%s12 + $0xd8] sm:$0xff]
        %v1360 = vld [vmem:[%s12 + $0xe0] sm:$0xff]
        %v1361 = vld [vmem:[%s12 + $0xe8] sm:$0xff]
        %v1362 = vld [vmem:[%s12 + $0xf0] sm:$0xff]
        %v1363 = vld [vmem:[%s12 + $0xf8] sm:$0xff]
        %v1396 = vunpack.c.l.b16 %v1332
        %v1397 = vunpack.c.h.b16 %v1332
        %v1398 = vunpack.c.l.b16 %v1333
        %v1399 = vunpack.c.h.b16 %v1333
        %v1400 = vunpack.c.l.b16 %v1334
        %v1401 = vunpack.c.h.b16 %v1334
        %v1402 = vunpack.c.l.b16 %v1335
        %v1403 = vunpack.c.h.b16 %v1335
        %v1404 = vunpack.c.l.b16 %v1336
        %v1405 = vunpack.c.h.b16 %v1336
        %v1406 = vunpack.c.l.b16 %v1337
        %v1407 = vunpack.c.h.b16 %v1337
        %v1408 = vunpack.c.l.b16 %v1338
        %v1409 = vunpack.c.h.b16 %v1338
        %v1410 = vunpack.c.l.b16 %v1339
        %v1411 = vunpack.c.h.b16 %v1339
        %v1412 = vunpack.c.l.b16 %v1340
        %v1413 = vunpack.c.h.b16 %v1340
        %v1414 = vunpack.c.l.b16 %v1341
        %v1415 = vunpack.c.h.b16 %v1341
        %v1416 = vunpack.c.l.b16 %v1342
        %v1417 = vunpack.c.h.b16 %v1342
        %v1418 = vunpack.c.l.b16 %v1343
        %v1419 = vunpack.c.h.b16 %v1343
        %v1420 = vunpack.c.l.b16 %v1344
        %v1421 = vunpack.c.h.b16 %v1344
        %v1422 = vunpack.c.l.b16 %v1345
        %v1423 = vunpack.c.h.b16 %v1345
        %v1424 = vunpack.c.l.b16 %v1346
        %v1425 = vunpack.c.h.b16 %v1346
        %v1426 = vunpack.c.l.b16 %v1347
        %v1427 = vunpack.c.h.b16 %v1347
        %v1428 = vunpack.c.l.b16 %v1348
        %v1429 = vunpack.c.h.b16 %v1348
        %v1430 = vunpack.c.l.b16 %v1349
        %v1431 = vunpack.c.h.b16 %v1349
        %v1432 = vunpack.c.l.b16 %v1350
        %v1433 = vunpack.c.h.b16 %v1350
        %v1434 = vunpack.c.l.b16 %v1351
        %v1435 = vunpack.c.h.b16 %v1351
        %v1436 = vunpack.c.l.b16 %v1352
        %v1437 = vunpack.c.h.b16 %v1352
        %v1438 = vunpack.c.l.b16 %v1353
        %v1439 = vunpack.c.h.b16 %v1353
        %v1440 = vunpack.c.l.b16 %v1354
        %v1441 = vunpack.c.h.b16 %v1354
        %v1442 = vunpack.c.l.b16 %v1355
        %v1443 = vunpack.c.h.b16 %v1355
        %v1444 = vunpack.c.l.b16 %v1356
        %v1445 = vunpack.c.h.b16 %v1356
        %v1446 = vunpack.c.l.b16 %v1357
        %v1447 = vunpack.c.h.b16 %v1357
        %v1448 = vunpack.c.l.b16 %v1358
        %v1449 = vunpack.c.h.b16 %v1358
        %v1450 = vunpack.c.l.b16 %v1359
        %v1451 = vunpack.c.h.b16 %v1359
        %v1452 = vunpack.c.l.b16 %v1360
        %v1453 = vunpack.c.h.b16 %v1360
        %v1454 = vunpack.c.l.b16 %v1361
        %v1455 = vunpack.c.h.b16 %v1361
        %v1456 = vunpack.c.l.b16 %v1362
        %v1457 = vunpack.c.h.b16 %v1362
        %v1458 = vunpack.c.l.b16 %v1363
        %v1459 = vunpack.c.h.b16 %v1363
        %v1460 = vpack.c.b16 %v1398, %v1396
        %v1461 = vpack.c.b16 %v1399, %v1397
        %v1462 = vpack.c.b16 %v1402, %v1400
        %v1463 = vpack.c.b16 %v1403, %v1401
        %v1464 = vpack.c.b16 %v1406, %v1404
        %v1465 = vpack.c.b16 %v1407, %v1405
        %v1466 = vpack.c.b16 %v1410, %v1408
        %v1467 = vpack.c.b16 %v1411, %v1409
        %v1468 = vpack.c.b16 %v1414, %v1412
        %v1469 = vpack.c.b16 %v1415, %v1413
        %v1470 = vpack.c.b16 %v1418, %v1416
        %v1471 = vpack.c.b16 %v1419, %v1417
        %v1472 = vpack.c.b16 %v1422, %v1420
        %v1473 = vpack.c.b16 %v1423, %v1421
        %v1474 = vpack.c.b16 %v1426, %v1424
        %v1475 = vpack.c.b16 %v1427, %v1425
        %v1476 = vpack.c.b16 %v1430, %v1428
        %v1477 = vpack.c.b16 %v1431, %v1429
        %v1478 = vpack.c.b16 %v1434, %v1432
        %v1479 = vpack.c.b16 %v1435, %v1433
        %v1480 = vpack.c.b16 %v1438, %v1436
        %v1481 = vpack.c.b16 %v1439, %v1437
        %v1482 = vpack.c.b16 %v1442, %v1440
        %v1483 = vpack.c.b16 %v1443, %v1441
        %v1484 = vpack.c.b16 %v1446, %v1444
        %v1485 = vpack.c.b16 %v1447, %v1445
        %v1486 = vpack.c.b16 %v1450, %v1448
        %v1487 = vpack.c.b16 %v1451, %v1449
        %v1488 = vpack.c.b16 %v1454, %v1452
        %v1489 = vpack.c.b16 %v1455, %v1453
        %v1490 = vpack.c.b16 %v1458, %v1456
        %v1491 = vpack.c.b16 %v1459, %v1457
        %1524 = vmatprep.subr.bf16.mxu0 %v1461
        %1525 = vmatpush1.bf16.msra.mxu0 %v1460
        %1526 = vmatprep.subr.bf16.mxu0 %v1463
        %1527 = vmatpush1.bf16.msra.mxu0 %v1462
        %1528 = vmatprep.subr.bf16.mxu0 %v1465
        %1529 = vmatpush1.bf16.msra.mxu0 %v1464
        %1530 = vmatprep.subr.bf16.mxu0 %v1467
        %1531 = vmatpush1.bf16.msra.mxu0 %v1466
        %1532 = vmatprep.subr.bf16.mxu0 %v1469
        %1533 = vmatpush1.bf16.msra.mxu0 %v1468
        %1534 = vmatprep.subr.bf16.mxu0 %v1471
        %1535 = vmatpush1.bf16.msra.mxu0 %v1470
        %1536 = vmatprep.subr.bf16.mxu0 %v1473
        %1537 = vmatpush1.bf16.msra.mxu0 %v1472
        %1538 = vmatprep.subr.bf16.mxu0 %v1475
        %1539 = vmatpush1.bf16.msra.mxu0 %v1474
        %1540 = vmatprep.subr.bf16.mxu0 %v1477
        %1541 = vmatpush1.bf16.msra.mxu0 %v1476
        %1542 = vmatprep.subr.bf16.mxu0 %v1479
        %1543 = vmatpush1.bf16.msra.mxu0 %v1478
        %1544 = vmatprep.subr.bf16.mxu0 %v1481
        %1545 = vmatpush1.bf16.msra.mxu0 %v1480
        %1546 = vmatprep.subr.bf16.mxu0 %v1483
        %1547 = vmatpush1.bf16.msra.mxu0 %v1482
        %1548 = vmatprep.subr.bf16.mxu0 %v1485
        %1549 = vmatpush1.bf16.msra.mxu0 %v1484
        %1550 = vmatprep.subr.bf16.mxu0 %v1487
        %1551 = vmatpush1.bf16.msra.mxu0 %v1486
        %1552 = vmatprep.subr.bf16.mxu0 %v1489
        %1553 = vmatpush1.bf16.msra.mxu0 %v1488
        %1554 = vmatprep.subr.bf16.mxu0 %v1491
        %1555 = vmatpush1.bf16.msra.mxu0 %v1490
        %1556 = vmatprep.mubr.bf16.mxu0 %v994
        %1557 = vmatmul.mubr.bf16.gmra.mrb[0].mxu0 %v993
        %v1558 = vpop.f32.mrb[0].mxu0
        %v1559 = vadd.f32 0.0, %v1558
        %v1560 = vpop.f32.mrb[0].mxu0
        %v1561 = vadd.f32 0.0, %v1560
        %v1562 = vpop.f32.mrb[0].mxu0
        %v1563 = vadd.f32 0.0, %v1562
        %v1564 = vpop.f32.mrb[0].mxu0
        %v1565 = vadd.f32 0.0, %v1564
        %1566 = vmatprep.mubr.bf16.mxu0 %v996
        %1567 = vmatmul.mubr.bf16.gmra.mrb[0].mxu0 %v995
        %v1568 = vpop.f32.mrb[0].mxu0
        %v1569 = vadd.f32 0.0, %v1568
        %v1570 = vpop.f32.mrb[0].mxu0
        %v1571 = vadd.f32 0.0, %v1570
        %v1572 = vpop.f32.mrb[0].mxu0
        %v1573 = vpop.f32.mrb[0].mxu0
        %1574 = vdwg.mxu0
        %v1575 = vpack.c.bf16 %v1563, %v1559
        %v1576 = vpack.c.bf16 %v1565, %v1561
        %v1577 = vpack.c.bf16 %v1569, %v1569
        %v1578 = vpack.c.bf16 %v1571, %v1571
        %v1579 = vld [vmem:[%s13] sm:$0xff]
        %v1580 = vld [vmem:[%s13 + $0x8] sm:$0xff]
        %v1581 = vld [vmem:[%s13 + $0x10] sm:$0xff]
        %v1582 = vld [vmem:[%s13 + $0x18] sm:$0xff]
        %v1583 = vld [vmem:[%s13 + $0x20] sm:$0xff]
        %v1584 = vld [vmem:[%s13 + $0x28] sm:$0xff]
        %v1585 = vld [vmem:[%s13 + $0x30] sm:$0xff]
        %v1586 = vld [vmem:[%s13 + $0x38] sm:$0xff]
        %v1587 = vld [vmem:[%s13 + $0x40] sm:$0xff]
        %v1588 = vld [vmem:[%s13 + $0x48] sm:$0xff]
        %v1589 = vld [vmem:[%s13 + $0x50] sm:$0xff]
        %v1590 = vld [vmem:[%s13 + $0x58] sm:$0xff]
        %v1591 = vld [vmem:[%s13 + $0x60] sm:$0xff]
        %v1592 = vld [vmem:[%s13 + $0x68] sm:$0xff]
        %v1593 = vld [vmem:[%s13 + $0x70] sm:$0xff]
        %v1594 = vld [vmem:[%s13 + $0x78] sm:$0xff]
        %v1595 = vld [vmem:[%s13 + $0x80] sm:$0xff]
        %v1596 = vld [vmem:[%s13 + $0x88] sm:$0xff]
        %v1597 = vld [vmem:[%s13 + $0x90] sm:$0xff]
        %v1598 = vld [vmem:[%s13 + $0x98] sm:$0xff]
        %v1599 = vld [vmem:[%s13 + $0xa0] sm:$0xff]
        %v1600 = vld [vmem:[%s13 + $0xa8] sm:$0xff]
        %v1601 = vld [vmem:[%s13 + $0xb0] sm:$0xff]
        %v1602 = vld [vmem:[%s13 + $0xb8] sm:$0xff]
        %v1603 = vld [vmem:[%s13 + $0xc0] sm:$0xff]
        %v1604 = vld [vmem:[%s13 + $0xc8] sm:$0xff]
        %v1605 = vld [vmem:[%s13 + $0xd0] sm:$0xff]
        %v1606 = vld [vmem:[%s13 + $0xd8] sm:$0xff]
        %v1607 = vld [vmem:[%s13 + $0xe0] sm:$0xff]
        %v1608 = vld [vmem:[%s13 + $0xe8] sm:$0xff]
        %v1609 = vld [vmem:[%s13 + $0xf0] sm:$0xff]
        %v1610 = vld [vmem:[%s13 + $0xf8] sm:$0xff]
        %v1611 = vld [vmem:[%s14] sm:$0x3]
        %v1613 = vlaneseq
        %v1614 = vshrl.u32 %v1613, 7
        %v1615 = vsub.s32 0, %v1614
        %v1616 = vrot.slane %v1611, %v1615
        %v1617 = vlaneseq
        %v1618 = vshrl.u32 %v1617, 7
        %v1619 = vsub.s32 1, %v1618
        %v1620 = vrot.slane %v1611, %v1619
        %v1655 = vunpack.c.l.b16 %v1579
        %v1656 = vunpack.c.h.b16 %v1579
        %v1657 = vunpack.c.l.b16 %v1580
        %v1658 = vunpack.c.h.b16 %v1580
        %v1659 = vunpack.c.l.b16 %v1581
        %v1660 = vunpack.c.h.b16 %v1581
        %v1661 = vunpack.c.l.b16 %v1582
        %v1662 = vunpack.c.h.b16 %v1582
        %v1663 = vunpack.c.l.b16 %v1583
        %v1664 = vunpack.c.h.b16 %v1583
        %v1665 = vunpack.c.l.b16 %v1584
        %v1666 = vunpack.c.h.b16 %v1584
        %v1667 = vunpack.c.l.b16 %v1585
        %v1668 = vunpack.c.h.b16 %v1585
        %v1669 = vunpack.c.l.b16 %v1586
        %v1670 = vunpack.c.h.b16 %v1586
        %v1671 = vunpack.c.l.b16 %v1587
        %v1672 = vunpack.c.h.b16 %v1587
        %v1673 = vunpack.c.l.b16 %v1588
        %v1674 = vunpack.c.h.b16 %v1588
        %v1675 = vunpack.c.l.b16 %v1589
        %v1676 = vunpack.c.h.b16 %v1589
        %v1677 = vunpack.c.l.b16 %v1590
        %v1678 = vunpack.c.h.b16 %v1590
        %v1679 = vunpack.c.l.b16 %v1591
        %v1680 = vunpack.c.h.b16 %v1591
        %v1681 = vunpack.c.l.b16 %v1592
        %v1682 = vunpack.c.h.b16 %v1592
        %v1683 = vunpack.c.l.b16 %v1593
        %v1684 = vunpack.c.h.b16 %v1593
        %v1685 = vunpack.c.l.b16 %v1594
        %v1686 = vunpack.c.h.b16 %v1594
        %v1687 = vunpack.c.l.b16 %v1595
        %v1688 = vunpack.c.h.b16 %v1595
        %v1689 = vunpack.c.l.b16 %v1596
        %v1690 = vunpack.c.h.b16 %v1596
        %v1691 = vunpack.c.l.b16 %v1597
        %v1692 = vunpack.c.h.b16 %v1597
        %v1693 = vunpack.c.l.b16 %v1598
        %v1694 = vunpack.c.h.b16 %v1598
        %v1695 = vunpack.c.l.b16 %v1599
        %v1696 = vunpack.c.h.b16 %v1599
        %v1697 = vunpack.c.l.b16 %v1600
        %v1698 = vunpack.c.h.b16 %v1600
        %v1699 = vunpack.c.l.b16 %v1601
        %v1700 = vunpack.c.h.b16 %v1601
        %v1701 = vunpack.c.l.b16 %v1602
        %v1702 = vunpack.c.h.b16 %v1602
        %v1703 = vunpack.c.l.b16 %v1603
        %v1704 = vunpack.c.h.b16 %v1603
        %v1705 = vunpack.c.l.b16 %v1604
        %v1706 = vunpack.c.h.b16 %v1604
        %v1707 = vunpack.c.l.b16 %v1605
        %v1708 = vunpack.c.h.b16 %v1605
        %v1709 = vunpack.c.l.b16 %v1606
        %v1710 = vunpack.c.h.b16 %v1606
        %v1711 = vunpack.c.l.b16 %v1607
        %v1712 = vunpack.c.h.b16 %v1607
        %v1713 = vunpack.c.l.b16 %v1608
        %v1714 = vunpack.c.h.b16 %v1608
        %v1715 = vunpack.c.l.b16 %v1609
        %v1716 = vunpack.c.h.b16 %v1609
        %v1717 = vunpack.c.l.b16 %v1610
        %v1718 = vunpack.c.h.b16 %v1610
        %v1719 = vpack.c.b16 %v1657, %v1655
        %v1720 = vpack.c.b16 %v1658, %v1656
        %v1721 = vpack.c.b16 %v1661, %v1659
        %v1722 = vpack.c.b16 %v1662, %v1660
        %v1723 = vpack.c.b16 %v1665, %v1663
        %v1724 = vpack.c.b16 %v1666, %v1664
        %v1725 = vpack.c.b16 %v1669, %v1667
        %v1726 = vpack.c.b16 %v1670, %v1668
        %v1727 = vpack.c.b16 %v1673, %v1671
        %v1728 = vpack.c.b16 %v1674, %v1672
        %v1729 = vpack.c.b16 %v1677, %v1675
        %v1730 = vpack.c.b16 %v1678, %v1676
        %v1731 = vpack.c.b16 %v1681, %v1679
        %v1732 = vpack.c.b16 %v1682, %v1680
        %v1733 = vpack.c.b16 %v1685, %v1683
        %v1734 = vpack.c.b16 %v1686, %v1684
        %v1735 = vpack.c.b16 %v1689, %v1687
        %v1736 = vpack.c.b16 %v1690, %v1688
        %v1737 = vpack.c.b16 %v1693, %v1691
        %v1738 = vpack.c.b16 %v1694, %v1692
        %v1739 = vpack.c.b16 %v1697, %v1695
        %v1740 = vpack.c.b16 %v1698, %v1696
        %v1741 = vpack.c.b16 %v1701, %v1699
        %v1742 = vpack.c.b16 %v1702, %v1700
        %v1743 = vpack.c.b16 %v1705, %v1703
        %v1744 = vpack.c.b16 %v1706, %v1704
        %v1745 = vpack.c.b16 %v1709, %v1707
        %v1746 = vpack.c.b16 %v1710, %v1708
        %v1747 = vpack.c.b16 %v1713, %v1711
        %v1748 = vpack.c.b16 %v1714, %v1712
        %v1749 = vpack.c.b16 %v1717, %v1715
        %v1750 = vpack.c.b16 %v1718, %v1716
        %1783 = vmatprep.subr.bf16.mxu0 %v1720
        %1784 = vmatpush1.bf16.msra.mxu0 %v1719
        %1785 = vmatprep.subr.bf16.mxu0 %v1722
        %1786 = vmatpush1.bf16.msra.mxu0 %v1721
        %1787 = vmatprep.subr.bf16.mxu0 %v1724
        %1788 = vmatpush1.bf16.msra.mxu0 %v1723
        %1789 = vmatprep.subr.bf16.mxu0 %v1726
        %1790 = vmatpush1.bf16.msra.mxu0 %v1725
        %1791 = vmatprep.subr.bf16.mxu0 %v1728
        %1792 = vmatpush1.bf16.msra.mxu0 %v1727
        %1793 = vmatprep.subr.bf16.mxu0 %v1730
        %1794 = vmatpush1.bf16.msra.mxu0 %v1729
        %1795 = vmatprep.subr.bf16.mxu0 %v1732
        %1796 = vmatpush1.bf16.msra.mxu0 %v1731
        %1797 = vmatprep.subr.bf16.mxu0 %v1734
        %1798 = vmatpush1.bf16.msra.mxu0 %v1733
        %1799 = vmatprep.subr.bf16.mxu0 %v1736
        %1800 = vmatpush1.bf16.msra.mxu0 %v1735
        %1801 = vmatprep.subr.bf16.mxu0 %v1738
        %1802 = vmatpush1.bf16.msra.mxu0 %v1737
        %1803 = vmatprep.subr.bf16.mxu0 %v1740
        %1804 = vmatpush1.bf16.msra.mxu0 %v1739
        %1805 = vmatprep.subr.bf16.mxu0 %v1742
        %1806 = vmatpush1.bf16.msra.mxu0 %v1741
        %1807 = vmatprep.subr.bf16.mxu0 %v1744
        %1808 = vmatpush1.bf16.msra.mxu0 %v1743
        %1809 = vmatprep.subr.bf16.mxu0 %v1746
        %1810 = vmatpush1.bf16.msra.mxu0 %v1745
        %1811 = vmatprep.subr.bf16.mxu0 %v1748
        %1812 = vmatpush1.bf16.msra.mxu0 %v1747
        %1813 = vmatprep.subr.bf16.mxu0 %v1750
        %1814 = vmatpush1.bf16.msra.mxu0 %v1749
        %1815 = vmatprep.mubr.bf16.mxu0 %v1082
        %1816 = vmatmul.mubr.bf16.gmra.mrb[0].mxu0 %v1081
        %v1817 = vpop.f32.mrb[0].mxu0
        %v1818 = vadd.f32 %v1616, %v1817
        %v1819 = vpop.f32.mrb[0].mxu0
        %v1820 = vadd.f32 %v1620, %v1819
        %v1821 = vpop.f32.mrb[0].mxu0
        %v1822 = vadd.f32 %v1616, %v1821
        %v1823 = vpop.f32.mrb[0].mxu0
        %v1824 = vadd.f32 %v1620, %v1823
        %1825 = vmatprep.mubr.bf16.mxu0 %v1084
        %1826 = vmatmul.mubr.bf16.gmra.mrb[0].mxu0 %v1083
        %v1827 = vpop.f32.mrb[0].mxu0
        %v1828 = vadd.f32 %v1616, %v1827
        %v1829 = vpop.f32.mrb[0].mxu0
        %v1830 = vadd.f32 %v1620, %v1829
        %v1831 = vpop.f32.mrb[0].mxu0
        %v1832 = vpop.f32.mrb[0].mxu0
        %1833 = vdwg.mxu0
        %v1834 = vpack.c.bf16 %v1822, %v1818
        %v1835 = vpack.c.bf16 %v1824, %v1820
        %v1836 = vpack.c.bf16 %v1828, %v1828
        %v1837 = vpack.c.bf16 %v1830, %v1830
        %1838 = vmatprep.subr.bf16.mxu0 0
        %1839 = vmatpush1.bf16.xpose.msra.mxu0 %v1575
        %1840 = vmatprep.subr.bf16.mxu0 0
        %1841 = vmatpush1.bf16.xpose.msra.mxu0 %v1577
        %1842 = vmatprep.subr.bf16.mxu0 0
        %1843 = vmatpush1.bf16.xpose.msra.mxu0 0
        %1844 = vmatprep.subr.bf16.mxu0 0
        %1845 = vmatpush1.bf16.xpose.msra.mxu0 0
        %1846 = vmatprep.subr.bf16.mxu0 0
        %1847 = vmatpush1.bf16.xpose.msra.mxu0 0
        %1848 = vmatprep.subr.bf16.mxu0 0
        %1849 = vmatpush1.bf16.xpose.msra.mxu0 0
        %1850 = vmatprep.subr.bf16.mxu0 0
        %1851 = vmatpush1.bf16.xpose.msra.mxu0 0
        %1852 = vmatprep.subr.bf16.mxu0 0
        %1853 = vmatpush1.bf16.xpose.msra.mxu0 0
        %1854 = vmatprep.subr.bf16.mxu0 0
        %1855 = vmatpush1.bf16.xpose.msra.mxu0 0
        %1856 = vmatprep.subr.bf16.mxu0 0
        %1857 = vmatpush1.bf16.xpose.msra.mxu0 0
        %1858 = vmatprep.subr.bf16.mxu0 0
        %1859 = vmatpush1.bf16.xpose.msra.mxu0 0
        %1860 = vmatprep.subr.bf16.mxu0 0
        %1861 = vmatpush1.bf16.xpose.msra.mxu0 0
        %1862 = vmatprep.subr.bf16.mxu0 0
        %1863 = vmatpush1.bf16.xpose.msra.mxu0 0
        %1864 = vmatprep.subr.bf16.mxu0 0
        %1865 = vmatpush1.bf16.xpose.msra.mxu0 0
        %1866 = vmatprep.subr.bf16.mxu0 0
        %1867 = vmatpush1.bf16.xpose.msra.mxu0 0
        %1868 = vmatprep.subr.bf16.mxu0 0
        %1869 = vmatpush1.bf16.xpose.msra.mxu0 0
        %1870 = vmatprep.mubr.bf16.mxu0 0
        %1871 = vmatmul.mubr.bf16.gmra.mrb[0].mxu0 %v1330
        %v1872 = vpop.f32.mrb[0].mxu0
        %v1873 = vadd.f32 0.0, %v1872
        %v1874 = vpop.f32.mrb[0].mxu0
        %v1875 = vpop.f32.mrb[0].mxu0
        %v1876 = vpop.f32.mrb[0].mxu0
        %1877 = vdwg.mxu0
        %vm1878 = vcmask 195584
        %v1879 = vsel %vm1878, %v1873, -inf
        %1880 = vmax.xlane.f32.xlu0 %v1879
        %v1881 = vpop.xlane.xlu0 %1880
        %v1882 = vsub.f32 %v1873, %v1881
        %v1883 = vmul.f32 %v1882, 1.442695
        %v1884 = vpow.pop %v1883
        %v1885 = vsel %vm1878, %v1884, 0.0
        %1886 = vadd.xlane.f32.xlu0 %v1885
        %v1887 = vpop.xlane.xlu0 %1886
        %v1888 = vrcp.pop %v1887
        %v1889 = vmul.f32 %v1884, %v1888
        %v1890 = vpack.c.bf16 %v1889, %v1889
        %v1892 = vsel %vm1878, %v1890, 0
        %vm1894 = vcmask 1043456
        %v1896 = vsel %vm1894, %v1836, 0
        %1898 = vmatprep.subr.bf16.mxu0 0
        %1899 = vmatpush1.bf16.msra.mxu0 %v1834
        %1900 = vmatprep.subr.bf16.mxu0 0
        %1901 = vmatpush1.bf16.msra.mxu0 %v1896
        %1902 = vmatprep.subr.bf16.mxu0 0
        %1903 = vmatpush1.bf16.msra.mxu0 0
        %1904 = vmatprep.subr.bf16.mxu0 0
        %1905 = vmatpush1.bf16.msra.mxu0 0
        %1906 = vmatprep.subr.bf16.mxu0 0
        %1907 = vmatpush1.bf16.msra.mxu0 0
        %1908 = vmatprep.subr.bf16.mxu0 0
        %1909 = vmatpush1.bf16.msra.mxu0 0
        %1910 = vmatprep.subr.bf16.mxu0 0
        %1911 = vmatpush1.bf16.msra.mxu0 0
        %1912 = vmatprep.subr.bf16.mxu0 0
        %1913 = vmatpush1.bf16.msra.mxu0 0
        %1914 = vmatprep.subr.bf16.mxu0 0
        %1915 = vmatpush1.bf16.msra.mxu0 0
        %1916 = vmatprep.subr.bf16.mxu0 0
        %1917 = vmatpush1.bf16.msra.mxu0 0
        %1918 = vmatprep.subr.bf16.mxu0 0
        %1919 = vmatpush1.bf16.msra.mxu0 0
        %1920 = vmatprep.subr.bf16.mxu0 0
        %1921 = vmatpush1.bf16.msra.mxu0 0
        %1922 = vmatprep.subr.bf16.mxu0 0
        %1923 = vmatpush1.bf16.msra.mxu0 0
        %1924 = vmatprep.subr.bf16.mxu0 0
        %1925 = vmatpush1.bf16.msra.mxu0 0
        %1926 = vmatprep.subr.bf16.mxu0 0
        %1927 = vmatpush1.bf16.msra.mxu0 0
        %1928 = vmatprep.subr.bf16.mxu0 0
        %1929 = vmatpush1.bf16.msra.mxu0 0
        %1930 = vmatprep.mubr.bf16.mxu0 0
        %1931 = vmatmul.mubr.bf16.gmra.mrb[0].mxu0 %v1892
        %v1932 = vpop.f32.mrb[0].mxu0
        %v1933 = vadd.f32 0.0, %v1932
        %v1934 = vpop.f32.mrb[0].mxu0
        %v1935 = vpop.f32.mrb[0].mxu0
        %v1936 = vpop.f32.mrb[0].mxu0
        %1937 = vdwg.mxu0
        %v1938 = vpack.c.bf16 %v1933, %v1933
        %v1939 = vld [vmem:[%s15] sm:$0xff]
        %v1940 = vld [vmem:[%s15 + $0x8] sm:$0xff]
        %v1941 = vld [vmem:[%s15 + $0x10] sm:$0xff]
        %v1942 = vld [vmem:[%s15 + $0x18] sm:$0xff]
        %v1943 = vld [vmem:[%s15 + $0x20] sm:$0xff]
        %v1944 = vld [vmem:[%s15 + $0x28] sm:$0xff]
        %v1945 = vld [vmem:[%s15 + $0x30] sm:$0xff]
        %v1946 = vld [vmem:[%s15 + $0x38] sm:$0xff]
        %v1947 = vld [vmem:[%s15 + $0x40] sm:$0xff]
        %v1948 = vld [vmem:[%s15 + $0x48] sm:$0xff]
        %v1949 = vld [vmem:[%s15 + $0x50] sm:$0xff]
        %v1950 = vld [vmem:[%s15 + $0x58] sm:$0xff]
        %v1951 = vld [vmem:[%s15 + $0x60] sm:$0xff]
        %v1952 = vld [vmem:[%s15 + $0x68] sm:$0xff]
        %v1953 = vld [vmem:[%s15 + $0x70] sm:$0xff]
        %v1954 = vld [vmem:[%s15 + $0x78] sm:$0xff]
        %1955 = vmatprep.subr.bf16.mxu0 0
        %1956 = vmatpush1.bf16.xpose.msra.mxu0 %v1576
        %1957 = vmatprep.subr.bf16.mxu0 0
        %1958 = vmatpush1.bf16.xpose.msra.mxu0 %v1578
        %1959 = vmatprep.subr.bf16.mxu0 0
        %1960 = vmatpush1.bf16.xpose.msra.mxu0 0
        %1961 = vmatprep.subr.bf16.mxu0 0
        %1962 = vmatpush1.bf16.xpose.msra.mxu0 0
        %1963 = vmatprep.subr.bf16.mxu0 0
        %1964 = vmatpush1.bf16.xpose.msra.mxu0 0
        %1965 = vmatprep.subr.bf16.mxu0 0
        %1966 = vmatpush1.bf16.xpose.msra.mxu0 0
        %1967 = vmatprep.subr.bf16.mxu0 0
        %1968 = vmatpush1.bf16.xpose.msra.mxu0 0
        %1969 = vmatprep.subr.bf16.mxu0 0
        %1970 = vmatpush1.bf16.xpose.msra.mxu0 0
        %1971 = vmatprep.subr.bf16.mxu0 0
        %1972 = vmatpush1.bf16.xpose.msra.mxu0 0
        %1973 = vmatprep.subr.bf16.mxu0 0
        %1974 = vmatpush1.bf16.xpose.msra.mxu0 0
        %1975 = vmatprep.subr.bf16.mxu0 0
        %1976 = vmatpush1.bf16.xpose.msra.mxu0 0
        %1977 = vmatprep.subr.bf16.mxu0 0
        %1978 = vmatpush1.bf16.xpose.msra.mxu0 0
        %1979 = vmatprep.subr.bf16.mxu0 0
        %1980 = vmatpush1.bf16.xpose.msra.mxu0 0
        %1981 = vmatprep.subr.bf16.mxu0 0
        %1982 = vmatpush1.bf16.xpose.msra.mxu0 0
        %1983 = vmatprep.subr.bf16.mxu0 0
        %1984 = vmatpush1.bf16.xpose.msra.mxu0 0
        %1985 = vmatprep.subr.bf16.mxu0 0
        %1986 = vmatpush1.bf16.xpose.msra.mxu0 0
        %1987 = vmatprep.mubr.bf16.mxu0 0
        %1988 = vmatmul.mubr.bf16.gmra.mrb[0].mxu0 %v1331
        %v1989 = vpop.f32.mrb[0].mxu0
        %v1990 = vadd.f32 0.0, %v1989
        %v1991 = vpop.f32.mrb[0].mxu0
        %v1992 = vpop.f32.mrb[0].mxu0
        %v1993 = vpop.f32.mrb[0].mxu0
        %1994 = vdwg.mxu0
        %v1995 = vsel %vm1878, %v1990, -inf
        %1996 = vmax.xlane.f32.xlu0 %v1995
        %v1997 = vpop.xlane.xlu0 %1996
        %v1998 = vsub.f32 %v1990, %v1997
        %v1999 = vmul.f32 %v1998, 1.442695
        %v2000 = vpow.pop %v1999
        %v2001 = vsel %vm1878, %v2000, 0.0
        %2002 = vadd.xlane.f32.xlu0 %v2001
        %v2003 = vpop.xlane.xlu0 %2002
        %v2004 = vrcp.pop %v2003
        %v2005 = vmul.f32 %v2000, %v2004
        %v2006 = vpack.c.bf16 %v2005, %v2005
        %v2008 = vsel %vm1878, %v2006, 0
        %v2011 = vsel %vm1894, %v1837, 0
        %2013 = vmatprep.subr.bf16.mxu0 0
        %2014 = vmatpush1.bf16.msra.mxu0 %v1835
        %2015 = vmatprep.subr.bf16.mxu0 0
        %2016 = vmatpush1.bf16.msra.mxu0 %v2011
        %2017 = vmatprep.subr.bf16.mxu0 0
        %2018 = vmatpush1.bf16.msra.mxu0 0
        %2019 = vmatprep.subr.bf16.mxu0 0
        %2020 = vmatpush1.bf16.msra.mxu0 0
        %2021 = vmatprep.subr.bf16.mxu0 0
        %2022 = vmatpush1.bf16.msra.mxu0 0
        %2023 = vmatprep.subr.bf16.mxu0 0
        %2024 = vmatpush1.bf16.msra.mxu0 0
        %2025 = vmatprep.subr.bf16.mxu0 0
        %2026 = vmatpush1.bf16.msra.mxu0 0
        %2027 = vmatprep.subr.bf16.mxu0 0
        %2028 = vmatpush1.bf16.msra.mxu0 0
        %2029 = vmatprep.subr.bf16.mxu0 0
        %2030 = vmatpush1.bf16.msra.mxu0 0
        %2031 = vmatprep.subr.bf16.mxu0 0
        %2032 = vmatpush1.bf16.msra.mxu0 0
        %2033 = vmatprep.subr.bf16.mxu0 0
        %2034 = vmatpush1.bf16.msra.mxu0 0
        %2035 = vmatprep.subr.bf16.mxu0 0
        %2036 = vmatpush1.bf16.msra.mxu0 0
        %2037 = vmatprep.subr.bf16.mxu0 0
        %2038 = vmatpush1.bf16.msra.mxu0 0
        %2039 = vmatprep.subr.bf16.mxu0 0
        %2040 = vmatpush1.bf16.msra.mxu0 0
        %2041 = vmatprep.subr.bf16.mxu0 0
        %2042 = vmatpush1.bf16.msra.mxu0 0
        %2043 = vmatprep.subr.bf16.mxu0 0
        %2044 = vmatpush1.bf16.msra.mxu0 0
        %2045 = vmatprep.mubr.bf16.mxu0 0
        %2046 = vmatmul.mubr.bf16.gmra.mrb[0].mxu0 %v2008
        %v2047 = vpop.f32.mrb[0].mxu0
        %v2048 = vadd.f32 0.0, %v2047
        %v2049 = vpop.f32.mrb[0].mxu0
        %v2050 = vpop.f32.mrb[0].mxu0
        %v2051 = vpop.f32.mrb[0].mxu0
        %2052 = vdwg.mxu0
        %v2053 = vpack.c.bf16 %v2048, %v2048
        %v2054 = vld [vmem:[%s15 + $0x80] sm:$0xff]
        %v2055 = vld [vmem:[%s15 + $0x88] sm:$0xff]
        %v2056 = vld [vmem:[%s15 + $0x90] sm:$0xff]
        %v2057 = vld [vmem:[%s15 + $0x98] sm:$0xff]
        %v2058 = vld [vmem:[%s15 + $0xa0] sm:$0xff]
        %v2059 = vld [vmem:[%s15 + $0xa8] sm:$0xff]
        %v2060 = vld [vmem:[%s15 + $0xb0] sm:$0xff]
        %v2061 = vld [vmem:[%s15 + $0xb8] sm:$0xff]
        %v2062 = vld [vmem:[%s15 + $0xc0] sm:$0xff]
        %v2063 = vld [vmem:[%s15 + $0xc8] sm:$0xff]
        %v2064 = vld [vmem:[%s15 + $0xd0] sm:$0xff]
        %v2065 = vld [vmem:[%s15 + $0xd8] sm:$0xff]
        %v2066 = vld [vmem:[%s15 + $0xe0] sm:$0xff]
        %v2067 = vld [vmem:[%s15 + $0xe8] sm:$0xff]
        %v2068 = vld [vmem:[%s15 + $0xf0] sm:$0xff]
        %v2069 = vld [vmem:[%s15 + $0xf8] sm:$0xff]
        %v2086 = vunpack.c.l.b16 %v2054
        %v2087 = vunpack.c.h.b16 %v2054
        %v2088 = vunpack.c.l.b16 %v2055
        %v2089 = vunpack.c.h.b16 %v2055
        %v2090 = vunpack.c.l.b16 %v2056
        %v2091 = vunpack.c.h.b16 %v2056
        %v2092 = vunpack.c.l.b16 %v2057
        %v2093 = vunpack.c.h.b16 %v2057
        %v2094 = vunpack.c.l.b16 %v2058
        %v2095 = vunpack.c.h.b16 %v2058
        %v2096 = vunpack.c.l.b16 %v2059
        %v2097 = vunpack.c.h.b16 %v2059
        %v2098 = vunpack.c.l.b16 %v2060
        %v2099 = vunpack.c.h.b16 %v2060
        %v2100 = vunpack.c.l.b16 %v2061
        %v2101 = vunpack.c.h.b16 %v2061
        %v2102 = vunpack.c.l.b16 %v2062
        %v2103 = vunpack.c.h.b16 %v2062
        %v2104 = vunpack.c.l.b16 %v2063
        %v2105 = vunpack.c.h.b16 %v2063
        %v2106 = vunpack.c.l.b16 %v2064
        %v2107 = vunpack.c.h.b16 %v2064
        %v2108 = vunpack.c.l.b16 %v2065
        %v2109 = vunpack.c.h.b16 %v2065
        %v2110 = vunpack.c.l.b16 %v2066
        %v2111 = vunpack.c.h.b16 %v2066
        %v2112 = vunpack.c.l.b16 %v2067
        %v2113 = vunpack.c.h.b16 %v2067
        %v2114 = vunpack.c.l.b16 %v2068
        %v2115 = vunpack.c.h.b16 %v2068
        %v2116 = vunpack.c.l.b16 %v2069
        %v2117 = vunpack.c.h.b16 %v2069
        %v2118 = vpack.c.b16 %v2088, %v2086
        %v2119 = vpack.c.b16 %v2089, %v2087
        %v2120 = vpack.c.b16 %v2092, %v2090
        %v2121 = vpack.c.b16 %v2093, %v2091
        %v2122 = vpack.c.b16 %v2096, %v2094
        %v2123 = vpack.c.b16 %v2097, %v2095
        %v2124 = vpack.c.b16 %v2100, %v2098
        %v2125 = vpack.c.b16 %v2101, %v2099
        %v2126 = vpack.c.b16 %v2104, %v2102
        %v2127 = vpack.c.b16 %v2105, %v2103
        %v2128 = vpack.c.b16 %v2108, %v2106
        %v2129 = vpack.c.b16 %v2109, %v2107
        %v2130 = vpack.c.b16 %v2112, %v2110
        %v2131 = vpack.c.b16 %v2113, %v2111
        %v2132 = vpack.c.b16 %v2116, %v2114
        %v2133 = vpack.c.b16 %v2117, %v2115
        %2150 = vmatprep.subr.bf16.mxu0 %v2119
        %2151 = vmatpush1.bf16.msra.mxu0 %v2118
        %2152 = vmatprep.subr.bf16.mxu0 %v2121
        %2153 = vmatpush1.bf16.msra.mxu0 %v2120
        %2154 = vmatprep.subr.bf16.mxu0 %v2123
        %2155 = vmatpush1.bf16.msra.mxu0 %v2122
        %2156 = vmatprep.subr.bf16.mxu0 %v2125
        %2157 = vmatpush1.bf16.msra.mxu0 %v2124
        %2158 = vmatprep.subr.bf16.mxu0 %v2127
        %2159 = vmatpush1.bf16.msra.mxu0 %v2126
        %2160 = vmatprep.subr.bf16.mxu0 %v2129
        %2161 = vmatpush1.bf16.msra.mxu0 %v2128
        %2162 = vmatprep.subr.bf16.mxu0 %v2131
        %2163 = vmatpush1.bf16.msra.mxu0 %v2130
        %2164 = vmatprep.subr.bf16.mxu0 %v2133
        %2165 = vmatpush1.bf16.msra.mxu0 %v2132
        %2166 = vmatprep.subr.bf16.mxu0 0
        %2167 = vmatpush1.bf16.msra.mxu0 0
        %2168 = vmatprep.subr.bf16.mxu0 0
        %2169 = vmatpush1.bf16.msra.mxu0 0
        %2170 = vmatprep.subr.bf16.mxu0 0
        %2171 = vmatpush1.bf16.msra.mxu0 0
        %2172 = vmatprep.subr.bf16.mxu0 0
        %2173 = vmatpush1.bf16.msra.mxu0 0
        %2174 = vmatprep.subr.bf16.mxu0 0
        %2175 = vmatpush1.bf16.msra.mxu0 0
        %2176 = vmatprep.subr.bf16.mxu0 0
        %2177 = vmatpush1.bf16.msra.mxu0 0
        %2178 = vmatprep.subr.bf16.mxu0 0
        %2179 = vmatpush1.bf16.msra.mxu0 0
        %2180 = vmatprep.subr.bf16.mxu0 0
        %2181 = vmatpush1.bf16.msra.mxu0 0
        %2182 = vmatprep.mubr.bf16.mxu0 0
        %2183 = vmatmul.mubr.bf16.gmra.mrb[0].mxu0 %v2053
        %v2184 = vpop.f32.mrb[0].mxu0
        %v2185 = vadd.f32 0.0, %v2184
        %v2186 = vpop.f32.mrb[0].mxu0
        %v2187 = vadd.f32 0.0, %v2186
        %v2188 = vpop.f32.mrb[0].mxu0
        %v2189 = vpop.f32.mrb[0].mxu0
        %2190 = vdwg.mxu0
        %v2207 = vunpack.c.l.b16 %v1939
        %v2208 = vunpack.c.h.b16 %v1939
        %v2209 = vunpack.c.l.b16 %v1940
        %v2210 = vunpack.c.h.b16 %v1940
        %v2211 = vunpack.c.l.b16 %v1941
        %v2212 = vunpack.c.h.b16 %v1941
        %v2213 = vunpack.c.l.b16 %v1942
        %v2214 = vunpack.c.h.b16 %v1942
        %v2215 = vunpack.c.l.b16 %v1943
        %v2216 = vunpack.c.h.b16 %v1943
        %v2217 = vunpack.c.l.b16 %v1944
        %v2218 = vunpack.c.h.b16 %v1944
        %v2219 = vunpack.c.l.b16 %v1945
        %v2220 = vunpack.c.h.b16 %v1945
        %v2221 = vunpack.c.l.b16 %v1946
        %v2222 = vunpack.c.h.b16 %v1946
        %v2223 = vunpack.c.l.b16 %v1947
        %v2224 = vunpack.c.h.b16 %v1947
        %v2225 = vunpack.c.l.b16 %v1948
        %v2226 = vunpack.c.h.b16 %v1948
        %v2227 = vunpack.c.l.b16 %v1949
        %v2228 = vunpack.c.h.b16 %v1949
        %v2229 = vunpack.c.l.b16 %v1950
        %v2230 = vunpack.c.h.b16 %v1950
        %v2231 = vunpack.c.l.b16 %v1951
        %v2232 = vunpack.c.h.b16 %v1951
        %v2233 = vunpack.c.l.b16 %v1952
        %v2234 = vunpack.c.h.b16 %v1952
        %v2235 = vunpack.c.l.b16 %v1953
        %v2236 = vunpack.c.h.b16 %v1953
        %v2237 = vunpack.c.l.b16 %v1954
        %v2238 = vunpack.c.h.b16 %v1954
        %v2239 = vpack.c.b16 %v2209, %v2207
        %v2240 = vpack.c.b16 %v2210, %v2208
        %v2241 = vpack.c.b16 %v2213, %v2211
        %v2242 = vpack.c.b16 %v2214, %v2212
        %v2243 = vpack.c.b16 %v2217, %v2215
        %v2244 = vpack.c.b16 %v2218, %v2216
        %v2245 = vpack.c.b16 %v2221, %v2219
        %v2246 = vpack.c.b16 %v2222, %v2220
        %v2247 = vpack.c.b16 %v2225, %v2223
        %v2248 = vpack.c.b16 %v2226, %v2224
        %v2249 = vpack.c.b16 %v2229, %v2227
        %v2250 = vpack.c.b16 %v2230, %v2228
        %v2251 = vpack.c.b16 %v2233, %v2231
        %v2252 = vpack.c.b16 %v2234, %v2232
        %v2253 = vpack.c.b16 %v2237, %v2235
        %v2254 = vpack.c.b16 %v2238, %v2236
        %2271 = vmatprep.subr.bf16.mxu0 %v2240
        %2272 = vmatpush1.bf16.msra.mxu0 %v2239
        %2273 = vmatprep.subr.bf16.mxu0 %v2242
        %2274 = vmatpush1.bf16.msra.mxu0 %v2241
        %2275 = vmatprep.subr.bf16.mxu0 %v2244
        %2276 = vmatpush1.bf16.msra.mxu0 %v2243
        %2277 = vmatprep.subr.bf16.mxu0 %v2246
        %2278 = vmatpush1.bf16.msra.mxu0 %v2245
        %2279 = vmatprep.subr.bf16.mxu0 %v2248
        %2280 = vmatpush1.bf16.msra.mxu0 %v2247
        %2281 = vmatprep.subr.bf16.mxu0 %v2250
        %2282 = vmatpush1.bf16.msra.mxu0 %v2249
        %2283 = vmatprep.subr.bf16.mxu0 %v2252
        %2284 = vmatpush1.bf16.msra.mxu0 %v2251
        %2285 = vmatprep.subr.bf16.mxu0 %v2254
        %2286 = vmatpush1.bf16.msra.mxu0 %v2253
        %2287 = vmatprep.subr.bf16.mxu0 0
        %2288 = vmatpush1.bf16.msra.mxu0 0
        %2289 = vmatprep.subr.bf16.mxu0 0
        %2290 = vmatpush1.bf16.msra.mxu0 0
        %2291 = vmatprep.subr.bf16.mxu0 0
        %2292 = vmatpush1.bf16.msra.mxu0 0
        %2293 = vmatprep.subr.bf16.mxu0 0
        %2294 = vmatpush1.bf16.msra.mxu0 0
        %2295 = vmatprep.subr.bf16.mxu0 0
        %2296 = vmatpush1.bf16.msra.mxu0 0
        %2297 = vmatprep.subr.bf16.mxu0 0
        %2298 = vmatpush1.bf16.msra.mxu0 0
        %2299 = vmatprep.subr.bf16.mxu0 0
        %2300 = vmatpush1.bf16.msra.mxu0 0
        %2301 = vmatprep.subr.bf16.mxu0 0
        %2302 = vmatpush1.bf16.msra.mxu0 0
        %2303 = vmatprep.mubr.bf16.mxu0 0
        %2304 = vmatmul.mubr.bf16.gmra.mrb[0].mxu0 %v1938
        %v2305 = vpop.f32.mrb[0].mxu0
        %v2306 = vadd.f32 %v2185, %v2305
        %v2307 = vpop.f32.mrb[0].mxu0
        %v2308 = vadd.f32 %v2187, %v2307
        %v2309 = vpop.f32.mrb[0].mxu0
        %v2310 = vpop.f32.mrb[0].mxu0
        %2311 = vdwg.mxu0
        %v2312 = vld [vmem:[%s17] sm:$0x3]
        %v2313 = vld [vmem:[%s16] sm:$0x3]
        %v2315 = vlaneseq
        %v2316 = vshrl.u32 %v2315, 7
        %v2317 = vsub.s32 0, %v2316
        %v2318 = vrot.slane %v2313, %v2317
        %v2319 = vlaneseq
        %v2320 = vshrl.u32 %v2319, 7
        %v2321 = vsub.s32 1, %v2320
        %v2322 = vrot.slane %v2313, %v2321
        %v2325 = vadd.f32 %v2306, %v2318
        %v2326 = vadd.f32 %v2308, %v2322
        %v2328 = vlaneseq
        %v2329 = vshrl.u32 %v2328, 7
        %v2330 = vsub.s32 0, %v2329
        %v2331 = vrot.slane %v2312, %v2330
        %v2332 = vlaneseq
        %v2333 = vshrl.u32 %v2332, 7
        %v2334 = vsub.s32 1, %v2333
        %v2335 = vrot.slane %v2312, %v2334
        %v2338 = vmul.f32 %v2331, %v2325
        %v2339 = vmul.f32 %v2335, %v2326
        %v2340 = vadd.f32 %v838, %v2338
        %v2341 = vadd.f32 %v839, %v2339
        %v2342 = vld [vmem:[%s18] sm:$0x3]
        %v2343 = vld [vmem:[%s19] sm:$0x3]
        %v2344 = vadd.f32 %v2340, %v2341
        %2345 = vadd.xlane.f32.xlu0 %v2344
        %v2346 = vpop.xlane.xlu0 %2345
        %v2347 = vmul.f32 %v2346, %v861
        %v2348 = vsub.f32 %v2340, %v2347
        %v2349 = vsub.f32 %v2341, %v2347
        %v2350 = vmul.f32 %v2348, %v2348
        %v2351 = vmul.f32 %v2349, %v2349
        %v2352 = vadd.f32 %v2350, %v2351
        %2353 = vadd.xlane.f32.xlu0 %v2352
        %v2354 = vpop.xlane.xlu0 %2353
        %v2355 = vmul.f32 %v2354, %v861
        %v2356 = vadd.f32 %v2355, 1e-06
        %v2357 = vrsqrt.pop %v2356
        %v2358 = vmul.f32 %v2348, %v2357
        %v2359 = vmul.f32 %v2349, %v2357
        %v2361 = vlaneseq
        %v2362 = vshrl.u32 %v2361, 7
        %v2363 = vsub.s32 0, %v2362
        %v2364 = vrot.slane %v2342, %v2363
        %v2365 = vlaneseq
        %v2366 = vshrl.u32 %v2365, 7
        %v2367 = vsub.s32 1, %v2366
        %v2368 = vrot.slane %v2342, %v2367
        %v2371 = vmul.f32 %v2358, %v2364
        %v2372 = vmul.f32 %v2359, %v2368
        %v2374 = vlaneseq
        %v2375 = vshrl.u32 %v2374, 7
        %v2376 = vsub.s32 0, %v2375
        %v2377 = vrot.slane %v2343, %v2376
        %v2378 = vlaneseq
        %v2379 = vshrl.u32 %v2378, 7
        %v2380 = vsub.s32 1, %v2379
        %v2381 = vrot.slane %v2343, %v2380
        %v2384 = vadd.f32 %v2371, %v2377
        %v2385 = vadd.f32 %v2372, %v2381
        %v2386 = vpack.c.bf16 %v2384, %v2384
        %v2387 = vpack.c.bf16 %v2385, %v2385
        %v2388 = vld [vmem:[%s20] sm:$0xff]
        %v2389 = vld [vmem:[%s20 + $0x8] sm:$0xff]
        %v2390 = vld [vmem:[%s20 + $0x10] sm:$0xff]
        %v2391 = vld [vmem:[%s20 + $0x18] sm:$0xff]
        %v2392 = vld [vmem:[%s20 + $0x20] sm:$0xff]
        %v2393 = vld [vmem:[%s20 + $0x28] sm:$0xff]
        %v2394 = vld [vmem:[%s20 + $0x30] sm:$0xff]
        %v2395 = vld [vmem:[%s20 + $0x38] sm:$0xff]
        %v2396 = vld [vmem:[%s20 + $0x40] sm:$0xff]
        %v2397 = vld [vmem:[%s20 + $0x48] sm:$0xff]
        %v2398 = vld [vmem:[%s20 + $0x50] sm:$0xff]
        %v2399 = vld [vmem:[%s20 + $0x58] sm:$0xff]
        %v2400 = vld [vmem:[%s20 + $0x60] sm:$0xff]
        %v2401 = vld [vmem:[%s20 + $0x68] sm:$0xff]
        %v2402 = vld [vmem:[%s20 + $0x70] sm:$0xff]
        %v2403 = vld [vmem:[%s20 + $0x78] sm:$0xff]
        %v2404 = vld [vmem:[%s20 + $0x80] sm:$0xff]
        %v2405 = vld [vmem:[%s20 + $0x88] sm:$0xff]
        %v2406 = vld [vmem:[%s20 + $0x90] sm:$0xff]
        %v2407 = vld [vmem:[%s20 + $0x98] sm:$0xff]
        %v2408 = vld [vmem:[%s20 + $0xa0] sm:$0xff]
        %v2409 = vld [vmem:[%s20 + $0xa8] sm:$0xff]
        %v2410 = vld [vmem:[%s20 + $0xb0] sm:$0xff]
        %v2411 = vld [vmem:[%s20 + $0xb8] sm:$0xff]
        %v2412 = vld [vmem:[%s20 + $0xc0] sm:$0xff]
        %v2413 = vld [vmem:[%s20 + $0xc8] sm:$0xff]
        %v2414 = vld [vmem:[%s20 + $0xd0] sm:$0xff]
        %v2415 = vld [vmem:[%s20 + $0xd8] sm:$0xff]
        %v2416 = vld [vmem:[%s20 + $0xe0] sm:$0xff]
        %v2417 = vld [vmem:[%s20 + $0xe8] sm:$0xff]
        %v2418 = vld [vmem:[%s20 + $0xf0] sm:$0xff]
        %v2419 = vld [vmem:[%s20 + $0xf8] sm:$0xff]
        %v2420 = vld [vmem:[%s20 + $0x100] sm:$0xff]
        %v2421 = vld [vmem:[%s20 + $0x108] sm:$0xff]
        %v2422 = vld [vmem:[%s20 + $0x110] sm:$0xff]
        %v2423 = vld [vmem:[%s20 + $0x118] sm:$0xff]
        %v2424 = vld [vmem:[%s20 + $0x120] sm:$0xff]
        %v2425 = vld [vmem:[%s20 + $0x128] sm:$0xff]
        %v2426 = vld [vmem:[%s20 + $0x130] sm:$0xff]
        %v2427 = vld [vmem:[%s20 + $0x138] sm:$0xff]
        %v2428 = vld [vmem:[%s20 + $0x140] sm:$0xff]
        %v2429 = vld [vmem:[%s20 + $0x148] sm:$0xff]
        %v2430 = vld [vmem:[%s20 + $0x150] sm:$0xff]
        %v2431 = vld [vmem:[%s20 + $0x158] sm:$0xff]
        %v2432 = vld [vmem:[%s20 + $0x160] sm:$0xff]
        %v2433 = vld [vmem:[%s20 + $0x168] sm:$0xff]
        %v2434 = vld [vmem:[%s20 + $0x170] sm:$0xff]
        %v2435 = vld [vmem:[%s20 + $0x178] sm:$0xff]
        %v2436 = vld [vmem:[%s20 + $0x180] sm:$0xff]
        %v2437 = vld [vmem:[%s20 + $0x188] sm:$0xff]
        %v2438 = vld [vmem:[%s20 + $0x190] sm:$0xff]
        %v2439 = vld [vmem:[%s20 + $0x198] sm:$0xff]
        %v2440 = vld [vmem:[%s20 + $0x1a0] sm:$0xff]
        %v2441 = vld [vmem:[%s20 + $0x1a8] sm:$0xff]
        %v2442 = vld [vmem:[%s20 + $0x1b0] sm:$0xff]
        %v2443 = vld [vmem:[%s20 + $0x1b8] sm:$0xff]
        %v2444 = vld [vmem:[%s20 + $0x1c0] sm:$0xff]
        %v2445 = vld [vmem:[%s20 + $0x1c8] sm:$0xff]
        %v2446 = vld [vmem:[%s20 + $0x1d0] sm:$0xff]
        %v2447 = vld [vmem:[%s20 + $0x1d8] sm:$0xff]
        %v2448 = vld [vmem:[%s20 + $0x1e0] sm:$0xff]
        %v2449 = vld [vmem:[%s20 + $0x1e8] sm:$0xff]
        %v2450 = vld [vmem:[%s20 + $0x1f0] sm:$0xff]
        %v2451 = vld [vmem:[%s20 + $0x1f8] sm:$0xff]
        %v2452 = vld [vmem:[%s20 + $0x200] sm:$0xff]
        %v2453 = vld [vmem:[%s20 + $0x208] sm:$0xff]
        %v2454 = vld [vmem:[%s20 + $0x210] sm:$0xff]
        %v2455 = vld [vmem:[%s20 + $0x218] sm:$0xff]
        %v2456 = vld [vmem:[%s20 + $0x220] sm:$0xff]
        %v2457 = vld [vmem:[%s20 + $0x228] sm:$0xff]
        %v2458 = vld [vmem:[%s20 + $0x230] sm:$0xff]
        %v2459 = vld [vmem:[%s20 + $0x238] sm:$0xff]
        %v2460 = vld [vmem:[%s20 + $0x240] sm:$0xff]
        %v2461 = vld [vmem:[%s20 + $0x248] sm:$0xff]
        %v2462 = vld [vmem:[%s20 + $0x250] sm:$0xff]
        %v2463 = vld [vmem:[%s20 + $0x258] sm:$0xff]
        %v2464 = vld [vmem:[%s20 + $0x260] sm:$0xff]
        %v2465 = vld [vmem:[%s20 + $0x268] sm:$0xff]
        %v2466 = vld [vmem:[%s20 + $0x270] sm:$0xff]
        %v2467 = vld [vmem:[%s20 + $0x278] sm:$0xff]
        %v2468 = vld [vmem:[%s20 + $0x280] sm:$0xff]
        %v2469 = vld [vmem:[%s20 + $0x288] sm:$0xff]
        %v2470 = vld [vmem:[%s20 + $0x290] sm:$0xff]
        %v2471 = vld [vmem:[%s20 + $0x298] sm:$0xff]
        %v2472 = vld [vmem:[%s20 + $0x2a0] sm:$0xff]
        %v2473 = vld [vmem:[%s20 + $0x2a8] sm:$0xff]
        %v2474 = vld [vmem:[%s20 + $0x2b0] sm:$0xff]
        %v2475 = vld [vmem:[%s20 + $0x2b8] sm:$0xff]
        %v2476 = vld [vmem:[%s20 + $0x2c0] sm:$0xff]
        %v2477 = vld [vmem:[%s20 + $0x2c8] sm:$0xff]
        %v2478 = vld [vmem:[%s20 + $0x2d0] sm:$0xff]
        %v2479 = vld [vmem:[%s20 + $0x2d8] sm:$0xff]
        %v2480 = vld [vmem:[%s20 + $0x2e0] sm:$0xff]
        %v2481 = vld [vmem:[%s20 + $0x2e8] sm:$0xff]
        %v2482 = vld [vmem:[%s20 + $0x2f0] sm:$0xff]
        %v2483 = vld [vmem:[%s20 + $0x2f8] sm:$0xff]
        %v2484 = vld [vmem:[%s20 + $0x300] sm:$0xff]
        %v2485 = vld [vmem:[%s20 + $0x308] sm:$0xff]
        %v2486 = vld [vmem:[%s20 + $0x310] sm:$0xff]
        %v2487 = vld [vmem:[%s20 + $0x318] sm:$0xff]
        %v2488 = vld [vmem:[%s20 + $0x320] sm:$0xff]
        %v2489 = vld [vmem:[%s20 + $0x328] sm:$0xff]
        %v2490 = vld [vmem:[%s20 + $0x330] sm:$0xff]
        %v2491 = vld [vmem:[%s20 + $0x338] sm:$0xff]
        %v2492 = vld [vmem:[%s20 + $0x340] sm:$0xff]
        %v2493 = vld [vmem:[%s20 + $0x348] sm:$0xff]
        %v2494 = vld [vmem:[%s20 + $0x350] sm:$0xff]
        %v2495 = vld [vmem:[%s20 + $0x358] sm:$0xff]
        %v2496 = vld [vmem:[%s20 + $0x360] sm:$0xff]
        %v2497 = vld [vmem:[%s20 + $0x368] sm:$0xff]
        %v2498 = vld [vmem:[%s20 + $0x370] sm:$0xff]
        %v2499 = vld [vmem:[%s20 + $0x378] sm:$0xff]
        %v2500 = vld [vmem:[%s20 + $0x380] sm:$0xff]
        %v2501 = vld [vmem:[%s20 + $0x388] sm:$0xff]
        %v2502 = vld [vmem:[%s20 + $0x390] sm:$0xff]
        %v2503 = vld [vmem:[%s20 + $0x398] sm:$0xff]
        %v2504 = vld [vmem:[%s20 + $0x3a0] sm:$0xff]
        %v2505 = vld [vmem:[%s20 + $0x3a8] sm:$0xff]
        %v2506 = vld [vmem:[%s20 + $0x3b0] sm:$0xff]
        %v2507 = vld [vmem:[%s20 + $0x3b8] sm:$0xff]
        %v2508 = vld [vmem:[%s20 + $0x3c0] sm:$0xff]
        %v2509 = vld [vmem:[%s20 + $0x3c8] sm:$0xff]
        %v2510 = vld [vmem:[%s20 + $0x3d0] sm:$0xff]
        %v2511 = vld [vmem:[%s20 + $0x3d8] sm:$0xff]
        %v2512 = vld [vmem:[%s20 + $0x3e0] sm:$0xff]
        %v2513 = vld [vmem:[%s20 + $0x3e8] sm:$0xff]
        %v2514 = vld [vmem:[%s20 + $0x3f0] sm:$0xff]
        %v2515 = vld [vmem:[%s20 + $0x3f8] sm:$0xff]
        %v2516 = vld [vmem:[%s21] sm:$0xff]
        %v2518 = vlaneseq
        %v2519 = vshrl.u32 %v2518, 7
        %v2520 = vsub.s32 0, %v2519
        %v2521 = vrot.slane %v2516, %v2520
        %v2522 = vlaneseq
        %v2523 = vshrl.u32 %v2522, 7
        %v2524 = vsub.s32 1, %v2523
        %v2525 = vrot.slane %v2516, %v2524
        %v2526 = vlaneseq
        %v2527 = vshrl.u32 %v2526, 7
        %v2528 = vsub.s32 2, %v2527
        %v2529 = vrot.slane %v2516, %v2528
        %v2530 = vlaneseq
        %v2531 = vshrl.u32 %v2530, 7
        %v2532 = vsub.s32 3, %v2531
        %v2533 = vrot.slane %v2516, %v2532
        %v2534 = vlaneseq
        %v2535 = vshrl.u32 %v2534, 7
        %v2536 = vsub.s32 4, %v2535
        %v2537 = vrot.slane %v2516, %v2536
        %v2538 = vlaneseq
        %v2539 = vshrl.u32 %v2538, 7
        %v2540 = vsub.s32 5, %v2539
        %v2541 = vrot.slane %v2516, %v2540
        %v2542 = vlaneseq
        %v2543 = vshrl.u32 %v2542, 7
        %v2544 = vsub.s32 6, %v2543
        %v2545 = vrot.slane %v2516, %v2544
        %v2546 = vlaneseq
        %v2547 = vshrl.u32 %v2546, 7
        %v2548 = vsub.s32 7, %v2547
        %v2549 = vrot.slane %v2516, %v2548
        %v2686 = vunpack.c.l.b16 %v2388
        %v2687 = vunpack.c.h.b16 %v2388
        %v2688 = vunpack.c.l.b16 %v2389
        %v2689 = vunpack.c.h.b16 %v2389
        %v2690 = vunpack.c.l.b16 %v2390
        %v2691 = vunpack.c.h.b16 %v2390
        %v2692 = vunpack.c.l.b16 %v2391
        %v2693 = vunpack.c.h.b16 %v2391
        %v2694 = vunpack.c.l.b16 %v2392
        %v2695 = vunpack.c.h.b16 %v2392
        %v2696 = vunpack.c.l.b16 %v2393
        %v2697 = vunpack.c.h.b16 %v2393
        %v2698 = vunpack.c.l.b16 %v2394
        %v2699 = vunpack.c.h.b16 %v2394
        %v2700 = vunpack.c.l.b16 %v2395
        %v2701 = vunpack.c.h.b16 %v2395
        %v2702 = vunpack.c.l.b16 %v2396
        %v2703 = vunpack.c.h.b16 %v2396
        %v2704 = vunpack.c.l.b16 %v2397
        %v2705 = vunpack.c.h.b16 %v2397
        %v2706 = vunpack.c.l.b16 %v2398
        %v2707 = vunpack.c.h.b16 %v2398
        %v2708 = vunpack.c.l.b16 %v2399
        %v2709 = vunpack.c.h.b16 %v2399
        %v2710 = vunpack.c.l.b16 %v2400
        %v2711 = vunpack.c.h.b16 %v2400
        %v2712 = vunpack.c.l.b16 %v2401
        %v2713 = vunpack.c.h.b16 %v2401
        %v2714 = vunpack.c.l.b16 %v2402
        %v2715 = vunpack.c.h.b16 %v2402
        %v2716 = vunpack.c.l.b16 %v2403
        %v2717 = vunpack.c.h.b16 %v2403
        %v2718 = vunpack.c.l.b16 %v2404
        %v2719 = vunpack.c.h.b16 %v2404
        %v2720 = vunpack.c.l.b16 %v2405
        %v2721 = vunpack.c.h.b16 %v2405
        %v2722 = vunpack.c.l.b16 %v2406
        %v2723 = vunpack.c.h.b16 %v2406
        %v2724 = vunpack.c.l.b16 %v2407
        %v2725 = vunpack.c.h.b16 %v2407
        %v2726 = vunpack.c.l.b16 %v2408
        %v2727 = vunpack.c.h.b16 %v2408
        %v2728 = vunpack.c.l.b16 %v2409
        %v2729 = vunpack.c.h.b16 %v2409
        %v2730 = vunpack.c.l.b16 %v2410
        %v2731 = vunpack.c.h.b16 %v2410
        %v2732 = vunpack.c.l.b16 %v2411
        %v2733 = vunpack.c.h.b16 %v2411
        %v2734 = vunpack.c.l.b16 %v2412
        %v2735 = vunpack.c.h.b16 %v2412
        %v2736 = vunpack.c.l.b16 %v2413
        %v2737 = vunpack.c.h.b16 %v2413
        %v2738 = vunpack.c.l.b16 %v2414
        %v2739 = vunpack.c.h.b16 %v2414
        %v2740 = vunpack.c.l.b16 %v2415
        %v2741 = vunpack.c.h.b16 %v2415
        %v2742 = vunpack.c.l.b16 %v2416
        %v2743 = vunpack.c.h.b16 %v2416
        %v2744 = vunpack.c.l.b16 %v2417
        %v2745 = vunpack.c.h.b16 %v2417
        %v2746 = vunpack.c.l.b16 %v2418
        %v2747 = vunpack.c.h.b16 %v2418
        %v2748 = vunpack.c.l.b16 %v2419
        %v2749 = vunpack.c.h.b16 %v2419
        %v2750 = vunpack.c.l.b16 %v2420
        %v2751 = vunpack.c.h.b16 %v2420
        %v2752 = vunpack.c.l.b16 %v2421
        %v2753 = vunpack.c.h.b16 %v2421
        %v2754 = vunpack.c.l.b16 %v2422
        %v2755 = vunpack.c.h.b16 %v2422
        %v2756 = vunpack.c.l.b16 %v2423
        %v2757 = vunpack.c.h.b16 %v2423
        %v2758 = vunpack.c.l.b16 %v2424
        %v2759 = vunpack.c.h.b16 %v2424
        %v2760 = vunpack.c.l.b16 %v2425
        %v2761 = vunpack.c.h.b16 %v2425
        %v2762 = vunpack.c.l.b16 %v2426
        %v2763 = vunpack.c.h.b16 %v2426
        %v2764 = vunpack.c.l.b16 %v2427
        %v2765 = vunpack.c.h.b16 %v2427
        %v2766 = vunpack.c.l.b16 %v2428
        %v2767 = vunpack.c.h.b16 %v2428
        %v2768 = vunpack.c.l.b16 %v2429
        %v2769 = vunpack.c.h.b16 %v2429
        %v2770 = vunpack.c.l.b16 %v2430
        %v2771 = vunpack.c.h.b16 %v2430
        %v2772 = vunpack.c.l.b16 %v2431
        %v2773 = vunpack.c.h.b16 %v2431
        %v2774 = vunpack.c.l.b16 %v2432
        %v2775 = vunpack.c.h.b16 %v2432
        %v2776 = vunpack.c.l.b16 %v2433
        %v2777 = vunpack.c.h.b16 %v2433
        %v2778 = vunpack.c.l.b16 %v2434
        %v2779 = vunpack.c.h.b16 %v2434
        %v2780 = vunpack.c.l.b16 %v2435
        %v2781 = vunpack.c.h.b16 %v2435
        %v2782 = vunpack.c.l.b16 %v2436
        %v2783 = vunpack.c.h.b16 %v2436
        %v2784 = vunpack.c.l.b16 %v2437
        %v2785 = vunpack.c.h.b16 %v2437
        %v2786 = vunpack.c.l.b16 %v2438
        %v2787 = vunpack.c.h.b16 %v2438
        %v2788 = vunpack.c.l.b16 %v2439
        %v2789 = vunpack.c.h.b16 %v2439
        %v2790 = vunpack.c.l.b16 %v2440
        %v2791 = vunpack.c.h.b16 %v2440
        %v2792 = vunpack.c.l.b16 %v2441
        %v2793 = vunpack.c.h.b16 %v2441
        %v2794 = vunpack.c.l.b16 %v2442
        %v2795 = vunpack.c.h.b16 %v2442
        %v2796 = vunpack.c.l.b16 %v2443
        %v2797 = vunpack.c.h.b16 %v2443
        %v2798 = vunpack.c.l.b16 %v2444
        %v2799 = vunpack.c.h.b16 %v2444
        %v2800 = vunpack.c.l.b16 %v2445
        %v2801 = vunpack.c.h.b16 %v2445
        %v2802 = vunpack.c.l.b16 %v2446
        %v2803 = vunpack.c.h.b16 %v2446
        %v2804 = vunpack.c.l.b16 %v2447
        %v2805 = vunpack.c.h.b16 %v2447
        %v2806 = vunpack.c.l.b16 %v2448
        %v2807 = vunpack.c.h.b16 %v2448
        %v2808 = vunpack.c.l.b16 %v2449
        %v2809 = vunpack.c.h.b16 %v2449
        %v2810 = vunpack.c.l.b16 %v2450
        %v2811 = vunpack.c.h.b16 %v2450
        %v2812 = vunpack.c.l.b16 %v2451
        %v2813 = vunpack.c.h.b16 %v2451
        %v2814 = vunpack.c.l.b16 %v2452
        %v2815 = vunpack.c.h.b16 %v2452
        %v2816 = vunpack.c.l.b16 %v2453
        %v2817 = vunpack.c.h.b16 %v2453
        %v2818 = vunpack.c.l.b16 %v2454
        %v2819 = vunpack.c.h.b16 %v2454
        %v2820 = vunpack.c.l.b16 %v2455
        %v2821 = vunpack.c.h.b16 %v2455
        %v2822 = vunpack.c.l.b16 %v2456
        %v2823 = vunpack.c.h.b16 %v2456
        %v2824 = vunpack.c.l.b16 %v2457
        %v2825 = vunpack.c.h.b16 %v2457
        %v2826 = vunpack.c.l.b16 %v2458
        %v2827 = vunpack.c.h.b16 %v2458
        %v2828 = vunpack.c.l.b16 %v2459
        %v2829 = vunpack.c.h.b16 %v2459
        %v2830 = vunpack.c.l.b16 %v2460
        %v2831 = vunpack.c.h.b16 %v2460
        %v2832 = vunpack.c.l.b16 %v2461
        %v2833 = vunpack.c.h.b16 %v2461
        %v2834 = vunpack.c.l.b16 %v2462
        %v2835 = vunpack.c.h.b16 %v2462
        %v2836 = vunpack.c.l.b16 %v2463
        %v2837 = vunpack.c.h.b16 %v2463
        %v2838 = vunpack.c.l.b16 %v2464
        %v2839 = vunpack.c.h.b16 %v2464
        %v2840 = vunpack.c.l.b16 %v2465
        %v2841 = vunpack.c.h.b16 %v2465
        %v2842 = vunpack.c.l.b16 %v2466
        %v2843 = vunpack.c.h.b16 %v2466
        %v2844 = vunpack.c.l.b16 %v2467
        %v2845 = vunpack.c.h.b16 %v2467
        %v2846 = vunpack.c.l.b16 %v2468
        %v2847 = vunpack.c.h.b16 %v2468
        %v2848 = vunpack.c.l.b16 %v2469
        %v2849 = vunpack.c.h.b16 %v2469
        %v2850 = vunpack.c.l.b16 %v2470
        %v2851 = vunpack.c.h.b16 %v2470
        %v2852 = vunpack.c.l.b16 %v2471
        %v2853 = vunpack.c.h.b16 %v2471
        %v2854 = vunpack.c.l.b16 %v2472
        %v2855 = vunpack.c.h.b16 %v2472
        %v2856 = vunpack.c.l.b16 %v2473
        %v2857 = vunpack.c.h.b16 %v2473
        %v2858 = vunpack.c.l.b16 %v2474
        %v2859 = vunpack.c.h.b16 %v2474
        %v2860 = vunpack.c.l.b16 %v2475
        %v2861 = vunpack.c.h.b16 %v2475
        %v2862 = vunpack.c.l.b16 %v2476
        %v2863 = vunpack.c.h.b16 %v2476
        %v2864 = vunpack.c.l.b16 %v2477
        %v2865 = vunpack.c.h.b16 %v2477
        %v2866 = vunpack.c.l.b16 %v2478
        %v2867 = vunpack.c.h.b16 %v2478
        %v2868 = vunpack.c.l.b16 %v2479
        %v2869 = vunpack.c.h.b16 %v2479
        %v2870 = vunpack.c.l.b16 %v2480
        %v2871 = vunpack.c.h.b16 %v2480
        %v2872 = vunpack.c.l.b16 %v2481
        %v2873 = vunpack.c.h.b16 %v2481
        %v2874 = vunpack.c.l.b16 %v2482
        %v2875 = vunpack.c.h.b16 %v2482
        %v2876 = vunpack.c.l.b16 %v2483
        %v2877 = vunpack.c.h.b16 %v2483
        %v2878 = vunpack.c.l.b16 %v2484
        %v2879 = vunpack.c.h.b16 %v2484
        %v2880 = vunpack.c.l.b16 %v2485
        %v2881 = vunpack.c.h.b16 %v2485
        %v2882 = vunpack.c.l.b16 %v2486
        %v2883 = vunpack.c.h.b16 %v2486
        %v2884 = vunpack.c.l.b16 %v2487
        %v2885 = vunpack.c.h.b16 %v2487
        %v2886 = vunpack.c.l.b16 %v2488
        %v2887 = vunpack.c.h.b16 %v2488
        %v2888 = vunpack.c.l.b16 %v2489
        %v2889 = vunpack.c.h.b16 %v2489
        %v2890 = vunpack.c.l.b16 %v2490
        %v2891 = vunpack.c.h.b16 %v2490
        %v2892 = vunpack.c.l.b16 %v2491
        %v2893 = vunpack.c.h.b16 %v2491
        %v2894 = vunpack.c.l.b16 %v2492
        %v2895 = vunpack.c.h.b16 %v2492
        %v2896 = vunpack.c.l.b16 %v2493
        %v2897 = vunpack.c.h.b16 %v2493
        %v2898 = vunpack.c.l.b16 %v2494
        %v2899 = vunpack.c.h.b16 %v2494
        %v2900 = vunpack.c.l.b16 %v2495
        %v2901 = vunpack.c.h.b16 %v2495
        %v2902 = vunpack.c.l.b16 %v2496
        %v2903 = vunpack.c.h.b16 %v2496
        %v2904 = vunpack.c.l.b16 %v2497
        %v2905 = vunpack.c.h.b16 %v2497
        %v2906 = vunpack.c.l.b16 %v2498
        %v2907 = vunpack.c.h.b16 %v2498
        %v2908 = vunpack.c.l.b16 %v2499
        %v2909 = vunpack.c.h.b16 %v2499
        %v2910 = vunpack.c.l.b16 %v2500
        %v2911 = vunpack.c.h.b16 %v2500
        %v2912 = vunpack.c.l.b16 %v2501
        %v2913 = vunpack.c.h.b16 %v2501
        %v2914 = vunpack.c.l.b16 %v2502
        %v2915 = vunpack.c.h.b16 %v2502
        %v2916 = vunpack.c.l.b16 %v2503
        %v2917 = vunpack.c.h.b16 %v2503
        %v2918 = vunpack.c.l.b16 %v2504
        %v2919 = vunpack.c.h.b16 %v2504
        %v2920 = vunpack.c.l.b16 %v2505
        %v2921 = vunpack.c.h.b16 %v2505
        %v2922 = vunpack.c.l.b16 %v2506
        %v2923 = vunpack.c.h.b16 %v2506
        %v2924 = vunpack.c.l.b16 %v2507
        %v2925 = vunpack.c.h.b16 %v2507
        %v2926 = vunpack.c.l.b16 %v2508
        %v2927 = vunpack.c.h.b16 %v2508
        %v2928 = vunpack.c.l.b16 %v2509
        %v2929 = vunpack.c.h.b16 %v2509
        %v2930 = vunpack.c.l.b16 %v2510
        %v2931 = vunpack.c.h.b16 %v2510
        %v2932 = vunpack.c.l.b16 %v2511
        %v2933 = vunpack.c.h.b16 %v2511
        %v2934 = vunpack.c.l.b16 %v2512
        %v2935 = vunpack.c.h.b16 %v2512
        %v2936 = vunpack.c.l.b16 %v2513
        %v2937 = vunpack.c.h.b16 %v2513
        %v2938 = vunpack.c.l.b16 %v2514
        %v2939 = vunpack.c.h.b16 %v2514
        %v2940 = vunpack.c.l.b16 %v2515
        %v2941 = vunpack.c.h.b16 %v2515
        %v2942 = vpack.c.b16 %v2694, %v2686
        %v2943 = vpack.c.b16 %v2695, %v2687
        %v2944 = vpack.c.b16 %v2696, %v2688
        %v2945 = vpack.c.b16 %v2697, %v2689
        %v2946 = vpack.c.b16 %v2698, %v2690
        %v2947 = vpack.c.b16 %v2699, %v2691
        %v2948 = vpack.c.b16 %v2700, %v2692
        %v2949 = vpack.c.b16 %v2701, %v2693
        %v2950 = vpack.c.b16 %v2710, %v2702
        %v2951 = vpack.c.b16 %v2711, %v2703
        %v2952 = vpack.c.b16 %v2712, %v2704
        %v2953 = vpack.c.b16 %v2713, %v2705
        %v2954 = vpack.c.b16 %v2714, %v2706
        %v2955 = vpack.c.b16 %v2715, %v2707
        %v2956 = vpack.c.b16 %v2716, %v2708
        %v2957 = vpack.c.b16 %v2717, %v2709
        %v2958 = vpack.c.b16 %v2726, %v2718
        %v2959 = vpack.c.b16 %v2727, %v2719
        %v2960 = vpack.c.b16 %v2728, %v2720
        %v2961 = vpack.c.b16 %v2729, %v2721
        %v2962 = vpack.c.b16 %v2730, %v2722
        %v2963 = vpack.c.b16 %v2731, %v2723
        %v2964 = vpack.c.b16 %v2732, %v2724
        %v2965 = vpack.c.b16 %v2733, %v2725
        %v2966 = vpack.c.b16 %v2742, %v2734
        %v2967 = vpack.c.b16 %v2743, %v2735
        %v2968 = vpack.c.b16 %v2744, %v2736
        %v2969 = vpack.c.b16 %v2745, %v2737
        %v2970 = vpack.c.b16 %v2746, %v2738
        %v2971 = vpack.c.b16 %v2747, %v2739
        %v2972 = vpack.c.b16 %v2748, %v2740
        %v2973 = vpack.c.b16 %v2749, %v2741
        %v2974 = vpack.c.b16 %v2758, %v2750
        %v2975 = vpack.c.b16 %v2759, %v2751
        %v2976 = vpack.c.b16 %v2760, %v2752
        %v2977 = vpack.c.b16 %v2761, %v2753
        %v2978 = vpack.c.b16 %v2762, %v2754
        %v2979 = vpack.c.b16 %v2763, %v2755
        %v2980 = vpack.c.b16 %v2764, %v2756
        %v2981 = vpack.c.b16 %v2765, %v2757
        %v2982 = vpack.c.b16 %v2774, %v2766
        %v2983 = vpack.c.b16 %v2775, %v2767
        %v2984 = vpack.c.b16 %v2776, %v2768
        %v2985 = vpack.c.b16 %v2777, %v2769
        %v2986 = vpack.c.b16 %v2778, %v2770
        %v2987 = vpack.c.b16 %v2779, %v2771
        %v2988 = vpack.c.b16 %v2780, %v2772
        %v2989 = vpack.c.b16 %v2781, %v2773
        %v2990 = vpack.c.b16 %v2790, %v2782
        %v2991 = vpack.c.b16 %v2791, %v2783
        %v2992 = vpack.c.b16 %v2792, %v2784
        %v2993 = vpack.c.b16 %v2793, %v2785
        %v2994 = vpack.c.b16 %v2794, %v2786
        %v2995 = vpack.c.b16 %v2795, %v2787
        %v2996 = vpack.c.b16 %v2796, %v2788
        %v2997 = vpack.c.b16 %v2797, %v2789
        %v2998 = vpack.c.b16 %v2806, %v2798
        %v2999 = vpack.c.b16 %v2807, %v2799
        %v3000 = vpack.c.b16 %v2808, %v2800
        %v3001 = vpack.c.b16 %v2809, %v2801
        %v3002 = vpack.c.b16 %v2810, %v2802
        %v3003 = vpack.c.b16 %v2811, %v2803
        %v3004 = vpack.c.b16 %v2812, %v2804
        %v3005 = vpack.c.b16 %v2813, %v2805
        %v3006 = vpack.c.b16 %v2822, %v2814
        %v3007 = vpack.c.b16 %v2823, %v2815
        %v3008 = vpack.c.b16 %v2824, %v2816
        %v3009 = vpack.c.b16 %v2825, %v2817
        %v3010 = vpack.c.b16 %v2826, %v2818
        %v3011 = vpack.c.b16 %v2827, %v2819
        %v3012 = vpack.c.b16 %v2828, %v2820
        %v3013 = vpack.c.b16 %v2829, %v2821
        %v3014 = vpack.c.b16 %v2838, %v2830
        %v3015 = vpack.c.b16 %v2839, %v2831
        %v3016 = vpack.c.b16 %v2840, %v2832
        %v3017 = vpack.c.b16 %v2841, %v2833
        %v3018 = vpack.c.b16 %v2842, %v2834
        %v3019 = vpack.c.b16 %v2843, %v2835
        %v3020 = vpack.c.b16 %v2844, %v2836
        %v3021 = vpack.c.b16 %v2845, %v2837
        %v3022 = vpack.c.b16 %v2854, %v2846
        %v3023 = vpack.c.b16 %v2855, %v2847
        %v3024 = vpack.c.b16 %v2856, %v2848
        %v3025 = vpack.c.b16 %v2857, %v2849
        %v3026 = vpack.c.b16 %v2858, %v2850
        %v3027 = vpack.c.b16 %v2859, %v2851
        %v3028 = vpack.c.b16 %v2860, %v2852
        %v3029 = vpack.c.b16 %v2861, %v2853
        %v3030 = vpack.c.b16 %v2870, %v2862
        %v3031 = vpack.c.b16 %v2871, %v2863
        %v3032 = vpack.c.b16 %v2872, %v2864
        %v3033 = vpack.c.b16 %v2873, %v2865
        %v3034 = vpack.c.b16 %v2874, %v2866
        %v3035 = vpack.c.b16 %v2875, %v2867
        %v3036 = vpack.c.b16 %v2876, %v2868
        %v3037 = vpack.c.b16 %v2877, %v2869
        %v3038 = vpack.c.b16 %v2886, %v2878
        %v3039 = vpack.c.b16 %v2887, %v2879
        %v3040 = vpack.c.b16 %v2888, %v2880
        %v3041 = vpack.c.b16 %v2889, %v2881
        %v3042 = vpack.c.b16 %v2890, %v2882
        %v3043 = vpack.c.b16 %v2891, %v2883
        %v3044 = vpack.c.b16 %v2892, %v2884
        %v3045 = vpack.c.b16 %v2893, %v2885
        %v3046 = vpack.c.b16 %v2902, %v2894
        %v3047 = vpack.c.b16 %v2903, %v2895
        %v3048 = vpack.c.b16 %v2904, %v2896
        %v3049 = vpack.c.b16 %v2905, %v2897
        %v3050 = vpack.c.b16 %v2906, %v2898
        %v3051 = vpack.c.b16 %v2907, %v2899
        %v3052 = vpack.c.b16 %v2908, %v2900
        %v3053 = vpack.c.b16 %v2909, %v2901
        %v3054 = vpack.c.b16 %v2918, %v2910
        %v3055 = vpack.c.b16 %v2919, %v2911
        %v3056 = vpack.c.b16 %v2920, %v2912
        %v3057 = vpack.c.b16 %v2921, %v2913
        %v3058 = vpack.c.b16 %v2922, %v2914
        %v3059 = vpack.c.b16 %v2923, %v2915
        %v3060 = vpack.c.b16 %v2924, %v2916
        %v3061 = vpack.c.b16 %v2925, %v2917
        %v3062 = vpack.c.b16 %v2934, %v2926
        %v3063 = vpack.c.b16 %v2935, %v2927
        %v3064 = vpack.c.b16 %v2936, %v2928
        %v3065 = vpack.c.b16 %v2937, %v2929
        %v3066 = vpack.c.b16 %v2938, %v2930
        %v3067 = vpack.c.b16 %v2939, %v2931
        %v3068 = vpack.c.b16 %v2940, %v2932
        %v3069 = vpack.c.b16 %v2941, %v2933
        %3198 = vmatprep.subr.bf16.mxu0 %v2943
        %3199 = vmatpush1.bf16.msra.mxu0 %v2942
        %3200 = vmatprep.subr.bf16.mxu0 %v2951
        %3201 = vmatpush1.bf16.msra.mxu0 %v2950
        %3202 = vmatprep.subr.bf16.mxu0 %v2959
        %3203 = vmatpush1.bf16.msra.mxu0 %v2958
        %3204 = vmatprep.subr.bf16.mxu0 %v2967
        %3205 = vmatpush1.bf16.msra.mxu0 %v2966
        %3206 = vmatprep.subr.bf16.mxu0 %v2975
        %3207 = vmatpush1.bf16.msra.mxu0 %v2974
        %3208 = vmatprep.subr.bf16.mxu0 %v2983
        %3209 = vmatpush1.bf16.msra.mxu0 %v2982
        %3210 = vmatprep.subr.bf16.mxu0 %v2991
        %3211 = vmatpush1.bf16.msra.mxu0 %v2990
        %3212 = vmatprep.subr.bf16.mxu0 %v2999
        %3213 = vmatpush1.bf16.msra.mxu0 %v2998
        %3214 = vmatprep.subr.bf16.mxu0 %v3007
        %3215 = vmatpush1.bf16.msra.mxu0 %v3006
        %3216 = vmatprep.subr.bf16.mxu0 %v3015
        %3217 = vmatpush1.bf16.msra.mxu0 %v3014
        %3218 = vmatprep.subr.bf16.mxu0 %v3023
        %3219 = vmatpush1.bf16.msra.mxu0 %v3022
        %3220 = vmatprep.subr.bf16.mxu0 %v3031
        %3221 = vmatpush1.bf16.msra.mxu0 %v3030
        %3222 = vmatprep.subr.bf16.mxu0 %v3039
        %3223 = vmatpush1.bf16.msra.mxu0 %v3038
        %3224 = vmatprep.subr.bf16.mxu0 %v3047
        %3225 = vmatpush1.bf16.msra.mxu0 %v3046
        %3226 = vmatprep.subr.bf16.mxu0 %v3055
        %3227 = vmatpush1.bf16.msra.mxu0 %v3054
        %3228 = vmatprep.subr.bf16.mxu0 %v3063
        %3229 = vmatpush1.bf16.msra.mxu0 %v3062
        %3230 = vmatprep.mubr.bf16.mxu0 %v2387
        %3231 = vmatmul.mubr.bf16.gmra.mrb[0].mxu0 %v2386
        %v3232 = vpop.f32.mrb[0].mxu0
        %v3233 = vadd.f32 %v2521, %v3232
        %v3234 = vpop.f32.mrb[0].mxu0
        %v3235 = vadd.f32 %v2525, %v3234
        %v3236 = vpop.f32.mrb[0].mxu0
        %v3237 = vpop.f32.mrb[0].mxu0
        %3238 = vdwg.mxu0
        %3239 = vmatprep.subr.bf16.mxu0 %v2945
        %3240 = vmatpush1.bf16.msra.mxu0 %v2944
        %3241 = vmatprep.subr.bf16.mxu0 %v2953
        %3242 = vmatpush1.bf16.msra.mxu0 %v2952
        %3243 = vmatprep.subr.bf16.mxu0 %v2961
        %3244 = vmatpush1.bf16.msra.mxu0 %v2960
        %3245 = vmatprep.subr.bf16.mxu0 %v2969
        %3246 = vmatpush1.bf16.msra.mxu0 %v2968
        %3247 = vmatprep.subr.bf16.mxu0 %v2977
        %3248 = vmatpush1.bf16.msra.mxu0 %v2976
        %3249 = vmatprep.subr.bf16.mxu0 %v2985
        %3250 = vmatpush1.bf16.msra.mxu0 %v2984
        %3251 = vmatprep.subr.bf16.mxu0 %v2993
        %3252 = vmatpush1.bf16.msra.mxu0 %v2992
        %3253 = vmatprep.subr.bf16.mxu0 %v3001
        %3254 = vmatpush1.bf16.msra.mxu0 %v3000
        %3255 = vmatprep.subr.bf16.mxu0 %v3009
        %3256 = vmatpush1.bf16.msra.mxu0 %v3008
        %3257 = vmatprep.subr.bf16.mxu0 %v3017
        %3258 = vmatpush1.bf16.msra.mxu0 %v3016
        %3259 = vmatprep.subr.bf16.mxu0 %v3025
        %3260 = vmatpush1.bf16.msra.mxu0 %v3024
        %3261 = vmatprep.subr.bf16.mxu0 %v3033
        %3262 = vmatpush1.bf16.msra.mxu0 %v3032
        %3263 = vmatprep.subr.bf16.mxu0 %v3041
        %3264 = vmatpush1.bf16.msra.mxu0 %v3040
        %3265 = vmatprep.subr.bf16.mxu0 %v3049
        %3266 = vmatpush1.bf16.msra.mxu0 %v3048
        %3267 = vmatprep.subr.bf16.mxu0 %v3057
        %3268 = vmatpush1.bf16.msra.mxu0 %v3056
        %3269 = vmatprep.subr.bf16.mxu0 %v3065
        %3270 = vmatpush1.bf16.msra.mxu0 %v3064
        %3271 = vmatprep.mubr.bf16.mxu0 %v2387
        %3272 = vmatmul.mubr.bf16.gmra.mrb[0].mxu0 %v2386
        %v3273 = vpop.f32.mrb[0].mxu0
        %v3274 = vadd.f32 %v2529, %v3273
        %v3275 = vpop.f32.mrb[0].mxu0
        %v3276 = vadd.f32 %v2533, %v3275
        %v3277 = vpop.f32.mrb[0].mxu0
        %v3278 = vpop.f32.mrb[0].mxu0
        %3279 = vdwg.mxu0
        %3280 = vmatprep.subr.bf16.mxu0 %v2947
        %3281 = vmatpush1.bf16.msra.mxu0 %v2946
        %3282 = vmatprep.subr.bf16.mxu0 %v2955
        %3283 = vmatpush1.bf16.msra.mxu0 %v2954
        %3284 = vmatprep.subr.bf16.mxu0 %v2963
        %3285 = vmatpush1.bf16.msra.mxu0 %v2962
        %3286 = vmatprep.subr.bf16.mxu0 %v2971
        %3287 = vmatpush1.bf16.msra.mxu0 %v2970
        %3288 = vmatprep.subr.bf16.mxu0 %v2979
        %3289 = vmatpush1.bf16.msra.mxu0 %v2978
        %3290 = vmatprep.subr.bf16.mxu0 %v2987
        %3291 = vmatpush1.bf16.msra.mxu0 %v2986
        %3292 = vmatprep.subr.bf16.mxu0 %v2995
        %3293 = vmatpush1.bf16.msra.mxu0 %v2994
        %3294 = vmatprep.subr.bf16.mxu0 %v3003
        %3295 = vmatpush1.bf16.msra.mxu0 %v3002
        %3296 = vmatprep.subr.bf16.mxu0 %v3011
        %3297 = vmatpush1.bf16.msra.mxu0 %v3010
        %3298 = vmatprep.subr.bf16.mxu0 %v3019
        %3299 = vmatpush1.bf16.msra.mxu0 %v3018
        %3300 = vmatprep.subr.bf16.mxu0 %v3027
        %3301 = vmatpush1.bf16.msra.mxu0 %v3026
        %3302 = vmatprep.subr.bf16.mxu0 %v3035
        %3303 = vmatpush1.bf16.msra.mxu0 %v3034
        %3304 = vmatprep.subr.bf16.mxu0 %v3043
        %3305 = vmatpush1.bf16.msra.mxu0 %v3042
        %3306 = vmatprep.subr.bf16.mxu0 %v3051
        %3307 = vmatpush1.bf16.msra.mxu0 %v3050
        %3308 = vmatprep.subr.bf16.mxu0 %v3059
        %3309 = vmatpush1.bf16.msra.mxu0 %v3058
        %3310 = vmatprep.subr.bf16.mxu0 %v3067
        %3311 = vmatpush1.bf16.msra.mxu0 %v3066
        %3312 = vmatprep.mubr.bf16.mxu0 %v2387
        %3313 = vmatmul.mubr.bf16.gmra.mrb[0].mxu0 %v2386
        %v3314 = vpop.f32.mrb[0].mxu0
        %v3315 = vadd.f32 %v2537, %v3314
        %v3316 = vpop.f32.mrb[0].mxu0
        %v3317 = vadd.f32 %v2541, %v3316
        %v3318 = vpop.f32.mrb[0].mxu0
        %v3319 = vpop.f32.mrb[0].mxu0
        %3320 = vdwg.mxu0
        %3321 = vmatprep.subr.bf16.mxu0 %v2949
        %3322 = vmatpush1.bf16.msra.mxu0 %v2948
        %3323 = vmatprep.subr.bf16.mxu0 %v2957
        %3324 = vmatpush1.bf16.msra.mxu0 %v2956
        %3325 = vmatprep.subr.bf16.mxu0 %v2965
        %3326 = vmatpush1.bf16.msra.mxu0 %v2964
        %3327 = vmatprep.subr.bf16.mxu0 %v2973
        %3328 = vmatpush1.bf16.msra.mxu0 %v2972
        %3329 = vmatprep.subr.bf16.mxu0 %v2981
        %3330 = vmatpush1.bf16.msra.mxu0 %v2980
        %3331 = vmatprep.subr.bf16.mxu0 %v2989
        %3332 = vmatpush1.bf16.msra.mxu0 %v2988
        %3333 = vmatprep.subr.bf16.mxu0 %v2997
        %3334 = vmatpush1.bf16.msra.mxu0 %v2996
        %3335 = vmatprep.subr.bf16.mxu0 %v3005
        %3336 = vmatpush1.bf16.msra.mxu0 %v3004
        %3337 = vmatprep.subr.bf16.mxu0 %v3013
        %3338 = vmatpush1.bf16.msra.mxu0 %v3012
        %3339 = vmatprep.subr.bf16.mxu0 %v3021
        %3340 = vmatpush1.bf16.msra.mxu0 %v3020
        %3341 = vmatprep.subr.bf16.mxu0 %v3029
        %3342 = vmatpush1.bf16.msra.mxu0 %v3028
        %3343 = vmatprep.subr.bf16.mxu0 %v3037
        %3344 = vmatpush1.bf16.msra.mxu0 %v3036
        %3345 = vmatprep.subr.bf16.mxu0 %v3045
        %3346 = vmatpush1.bf16.msra.mxu0 %v3044
        %3347 = vmatprep.subr.bf16.mxu0 %v3053
        %3348 = vmatpush1.bf16.msra.mxu0 %v3052
        %3349 = vmatprep.subr.bf16.mxu0 %v3061
        %3350 = vmatpush1.bf16.msra.mxu0 %v3060
        %3351 = vmatprep.subr.bf16.mxu0 %v3069
        %3352 = vmatpush1.bf16.msra.mxu0 %v3068
        %3353 = vmatprep.mubr.bf16.mxu0 %v2387
        %3354 = vmatmul.mubr.bf16.gmra.mrb[0].mxu0 %v2386
        %v3355 = vpop.f32.mrb[0].mxu0
        %v3356 = vadd.f32 %v2545, %v3355
        %v3357 = vpop.f32.mrb[0].mxu0
        %v3358 = vadd.f32 %v2549, %v3357
        %v3359 = vpop.f32.mrb[0].mxu0
        %v3360 = vpop.f32.mrb[0].mxu0
        %3361 = vdwg.mxu0
        %v3362 = vmul.f32 %v3233, 0.5
        %v3363 = vmul.f32 %v3235, 0.5
        %v3364 = vmul.f32 %v3274, 0.5
        %v3365 = vmul.f32 %v3276, 0.5
        %v3366 = vmul.f32 %v3315, 0.5
        %v3367 = vmul.f32 %v3317, 0.5
        %v3368 = vmul.f32 %v3356, 0.5
        %v3369 = vmul.f32 %v3358, 0.5
        %v3370 = vmul.f32 %v3233, 0.044715
        %v3371 = vmul.f32 %v3235, 0.044715
        %v3372 = vmul.f32 %v3274, 0.044715
        %v3373 = vmul.f32 %v3276, 0.044715
        %v3374 = vmul.f32 %v3315, 0.044715
        %v3375 = vmul.f32 %v3317, 0.044715
        %v3376 = vmul.f32 %v3356, 0.044715
        %v3377 = vmul.f32 %v3358, 0.044715
        %v3378 = vmul.f32 %v3370, %v3233
        %v3379 = vmul.f32 %v3371, %v3235
        %v3380 = vmul.f32 %v3372, %v3274
        %v3381 = vmul.f32 %v3373, %v3276
        %v3382 = vmul.f32 %v3374, %v3315
        %v3383 = vmul.f32 %v3375, %v3317
        %v3384 = vmul.f32 %v3376, %v3356
        %v3385 = vmul.f32 %v3377, %v3358
        %v3386 = vmul.f32 %v3378, %v3233
        %v3387 = vmul.f32 %v3379, %v3235
        %v3388 = vmul.f32 %v3380, %v3274
        %v3389 = vmul.f32 %v3381, %v3276
        %v3390 = vmul.f32 %v3382, %v3315
        %v3391 = vmul.f32 %v3383, %v3317
        %v3392 = vmul.f32 %v3384, %v3356
        %v3393 = vmul.f32 %v3385, %v3358
        %v3394 = vadd.f32 %v3233, %v3386
        %v3395 = vadd.f32 %v3235, %v3387
        %v3396 = vadd.f32 %v3274, %v3388
        %v3397 = vadd.f32 %v3276, %v3389
        %v3398 = vadd.f32 %v3315, %v3390
        %v3399 = vadd.f32 %v3317, %v3391
        %v3400 = vadd.f32 %v3356, %v3392
        %v3401 = vadd.f32 %v3358, %v3393
        %v3402 = vmul.f32 %v3394, 0.7978846
        %v3403 = vmul.f32 %v3395, 0.7978846
        %v3404 = vmul.f32 %v3396, 0.7978846
        %v3405 = vmul.f32 %v3397, 0.7978846
        %v3406 = vmul.f32 %v3398, 0.7978846
        %v3407 = vmul.f32 %v3399, 0.7978846
        %v3408 = vmul.f32 %v3400, 0.7978846
        %v3409 = vmul.f32 %v3401, 0.7978846
        %v3410 = vtanh.pop %v3402
        %v3411 = vtanh.pop %v3403
        %v3412 = vtanh.pop %v3404
        %v3413 = vtanh.pop %v3405
        %v3414 = vtanh.pop %v3406
        %v3415 = vtanh.pop %v3407
        %v3416 = vtanh.pop %v3408
        %v3417 = vtanh.pop %v3409
        %v3418 = vadd.f32 %v3410, 1.0
        %v3419 = vadd.f32 %v3411, 1.0
        %v3420 = vadd.f32 %v3412, 1.0
        %v3421 = vadd.f32 %v3413, 1.0
        %v3422 = vadd.f32 %v3414, 1.0
        %v3423 = vadd.f32 %v3415, 1.0
        %v3424 = vadd.f32 %v3416, 1.0
        %v3425 = vadd.f32 %v3417, 1.0
        %v3426 = vmul.f32 %v3362, %v3418
        %v3427 = vmul.f32 %v3363, %v3419
        %v3428 = vmul.f32 %v3364, %v3420
        %v3429 = vmul.f32 %v3365, %v3421
        %v3430 = vmul.f32 %v3366, %v3422
        %v3431 = vmul.f32 %v3367, %v3423
        %v3432 = vmul.f32 %v3368, %v3424
        %v3433 = vmul.f32 %v3369, %v3425
        %v3434 = vpack.c.bf16 %v3426, %v3426
        %v3435 = vpack.c.bf16 %v3427, %v3427
        %v3436 = vpack.c.bf16 %v3428, %v3428
        %v3437 = vpack.c.bf16 %v3429, %v3429
        %v3438 = vpack.c.bf16 %v3430, %v3430
        %v3439 = vpack.c.bf16 %v3431, %v3431
        %v3440 = vpack.c.bf16 %v3432, %v3432
        %v3441 = vpack.c.bf16 %v3433, %v3433
        %v3442 = vld [vmem:[%s22] sm:$0xff]
        %v3443 = vld [vmem:[%s22 + $0x8] sm:$0xff]
        %v3444 = vld [vmem:[%s22 + $0x10] sm:$0xff]
        %v3445 = vld [vmem:[%s22 + $0x18] sm:$0xff]
        %v3446 = vld [vmem:[%s22 + $0x20] sm:$0xff]
        %v3447 = vld [vmem:[%s22 + $0x28] sm:$0xff]
        %v3448 = vld [vmem:[%s22 + $0x30] sm:$0xff]
        %v3449 = vld [vmem:[%s22 + $0x38] sm:$0xff]
        %v3450 = vld [vmem:[%s22 + $0x40] sm:$0xff]
        %v3451 = vld [vmem:[%s22 + $0x48] sm:$0xff]
        %v3452 = vld [vmem:[%s22 + $0x50] sm:$0xff]
        %v3453 = vld [vmem:[%s22 + $0x58] sm:$0xff]
        %v3454 = vld [vmem:[%s22 + $0x60] sm:$0xff]
        %v3455 = vld [vmem:[%s22 + $0x68] sm:$0xff]
        %v3456 = vld [vmem:[%s22 + $0x70] sm:$0xff]
        %v3457 = vld [vmem:[%s22 + $0x78] sm:$0xff]
        %v3458 = vld [vmem:[%s22 + $0x80] sm:$0xff]
        %v3459 = vld [vmem:[%s22 + $0x88] sm:$0xff]
        %v3460 = vld [vmem:[%s22 + $0x90] sm:$0xff]
        %v3461 = vld [vmem:[%s22 + $0x98] sm:$0xff]
        %v3462 = vld [vmem:[%s22 + $0xa0] sm:$0xff]
        %v3463 = vld [vmem:[%s22 + $0xa8] sm:$0xff]
        %v3464 = vld [vmem:[%s22 + $0xb0] sm:$0xff]
        %v3465 = vld [vmem:[%s22 + $0xb8] sm:$0xff]
        %v3466 = vld [vmem:[%s22 + $0xc0] sm:$0xff]
        %v3467 = vld [vmem:[%s22 + $0xc8] sm:$0xff]
        %v3468 = vld [vmem:[%s22 + $0xd0] sm:$0xff]
        %v3469 = vld [vmem:[%s22 + $0xd8] sm:$0xff]
        %v3470 = vld [vmem:[%s22 + $0xe0] sm:$0xff]
        %v3471 = vld [vmem:[%s22 + $0xe8] sm:$0xff]
        %v3472 = vld [vmem:[%s22 + $0xf0] sm:$0xff]
        %v3473 = vld [vmem:[%s22 + $0xf8] sm:$0xff]
        %v3474 = vld [vmem:[%s22 + $0x100] sm:$0xff]
        %v3475 = vld [vmem:[%s22 + $0x108] sm:$0xff]
        %v3476 = vld [vmem:[%s22 + $0x110] sm:$0xff]
        %v3477 = vld [vmem:[%s22 + $0x118] sm:$0xff]
        %v3478 = vld [vmem:[%s22 + $0x120] sm:$0xff]
        %v3479 = vld [vmem:[%s22 + $0x128] sm:$0xff]
        %v3480 = vld [vmem:[%s22 + $0x130] sm:$0xff]
        %v3481 = vld [vmem:[%s22 + $0x138] sm:$0xff]
        %v3482 = vld [vmem:[%s22 + $0x140] sm:$0xff]
        %v3483 = vld [vmem:[%s22 + $0x148] sm:$0xff]
        %v3484 = vld [vmem:[%s22 + $0x150] sm:$0xff]
        %v3485 = vld [vmem:[%s22 + $0x158] sm:$0xff]
        %v3486 = vld [vmem:[%s22 + $0x160] sm:$0xff]
        %v3487 = vld [vmem:[%s22 + $0x168] sm:$0xff]
        %v3488 = vld [vmem:[%s22 + $0x170] sm:$0xff]
        %v3489 = vld [vmem:[%s22 + $0x178] sm:$0xff]
        %v3490 = vld [vmem:[%s22 + $0x180] sm:$0xff]
        %v3491 = vld [vmem:[%s22 + $0x188] sm:$0xff]
        %v3492 = vld [vmem:[%s22 + $0x190] sm:$0xff]
        %v3493 = vld [vmem:[%s22 + $0x198] sm:$0xff]
        %v3494 = vld [vmem:[%s22 + $0x1a0] sm:$0xff]
        %v3495 = vld [vmem:[%s22 + $0x1a8] sm:$0xff]
        %v3496 = vld [vmem:[%s22 + $0x1b0] sm:$0xff]
        %v3497 = vld [vmem:[%s22 + $0x1b8] sm:$0xff]
        %v3498 = vld [vmem:[%s22 + $0x1c0] sm:$0xff]
        %v3499 = vld [vmem:[%s22 + $0x1c8] sm:$0xff]
        %v3500 = vld [vmem:[%s22 + $0x1d0] sm:$0xff]
        %v3501 = vld [vmem:[%s22 + $0x1d8] sm:$0xff]
        %v3502 = vld [vmem:[%s22 + $0x1e0] sm:$0xff]
        %v3503 = vld [vmem:[%s22 + $0x1e8] sm:$0xff]
        %v3504 = vld [vmem:[%s22 + $0x1f0] sm:$0xff]
        %v3505 = vld [vmem:[%s22 + $0x1f8] sm:$0xff]
        %v3506 = vld [vmem:[%s22 + $0x200] sm:$0xff]
        %v3507 = vld [vmem:[%s22 + $0x208] sm:$0xff]
        %v3508 = vld [vmem:[%s22 + $0x210] sm:$0xff]
        %v3509 = vld [vmem:[%s22 + $0x218] sm:$0xff]
        %v3510 = vld [vmem:[%s22 + $0x220] sm:$0xff]
        %v3511 = vld [vmem:[%s22 + $0x228] sm:$0xff]
        %v3512 = vld [vmem:[%s22 + $0x230] sm:$0xff]
        %v3513 = vld [vmem:[%s22 + $0x238] sm:$0xff]
        %v3514 = vld [vmem:[%s22 + $0x240] sm:$0xff]
        %v3515 = vld [vmem:[%s22 + $0x248] sm:$0xff]
        %v3516 = vld [vmem:[%s22 + $0x250] sm:$0xff]
        %v3517 = vld [vmem:[%s22 + $0x258] sm:$0xff]
        %v3518 = vld [vmem:[%s22 + $0x260] sm:$0xff]
        %v3519 = vld [vmem:[%s22 + $0x268] sm:$0xff]
        %v3520 = vld [vmem:[%s22 + $0x270] sm:$0xff]
        %v3521 = vld [vmem:[%s22 + $0x278] sm:$0xff]
        %v3522 = vld [vmem:[%s22 + $0x280] sm:$0xff]
        %v3523 = vld [vmem:[%s22 + $0x288] sm:$0xff]
        %v3524 = vld [vmem:[%s22 + $0x290] sm:$0xff]
        %v3525 = vld [vmem:[%s22 + $0x298] sm:$0xff]
        %v3526 = vld [vmem:[%s22 + $0x2a0] sm:$0xff]
        %v3527 = vld [vmem:[%s22 + $0x2a8] sm:$0xff]
        %v3528 = vld [vmem:[%s22 + $0x2b0] sm:$0xff]
        %v3529 = vld [vmem:[%s22 + $0x2b8] sm:$0xff]
        %v3530 = vld [vmem:[%s22 + $0x2c0] sm:$0xff]
        %v3531 = vld [vmem:[%s22 + $0x2c8] sm:$0xff]
        %v3532 = vld [vmem:[%s22 + $0x2d0] sm:$0xff]
        %v3533 = vld [vmem:[%s22 + $0x2d8] sm:$0xff]
        %v3534 = vld [vmem:[%s22 + $0x2e0] sm:$0xff]
        %v3535 = vld [vmem:[%s22 + $0x2e8] sm:$0xff]
        %v3536 = vld [vmem:[%s22 + $0x2f0] sm:$0xff]
        %v3537 = vld [vmem:[%s22 + $0x2f8] sm:$0xff]
        %v3538 = vld [vmem:[%s22 + $0x300] sm:$0xff]
        %v3539 = vld [vmem:[%s22 + $0x308] sm:$0xff]
        %v3540 = vld [vmem:[%s22 + $0x310] sm:$0xff]
        %v3541 = vld [vmem:[%s22 + $0x318] sm:$0xff]
        %v3542 = vld [vmem:[%s22 + $0x320] sm:$0xff]
        %v3543 = vld [vmem:[%s22 + $0x328] sm:$0xff]
        %v3544 = vld [vmem:[%s22 + $0x330] sm:$0xff]
        %v3545 = vld [vmem:[%s22 + $0x338] sm:$0xff]
        %v3546 = vld [vmem:[%s22 + $0x340] sm:$0xff]
        %v3547 = vld [vmem:[%s22 + $0x348] sm:$0xff]
        %v3548 = vld [vmem:[%s22 + $0x350] sm:$0xff]
        %v3549 = vld [vmem:[%s22 + $0x358] sm:$0xff]
        %v3550 = vld [vmem:[%s22 + $0x360] sm:$0xff]
        %v3551 = vld [vmem:[%s22 + $0x368] sm:$0xff]
        %v3552 = vld [vmem:[%s22 + $0x370] sm:$0xff]
        %v3553 = vld [vmem:[%s22 + $0x378] sm:$0xff]
        %v3554 = vld [vmem:[%s22 + $0x380] sm:$0xff]
        %v3555 = vld [vmem:[%s22 + $0x388] sm:$0xff]
        %v3556 = vld [vmem:[%s22 + $0x390] sm:$0xff]
        %v3557 = vld [vmem:[%s22 + $0x398] sm:$0xff]
        %v3558 = vld [vmem:[%s22 + $0x3a0] sm:$0xff]
        %v3559 = vld [vmem:[%s22 + $0x3a8] sm:$0xff]
        %v3560 = vld [vmem:[%s22 + $0x3b0] sm:$0xff]
        %v3561 = vld [vmem:[%s22 + $0x3b8] sm:$0xff]
        %v3562 = vld [vmem:[%s22 + $0x3c0] sm:$0xff]
        %v3563 = vld [vmem:[%s22 + $0x3c8] sm:$0xff]
        %v3564 = vld [vmem:[%s22 + $0x3d0] sm:$0xff]
        %v3565 = vld [vmem:[%s22 + $0x3d8] sm:$0xff]
        %v3566 = vld [vmem:[%s22 + $0x3e0] sm:$0xff]
        %v3567 = vld [vmem:[%s22 + $0x3e8] sm:$0xff]
        %v3568 = vld [vmem:[%s22 + $0x3f0] sm:$0xff]
        %v3569 = vld [vmem:[%s22 + $0x3f8] sm:$0xff]
        %v3570 = vld [vmem:[%s23] sm:$0x3]
        %v3572 = vlaneseq
        %v3573 = vshrl.u32 %v3572, 7
        %v3574 = vsub.s32 0, %v3573
        %v3575 = vrot.slane %v3570, %v3574
        %v3576 = vlaneseq
        %v3577 = vshrl.u32 %v3576, 7
        %v3578 = vsub.s32 1, %v3577
        %v3579 = vrot.slane %v3570, %v3578
        %v3710 = vunpack.c.l.b16 %v3442
        %v3711 = vunpack.c.h.b16 %v3442
        %v3712 = vunpack.c.l.b16 %v3443
        %v3713 = vunpack.c.h.b16 %v3443
        %v3714 = vunpack.c.l.b16 %v3444
        %v3715 = vunpack.c.h.b16 %v3444
        %v3716 = vunpack.c.l.b16 %v3445
        %v3717 = vunpack.c.h.b16 %v3445
        %v3718 = vunpack.c.l.b16 %v3446
        %v3719 = vunpack.c.h.b16 %v3446
        %v3720 = vunpack.c.l.b16 %v3447
        %v3721 = vunpack.c.h.b16 %v3447
        %v3722 = vunpack.c.l.b16 %v3448
        %v3723 = vunpack.c.h.b16 %v3448
        %v3724 = vunpack.c.l.b16 %v3449
        %v3725 = vunpack.c.h.b16 %v3449
        %v3726 = vunpack.c.l.b16 %v3450
        %v3727 = vunpack.c.h.b16 %v3450
        %v3728 = vunpack.c.l.b16 %v3451
        %v3729 = vunpack.c.h.b16 %v3451
        %v3730 = vunpack.c.l.b16 %v3452
        %v3731 = vunpack.c.h.b16 %v3452
        %v3732 = vunpack.c.l.b16 %v3453
        %v3733 = vunpack.c.h.b16 %v3453
        %v3734 = vunpack.c.l.b16 %v3454
        %v3735 = vunpack.c.h.b16 %v3454
        %v3736 = vunpack.c.l.b16 %v3455
        %v3737 = vunpack.c.h.b16 %v3455
        %v3738 = vunpack.c.l.b16 %v3456
        %v3739 = vunpack.c.h.b16 %v3456
        %v3740 = vunpack.c.l.b16 %v3457
        %v3741 = vunpack.c.h.b16 %v3457
        %v3742 = vunpack.c.l.b16 %v3458
        %v3743 = vunpack.c.h.b16 %v3458
        %v3744 = vunpack.c.l.b16 %v3459
        %v3745 = vunpack.c.h.b16 %v3459
        %v3746 = vunpack.c.l.b16 %v3460
        %v3747 = vunpack.c.h.b16 %v3460
        %v3748 = vunpack.c.l.b16 %v3461
        %v3749 = vunpack.c.h.b16 %v3461
        %v3750 = vunpack.c.l.b16 %v3462
        %v3751 = vunpack.c.h.b16 %v3462
        %v3752 = vunpack.c.l.b16 %v3463
        %v3753 = vunpack.c.h.b16 %v3463
        %v3754 = vunpack.c.l.b16 %v3464
        %v3755 = vunpack.c.h.b16 %v3464
        %v3756 = vunpack.c.l.b16 %v3465
        %v3757 = vunpack.c.h.b16 %v3465
        %v3758 = vunpack.c.l.b16 %v3466
        %v3759 = vunpack.c.h.b16 %v3466
        %v3760 = vunpack.c.l.b16 %v3467
        %v3761 = vunpack.c.h.b16 %v3467
        %v3762 = vunpack.c.l.b16 %v3468
        %v3763 = vunpack.c.h.b16 %v3468
        %v3764 = vunpack.c.l.b16 %v3469
        %v3765 = vunpack.c.h.b16 %v3469
        %v3766 = vunpack.c.l.b16 %v3470
        %v3767 = vunpack.c.h.b16 %v3470
        %v3768 = vunpack.c.l.b16 %v3471
        %v3769 = vunpack.c.h.b16 %v3471
        %v3770 = vunpack.c.l.b16 %v3472
        %v3771 = vunpack.c.h.b16 %v3472
        %v3772 = vunpack.c.l.b16 %v3473
        %v3773 = vunpack.c.h.b16 %v3473
        %v3774 = vunpack.c.l.b16 %v3474
        %v3775 = vunpack.c.h.b16 %v3474
        %v3776 = vunpack.c.l.b16 %v3475
        %v3777 = vunpack.c.h.b16 %v3475
        %v3778 = vunpack.c.l.b16 %v3476
        %v3779 = vunpack.c.h.b16 %v3476
        %v3780 = vunpack.c.l.b16 %v3477
        %v3781 = vunpack.c.h.b16 %v3477
        %v3782 = vunpack.c.l.b16 %v3478
        %v3783 = vunpack.c.h.b16 %v3478
        %v3784 = vunpack.c.l.b16 %v3479
        %v3785 = vunpack.c.h.b16 %v3479
        %v3786 = vunpack.c.l.b16 %v3480
        %v3787 = vunpack.c.h.b16 %v3480
        %v3788 = vunpack.c.l.b16 %v3481
        %v3789 = vunpack.c.h.b16 %v3481
        %v3790 = vunpack.c.l.b16 %v3482
        %v3791 = vunpack.c.h.b16 %v3482
        %v3792 = vunpack.c.l.b16 %v3483
        %v3793 = vunpack.c.h.b16 %v3483
        %v3794 = vunpack.c.l.b16 %v3484
        %v3795 = vunpack.c.h.b16 %v3484
        %v3796 = vunpack.c.l.b16 %v3485
        %v3797 = vunpack.c.h.b16 %v3485
        %v3798 = vunpack.c.l.b16 %v3486
        %v3799 = vunpack.c.h.b16 %v3486
        %v3800 = vunpack.c.l.b16 %v3487
        %v3801 = vunpack.c.h.b16 %v3487
        %v3802 = vunpack.c.l.b16 %v3488
        %v3803 = vunpack.c.h.b16 %v3488
        %v3804 = vunpack.c.l.b16 %v3489
        %v3805 = vunpack.c.h.b16 %v3489
        %v3806 = vunpack.c.l.b16 %v3490
        %v3807 = vunpack.c.h.b16 %v3490
        %v3808 = vunpack.c.l.b16 %v3491
        %v3809 = vunpack.c.h.b16 %v3491
        %v3810 = vunpack.c.l.b16 %v3492
        %v3811 = vunpack.c.h.b16 %v3492
        %v3812 = vunpack.c.l.b16 %v3493
        %v3813 = vunpack.c.h.b16 %v3493
        %v3814 = vunpack.c.l.b16 %v3494
        %v3815 = vunpack.c.h.b16 %v3494
        %v3816 = vunpack.c.l.b16 %v3495
        %v3817 = vunpack.c.h.b16 %v3495
        %v3818 = vunpack.c.l.b16 %v3496
        %v3819 = vunpack.c.h.b16 %v3496
        %v3820 = vunpack.c.l.b16 %v3497
        %v3821 = vunpack.c.h.b16 %v3497
        %v3822 = vunpack.c.l.b16 %v3498
        %v3823 = vunpack.c.h.b16 %v3498
        %v3824 = vunpack.c.l.b16 %v3499
        %v3825 = vunpack.c.h.b16 %v3499
        %v3826 = vunpack.c.l.b16 %v3500
        %v3827 = vunpack.c.h.b16 %v3500
        %v3828 = vunpack.c.l.b16 %v3501
        %v3829 = vunpack.c.h.b16 %v3501
        %v3830 = vunpack.c.l.b16 %v3502
        %v3831 = vunpack.c.h.b16 %v3502
        %v3832 = vunpack.c.l.b16 %v3503
        %v3833 = vunpack.c.h.b16 %v3503
        %v3834 = vunpack.c.l.b16 %v3504
        %v3835 = vunpack.c.h.b16 %v3504
        %v3836 = vunpack.c.l.b16 %v3505
        %v3837 = vunpack.c.h.b16 %v3505
        %v3838 = vunpack.c.l.b16 %v3506
        %v3839 = vunpack.c.h.b16 %v3506
        %v3840 = vunpack.c.l.b16 %v3507
        %v3841 = vunpack.c.h.b16 %v3507
        %v3842 = vunpack.c.l.b16 %v3508
        %v3843 = vunpack.c.h.b16 %v3508
        %v3844 = vunpack.c.l.b16 %v3509
        %v3845 = vunpack.c.h.b16 %v3509
        %v3846 = vunpack.c.l.b16 %v3510
        %v3847 = vunpack.c.h.b16 %v3510
        %v3848 = vunpack.c.l.b16 %v3511
        %v3849 = vunpack.c.h.b16 %v3511
        %v3850 = vunpack.c.l.b16 %v3512
        %v3851 = vunpack.c.h.b16 %v3512
        %v3852 = vunpack.c.l.b16 %v3513
        %v3853 = vunpack.c.h.b16 %v3513
        %v3854 = vunpack.c.l.b16 %v3514
        %v3855 = vunpack.c.h.b16 %v3514
        %v3856 = vunpack.c.l.b16 %v3515
        %v3857 = vunpack.c.h.b16 %v3515
        %v3858 = vunpack.c.l.b16 %v3516
        %v3859 = vunpack.c.h.b16 %v3516
        %v3860 = vunpack.c.l.b16 %v3517
        %v3861 = vunpack.c.h.b16 %v3517
        %v3862 = vunpack.c.l.b16 %v3518
        %v3863 = vunpack.c.h.b16 %v3518
        %v3864 = vunpack.c.l.b16 %v3519
        %v3865 = vunpack.c.h.b16 %v3519
        %v3866 = vunpack.c.l.b16 %v3520
        %v3867 = vunpack.c.h.b16 %v3520
        %v3868 = vunpack.c.l.b16 %v3521
        %v3869 = vunpack.c.h.b16 %v3521
        %v3870 = vunpack.c.l.b16 %v3522
        %v3871 = vunpack.c.h.b16 %v3522
        %v3872 = vunpack.c.l.b16 %v3523
        %v3873 = vunpack.c.h.b16 %v3523
        %v3874 = vunpack.c.l.b16 %v3524
        %v3875 = vunpack.c.h.b16 %v3524
        %v3876 = vunpack.c.l.b16 %v3525
        %v3877 = vunpack.c.h.b16 %v3525
        %v3878 = vunpack.c.l.b16 %v3526
        %v3879 = vunpack.c.h.b16 %v3526
        %v3880 = vunpack.c.l.b16 %v3527
        %v3881 = vunpack.c.h.b16 %v3527
        %v3882 = vunpack.c.l.b16 %v3528
        %v3883 = vunpack.c.h.b16 %v3528
        %v3884 = vunpack.c.l.b16 %v3529
        %v3885 = vunpack.c.h.b16 %v3529
        %v3886 = vunpack.c.l.b16 %v3530
        %v3887 = vunpack.c.h.b16 %v3530
        %v3888 = vunpack.c.l.b16 %v3531
        %v3889 = vunpack.c.h.b16 %v3531
        %v3890 = vunpack.c.l.b16 %v3532
        %v3891 = vunpack.c.h.b16 %v3532
        %v3892 = vunpack.c.l.b16 %v3533
        %v3893 = vunpack.c.h.b16 %v3533
        %v3894 = vunpack.c.l.b16 %v3534
        %v3895 = vunpack.c.h.b16 %v3534
        %v3896 = vunpack.c.l.b16 %v3535
        %v3897 = vunpack.c.h.b16 %v3535
        %v3898 = vunpack.c.l.b16 %v3536
        %v3899 = vunpack.c.h.b16 %v3536
        %v3900 = vunpack.c.l.b16 %v3537
        %v3901 = vunpack.c.h.b16 %v3537
        %v3902 = vunpack.c.l.b16 %v3538
        %v3903 = vunpack.c.h.b16 %v3538
        %v3904 = vunpack.c.l.b16 %v3539
        %v3905 = vunpack.c.h.b16 %v3539
        %v3906 = vunpack.c.l.b16 %v3540
        %v3907 = vunpack.c.h.b16 %v3540
        %v3908 = vunpack.c.l.b16 %v3541
        %v3909 = vunpack.c.h.b16 %v3541
        %v3910 = vunpack.c.l.b16 %v3542
        %v3911 = vunpack.c.h.b16 %v3542
        %v3912 = vunpack.c.l.b16 %v3543
        %v3913 = vunpack.c.h.b16 %v3543
        %v3914 = vunpack.c.l.b16 %v3544
        %v3915 = vunpack.c.h.b16 %v3544
        %v3916 = vunpack.c.l.b16 %v3545
        %v3917 = vunpack.c.h.b16 %v3545
        %v3918 = vunpack.c.l.b16 %v3546
        %v3919 = vunpack.c.h.b16 %v3546
        %v3920 = vunpack.c.l.b16 %v3547
        %v3921 = vunpack.c.h.b16 %v3547
        %v3922 = vunpack.c.l.b16 %v3548
        %v3923 = vunpack.c.h.b16 %v3548
        %v3924 = vunpack.c.l.b16 %v3549
        %v3925 = vunpack.c.h.b16 %v3549
        %v3926 = vunpack.c.l.b16 %v3550
        %v3927 = vunpack.c.h.b16 %v3550
        %v3928 = vunpack.c.l.b16 %v3551
        %v3929 = vunpack.c.h.b16 %v3551
        %v3930 = vunpack.c.l.b16 %v3552
        %v3931 = vunpack.c.h.b16 %v3552
        %v3932 = vunpack.c.l.b16 %v3553
        %v3933 = vunpack.c.h.b16 %v3553
        %v3934 = vunpack.c.l.b16 %v3554
        %v3935 = vunpack.c.h.b16 %v3554
        %v3936 = vunpack.c.l.b16 %v3555
        %v3937 = vunpack.c.h.b16 %v3555
        %v3938 = vunpack.c.l.b16 %v3556
        %v3939 = vunpack.c.h.b16 %v3556
        %v3940 = vunpack.c.l.b16 %v3557
        %v3941 = vunpack.c.h.b16 %v3557
        %v3942 = vunpack.c.l.b16 %v3558
        %v3943 = vunpack.c.h.b16 %v3558
        %v3944 = vunpack.c.l.b16 %v3559
        %v3945 = vunpack.c.h.b16 %v3559
        %v3946 = vunpack.c.l.b16 %v3560
        %v3947 = vunpack.c.h.b16 %v3560
        %v3948 = vunpack.c.l.b16 %v3561
        %v3949 = vunpack.c.h.b16 %v3561
        %v3950 = vunpack.c.l.b16 %v3562
        %v3951 = vunpack.c.h.b16 %v3562
        %v3952 = vunpack.c.l.b16 %v3563
        %v3953 = vunpack.c.h.b16 %v3563
        %v3954 = vunpack.c.l.b16 %v3564
        %v3955 = vunpack.c.h.b16 %v3564
        %v3956 = vunpack.c.l.b16 %v3565
        %v3957 = vunpack.c.h.b16 %v3565
        %v3958 = vunpack.c.l.b16 %v3566
        %v3959 = vunpack.c.h.b16 %v3566
        %v3960 = vunpack.c.l.b16 %v3567
        %v3961 = vunpack.c.h.b16 %v3567
        %v3962 = vunpack.c.l.b16 %v3568
        %v3963 = vunpack.c.h.b16 %v3568
        %v3964 = vunpack.c.l.b16 %v3569
        %v3965 = vunpack.c.h.b16 %v3569
        %v3966 = vpack.c.b16 %v3712, %v3710
        %v3967 = vpack.c.b16 %v3713, %v3711
        %v3968 = vpack.c.b16 %v3716, %v3714
        %v3969 = vpack.c.b16 %v3717, %v3715
        %v3970 = vpack.c.b16 %v3720, %v3718
        %v3971 = vpack.c.b16 %v3721, %v3719
        %v3972 = vpack.c.b16 %v3724, %v3722
        %v3973 = vpack.c.b16 %v3725, %v3723
        %v3974 = vpack.c.b16 %v3728, %v3726
        %v3975 = vpack.c.b16 %v3729, %v3727
        %v3976 = vpack.c.b16 %v3732, %v3730
        %v3977 = vpack.c.b16 %v3733, %v3731
        %v3978 = vpack.c.b16 %v3736, %v3734
        %v3979 = vpack.c.b16 %v3737, %v3735
        %v3980 = vpack.c.b16 %v3740, %v3738
        %v3981 = vpack.c.b16 %v3741, %v3739
        %v3982 = vpack.c.b16 %v3744, %v3742
        %v3983 = vpack.c.b16 %v3745, %v3743
        %v3984 = vpack.c.b16 %v3748, %v3746
        %v3985 = vpack.c.b16 %v3749, %v3747
        %v3986 = vpack.c.b16 %v3752, %v3750
        %v3987 = vpack.c.b16 %v3753, %v3751
        %v3988 = vpack.c.b16 %v3756, %v3754
        %v3989 = vpack.c.b16 %v3757, %v3755
        %v3990 = vpack.c.b16 %v3760, %v3758
        %v3991 = vpack.c.b16 %v3761, %v3759
        %v3992 = vpack.c.b16 %v3764, %v3762
        %v3993 = vpack.c.b16 %v3765, %v3763
        %v3994 = vpack.c.b16 %v3768, %v3766
        %v3995 = vpack.c.b16 %v3769, %v3767
        %v3996 = vpack.c.b16 %v3772, %v3770
        %v3997 = vpack.c.b16 %v3773, %v3771
        %v3998 = vpack.c.b16 %v3776, %v3774
        %v3999 = vpack.c.b16 %v3777, %v3775
        %v4000 = vpack.c.b16 %v3780, %v3778
        %v4001 = vpack.c.b16 %v3781, %v3779
        %v4002 = vpack.c.b16 %v3784, %v3782
        %v4003 = vpack.c.b16 %v3785, %v3783
        %v4004 = vpack.c.b16 %v3788, %v3786
        %v4005 = vpack.c.b16 %v3789, %v3787
        %v4006 = vpack.c.b16 %v3792, %v3790
        %v4007 = vpack.c.b16 %v3793, %v3791
        %v4008 = vpack.c.b16 %v3796, %v3794
        %v4009 = vpack.c.b16 %v3797, %v3795
        %v4010 = vpack.c.b16 %v3800, %v3798
        %v4011 = vpack.c.b16 %v3801, %v3799
        %v4012 = vpack.c.b16 %v3804, %v3802
        %v4013 = vpack.c.b16 %v3805, %v3803
        %v4014 = vpack.c.b16 %v3808, %v3806
        %v4015 = vpack.c.b16 %v3809, %v3807
        %v4016 = vpack.c.b16 %v3812, %v3810
        %v4017 = vpack.c.b16 %v3813, %v3811
        %v4018 = vpack.c.b16 %v3816, %v3814
        %v4019 = vpack.c.b16 %v3817, %v3815
        %v4020 = vpack.c.b16 %v3820, %v3818
        %v4021 = vpack.c.b16 %v3821, %v3819
        %v4022 = vpack.c.b16 %v3824, %v3822
        %v4023 = vpack.c.b16 %v3825, %v3823
        %v4024 = vpack.c.b16 %v3828, %v3826
        %v4025 = vpack.c.b16 %v3829, %v3827
        %v4026 = vpack.c.b16 %v3832, %v3830
        %v4027 = vpack.c.b16 %v3833, %v3831
        %v4028 = vpack.c.b16 %v3836, %v3834
        %v4029 = vpack.c.b16 %v3837, %v3835
        %v4030 = vpack.c.b16 %v3840, %v3838
        %v4031 = vpack.c.b16 %v3841, %v3839
        %v4032 = vpack.c.b16 %v3844, %v3842
        %v4033 = vpack.c.b16 %v3845, %v3843
        %v4034 = vpack.c.b16 %v3848, %v3846
        %v4035 = vpack.c.b16 %v3849, %v3847
        %v4036 = vpack.c.b16 %v3852, %v3850
        %v4037 = vpack.c.b16 %v3853, %v3851
        %v4038 = vpack.c.b16 %v3856, %v3854
        %v4039 = vpack.c.b16 %v3857, %v3855
        %v4040 = vpack.c.b16 %v3860, %v3858
        %v4041 = vpack.c.b16 %v3861, %v3859
        %v4042 = vpack.c.b16 %v3864, %v3862
        %v4043 = vpack.c.b16 %v3865, %v3863
        %v4044 = vpack.c.b16 %v3868, %v3866
        %v4045 = vpack.c.b16 %v3869, %v3867
        %v4046 = vpack.c.b16 %v3872, %v3870
        %v4047 = vpack.c.b16 %v3873, %v3871
        %v4048 = vpack.c.b16 %v3876, %v3874
        %v4049 = vpack.c.b16 %v3877, %v3875
        %v4050 = vpack.c.b16 %v3880, %v3878
        %v4051 = vpack.c.b16 %v3881, %v3879
        %v4052 = vpack.c.b16 %v3884, %v3882
        %v4053 = vpack.c.b16 %v3885, %v3883
        %v4054 = vpack.c.b16 %v3888, %v3886
        %v4055 = vpack.c.b16 %v3889, %v3887
        %v4056 = vpack.c.b16 %v3892, %v3890
        %v4057 = vpack.c.b16 %v3893, %v3891
        %v4058 = vpack.c.b16 %v3896, %v3894
        %v4059 = vpack.c.b16 %v3897, %v3895
        %v4060 = vpack.c.b16 %v3900, %v3898
        %v4061 = vpack.c.b16 %v3901, %v3899
        %v4062 = vpack.c.b16 %v3904, %v3902
        %v4063 = vpack.c.b16 %v3905, %v3903
        %v4064 = vpack.c.b16 %v3908, %v3906
        %v4065 = vpack.c.b16 %v3909, %v3907
        %v4066 = vpack.c.b16 %v3912, %v3910
        %v4067 = vpack.c.b16 %v3913, %v3911
        %v4068 = vpack.c.b16 %v3916, %v3914
        %v4069 = vpack.c.b16 %v3917, %v3915
        %v4070 = vpack.c.b16 %v3920, %v3918
        %v4071 = vpack.c.b16 %v3921, %v3919
        %v4072 = vpack.c.b16 %v3924, %v3922
        %v4073 = vpack.c.b16 %v3925, %v3923
        %v4074 = vpack.c.b16 %v3928, %v3926
        %v4075 = vpack.c.b16 %v3929, %v3927
        %v4076 = vpack.c.b16 %v3932, %v3930
        %v4077 = vpack.c.b16 %v3933, %v3931
        %v4078 = vpack.c.b16 %v3936, %v3934
        %v4079 = vpack.c.b16 %v3937, %v3935
        %v4080 = vpack.c.b16 %v3940, %v3938
        %v4081 = vpack.c.b16 %v3941, %v3939
        %v4082 = vpack.c.b16 %v3944, %v3942
        %v4083 = vpack.c.b16 %v3945, %v3943
        %v4084 = vpack.c.b16 %v3948, %v3946
        %v4085 = vpack.c.b16 %v3949, %v3947
        %v4086 = vpack.c.b16 %v3952, %v3950
        %v4087 = vpack.c.b16 %v3953, %v3951
        %v4088 = vpack.c.b16 %v3956, %v3954
        %v4089 = vpack.c.b16 %v3957, %v3955
        %v4090 = vpack.c.b16 %v3960, %v3958
        %v4091 = vpack.c.b16 %v3961, %v3959
        %v4092 = vpack.c.b16 %v3964, %v3962
        %v4093 = vpack.c.b16 %v3965, %v3963
        %4222 = vmatprep.subr.bf16.mxu0 %v3967
        %4223 = vmatpush1.bf16.msra.mxu0 %v3966
        %4224 = vmatprep.subr.bf16.mxu0 %v3969
        %4225 = vmatpush1.bf16.msra.mxu0 %v3968
        %4226 = vmatprep.subr.bf16.mxu0 %v3971
        %4227 = vmatpush1.bf16.msra.mxu0 %v3970
        %4228 = vmatprep.subr.bf16.mxu0 %v3973
        %4229 = vmatpush1.bf16.msra.mxu0 %v3972
        %4230 = vmatprep.subr.bf16.mxu0 %v3975
        %4231 = vmatpush1.bf16.msra.mxu0 %v3974
        %4232 = vmatprep.subr.bf16.mxu0 %v3977
        %4233 = vmatpush1.bf16.msra.mxu0 %v3976
        %4234 = vmatprep.subr.bf16.mxu0 %v3979
        %4235 = vmatpush1.bf16.msra.mxu0 %v3978
        %4236 = vmatprep.subr.bf16.mxu0 %v3981
        %4237 = vmatpush1.bf16.msra.mxu0 %v3980
        %4238 = vmatprep.subr.bf16.mxu0 %v3983
        %4239 = vmatpush1.bf16.msra.mxu0 %v3982
        %4240 = vmatprep.subr.bf16.mxu0 %v3985
        %4241 = vmatpush1.bf16.msra.mxu0 %v3984
        %4242 = vmatprep.subr.bf16.mxu0 %v3987
        %4243 = vmatpush1.bf16.msra.mxu0 %v3986
        %4244 = vmatprep.subr.bf16.mxu0 %v3989
        %4245 = vmatpush1.bf16.msra.mxu0 %v3988
        %4246 = vmatprep.subr.bf16.mxu0 %v3991
        %4247 = vmatpush1.bf16.msra.mxu0 %v3990
        %4248 = vmatprep.subr.bf16.mxu0 %v3993
        %4249 = vmatpush1.bf16.msra.mxu0 %v3992
        %4250 = vmatprep.subr.bf16.mxu0 %v3995
        %4251 = vmatpush1.bf16.msra.mxu0 %v3994
        %4252 = vmatprep.subr.bf16.mxu0 %v3997
        %4253 = vmatpush1.bf16.msra.mxu0 %v3996
        %4254 = vmatprep.mubr.bf16.mxu0 %v3435
        %4255 = vmatmul.mubr.bf16.gmra.mrb[0].mxu0 %v3434
        %v4256 = vpop.f32.mrb[0].mxu0
        %v4257 = vadd.f32 %v3575, %v4256
        %v4258 = vpop.f32.mrb[0].mxu0
        %v4259 = vadd.f32 %v3579, %v4258
        %v4260 = vpop.f32.mrb[0].mxu0
        %v4261 = vpop.f32.mrb[0].mxu0
        %4262 = vdwg.mxu0
        %4263 = vmatprep.subr.bf16.mxu0 %v3999
        %4264 = vmatpush1.bf16.msra.mxu0 %v3998
        %4265 = vmatprep.subr.bf16.mxu0 %v4001
        %4266 = vmatpush1.bf16.msra.mxu0 %v4000
        %4267 = vmatprep.subr.bf16.mxu0 %v4003
        %4268 = vmatpush1.bf16.msra.mxu0 %v4002
        %4269 = vmatprep.subr.bf16.mxu0 %v4005
        %4270 = vmatpush1.bf16.msra.mxu0 %v4004
        %4271 = vmatprep.subr.bf16.mxu0 %v4007
        %4272 = vmatpush1.bf16.msra.mxu0 %v4006
        %4273 = vmatprep.subr.bf16.mxu0 %v4009
        %4274 = vmatpush1.bf16.msra.mxu0 %v4008
        %4275 = vmatprep.subr.bf16.mxu0 %v4011
        %4276 = vmatpush1.bf16.msra.mxu0 %v4010
        %4277 = vmatprep.subr.bf16.mxu0 %v4013
        %4278 = vmatpush1.bf16.msra.mxu0 %v4012
        %4279 = vmatprep.subr.bf16.mxu0 %v4015
        %4280 = vmatpush1.bf16.msra.mxu0 %v4014
        %4281 = vmatprep.subr.bf16.mxu0 %v4017
        %4282 = vmatpush1.bf16.msra.mxu0 %v4016
        %4283 = vmatprep.subr.bf16.mxu0 %v4019
        %4284 = vmatpush1.bf16.msra.mxu0 %v4018
        %4285 = vmatprep.subr.bf16.mxu0 %v4021
        %4286 = vmatpush1.bf16.msra.mxu0 %v4020
        %4287 = vmatprep.subr.bf16.mxu0 %v4023
        %4288 = vmatpush1.bf16.msra.mxu0 %v4022
        %4289 = vmatprep.subr.bf16.mxu0 %v4025
        %4290 = vmatpush1.bf16.msra.mxu0 %v4024
        %4291 = vmatprep.subr.bf16.mxu0 %v4027
        %4292 = vmatpush1.bf16.msra.mxu0 %v4026
        %4293 = vmatprep.subr.bf16.mxu0 %v4029
        %4294 = vmatpush1.bf16.msra.mxu0 %v4028
        %4295 = vmatprep.mubr.bf16.mxu0 %v3437
        %4296 = vmatmul.mubr.bf16.gmra.mrb[0].mxu0 %v3436
        %v4297 = vpop.f32.mrb[0].mxu0
        %v4298 = vadd.f32 %v4257, %v4297
        %v4299 = vpop.f32.mrb[0].mxu0
        %v4300 = vadd.f32 %v4259, %v4299
        %v4301 = vpop.f32.mrb[0].mxu0
        %v4302 = vpop.f32.mrb[0].mxu0
        %4303 = vdwg.mxu0
        %4304 = vmatprep.subr.bf16.mxu0 %v4031
        %4305 = vmatpush1.bf16.msra.mxu0 %v4030
        %4306 = vmatprep.subr.bf16.mxu0 %v4033
        %4307 = vmatpush1.bf16.msra.mxu0 %v4032
        %4308 = vmatprep.subr.bf16.mxu0 %v4035
        %4309 = vmatpush1.bf16.msra.mxu0 %v4034
        %4310 = vmatprep.subr.bf16.mxu0 %v4037
        %4311 = vmatpush1.bf16.msra.mxu0 %v4036
        %4312 = vmatprep.subr.bf16.mxu0 %v4039
        %4313 = vmatpush1.bf16.msra.mxu0 %v4038
        %4314 = vmatprep.subr.bf16.mxu0 %v4041
        %4315 = vmatpush1.bf16.msra.mxu0 %v4040
        %4316 = vmatprep.subr.bf16.mxu0 %v4043
        %4317 = vmatpush1.bf16.msra.mxu0 %v4042
        %4318 = vmatprep.subr.bf16.mxu0 %v4045
        %4319 = vmatpush1.bf16.msra.mxu0 %v4044
        %4320 = vmatprep.subr.bf16.mxu0 %v4047
        %4321 = vmatpush1.bf16.msra.mxu0 %v4046
        %4322 = vmatprep.subr.bf16.mxu0 %v4049
        %4323 = vmatpush1.bf16.msra.mxu0 %v4048
        %4324 = vmatprep.subr.bf16.mxu0 %v4051
        %4325 = vmatpush1.bf16.msra.mxu0 %v4050
        %4326 = vmatprep.subr.bf16.mxu0 %v4053
        %4327 = vmatpush1.bf16.msra.mxu0 %v4052
        %4328 = vmatprep.subr.bf16.mxu0 %v4055
        %4329 = vmatpush1.bf16.msra.mxu0 %v4054
        %4330 = vmatprep.subr.bf16.mxu0 %v4057
        %4331 = vmatpush1.bf16.msra.mxu0 %v4056
        %4332 = vmatprep.subr.bf16.mxu0 %v4059
        %4333 = vmatpush1.bf16.msra.mxu0 %v4058
        %4334 = vmatprep.subr.bf16.mxu0 %v4061
        %4335 = vmatpush1.bf16.msra.mxu0 %v4060
        %4336 = vmatprep.mubr.bf16.mxu0 %v3439
        %4337 = vmatmul.mubr.bf16.gmra.mrb[0].mxu0 %v3438
        %v4338 = vpop.f32.mrb[0].mxu0
        %v4339 = vadd.f32 %v4298, %v4338
        %v4340 = vpop.f32.mrb[0].mxu0
        %v4341 = vadd.f32 %v4300, %v4340
        %v4342 = vpop.f32.mrb[0].mxu0
        %v4343 = vpop.f32.mrb[0].mxu0
        %4344 = vdwg.mxu0
        %4345 = vmatprep.subr.bf16.mxu0 %v4063
        %4346 = vmatpush1.bf16.msra.mxu0 %v4062
        %4347 = vmatprep.subr.bf16.mxu0 %v4065
        %4348 = vmatpush1.bf16.msra.mxu0 %v4064
        %4349 = vmatprep.subr.bf16.mxu0 %v4067
        %4350 = vmatpush1.bf16.msra.mxu0 %v4066
        %4351 = vmatprep.subr.bf16.mxu0 %v4069
        %4352 = vmatpush1.bf16.msra.mxu0 %v4068
        %4353 = vmatprep.subr.bf16.mxu0 %v4071
        %4354 = vmatpush1.bf16.msra.mxu0 %v4070
        %4355 = vmatprep.subr.bf16.mxu0 %v4073
        %4356 = vmatpush1.bf16.msra.mxu0 %v4072
        %4357 = vmatprep.subr.bf16.mxu0 %v4075
        %4358 = vmatpush1.bf16.msra.mxu0 %v4074
        %4359 = vmatprep.subr.bf16.mxu0 %v4077
        %4360 = vmatpush1.bf16.msra.mxu0 %v4076
        %4361 = vmatprep.subr.bf16.mxu0 %v4079
        %4362 = vmatpush1.bf16.msra.mxu0 %v4078
        %4363 = vmatprep.subr.bf16.mxu0 %v4081
        %4364 = vmatpush1.bf16.msra.mxu0 %v4080
        %4365 = vmatprep.subr.bf16.mxu0 %v4083
        %4366 = vmatpush1.bf16.msra.mxu0 %v4082
        %4367 = vmatprep.subr.bf16.mxu0 %v4085
        %4368 = vmatpush1.bf16.msra.mxu0 %v4084
        %4369 = vmatprep.subr.bf16.mxu0 %v4087
        %4370 = vmatpush1.bf16.msra.mxu0 %v4086
        %4371 = vmatprep.subr.bf16.mxu0 %v4089
        %4372 = vmatpush1.bf16.msra.mxu0 %v4088
        %4373 = vmatprep.subr.bf16.mxu0 %v4091
        %4374 = vmatpush1.bf16.msra.mxu0 %v4090
        %4375 = vmatprep.subr.bf16.mxu0 %v4093
        %4376 = vmatpush1.bf16.msra.mxu0 %v4092
        %4377 = vmatprep.mubr.bf16.mxu0 %v3441
        %4378 = vmatmul.mubr.bf16.gmra.mrb[0].mxu0 %v3440
        %v4379 = vpop.f32.mrb[0].mxu0
        %v4380 = vadd.f32 %v4339, %v4379
        %v4381 = vpop.f32.mrb[0].mxu0
        %v4382 = vadd.f32 %v4341, %v4381
        %v4383 = vpop.f32.mrb[0].mxu0
        %v4384 = vpop.f32.mrb[0].mxu0
        %4385 = vdwg.mxu0
        %v4386 = vld [vmem:[%s24] sm:$0x3]
        %v4388 = vlaneseq
        %v4389 = vshrl.u32 %v4388, 7
        %v4390 = vsub.s32 0, %v4389
        %v4391 = vrot.slane %v4386, %v4390
        %v4392 = vlaneseq
        %v4393 = vshrl.u32 %v4392, 7
        %v4394 = vsub.s32 1, %v4393
        %v4395 = vrot.slane %v4386, %v4394
        %v4398 = vmul.f32 %v4391, %v4380
        %v4399 = vmul.f32 %v4395, %v4382
        %v4400 = vadd.f32 %v2384, %v4398
        %v4401 = vadd.f32 %v2385, %v4399
        %v4402 = vld [vmem:[%s25] sm:$0x3]
        %v4403 = vld [vmem:[%s26] sm:$0x3]
        %v4404 = vadd.f32 %v4400, %v4401
        %4405 = vadd.xlane.f32.xlu0 %v4404
        %v4406 = vpop.xlane.xlu0 %4405
        %v4407 = vmul.f32 %v4406, %v861
        %v4408 = vsub.f32 %v4400, %v4407
        %v4409 = vsub.f32 %v4401, %v4407
        %v4410 = vmul.f32 %v4408, %v4408
        %v4411 = vmul.f32 %v4409, %v4409
        %v4412 = vadd.f32 %v4410, %v4411
        %4413 = vadd.xlane.f32.xlu0 %v4412
        %v4414 = vpop.xlane.xlu0 %4413
        %v4415 = vmul.f32 %v4414, %v861
        %v4416 = vadd.f32 %v4415, 1e-06
        %v4417 = vrsqrt.pop %v4416
        %v4418 = vmul.f32 %v4408, %v4417
        %v4419 = vmul.f32 %v4409, %v4417
        %v4421 = vlaneseq
        %v4422 = vshrl.u32 %v4421, 7
        %v4423 = vsub.s32 0, %v4422
        %v4424 = vrot.slane %v4402, %v4423
        %v4425 = vlaneseq
        %v4426 = vshrl.u32 %v4425, 7
        %v4427 = vsub.s32 1, %v4426
        %v4428 = vrot.slane %v4402, %v4427
        %v4431 = vmul.f32 %v4418, %v4424
        %v4432 = vmul.f32 %v4419, %v4428
        %v4434 = vlaneseq
        %v4435 = vshrl.u32 %v4434, 7
        %v4436 = vsub.s32 0, %v4435
        %v4437 = vrot.slane %v4403, %v4436
        %v4438 = vlaneseq
        %v4439 = vshrl.u32 %v4438, 7
        %v4440 = vsub.s32 1, %v4439
        %v4441 = vrot.slane %v4403, %v4440
        %v4444 = vadd.f32 %v4431, %v4437
        %v4445 = vadd.f32 %v4432, %v4441
        %4446 = vst [vmem:[%s826] sm:$0xff] %v4444
        %4447 = vst [vmem:[%s826 + $0x8] sm:$0xff] %v4445
        %s4448 = sand.u32 %s626, 1
        %s4449 = scalar_lea.sflag [#allocation3], %s4448
        %s4450 = sand.u32 %s626, 1
        %s4451 = smul.addr %s4450, 16
        %s4452 = scalar_lea.vmem [#allocation2], %s4451
        // Predicated region
        $region129: #{latent_regresser_forward.3} parent=127 // pred_check
          %p4453 = pneg %p636
        $region130: #{latent_regresser_forward.3} parent=127 // pred_check_branch
          %4455 = sbr.rel (%p4453) target = $region132
        $region131: #{latent_regresser_forward.3} parent=127 // pred_region
          %s4457 = ssub.s32 256, 256
          %4458 = vsyncadd %s4449, %s4457
          %s4459 = smul.addr %s41, 2
          %s4460 = smul.addr %s4459, 128
          %s4461 = scalar_lea.hbm %s27, %s4460
          %s4463 = sshll.u32 %s4452, 4
          %s4464 = int_to_ptr.vmem [resolvable:$true] %s4463
          %4466 = dma.vmem_to_hbm [thread:$0]  %s4464, 256, %s4461, %s4449
        $region132: #{latent_regresser_forward.3} parent=127 // pred_fallthru
          _
      $region128: #{latent_regresser_forward.3} parent=5 // pred_fallthru
        _
      %p4467 = scmp.le.s32.totalorder 2, %s36
      // Predicated region
      $region133: #{latent_regresser_forward.3} parent=5 // pred_check
        %p4468 = pneg %p4467
      $region134: #{latent_regresser_forward.3} parent=5 // pred_check_branch
        %4470 = sbr.rel (%p4468) target = $region136
      $region135: #{latent_regresser_forward.3} parent=5 // pred_region
        %s4471 = ssub.s32 %s36, 2
        // Predicated region
        $region137: #{latent_regresser_forward.3} parent=135 // pred_check
          %p4472 = pneg %p642
        $region138: #{latent_regresser_forward.3} parent=135 // pred_check_branch
          %4474 = sbr.rel (%p4472) target = $region140
        $region139: #{latent_regresser_forward.3} parent=135 // pred_region
          %s4475 = sand.u32 %s627, 1
          %s4476 = scalar_lea.sflag [#allocation3], %s4475
          %s4477 = sand.u32 %s627, 1
          %s4478 = smul.addr %s4477, 16
          %s4479 = scalar_lea.vmem [#allocation2], %s4478
          %4480 = dma.done %s4476, 256
        $region140: #{latent_regresser_forward.3} parent=135 // pred_fallthru
          _
      $region136: #{latent_regresser_forward.3} parent=5 // pred_fallthru
        _
    $region6: #{latent_regresser_forward.3} parent=1 // loop_footer
      %s40 = sadd.s32 1, %s36
    $region7: #{latent_regresser_forward.3} parent=1 // loop_footer_branch
      %35 = sbr.rel target = $region3
    $region8: #{latent_regresser_forward.3} parent=1 // loop_exit
      _
    %4481 = vsyncpa [#allocation3], 1
    %s4482 = scalar_lea.sflag [#allocation3], 1
    %4483 = vsyncpa %s4482, 1

</llo_original>
